<compile_context>
chip_gen: v7x
topology: tpu7x:2x2x1
jax: 0.10.0
libtpu: 0.0.40
codegen_flags: <defaults>
</compile_context>

<pallas_src>
import functools

import numpy as np
import jax
import jax.numpy as jnp
from jax.experimental import pallas as pl
from jax.experimental.pallas import tpu as pltpu

# constants copied from the PyTorch module
THRESH = 0.5
DECAY = 0.2
CFG_CNN = (4, 64)   # (in_planes, out_planes)
CFG_S = 39          # taxels per finger == spatial_window
K_HOPS = 3          # TAGConv K

LANE = 128
SUBLANE = 8
BT_MAX = 128        # max batch rows per grid tile (slab ~10 MiB -> fits v5e/v7x)


def _round_up(x, m):
    return ((x + m - 1) // m) * m


def _lif_gnn_kernel(x_ref, wbig_ref, bcb_ref, wf_ref, bf_ref, out_ref,
                    conv_ref, *, n_steps, b_tile):
    """x_ref:    (S*Bt, T*Cin)   node features of this batch tile, (s,b) rows
       wbig_ref: (T*Cin, T*Cout) TAGConv folded with A^k hop matrices
       bcb_ref:  (1, T*Cout)     conv bias tiled over time
       wf_ref:   (T*Cout, Npad)  tfc1 weight, classes padded to 128 lanes
       bf_ref:   (1, Npad)       tfc1 bias (padded)
       out_ref:  (Bt, Npad)      averaged spike counts (padded)
       conv_ref: (S*Bt, T*Cout)  VMEM scratch holding the hoisted TAGConv
    """
    # ---- hoisted TAGConv for ALL spatial steps of this batch tile:
    # one wide matmul, no per-step / per-batch tiny matmuls.
    conv_ref[...] = (
        jnp.dot(x_ref[...], wbig_ref[...], preferred_element_type=jnp.float32)
        + bcb_ref[...]
    )

    t_cout = conv_ref.shape[1]
    n_pad = out_ref.shape[1]

    # Loop-invariant values hoisted OUT of the recurrence (perf review):
    wf = wf_ref[...]                                        # tfc1 RHS, loaded once
    bf_b = jnp.broadcast_to(bf_ref[...], (b_tile, n_pad))   # bias broadcast, once

    t1_mem = jnp.zeros((b_tile, t_cout), jnp.float32)
    t1_spk = jnp.zeros((b_tile, t_cout), jnp.bool_)
    th1_mem = jnp.zeros((b_tile, n_pad), jnp.float32)
    th1_spk = jnp.zeros((b_tile, n_pad), jnp.bool_)
    th1_sum = jnp.zeros((b_tile, n_pad), jnp.float32)

    # Fully unrolled recurrence: straight-line code, static tile-aligned
    # slices of the conv slab, one SSA value for wf reused by all 39 matmuls.
    for s in range(n_steps):
        conv_s = conv_ref[pl.ds(s * b_tile, b_tile), :]      # (Bt, T*Cout)

        # mem_update_conv: LIF with exact select form (spike is exactly 0/1):
        #   spike==1 -> mem = x ; spike==0 -> mem = decay*mem + x
        t1_mem = jnp.where(t1_spk, conv_s, DECAY * t1_mem + conv_s)
        t1_spk = t1_mem > THRESH

        # tfc1 on the flattened spike train (columns already (t, c) row-major
        # == torch .view(batch, -1)): one fused matmul per step.
        fc = jnp.dot(t1_spk.astype(wf.dtype), wf,
                     preferred_element_type=jnp.float32) + bf_b   # (Bt, Npad)

        # mem_update: LIF on class-logit membranes.
        th1_mem = jnp.where(th1_spk, fc, DECAY * th1_mem + fc)
        th1_spk = th1_mem > THRESH
        th1_sum = th1_sum + th1_spk.astype(jnp.float32)

    # outputs_temporal = th1_sumspike / spatial_window
    out_ref[...] = th1_sum * (1.0 / n_steps)


def prepare_params(params, t_len, *, matmul_dtype=jnp.float32):
    """One-time weight preprocessing, hoisted out of the forward hot path."""
    wc, bc, wf, bf, a_norm = params
    c_in, c_out = CFG_CNN
    n_cls = wf.shape[1]

    # Fold TAGConv hop matrices into one wide weight:
    #   conv[s,b,t,o] = sum_k (A^k X_sb Wc_k)[t,o] + bc[o]
    wc_k = wc.reshape(K_HOPS + 1, c_in, c_out)
    a_pows = [jnp.eye(t_len, dtype=jnp.float32)]
    for _ in range(K_HOPS):
        a_pows.append(a_pows[-1] @ a_norm)
    a_stack = jnp.stack(a_pows)                                   # (K+1, T, T)
    w_big = jnp.einsum("ktu,kco->ucto", a_stack, wc_k)
    w_big = w_big.reshape(t_len * c_in, t_len * c_out)            # (T*Cin, T*Cout)
    bc_big = jnp.tile(bc.reshape(1, c_out), (1, t_len))           # (1, T*Cout)

    # Lane-dense logits: pad classes to 128.
    n_pad = _round_up(n_cls, LANE)
    wf_pad = jnp.pad(wf, ((0, 0), (0, n_pad - n_cls))).astype(matmul_dtype)
    bf_pad = jnp.pad(bf, ((0, 0), (0, n_pad - n_cls))).astype(jnp.float32)

    prepped = (w_big.astype(jnp.float32), bc_big.astype(jnp.float32),
               wf_pad, bf_pad)
    return jax.tree_util.tree_map(jax.block_until_ready, prepped)


@functools.partial(jax.jit, static_argnames=("num_classes",))
def hybrid_lif_gnn_only_location(data, prepped, *, num_classes):
    """data: (batch, 2*39, 2, time) float32 -> (batch, num_classes) float32."""
    w_big, bc_big, wf_pad, bf_pad = prepped
    b, ch, f, t = data.shape
    n_steps = ch // 2                    # spatial_window == 39
    c_in = 2 * f                         # cfg_cnn in_planes == 4
    c_out = CFG_CNN[1]                   # 64
    n_pad = wf_pad.shape[1]

    # ---- data-dependent layout plumbing (pure reshapes / transposes / pads)
    # torch.cat((data[:, :39], data[:, 39:]), dim=-2) -> (B, 39, 4, T)
    d_cat = jnp.concatenate([data[:, :n_steps], data[:, n_steps:]], axis=-2)
    # per-step: squeeze + transpose(1, 2) -> (B, T, 4); stack all steps.
    x_all = jnp.transpose(d_cat, (1, 0, 3, 2)).astype(jnp.float32)  # (S,B,T,4)

    # Batch tiling: one grid program per batch tile (parallel -> megacore on
    # v7x); collapses to a single program for tiny batch.
    bt = min(_round_up(b, SUBLANE), BT_MAX)
    b_pad = _round_up(b, bt)
    n_bt = b_pad // bt
    x_pad = jnp.pad(x_all, ((0, 0), (0, b_pad - b), (0, 0), (0, 0)))
    x_tiles = x_pad.reshape(n_steps, n_bt, bt, t * c_in)
    x_tiles = jnp.transpose(x_tiles, (1, 0, 2, 3))
    x_tiles = x_tiles.reshape(n_bt, n_steps * bt, t * c_in)   # (nbt, S*Bt, T*Cin)

    kernel = functools.partial(_lif_gnn_kernel, n_steps=n_steps, b_tile=bt)

    # Advisory cost + explicit VMEM budget (re-derived per tile).
    flops = (2 * n_steps * b_pad * (t * c_in) * (t * c_out)
             + 2 * n_steps * b_pad * (t * c_out) * n_pad)
    bytes_accessed = 4 * (x_tiles.size + w_big.size + bc_big.size
                          + wf_pad.size + bf_pad.size + b_pad * n_pad)
    slab_bytes = n_steps * bt * t * c_out * 4
    io_bytes = n_steps * bt * t * c_in * 4 + bt * n_pad * 4
    w_bytes = 4 * (w_big.size + bc_big.size + wf_pad.size + bf_pad.size)
    vmem_limit = int(min(max(2 * (slab_bytes + 2 * io_bytes + w_bytes),
                             32 * 1024 * 1024), 64 * 1024 * 1024))

    out_tiles = pl.pallas_call(
        kernel,
        out_shape=jax.ShapeDtypeStruct((n_bt, bt, n_pad), jnp.float32),
        grid=(n_bt,),
        in_specs=[
            pl.BlockSpec((None, n_steps * bt, t * c_in), lambda i: (i, 0, 0)),
            pl.BlockSpec((t * c_in, t * c_out), lambda i: (0, 0)),
            pl.BlockSpec((1, t * c_out), lambda i: (0, 0)),
            pl.BlockSpec((t * c_out, n_pad), lambda i: (0, 0)),
            pl.BlockSpec((1, n_pad), lambda i: (0, 0)),
        ],
        out_specs=pl.BlockSpec((None, bt, n_pad), lambda i: (i, 0, 0)),
        scratch_shapes=[
            pltpu.VMEM((n_steps * bt, t * c_out), jnp.float32),  # conv slab
        ],
        compiler_params=pltpu.CompilerParams(
            dimension_semantics=("parallel",),
            vmem_limit_bytes=vmem_limit),
        cost_estimate=pl.CostEstimate(flops=flops, transcendentals=0,
                                      bytes_accessed=bytes_accessed),
    )(x_tiles, w_big, bc_big, wf_pad, bf_pad)

    out = out_tiles.reshape(b_pad, n_pad)
    return out[:b, :num_classes]


def init_params(key, t_len, num_classes):
    """Deterministic synthetic weights for conv2 (TAGConv) and tfc1."""
    c_in, c_out = CFG_CNN
    k1, k2, k3, k4 = jax.random.split(key, 4)
    wc = 0.1 * jax.random.normal(k1, ((K_HOPS + 1) * c_in, c_out), jnp.float32)
    bc = 0.1 * jax.random.normal(k2, (1, c_out), jnp.float32)
    wf = 0.05 * jax.random.normal(k3, (t_len * c_out, num_classes), jnp.float32)
    bf = 0.05 * jax.random.normal(k4, (1, num_classes), jnp.float32)

    # Temporal chain graph: bidirectional edges between consecutive time
    # steps, symmetric gcn normalization D^-1/2 A D^-1/2 (no self loops).
    a = np.zeros((t_len, t_len), np.float32)
    for i in range(t_len - 1):
        a[i, i + 1] = 1.0
        a[i + 1, i] = 1.0
    deg = a.sum(axis=1)
    dinv = 1.0 / np.sqrt(np.maximum(deg, 1e-12))
    a_norm = jnp.asarray(dinv[:, None] * a * dinv[None, :], dtype=jnp.float32)
    return wc, bc, wf, bf, a_norm


if __name__ == "__main__":
    B, T, NUM_CLASSES = 2, 8, 20           # small shapes; time_length == T
    key = jax.random.PRNGKey(0)
    k_data, k_params = jax.random.split(key)

    data = jax.random.normal(k_data, (B, 2 * CFG_S, 2, T), jnp.float32)
    params = init_params(k_params, T, NUM_CLASSES)

    # One-time parameter preprocessing (hoisted out of the forward hot path).
    prepped = prepare_params(params, T)

    out = hybrid_lif_gnn_only_location(data, prepped, num_classes=NUM_CLASSES)
    out = jax.block_until_ready(out)

    assert out.shape == (B, NUM_CLASSES), out.shape
    assert out.dtype == jnp.float32
    assert bool(jnp.all(jnp.isfinite(out)))
    print("KERNEL_OK")
</pallas_src>

<mosaic_0001>
module attributes {stable_mosaic.version = 11 : i64} {
  func.func @_lif_gnn_kernel(%arg0: i32, %arg1: memref<1x312x32xf32, #tpu.memory_space<vmem>>, %arg2: memref<32x512xf32, #tpu.memory_space<vmem>>, %arg3: memref<1x512xf32, #tpu.memory_space<vmem>>, %arg4: memref<512x128xf32, #tpu.memory_space<vmem>>, %arg5: memref<1x128xf32, #tpu.memory_space<vmem>>, %arg6: memref<1x8x128xf32, #tpu.memory_space<vmem>>, %arg7: memref<312x512xf32, #tpu.memory_space<vmem>>) attributes {dimension_semantics = [#tpu.dimension_semantics<parallel>], iteration_bounds = array<i64: 1>, scalar_prefetch = 0 : i64, scratch_operands = 1 : i64, tpu.core_type = #tpu.core_type<tc>, window_params = [{transform_indices = @transform_0, window_bounds = array<i64: 1, 312, 32>}, {pipeline_mode = #tpu.pipeline_mode<synchronous>, transform_indices = @transform_1, window_bounds = array<i64: 32, 512>}, {pipeline_mode = #tpu.pipeline_mode<synchronous>, transform_indices = @transform_2, window_bounds = array<i64: 1, 512>}, {pipeline_mode = #tpu.pipeline_mode<synchronous>, transform_indices = @transform_3, window_bounds = array<i64: 512, 128>}, {pipeline_mode = #tpu.pipeline_mode<synchronous>, transform_indices = @transform_4, window_bounds = array<i64: 1, 128>}, {transform_indices = @transform_5, window_bounds = array<i64: 1, 8, 128>}]} {
    %c0 = arith.constant 0 : index
    %c0_0 = arith.constant 0 : index
    %c0_1 = arith.constant 0 : index
    %0 = vector.load %arg1[%c0, %c0_0, %c0_1] : memref<1x312x32xf32, #tpu.memory_space<vmem>>, vector<1x312x32xf32>
    %1 = vector.shape_cast %0 : vector<1x312x32xf32> to vector<312x32xf32>
    %c0_2 = arith.constant 0 : index
    %c0_3 = arith.constant 0 : index
    %2 = vector.load %arg2[%c0_2, %c0_3] : memref<32x512xf32, #tpu.memory_space<vmem>>, vector<32x512xf32>
    %cst = arith.constant dense<0.000000e+00> : vector<312x512xf32>
    %3 = tpu.matmul %1, %2, %cst {dimension_numbers = #tpu.dot_dimension_numbers<[1], [0], [0], [1], [0, 0, 1, 1], [], []>} : vector<312x32xf32>, vector<32x512xf32>, vector<312x512xf32> -> vector<312x512xf32>
    %c0_4 = arith.constant 0 : index
    %c0_5 = arith.constant 0 : index
    %4 = vector.load %arg3[%c0_4, %c0_5] : memref<1x512xf32, #tpu.memory_space<vmem>>, vector<1x512xf32>
    %5 = vector.broadcast %4 : vector<1x512xf32> to vector<312x512xf32>
    %6 = arith.addf %3, %5 : vector<312x512xf32>
    %c0_6 = arith.constant 0 : index
    %c0_7 = arith.constant 0 : index
    %7 = vector.load %arg7[%c0_6, %c0_7] : memref<312x512xf32, #tpu.memory_space<vmem>>, vector<312x512xf32>
    tpu.vector_store %arg7[%c0_6, %c0_7], %6 {strides = array<i32>} : memref<312x512xf32, #tpu.memory_space<vmem>>, vector<312x512xf32>,
    %c0_8 = arith.constant 0 : index
    %c0_9 = arith.constant 0 : index
    %8 = vector.load %arg4[%c0_8, %c0_9] : memref<512x128xf32, #tpu.memory_space<vmem>>, vector<512x128xf32>
    %c0_10 = arith.constant 0 : index
    %c0_11 = arith.constant 0 : index
    %9 = vector.load %arg5[%c0_10, %c0_11] : memref<1x128xf32, #tpu.memory_space<vmem>>, vector<1x128xf32>
    %10 = vector.shape_cast %9 : vector<1x128xf32> to vector<1x128xf32>
    %11 = vector.broadcast %10 : vector<1x128xf32> to vector<8x128xf32>
    %cst_12 = arith.constant 0.000000e+00 : f32
    %12 = vector.broadcast %cst_12 : f32 to vector<8x512xf32>
    %false = arith.constant false
    %13 = vector.broadcast %false : i1 to vector<8x512xi1>
    %cst_13 = arith.constant 0.000000e+00 : f32
    %14 = vector.broadcast %cst_13 : f32 to vector<8x128xf32>
    %false_14 = arith.constant false
    %15 = vector.broadcast %false_14 : i1 to vector<8x128xi1>
    %cst_15 = arith.constant 0.000000e+00 : f32
    %16 = vector.broadcast %cst_15 : f32 to vector<8x128xf32>
    %c0_16 = arith.constant 0 : index
    %c0_17 = arith.constant 0 : index
    %17 = vector.load %arg7[%c0_16, %c0_17] : memref<312x512xf32, #tpu.memory_space<vmem>>, vector<8x512xf32>
    %cst_18 = arith.constant 2.000000e-01 : f32
    %18 = vector.broadcast %cst_18 : f32 to vector<8x512xf32>
    %19 = arith.mulf %18, %12 : vector<8x512xf32>
    %20 = arith.addf %19, %17 : vector<8x512xf32>
    %21 = arith.select %13, %17, %20 : vector<8x512xi1>, vector<8x512xf32>
    %cst_19 = arith.constant 5.000000e-01 : f32
    %22 = vector.broadcast %cst_19 : f32 to vector<8x512xf32>
    %23 = arith.cmpf ogt, %21, %22 : vector<8x512xf32>
    %24 = arith.extui %23 : vector<8x512xi1> to vector<8x512xi32>
    %25 = arith.sitofp %24 : vector<8x512xi32> to vector<8x512xf32>
    %cst_20 = arith.constant dense<0.000000e+00> : vector<8x128xf32>
    %26 = tpu.matmul %25, %8, %cst_20 {dimension_numbers = #tpu.dot_dimension_numbers<[1], [0], [0], [1], [0, 0, 1, 1], [], []>} : vector<8x512xf32>, vector<512x128xf32>, vector<8x128xf32> -> vector<8x128xf32>
    %27 = arith.addf %26, %11 : vector<8x128xf32>
    %cst_21 = arith.constant 2.000000e-01 : f32
    %28 = vector.broadcast %cst_21 : f32 to vector<8x128xf32>
    %29 = arith.mulf %28, %14 : vector<8x128xf32>
    %30 = arith.addf %29, %27 : vector<8x128xf32>
    %31 = arith.select %15, %27, %30 : vector<8x128xi1>, vector<8x128xf32>
    %cst_22 = arith.constant 5.000000e-01 : f32
    %32 = vector.broadcast %cst_22 : f32 to vector<8x128xf32>
    %33 = arith.cmpf ogt, %31, %32 : vector<8x128xf32>
    %34 = arith.extui %33 : vector<8x128xi1> to vector<8x128xi32>
    %35 = arith.sitofp %34 : vector<8x128xi32> to vector<8x128xf32>
    %36 = arith.addf %16, %35 : vector<8x128xf32>
    %c8 = arith.constant 8 : index
    %c0_23 = arith.constant 0 : index
    %37 = vector.load %arg7[%c8, %c0_23] : memref<312x512xf32, #tpu.memory_space<vmem>>, vector<8x512xf32>
    %cst_24 = arith.constant 2.000000e-01 : f32
    %38 = vector.broadcast %cst_24 : f32 to vector<8x512xf32>
    %39 = arith.mulf %38, %21 : vector<8x512xf32>
    %40 = arith.addf %39, %37 : vector<8x512xf32>
    %41 = arith.select %23, %37, %40 : vector<8x512xi1>, vector<8x512xf32>
    %cst_25 = arith.constant 5.000000e-01 : f32
    %42 = vector.broadcast %cst_25 : f32 to vector<8x512xf32>
    %43 = arith.cmpf ogt, %41, %42 : vector<8x512xf32>
    %44 = arith.extui %43 : vector<8x512xi1> to vector<8x512xi32>
    %45 = arith.sitofp %44 : vector<8x512xi32> to vector<8x512xf32>
    %cst_26 = arith.constant dense<0.000000e+00> : vector<8x128xf32>
    %46 = tpu.matmul %45, %8, %cst_26 {dimension_numbers = #tpu.dot_dimension_numbers<[1], [0], [0], [1], [0, 0, 1, 1], [], []>} : vector<8x512xf32>, vector<512x128xf32>, vector<8x128xf32> -> vector<8x128xf32>
    %47 = arith.addf %46, %11 : vector<8x128xf32>
    %cst_27 = arith.constant 2.000000e-01 : f32
    %48 = vector.broadcast %cst_27 : f32 to vector<8x128xf32>
    %49 = arith.mulf %48, %31 : vector<8x128xf32>
    %50 = arith.addf %49, %47 : vector<8x128xf32>
    %51 = arith.select %33, %47, %50 : vector<8x128xi1>, vector<8x128xf32>
    %cst_28 = arith.constant 5.000000e-01 : f32
    %52 = vector.broadcast %cst_28 : f32 to vector<8x128xf32>
    %53 = arith.cmpf ogt, %51, %52 : vector<8x128xf32>
    %54 = arith.extui %53 : vector<8x128xi1> to vector<8x128xi32>
    %55 = arith.sitofp %54 : vector<8x128xi32> to vector<8x128xf32>
    %56 = arith.addf %36, %55 : vector<8x128xf32>
    %c16 = arith.constant 16 : index
    %c0_29 = arith.constant 0 : index
    %57 = vector.load %arg7[%c16, %c0_29] : memref<312x512xf32, #tpu.memory_space<vmem>>, vector<8x512xf32>
    %cst_30 = arith.constant 2.000000e-01 : f32
    %58 = vector.broadcast %cst_30 : f32 to vector<8x512xf32>
    %59 = arith.mulf %58, %41 : vector<8x512xf32>
    %60 = arith.addf %59, %57 : vector<8x512xf32>
    %61 = arith.select %43, %57, %60 : vector<8x512xi1>, vector<8x512xf32>
    %cst_31 = arith.constant 5.000000e-01 : f32
    %62 = vector.broadcast %cst_31 : f32 to vector<8x512xf32>
    %63 = arith.cmpf ogt, %61, %62 : vector<8x512xf32>
    %64 = arith.extui %63 : vector<8x512xi1> to vector<8x512xi32>
    %65 = arith.sitofp %64 : vector<8x512xi32> to vector<8x512xf32>
    %cst_32 = arith.constant dense<0.000000e+00> : vector<8x128xf32>
    %66 = tpu.matmul %65, %8, %cst_32 {dimension_numbers = #tpu.dot_dimension_numbers<[1], [0], [0], [1], [0, 0, 1, 1], [], []>} : vector<8x512xf32>, vector<512x128xf32>, vector<8x128xf32> -> vector<8x128xf32>
    %67 = arith.addf %66, %11 : vector<8x128xf32>
    %cst_33 = arith.constant 2.000000e-01 : f32
    %68 = vector.broadcast %cst_33 : f32 to vector<8x128xf32>
    %69 = arith.mulf %68, %51 : vector<8x128xf32>
    %70 = arith.addf %69, %67 : vector<8x128xf32>
    %71 = arith.select %53, %67, %70 : vector<8x128xi1>, vector<8x128xf32>
    %cst_34 = arith.constant 5.000000e-01 : f32
    %72 = vector.broadcast %cst_34 : f32 to vector<8x128xf32>
    %73 = arith.cmpf ogt, %71, %72 : vector<8x128xf32>
    %74 = arith.extui %73 : vector<8x128xi1> to vector<8x128xi32>
    %75 = arith.sitofp %74 : vector<8x128xi32> to vector<8x128xf32>
    %76 = arith.addf %56, %75 : vector<8x128xf32>
    %c24 = arith.constant 24 : index
    %c0_35 = arith.constant 0 : index
    %77 = vector.load %arg7[%c24, %c0_35] : memref<312x512xf32, #tpu.memory_space<vmem>>, vector<8x512xf32>
    %cst_36 = arith.constant 2.000000e-01 : f32
    %78 = vector.broadcast %cst_36 : f32 to vector<8x512xf32>
    %79 = arith.mulf %78, %61 : vector<8x512xf32>
    %80 = arith.addf %79, %77 : vector<8x512xf32>
    %81 = arith.select %63, %77, %80 : vector<8x512xi1>, vector<8x512xf32>
    %cst_37 = arith.constant 5.000000e-01 : f32
    %82 = vector.broadcast %cst_37 : f32 to vector<8x512xf32>
    %83 = arith.cmpf ogt, %81, %82 : vector<8x512xf32>
    %84 = arith.extui %83 : vector<8x512xi1> to vector<8x512xi32>
    %85 = arith.sitofp %84 : vector<8x512xi32> to vector<8x512xf32>
    %cst_38 = arith.constant dense<0.000000e+00> : vector<8x128xf32>
    %86 = tpu.matmul %85, %8, %cst_38 {dimension_numbers = #tpu.dot_dimension_numbers<[1], [0], [0], [1], [0, 0, 1, 1], [], []>} : vector<8x512xf32>, vector<512x128xf32>, vector<8x128xf32> -> vector<8x128xf32>
    %87 = arith.addf %86, %11 : vector<8x128xf32>
    %cst_39 = arith.constant 2.000000e-01 : f32
    %88 = vector.broadcast %cst_39 : f32 to vector<8x128xf32>
    %89 = arith.mulf %88, %71 : vector<8x128xf32>
    %90 = arith.addf %89, %87 : vector<8x128xf32>
    %91 = arith.select %73, %87, %90 : vector<8x128xi1>, vector<8x128xf32>
    %cst_40 = arith.constant 5.000000e-01 : f32
    %92 = vector.broadcast %cst_40 : f32 to vector<8x128xf32>
    %93 = arith.cmpf ogt, %91, %92 : vector<8x128xf32>
    %94 = arith.extui %93 : vector<8x128xi1> to vector<8x128xi32>
    %95 = arith.sitofp %94 : vector<8x128xi32> to vector<8x128xf32>
    %96 = arith.addf %76, %95 : vector<8x128xf32>
    %c32 = arith.constant 32 : index
    %c0_41 = arith.constant 0 : index
    %97 = vector.load %arg7[%c32, %c0_41] : memref<312x512xf32, #tpu.memory_space<vmem>>, vector<8x512xf32>
    %cst_42 = arith.constant 2.000000e-01 : f32
    %98 = vector.broadcast %cst_42 : f32 to vector<8x512xf32>
    %99 = arith.mulf %98, %81 : vector<8x512xf32>
    %100 = arith.addf %99, %97 : vector<8x512xf32>
    %101 = arith.select %83, %97, %100 : vector<8x512xi1>, vector<8x512xf32>
    %cst_43 = arith.constant 5.000000e-01 : f32
    %102 = vector.broadcast %cst_43 : f32 to vector<8x512xf32>
    %103 = arith.cmpf ogt, %101, %102 : vector<8x512xf32>
    %104 = arith.extui %103 : vector<8x512xi1> to vector<8x512xi32>
    %105 = arith.sitofp %104 : vector<8x512xi32> to vector<8x512xf32>
    %cst_44 = arith.constant dense<0.000000e+00> : vector<8x128xf32>
    %106 = tpu.matmul %105, %8, %cst_44 {dimension_numbers = #tpu.dot_dimension_numbers<[1], [0], [0], [1], [0, 0, 1, 1], [], []>} : vector<8x512xf32>, vector<512x128xf32>, vector<8x128xf32> -> vector<8x128xf32>
    %107 = arith.addf %106, %11 : vector<8x128xf32>
    %cst_45 = arith.constant 2.000000e-01 : f32
    %108 = vector.broadcast %cst_45 : f32 to vector<8x128xf32>
    %109 = arith.mulf %108, %91 : vector<8x128xf32>
    %110 = arith.addf %109, %107 : vector<8x128xf32>
    %111 = arith.select %93, %107, %110 : vector<8x128xi1>, vector<8x128xf32>
    %cst_46 = arith.constant 5.000000e-01 : f32
    %112 = vector.broadcast %cst_46 : f32 to vector<8x128xf32>
    %113 = arith.cmpf ogt, %111, %112 : vector<8x128xf32>
    %114 = arith.extui %113 : vector<8x128xi1> to vector<8x128xi32>
    %115 = arith.sitofp %114 : vector<8x128xi32> to vector<8x128xf32>
    %116 = arith.addf %96, %115 : vector<8x128xf32>
    %c40 = arith.constant 40 : index
    %c0_47 = arith.constant 0 : index
    %117 = vector.load %arg7[%c40, %c0_47] : memref<312x512xf32, #tpu.memory_space<vmem>>, vector<8x512xf32>
    %cst_48 = arith.constant 2.000000e-01 : f32
    %118 = vector.broadcast %cst_48 : f32 to vector<8x512xf32>
    %119 = arith.mulf %118, %101 : vector<8x512xf32>
    %120 = arith.addf %119, %117 : vector<8x512xf32>
    %121 = arith.select %103, %117, %120 : vector<8x512xi1>, vector<8x512xf32>
    %cst_49 = arith.constant 5.000000e-01 : f32
    %122 = vector.broadcast %cst_49 : f32 to vector<8x512xf32>
    %123 = arith.cmpf ogt, %121, %122 : vector<8x512xf32>
    %124 = arith.extui %123 : vector<8x512xi1> to vector<8x512xi32>
    %125 = arith.sitofp %124 : vector<8x512xi32> to vector<8x512xf32>
    %cst_50 = arith.constant dense<0.000000e+00> : vector<8x128xf32>
    %126 = tpu.matmul %125, %8, %cst_50 {dimension_numbers = #tpu.dot_dimension_numbers<[1], [0], [0], [1], [0, 0, 1, 1], [], []>} : vector<8x512xf32>, vector<512x128xf32>, vector<8x128xf32> -> vector<8x128xf32>
    %127 = arith.addf %126, %11 : vector<8x128xf32>
    %cst_51 = arith.constant 2.000000e-01 : f32
    %128 = vector.broadcast %cst_51 : f32 to vector<8x128xf32>
    %129 = arith.mulf %128, %111 : vector<8x128xf32>
    %130 = arith.addf %129, %127 : vector<8x128xf32>
    %131 = arith.select %113, %127, %130 : vector<8x128xi1>, vector<8x128xf32>
    %cst_52 = arith.constant 5.000000e-01 : f32
    %132 = vector.broadcast %cst_52 : f32 to vector<8x128xf32>
    %133 = arith.cmpf ogt, %131, %132 : vector<8x128xf32>
    %134 = arith.extui %133 : vector<8x128xi1> to vector<8x128xi32>
    %135 = arith.sitofp %134 : vector<8x128xi32> to vector<8x128xf32>
    %136 = arith.addf %116, %135 : vector<8x128xf32>
    %c48 = arith.constant 48 : index
    %c0_53 = arith.constant 0 : index
    %137 = vector.load %arg7[%c48, %c0_53] : memref<312x512xf32, #tpu.memory_space<vmem>>, vector<8x512xf32>
    %cst_54 = arith.constant 2.000000e-01 : f32
    %138 = vector.broadcast %cst_54 : f32 to vector<8x512xf32>
    %139 = arith.mulf %138, %121 : vector<8x512xf32>
    %140 = arith.addf %139, %137 : vector<8x512xf32>
    %141 = arith.select %123, %137, %140 : vector<8x512xi1>, vector<8x512xf32>
    %cst_55 = arith.constant 5.000000e-01 : f32
    %142 = vector.broadcast %cst_55 : f32 to vector<8x512xf32>
    %143 = arith.cmpf ogt, %141, %142 : vector<8x512xf32>
    %144 = arith.extui %143 : vector<8x512xi1> to vector<8x512xi32>
    %145 = arith.sitofp %144 : vector<8x512xi32> to vector<8x512xf32>
    %cst_56 = arith.constant dense<0.000000e+00> : vector<8x128xf32>
    %146 = tpu.matmul %145, %8, %cst_56 {dimension_numbers = #tpu.dot_dimension_numbers<[1], [0], [0], [1], [0, 0, 1, 1], [], []>} : vector<8x512xf32>, vector<512x128xf32>, vector<8x128xf32> -> vector<8x128xf32>
    %147 = arith.addf %146, %11 : vector<8x128xf32>
    %cst_57 = arith.constant 2.000000e-01 : f32
    %148 = vector.broadcast %cst_57 : f32 to vector<8x128xf32>
    %149 = arith.mulf %148, %131 : vector<8x128xf32>
    %150 = arith.addf %149, %147 : vector<8x128xf32>
    %151 = arith.select %133, %147, %150 : vector<8x128xi1>, vector<8x128xf32>
    %cst_58 = arith.constant 5.000000e-01 : f32
    %152 = vector.broadcast %cst_58 : f32 to vector<8x128xf32>
    %153 = arith.cmpf ogt, %151, %152 : vector<8x128xf32>
    %154 = arith.extui %153 : vector<8x128xi1> to vector<8x128xi32>
    %155 = arith.sitofp %154 : vector<8x128xi32> to vector<8x128xf32>
    %156 = arith.addf %136, %155 : vector<8x128xf32>
    %c56 = arith.constant 56 : index
    %c0_59 = arith.constant 0 : index
    %157 = vector.load %arg7[%c56, %c0_59] : memref<312x512xf32, #tpu.memory_space<vmem>>, vector<8x512xf32>
    %cst_60 = arith.constant 2.000000e-01 : f32
    %158 = vector.broadcast %cst_60 : f32 to vector<8x512xf32>
    %159 = arith.mulf %158, %141 : vector<8x512xf32>
    %160 = arith.addf %159, %157 : vector<8x512xf32>
    %161 = arith.select %143, %157, %160 : vector<8x512xi1>, vector<8x512xf32>
    %cst_61 = arith.constant 5.000000e-01 : f32
    %162 = vector.broadcast %cst_61 : f32 to vector<8x512xf32>
    %163 = arith.cmpf ogt, %161, %162 : vector<8x512xf32>
    %164 = arith.extui %163 : vector<8x512xi1> to vector<8x512xi32>
    %165 = arith.sitofp %164 : vector<8x512xi32> to vector<8x512xf32>
    %cst_62 = arith.constant dense<0.000000e+00> : vector<8x128xf32>
    %166 = tpu.matmul %165, %8, %cst_62 {dimension_numbers = #tpu.dot_dimension_numbers<[1], [0], [0], [1], [0, 0, 1, 1], [], []>} : vector<8x512xf32>, vector<512x128xf32>, vector<8x128xf32> -> vector<8x128xf32>
    %167 = arith.addf %166, %11 : vector<8x128xf32>
    %cst_63 = arith.constant 2.000000e-01 : f32
    %168 = vector.broadcast %cst_63 : f32 to vector<8x128xf32>
    %169 = arith.mulf %168, %151 : vector<8x128xf32>
    %170 = arith.addf %169, %167 : vector<8x128xf32>
    %171 = arith.select %153, %167, %170 : vector<8x128xi1>, vector<8x128xf32>
    %cst_64 = arith.constant 5.000000e-01 : f32
    %172 = vector.broadcast %cst_64 : f32 to vector<8x128xf32>
    %173 = arith.cmpf ogt, %171, %172 : vector<8x128xf32>
    %174 = arith.extui %173 : vector<8x128xi1> to vector<8x128xi32>
    %175 = arith.sitofp %174 : vector<8x128xi32> to vector<8x128xf32>
    %176 = arith.addf %156, %175 : vector<8x128xf32>
    %c64 = arith.constant 64 : index
    %c0_65 = arith.constant 0 : index
    %177 = vector.load %arg7[%c64, %c0_65] : memref<312x512xf32, #tpu.memory_space<vmem>>, vector<8x512xf32>
    %cst_66 = arith.constant 2.000000e-01 : f32
    %178 = vector.broadcast %cst_66 : f32 to vector<8x512xf32>
    %179 = arith.mulf %178, %161 : vector<8x512xf32>
    %180 = arith.addf %179, %177 : vector<8x512xf32>
    %181 = arith.select %163, %177, %180 : vector<8x512xi1>, vector<8x512xf32>
    %cst_67 = arith.constant 5.000000e-01 : f32
    %182 = vector.broadcast %cst_67 : f32 to vector<8x512xf32>
    %183 = arith.cmpf ogt, %181, %182 : vector<8x512xf32>
    %184 = arith.extui %183 : vector<8x512xi1> to vector<8x512xi32>
    %185 = arith.sitofp %184 : vector<8x512xi32> to vector<8x512xf32>
    %cst_68 = arith.constant dense<0.000000e+00> : vector<8x128xf32>
    %186 = tpu.matmul %185, %8, %cst_68 {dimension_numbers = #tpu.dot_dimension_numbers<[1], [0], [0], [1], [0, 0, 1, 1], [], []>} : vector<8x512xf32>, vector<512x128xf32>, vector<8x128xf32> -> vector<8x128xf32>
    %187 = arith.addf %186, %11 : vector<8x128xf32>
    %cst_69 = arith.constant 2.000000e-01 : f32
    %188 = vector.broadcast %cst_69 : f32 to vector<8x128xf32>
    %189 = arith.mulf %188, %171 : vector<8x128xf32>
    %190 = arith.addf %189, %187 : vector<8x128xf32>
    %191 = arith.select %173, %187, %190 : vector<8x128xi1>, vector<8x128xf32>
    %cst_70 = arith.constant 5.000000e-01 : f32
    %192 = vector.broadcast %cst_70 : f32 to vector<8x128xf32>
    %193 = arith.cmpf ogt, %191, %192 : vector<8x128xf32>
    %194 = arith.extui %193 : vector<8x128xi1> to vector<8x128xi32>
    %195 = arith.sitofp %194 : vector<8x128xi32> to vector<8x128xf32>
    %196 = arith.addf %176, %195 : vector<8x128xf32>
    %c72 = arith.constant 72 : index
    %c0_71 = arith.constant 0 : index
    %197 = vector.load %arg7[%c72, %c0_71] : memref<312x512xf32, #tpu.memory_space<vmem>>, vector<8x512xf32>
    %cst_72 = arith.constant 2.000000e-01 : f32
    %198 = vector.broadcast %cst_72 : f32 to vector<8x512xf32>
    %199 = arith.mulf %198, %181 : vector<8x512xf32>
    %200 = arith.addf %199, %197 : vector<8x512xf32>
    %201 = arith.select %183, %197, %200 : vector<8x512xi1>, vector<8x512xf32>
    %cst_73 = arith.constant 5.000000e-01 : f32
    %202 = vector.broadcast %cst_73 : f32 to vector<8x512xf32>
    %203 = arith.cmpf ogt, %201, %202 : vector<8x512xf32>
    %204 = arith.extui %203 : vector<8x512xi1> to vector<8x512xi32>
    %205 = arith.sitofp %204 : vector<8x512xi32> to vector<8x512xf32>
    %cst_74 = arith.constant dense<0.000000e+00> : vector<8x128xf32>
    %206 = tpu.matmul %205, %8, %cst_74 {dimension_numbers = #tpu.dot_dimension_numbers<[1], [0], [0], [1], [0, 0, 1, 1], [], []>} : vector<8x512xf32>, vector<512x128xf32>, vector<8x128xf32> -> vector<8x128xf32>
    %207 = arith.addf %206, %11 : vector<8x128xf32>
    %cst_75 = arith.constant 2.000000e-01 : f32
    %208 = vector.broadcast %cst_75 : f32 to vector<8x128xf32>
    %209 = arith.mulf %208, %191 : vector<8x128xf32>
    %210 = arith.addf %209, %207 : vector<8x128xf32>
    %211 = arith.select %193, %207, %210 : vector<8x128xi1>, vector<8x128xf32>
    %cst_76 = arith.constant 5.000000e-01 : f32
    %212 = vector.broadcast %cst_76 : f32 to vector<8x128xf32>
    %213 = arith.cmpf ogt, %211, %212 : vector<8x128xf32>
    %214 = arith.extui %213 : vector<8x128xi1> to vector<8x128xi32>
    %215 = arith.sitofp %214 : vector<8x128xi32> to vector<8x128xf32>
    %216 = arith.addf %196, %215 : vector<8x128xf32>
    %c80 = arith.constant 80 : index
    %c0_77 = arith.constant 0 : index
    %217 = vector.load %arg7[%c80, %c0_77] : memref<312x512xf32, #tpu.memory_space<vmem>>, vector<8x512xf32>
    %cst_78 = arith.constant 2.000000e-01 : f32
    %218 = vector.broadcast %cst_78 : f32 to vector<8x512xf32>
    %219 = arith.mulf %218, %201 : vector<8x512xf32>
    %220 = arith.addf %219, %217 : vector<8x512xf32>
    %221 = arith.select %203, %217, %220 : vector<8x512xi1>, vector<8x512xf32>
    %cst_79 = arith.constant 5.000000e-01 : f32
    %222 = vector.broadcast %cst_79 : f32 to vector<8x512xf32>
    %223 = arith.cmpf ogt, %221, %222 : vector<8x512xf32>
    %224 = arith.extui %223 : vector<8x512xi1> to vector<8x512xi32>
    %225 = arith.sitofp %224 : vector<8x512xi32> to vector<8x512xf32>
    %cst_80 = arith.constant dense<0.000000e+00> : vector<8x128xf32>
    %226 = tpu.matmul %225, %8, %cst_80 {dimension_numbers = #tpu.dot_dimension_numbers<[1], [0], [0], [1], [0, 0, 1, 1], [], []>} : vector<8x512xf32>, vector<512x128xf32>, vector<8x128xf32> -> vector<8x128xf32>
    %227 = arith.addf %226, %11 : vector<8x128xf32>
    %cst_81 = arith.constant 2.000000e-01 : f32
    %228 = vector.broadcast %cst_81 : f32 to vector<8x128xf32>
    %229 = arith.mulf %228, %211 : vector<8x128xf32>
    %230 = arith.addf %229, %227 : vector<8x128xf32>
    %231 = arith.select %213, %227, %230 : vector<8x128xi1>, vector<8x128xf32>
    %cst_82 = arith.constant 5.000000e-01 : f32
    %232 = vector.broadcast %cst_82 : f32 to vector<8x128xf32>
    %233 = arith.cmpf ogt, %231, %232 : vector<8x128xf32>
    %234 = arith.extui %233 : vector<8x128xi1> to vector<8x128xi32>
    %235 = arith.sitofp %234 : vector<8x128xi32> to vector<8x128xf32>
    %236 = arith.addf %216, %235 : vector<8x128xf32>
    %c88 = arith.constant 88 : index
    %c0_83 = arith.constant 0 : index
    %237 = vector.load %arg7[%c88, %c0_83] : memref<312x512xf32, #tpu.memory_space<vmem>>, vector<8x512xf32>
    %cst_84 = arith.constant 2.000000e-01 : f32
    %238 = vector.broadcast %cst_84 : f32 to vector<8x512xf32>
    %239 = arith.mulf %238, %221 : vector<8x512xf32>
    %240 = arith.addf %239, %237 : vector<8x512xf32>
    %241 = arith.select %223, %237, %240 : vector<8x512xi1>, vector<8x512xf32>
    %cst_85 = arith.constant 5.000000e-01 : f32
    %242 = vector.broadcast %cst_85 : f32 to vector<8x512xf32>
    %243 = arith.cmpf ogt, %241, %242 : vector<8x512xf32>
    %244 = arith.extui %243 : vector<8x512xi1> to vector<8x512xi32>
    %245 = arith.sitofp %244 : vector<8x512xi32> to vector<8x512xf32>
    %cst_86 = arith.constant dense<0.000000e+00> : vector<8x128xf32>
    %246 = tpu.matmul %245, %8, %cst_86 {dimension_numbers = #tpu.dot_dimension_numbers<[1], [0], [0], [1], [0, 0, 1, 1], [], []>} : vector<8x512xf32>, vector<512x128xf32>, vector<8x128xf32> -> vector<8x128xf32>
    %247 = arith.addf %246, %11 : vector<8x128xf32>
    %cst_87 = arith.constant 2.000000e-01 : f32
    %248 = vector.broadcast %cst_87 : f32 to vector<8x128xf32>
    %249 = arith.mulf %248, %231 : vector<8x128xf32>
    %250 = arith.addf %249, %247 : vector<8x128xf32>
    %251 = arith.select %233, %247, %250 : vector<8x128xi1>, vector<8x128xf32>
    %cst_88 = arith.constant 5.000000e-01 : f32
    %252 = vector.broadcast %cst_88 : f32 to vector<8x128xf32>
    %253 = arith.cmpf ogt, %251, %252 : vector<8x128xf32>
    %254 = arith.extui %253 : vector<8x128xi1> to vector<8x128xi32>
    %255 = arith.sitofp %254 : vector<8x128xi32> to vector<8x128xf32>
    %256 = arith.addf %236, %255 : vector<8x128xf32>
    %c96 = arith.constant 96 : index
    %c0_89 = arith.constant 0 : index
    %257 = vector.load %arg7[%c96, %c0_89] : memref<312x512xf32, #tpu.memory_space<vmem>>, vector<8x512xf32>
    %cst_90 = arith.constant 2.000000e-01 : f32
    %258 = vector.broadcast %cst_90 : f32 to vector<8x512xf32>
    %259 = arith.mulf %258, %241 : vector<8x512xf32>
    %260 = arith.addf %259, %257 : vector<8x512xf32>
    %261 = arith.select %243, %257, %260 : vector<8x512xi1>, vector<8x512xf32>
    %cst_91 = arith.constant 5.000000e-01 : f32
    %262 = vector.broadcast %cst_91 : f32 to vector<8x512xf32>
    %263 = arith.cmpf ogt, %261, %262 : vector<8x512xf32>
    %264 = arith.extui %263 : vector<8x512xi1> to vector<8x512xi32>
    %265 = arith.sitofp %264 : vector<8x512xi32> to vector<8x512xf32>
    %cst_92 = arith.constant dense<0.000000e+00> : vector<8x128xf32>
    %266 = tpu.matmul %265, %8, %cst_92 {dimension_numbers = #tpu.dot_dimension_numbers<[1], [0], [0], [1], [0, 0, 1, 1], [], []>} : vector<8x512xf32>, vector<512x128xf32>, vector<8x128xf32> -> vector<8x128xf32>
    %267 = arith.addf %266, %11 : vector<8x128xf32>
    %cst_93 = arith.constant 2.000000e-01 : f32
    %268 = vector.broadcast %cst_93 : f32 to vector<8x128xf32>
    %269 = arith.mulf %268, %251 : vector<8x128xf32>
    %270 = arith.addf %269, %267 : vector<8x128xf32>
    %271 = arith.select %253, %267, %270 : vector<8x128xi1>, vector<8x128xf32>
    %cst_94 = arith.constant 5.000000e-01 : f32
    %272 = vector.broadcast %cst_94 : f32 to vector<8x128xf32>
    %273 = arith.cmpf ogt, %271, %272 : vector<8x128xf32>
    %274 = arith.extui %273 : vector<8x128xi1> to vector<8x128xi32>
    %275 = arith.sitofp %274 : vector<8x128xi32> to vector<8x128xf32>
    %276 = arith.addf %256, %275 : vector<8x128xf32>
    %c104 = arith.constant 104 : index
    %c0_95 = arith.constant 0 : index
    %277 = vector.load %arg7[%c104, %c0_95] : memref<312x512xf32, #tpu.memory_space<vmem>>, vector<8x512xf32>
    %cst_96 = arith.constant 2.000000e-01 : f32
    %278 = vector.broadcast %cst_96 : f32 to vector<8x512xf32>
    %279 = arith.mulf %278, %261 : vector<8x512xf32>
    %280 = arith.addf %279, %277 : vector<8x512xf32>
    %281 = arith.select %263, %277, %280 : vector<8x512xi1>, vector<8x512xf32>
    %cst_97 = arith.constant 5.000000e-01 : f32
    %282 = vector.broadcast %cst_97 : f32 to vector<8x512xf32>
    %283 = arith.cmpf ogt, %281, %282 : vector<8x512xf32>
    %284 = arith.extui %283 : vector<8x512xi1> to vector<8x512xi32>
    %285 = arith.sitofp %284 : vector<8x512xi32> to vector<8x512xf32>
    %cst_98 = arith.constant dense<0.000000e+00> : vector<8x128xf32>
    %286 = tpu.matmul %285, %8, %cst_98 {dimension_numbers = #tpu.dot_dimension_numbers<[1], [0], [0], [1], [0, 0, 1, 1], [], []>} : vector<8x512xf32>, vector<512x128xf32>, vector<8x128xf32> -> vector<8x128xf32>
    %287 = arith.addf %286, %11 : vector<8x128xf32>
    %cst_99 = arith.constant 2.000000e-01 : f32
    %288 = vector.broadcast %cst_99 : f32 to vector<8x128xf32>
    %289 = arith.mulf %288, %271 : vector<8x128xf32>
    %290 = arith.addf %289, %287 : vector<8x128xf32>
    %291 = arith.select %273, %287, %290 : vector<8x128xi1>, vector<8x128xf32>
    %cst_100 = arith.constant 5.000000e-01 : f32
    %292 = vector.broadcast %cst_100 : f32 to vector<8x128xf32>
    %293 = arith.cmpf ogt, %291, %292 : vector<8x128xf32>
    %294 = arith.extui %293 : vector<8x128xi1> to vector<8x128xi32>
    %295 = arith.sitofp %294 : vector<8x128xi32> to vector<8x128xf32>
    %296 = arith.addf %276, %295 : vector<8x128xf32>
    %c112 = arith.constant 112 : index
    %c0_101 = arith.constant 0 : index
    %297 = vector.load %arg7[%c112, %c0_101] : memref<312x512xf32, #tpu.memory_space<vmem>>, vector<8x512xf32>
    %cst_102 = arith.constant 2.000000e-01 : f32
    %298 = vector.broadcast %cst_102 : f32 to vector<8x512xf32>
    %299 = arith.mulf %298, %281 : vector<8x512xf32>
    %300 = arith.addf %299, %297 : vector<8x512xf32>
    %301 = arith.select %283, %297, %300 : vector<8x512xi1>, vector<8x512xf32>
    %cst_103 = arith.constant 5.000000e-01 : f32
    %302 = vector.broadcast %cst_103 : f32 to vector<8x512xf32>
    %303 = arith.cmpf ogt, %301, %302 : vector<8x512xf32>
    %304 = arith.extui %303 : vector<8x512xi1> to vector<8x512xi32>
    %305 = arith.sitofp %304 : vector<8x512xi32> to vector<8x512xf32>
    %cst_104 = arith.constant dense<0.000000e+00> : vector<8x128xf32>
    %306 = tpu.matmul %305, %8, %cst_104 {dimension_numbers = #tpu.dot_dimension_numbers<[1], [0], [0], [1], [0, 0, 1, 1], [], []>} : vector<8x512xf32>, vector<512x128xf32>, vector<8x128xf32> -> vector<8x128xf32>
    %307 = arith.addf %306, %11 : vector<8x128xf32>
    %cst_105 = arith.constant 2.000000e-01 : f32
    %308 = vector.broadcast %cst_105 : f32 to vector<8x128xf32>
    %309 = arith.mulf %308, %291 : vector<8x128xf32>
    %310 = arith.addf %309, %307 : vector<8x128xf32>
    %311 = arith.select %293, %307, %310 : vector<8x128xi1>, vector<8x128xf32>
    %cst_106 = arith.constant 5.000000e-01 : f32
    %312 = vector.broadcast %cst_106 : f32 to vector<8x128xf32>
    %313 = arith.cmpf ogt, %311, %312 : vector<8x128xf32>
    %314 = arith.extui %313 : vector<8x128xi1> to vector<8x128xi32>
    %315 = arith.sitofp %314 : vector<8x128xi32> to vector<8x128xf32>
    %316 = arith.addf %296, %315 : vector<8x128xf32>
    %c120 = arith.constant 120 : index
    %c0_107 = arith.constant 0 : index
    %317 = vector.load %arg7[%c120, %c0_107] : memref<312x512xf32, #tpu.memory_space<vmem>>, vector<8x512xf32>
    %cst_108 = arith.constant 2.000000e-01 : f32
    %318 = vector.broadcast %cst_108 : f32 to vector<8x512xf32>
    %319 = arith.mulf %318, %301 : vector<8x512xf32>
    %320 = arith.addf %319, %317 : vector<8x512xf32>
    %321 = arith.select %303, %317, %320 : vector<8x512xi1>, vector<8x512xf32>
    %cst_109 = arith.constant 5.000000e-01 : f32
    %322 = vector.broadcast %cst_109 : f32 to vector<8x512xf32>
    %323 = arith.cmpf ogt, %321, %322 : vector<8x512xf32>
    %324 = arith.extui %323 : vector<8x512xi1> to vector<8x512xi32>
    %325 = arith.sitofp %324 : vector<8x512xi32> to vector<8x512xf32>
    %cst_110 = arith.constant dense<0.000000e+00> : vector<8x128xf32>
    %326 = tpu.matmul %325, %8, %cst_110 {dimension_numbers = #tpu.dot_dimension_numbers<[1], [0], [0], [1], [0, 0, 1, 1], [], []>} : vector<8x512xf32>, vector<512x128xf32>, vector<8x128xf32> -> vector<8x128xf32>
    %327 = arith.addf %326, %11 : vector<8x128xf32>
    %cst_111 = arith.constant 2.000000e-01 : f32
    %328 = vector.broadcast %cst_111 : f32 to vector<8x128xf32>
    %329 = arith.mulf %328, %311 : vector<8x128xf32>
    %330 = arith.addf %329, %327 : vector<8x128xf32>
    %331 = arith.select %313, %327, %330 : vector<8x128xi1>, vector<8x128xf32>
    %cst_112 = arith.constant 5.000000e-01 : f32
    %332 = vector.broadcast %cst_112 : f32 to vector<8x128xf32>
    %333 = arith.cmpf ogt, %331, %332 : vector<8x128xf32>
    %334 = arith.extui %333 : vector<8x128xi1> to vector<8x128xi32>
    %335 = arith.sitofp %334 : vector<8x128xi32> to vector<8x128xf32>
    %336 = arith.addf %316, %335 : vector<8x128xf32>
    %c128 = arith.constant 128 : index
    %c0_113 = arith.constant 0 : index
    %337 = vector.load %arg7[%c128, %c0_113] : memref<312x512xf32, #tpu.memory_space<vmem>>, vector<8x512xf32>
    %cst_114 = arith.constant 2.000000e-01 : f32
    %338 = vector.broadcast %cst_114 : f32 to vector<8x512xf32>
    %339 = arith.mulf %338, %321 : vector<8x512xf32>
    %340 = arith.addf %339, %337 : vector<8x512xf32>
    %341 = arith.select %323, %337, %340 : vector<8x512xi1>, vector<8x512xf32>
    %cst_115 = arith.constant 5.000000e-01 : f32
    %342 = vector.broadcast %cst_115 : f32 to vector<8x512xf32>
    %343 = arith.cmpf ogt, %341, %342 : vector<8x512xf32>
    %344 = arith.extui %343 : vector<8x512xi1> to vector<8x512xi32>
    %345 = arith.sitofp %344 : vector<8x512xi32> to vector<8x512xf32>
    %cst_116 = arith.constant dense<0.000000e+00> : vector<8x128xf32>
    %346 = tpu.matmul %345, %8, %cst_116 {dimension_numbers = #tpu.dot_dimension_numbers<[1], [0], [0], [1], [0, 0, 1, 1], [], []>} : vector<8x512xf32>, vector<512x128xf32>, vector<8x128xf32> -> vector<8x128xf32>
    %347 = arith.addf %346, %11 : vector<8x128xf32>
    %cst_117 = arith.constant 2.000000e-01 : f32
    %348 = vector.broadcast %cst_117 : f32 to vector<8x128xf32>
    %349 = arith.mulf %348, %331 : vector<8x128xf32>
    %350 = arith.addf %349, %347 : vector<8x128xf32>
    %351 = arith.select %333, %347, %350 : vector<8x128xi1>, vector<8x128xf32>
    %cst_118 = arith.constant 5.000000e-01 : f32
    %352 = vector.broadcast %cst_118 : f32 to vector<8x128xf32>
    %353 = arith.cmpf ogt, %351, %352 : vector<8x128xf32>
    %354 = arith.extui %353 : vector<8x128xi1> to vector<8x128xi32>
    %355 = arith.sitofp %354 : vector<8x128xi32> to vector<8x128xf32>
    %356 = arith.addf %336, %355 : vector<8x128xf32>
    %c136 = arith.constant 136 : index
    %c0_119 = arith.constant 0 : index
    %357 = vector.load %arg7[%c136, %c0_119] : memref<312x512xf32, #tpu.memory_space<vmem>>, vector<8x512xf32>
    %cst_120 = arith.constant 2.000000e-01 : f32
    %358 = vector.broadcast %cst_120 : f32 to vector<8x512xf32>
    %359 = arith.mulf %358, %341 : vector<8x512xf32>
    %360 = arith.addf %359, %357 : vector<8x512xf32>
    %361 = arith.select %343, %357, %360 : vector<8x512xi1>, vector<8x512xf32>
    %cst_121 = arith.constant 5.000000e-01 : f32
    %362 = vector.broadcast %cst_121 : f32 to vector<8x512xf32>
    %363 = arith.cmpf ogt, %361, %362 : vector<8x512xf32>
    %364 = arith.extui %363 : vector<8x512xi1> to vector<8x512xi32>
    %365 = arith.sitofp %364 : vector<8x512xi32> to vector<8x512xf32>
    %cst_122 = arith.constant dense<0.000000e+00> : vector<8x128xf32>
    %366 = tpu.matmul %365, %8, %cst_122 {dimension_numbers = #tpu.dot_dimension_numbers<[1], [0], [0], [1], [0, 0, 1, 1], [], []>} : vector<8x512xf32>, vector<512x128xf32>, vector<8x128xf32> -> vector<8x128xf32>
    %367 = arith.addf %366, %11 : vector<8x128xf32>
    %cst_123 = arith.constant 2.000000e-01 : f32
    %368 = vector.broadcast %cst_123 : f32 to vector<8x128xf32>
    %369 = arith.mulf %368, %351 : vector<8x128xf32>
    %370 = arith.addf %369, %367 : vector<8x128xf32>
    %371 = arith.select %353, %367, %370 : vector<8x128xi1>, vector<8x128xf32>
    %cst_124 = arith.constant 5.000000e-01 : f32
    %372 = vector.broadcast %cst_124 : f32 to vector<8x128xf32>
    %373 = arith.cmpf ogt, %371, %372 : vector<8x128xf32>
    %374 = arith.extui %373 : vector<8x128xi1> to vector<8x128xi32>
    %375 = arith.sitofp %374 : vector<8x128xi32> to vector<8x128xf32>
    %376 = arith.addf %356, %375 : vector<8x128xf32>
    %c144 = arith.constant 144 : index
    %c0_125 = arith.constant 0 : index
    %377 = vector.load %arg7[%c144, %c0_125] : memref<312x512xf32, #tpu.memory_space<vmem>>, vector<8x512xf32>
    %cst_126 = arith.constant 2.000000e-01 : f32
    %378 = vector.broadcast %cst_126 : f32 to vector<8x512xf32>
    %379 = arith.mulf %378, %361 : vector<8x512xf32>
    %380 = arith.addf %379, %377 : vector<8x512xf32>
    %381 = arith.select %363, %377, %380 : vector<8x512xi1>, vector<8x512xf32>
    %cst_127 = arith.constant 5.000000e-01 : f32
    %382 = vector.broadcast %cst_127 : f32 to vector<8x512xf32>
    %383 = arith.cmpf ogt, %381, %382 : vector<8x512xf32>
    %384 = arith.extui %383 : vector<8x512xi1> to vector<8x512xi32>
    %385 = arith.sitofp %384 : vector<8x512xi32> to vector<8x512xf32>
    %cst_128 = arith.constant dense<0.000000e+00> : vector<8x128xf32>
    %386 = tpu.matmul %385, %8, %cst_128 {dimension_numbers = #tpu.dot_dimension_numbers<[1], [0], [0], [1], [0, 0, 1, 1], [], []>} : vector<8x512xf32>, vector<512x128xf32>, vector<8x128xf32> -> vector<8x128xf32>
    %387 = arith.addf %386, %11 : vector<8x128xf32>
    %cst_129 = arith.constant 2.000000e-01 : f32
    %388 = vector.broadcast %cst_129 : f32 to vector<8x128xf32>
    %389 = arith.mulf %388, %371 : vector<8x128xf32>
    %390 = arith.addf %389, %387 : vector<8x128xf32>
    %391 = arith.select %373, %387, %390 : vector<8x128xi1>, vector<8x128xf32>
    %cst_130 = arith.constant 5.000000e-01 : f32
    %392 = vector.broadcast %cst_130 : f32 to vector<8x128xf32>
    %393 = arith.cmpf ogt, %391, %392 : vector<8x128xf32>
    %394 = arith.extui %393 : vector<8x128xi1> to vector<8x128xi32>
    %395 = arith.sitofp %394 : vector<8x128xi32> to vector<8x128xf32>
    %396 = arith.addf %376, %395 : vector<8x128xf32>
    %c152 = arith.constant 152 : index
    %c0_131 = arith.constant 0 : index
    %397 = vector.load %arg7[%c152, %c0_131] : memref<312x512xf32, #tpu.memory_space<vmem>>, vector<8x512xf32>
    %cst_132 = arith.constant 2.000000e-01 : f32
    %398 = vector.broadcast %cst_132 : f32 to vector<8x512xf32>
    %399 = arith.mulf %398, %381 : vector<8x512xf32>
    %400 = arith.addf %399, %397 : vector<8x512xf32>
    %401 = arith.select %383, %397, %400 : vector<8x512xi1>, vector<8x512xf32>
    %cst_133 = arith.constant 5.000000e-01 : f32
    %402 = vector.broadcast %cst_133 : f32 to vector<8x512xf32>
    %403 = arith.cmpf ogt, %401, %402 : vector<8x512xf32>
    %404 = arith.extui %403 : vector<8x512xi1> to vector<8x512xi32>
    %405 = arith.sitofp %404 : vector<8x512xi32> to vector<8x512xf32>
    %cst_134 = arith.constant dense<0.000000e+00> : vector<8x128xf32>
    %406 = tpu.matmul %405, %8, %cst_134 {dimension_numbers = #tpu.dot_dimension_numbers<[1], [0], [0], [1], [0, 0, 1, 1], [], []>} : vector<8x512xf32>, vector<512x128xf32>, vector<8x128xf32> -> vector<8x128xf32>
    %407 = arith.addf %406, %11 : vector<8x128xf32>
    %cst_135 = arith.constant 2.000000e-01 : f32
    %408 = vector.broadcast %cst_135 : f32 to vector<8x128xf32>
    %409 = arith.mulf %408, %391 : vector<8x128xf32>
    %410 = arith.addf %409, %407 : vector<8x128xf32>
    %411 = arith.select %393, %407, %410 : vector<8x128xi1>, vector<8x128xf32>
    %cst_136 = arith.constant 5.000000e-01 : f32
    %412 = vector.broadcast %cst_136 : f32 to vector<8x128xf32>
    %413 = arith.cmpf ogt, %411, %412 : vector<8x128xf32>
    %414 = arith.extui %413 : vector<8x128xi1> to vector<8x128xi32>
    %415 = arith.sitofp %414 : vector<8x128xi32> to vector<8x128xf32>
    %416 = arith.addf %396, %415 : vector<8x128xf32>
    %c160 = arith.constant 160 : index
    %c0_137 = arith.constant 0 : index
    %417 = vector.load %arg7[%c160, %c0_137] : memref<312x512xf32, #tpu.memory_space<vmem>>, vector<8x512xf32>
    %cst_138 = arith.constant 2.000000e-01 : f32
    %418 = vector.broadcast %cst_138 : f32 to vector<8x512xf32>
    %419 = arith.mulf %418, %401 : vector<8x512xf32>
    %420 = arith.addf %419, %417 : vector<8x512xf32>
    %421 = arith.select %403, %417, %420 : vector<8x512xi1>, vector<8x512xf32>
    %cst_139 = arith.constant 5.000000e-01 : f32
    %422 = vector.broadcast %cst_139 : f32 to vector<8x512xf32>
    %423 = arith.cmpf ogt, %421, %422 : vector<8x512xf32>
    %424 = arith.extui %423 : vector<8x512xi1> to vector<8x512xi32>
    %425 = arith.sitofp %424 : vector<8x512xi32> to vector<8x512xf32>
    %cst_140 = arith.constant dense<0.000000e+00> : vector<8x128xf32>
    %426 = tpu.matmul %425, %8, %cst_140 {dimension_numbers = #tpu.dot_dimension_numbers<[1], [0], [0], [1], [0, 0, 1, 1], [], []>} : vector<8x512xf32>, vector<512x128xf32>, vector<8x128xf32> -> vector<8x128xf32>
    %427 = arith.addf %426, %11 : vector<8x128xf32>
    %cst_141 = arith.constant 2.000000e-01 : f32
    %428 = vector.broadcast %cst_141 : f32 to vector<8x128xf32>
    %429 = arith.mulf %428, %411 : vector<8x128xf32>
    %430 = arith.addf %429, %427 : vector<8x128xf32>
    %431 = arith.select %413, %427, %430 : vector<8x128xi1>, vector<8x128xf32>
    %cst_142 = arith.constant 5.000000e-01 : f32
    %432 = vector.broadcast %cst_142 : f32 to vector<8x128xf32>
    %433 = arith.cmpf ogt, %431, %432 : vector<8x128xf32>
    %434 = arith.extui %433 : vector<8x128xi1> to vector<8x128xi32>
    %435 = arith.sitofp %434 : vector<8x128xi32> to vector<8x128xf32>
    %436 = arith.addf %416, %435 : vector<8x128xf32>
    %c168 = arith.constant 168 : index
    %c0_143 = arith.constant 0 : index
    %437 = vector.load %arg7[%c168, %c0_143] : memref<312x512xf32, #tpu.memory_space<vmem>>, vector<8x512xf32>
    %cst_144 = arith.constant 2.000000e-01 : f32
    %438 = vector.broadcast %cst_144 : f32 to vector<8x512xf32>
    %439 = arith.mulf %438, %421 : vector<8x512xf32>
    %440 = arith.addf %439, %437 : vector<8x512xf32>
    %441 = arith.select %423, %437, %440 : vector<8x512xi1>, vector<8x512xf32>
    %cst_145 = arith.constant 5.000000e-01 : f32
    %442 = vector.broadcast %cst_145 : f32 to vector<8x512xf32>
    %443 = arith.cmpf ogt, %441, %442 : vector<8x512xf32>
    %444 = arith.extui %443 : vector<8x512xi1> to vector<8x512xi32>
    %445 = arith.sitofp %444 : vector<8x512xi32> to vector<8x512xf32>
    %cst_146 = arith.constant dense<0.000000e+00> : vector<8x128xf32>
    %446 = tpu.matmul %445, %8, %cst_146 {dimension_numbers = #tpu.dot_dimension_numbers<[1], [0], [0], [1], [0, 0, 1, 1], [], []>} : vector<8x512xf32>, vector<512x128xf32>, vector<8x128xf32> -> vector<8x128xf32>
    %447 = arith.addf %446, %11 : vector<8x128xf32>
    %cst_147 = arith.constant 2.000000e-01 : f32
    %448 = vector.broadcast %cst_147 : f32 to vector<8x128xf32>
    %449 = arith.mulf %448, %431 : vector<8x128xf32>
    %450 = arith.addf %449, %447 : vector<8x128xf32>
    %451 = arith.select %433, %447, %450 : vector<8x128xi1>, vector<8x128xf32>
    %cst_148 = arith.constant 5.000000e-01 : f32
    %452 = vector.broadcast %cst_148 : f32 to vector<8x128xf32>
    %453 = arith.cmpf ogt, %451, %452 : vector<8x128xf32>
    %454 = arith.extui %453 : vector<8x128xi1> to vector<8x128xi32>
    %455 = arith.sitofp %454 : vector<8x128xi32> to vector<8x128xf32>
    %456 = arith.addf %436, %455 : vector<8x128xf32>
    %c176 = arith.constant 176 : index
    %c0_149 = arith.constant 0 : index
    %457 = vector.load %arg7[%c176, %c0_149] : memref<312x512xf32, #tpu.memory_space<vmem>>, vector<8x512xf32>
    %cst_150 = arith.constant 2.000000e-01 : f32
    %458 = vector.broadcast %cst_150 : f32 to vector<8x512xf32>
    %459 = arith.mulf %458, %441 : vector<8x512xf32>
    %460 = arith.addf %459, %457 : vector<8x512xf32>
    %461 = arith.select %443, %457, %460 : vector<8x512xi1>, vector<8x512xf32>
    %cst_151 = arith.constant 5.000000e-01 : f32
    %462 = vector.broadcast %cst_151 : f32 to vector<8x512xf32>
    %463 = arith.cmpf ogt, %461, %462 : vector<8x512xf32>
    %464 = arith.extui %463 : vector<8x512xi1> to vector<8x512xi32>
    %465 = arith.sitofp %464 : vector<8x512xi32> to vector<8x512xf32>
    %cst_152 = arith.constant dense<0.000000e+00> : vector<8x128xf32>
    %466 = tpu.matmul %465, %8, %cst_152 {dimension_numbers = #tpu.dot_dimension_numbers<[1], [0], [0], [1], [0, 0, 1, 1], [], []>} : vector<8x512xf32>, vector<512x128xf32>, vector<8x128xf32> -> vector<8x128xf32>
    %467 = arith.addf %466, %11 : vector<8x128xf32>
    %cst_153 = arith.constant 2.000000e-01 : f32
    %468 = vector.broadcast %cst_153 : f32 to vector<8x128xf32>
    %469 = arith.mulf %468, %451 : vector<8x128xf32>
    %470 = arith.addf %469, %467 : vector<8x128xf32>
    %471 = arith.select %453, %467, %470 : vector<8x128xi1>, vector<8x128xf32>
    %cst_154 = arith.constant 5.000000e-01 : f32
    %472 = vector.broadcast %cst_154 : f32 to vector<8x128xf32>
    %473 = arith.cmpf ogt, %471, %472 : vector<8x128xf32>
    %474 = arith.extui %473 : vector<8x128xi1> to vector<8x128xi32>
    %475 = arith.sitofp %474 : vector<8x128xi32> to vector<8x128xf32>
    %476 = arith.addf %456, %475 : vector<8x128xf32>
    %c184 = arith.constant 184 : index
    %c0_155 = arith.constant 0 : index
    %477 = vector.load %arg7[%c184, %c0_155] : memref<312x512xf32, #tpu.memory_space<vmem>>, vector<8x512xf32>
    %cst_156 = arith.constant 2.000000e-01 : f32
    %478 = vector.broadcast %cst_156 : f32 to vector<8x512xf32>
    %479 = arith.mulf %478, %461 : vector<8x512xf32>
    %480 = arith.addf %479, %477 : vector<8x512xf32>
    %481 = arith.select %463, %477, %480 : vector<8x512xi1>, vector<8x512xf32>
    %cst_157 = arith.constant 5.000000e-01 : f32
    %482 = vector.broadcast %cst_157 : f32 to vector<8x512xf32>
    %483 = arith.cmpf ogt, %481, %482 : vector<8x512xf32>
    %484 = arith.extui %483 : vector<8x512xi1> to vector<8x512xi32>
    %485 = arith.sitofp %484 : vector<8x512xi32> to vector<8x512xf32>
    %cst_158 = arith.constant dense<0.000000e+00> : vector<8x128xf32>
    %486 = tpu.matmul %485, %8, %cst_158 {dimension_numbers = #tpu.dot_dimension_numbers<[1], [0], [0], [1], [0, 0, 1, 1], [], []>} : vector<8x512xf32>, vector<512x128xf32>, vector<8x128xf32> -> vector<8x128xf32>
    %487 = arith.addf %486, %11 : vector<8x128xf32>
    %cst_159 = arith.constant 2.000000e-01 : f32
    %488 = vector.broadcast %cst_159 : f32 to vector<8x128xf32>
    %489 = arith.mulf %488, %471 : vector<8x128xf32>
    %490 = arith.addf %489, %487 : vector<8x128xf32>
    %491 = arith.select %473, %487, %490 : vector<8x128xi1>, vector<8x128xf32>
    %cst_160 = arith.constant 5.000000e-01 : f32
    %492 = vector.broadcast %cst_160 : f32 to vector<8x128xf32>
    %493 = arith.cmpf ogt, %491, %492 : vector<8x128xf32>
    %494 = arith.extui %493 : vector<8x128xi1> to vector<8x128xi32>
    %495 = arith.sitofp %494 : vector<8x128xi32> to vector<8x128xf32>
    %496 = arith.addf %476, %495 : vector<8x128xf32>
    %c192 = arith.constant 192 : index
    %c0_161 = arith.constant 0 : index
    %497 = vector.load %arg7[%c192, %c0_161] : memref<312x512xf32, #tpu.memory_space<vmem>>, vector<8x512xf32>
    %cst_162 = arith.constant 2.000000e-01 : f32
    %498 = vector.broadcast %cst_162 : f32 to vector<8x512xf32>
    %499 = arith.mulf %498, %481 : vector<8x512xf32>
    %500 = arith.addf %499, %497 : vector<8x512xf32>
    %501 = arith.select %483, %497, %500 : vector<8x512xi1>, vector<8x512xf32>
    %cst_163 = arith.constant 5.000000e-01 : f32
    %502 = vector.broadcast %cst_163 : f32 to vector<8x512xf32>
    %503 = arith.cmpf ogt, %501, %502 : vector<8x512xf32>
    %504 = arith.extui %503 : vector<8x512xi1> to vector<8x512xi32>
    %505 = arith.sitofp %504 : vector<8x512xi32> to vector<8x512xf32>
    %cst_164 = arith.constant dense<0.000000e+00> : vector<8x128xf32>
    %506 = tpu.matmul %505, %8, %cst_164 {dimension_numbers = #tpu.dot_dimension_numbers<[1], [0], [0], [1], [0, 0, 1, 1], [], []>} : vector<8x512xf32>, vector<512x128xf32>, vector<8x128xf32> -> vector<8x128xf32>
    %507 = arith.addf %506, %11 : vector<8x128xf32>
    %cst_165 = arith.constant 2.000000e-01 : f32
    %508 = vector.broadcast %cst_165 : f32 to vector<8x128xf32>
    %509 = arith.mulf %508, %491 : vector<8x128xf32>
    %510 = arith.addf %509, %507 : vector<8x128xf32>
    %511 = arith.select %493, %507, %510 : vector<8x128xi1>, vector<8x128xf32>
    %cst_166 = arith.constant 5.000000e-01 : f32
    %512 = vector.broadcast %cst_166 : f32 to vector<8x128xf32>
    %513 = arith.cmpf ogt, %511, %512 : vector<8x128xf32>
    %514 = arith.extui %513 : vector<8x128xi1> to vector<8x128xi32>
    %515 = arith.sitofp %514 : vector<8x128xi32> to vector<8x128xf32>
    %516 = arith.addf %496, %515 : vector<8x128xf32>
    %c200 = arith.constant 200 : index
    %c0_167 = arith.constant 0 : index
    %517 = vector.load %arg7[%c200, %c0_167] : memref<312x512xf32, #tpu.memory_space<vmem>>, vector<8x512xf32>
    %cst_168 = arith.constant 2.000000e-01 : f32
    %518 = vector.broadcast %cst_168 : f32 to vector<8x512xf32>
    %519 = arith.mulf %518, %501 : vector<8x512xf32>
    %520 = arith.addf %519, %517 : vector<8x512xf32>
    %521 = arith.select %503, %517, %520 : vector<8x512xi1>, vector<8x512xf32>
    %cst_169 = arith.constant 5.000000e-01 : f32
    %522 = vector.broadcast %cst_169 : f32 to vector<8x512xf32>
    %523 = arith.cmpf ogt, %521, %522 : vector<8x512xf32>
    %524 = arith.extui %523 : vector<8x512xi1> to vector<8x512xi32>
    %525 = arith.sitofp %524 : vector<8x512xi32> to vector<8x512xf32>
    %cst_170 = arith.constant dense<0.000000e+00> : vector<8x128xf32>
    %526 = tpu.matmul %525, %8, %cst_170 {dimension_numbers = #tpu.dot_dimension_numbers<[1], [0], [0], [1], [0, 0, 1, 1], [], []>} : vector<8x512xf32>, vector<512x128xf32>, vector<8x128xf32> -> vector<8x128xf32>
    %527 = arith.addf %526, %11 : vector<8x128xf32>
    %cst_171 = arith.constant 2.000000e-01 : f32
    %528 = vector.broadcast %cst_171 : f32 to vector<8x128xf32>
    %529 = arith.mulf %528, %511 : vector<8x128xf32>
    %530 = arith.addf %529, %527 : vector<8x128xf32>
    %531 = arith.select %513, %527, %530 : vector<8x128xi1>, vector<8x128xf32>
    %cst_172 = arith.constant 5.000000e-01 : f32
    %532 = vector.broadcast %cst_172 : f32 to vector<8x128xf32>
    %533 = arith.cmpf ogt, %531, %532 : vector<8x128xf32>
    %534 = arith.extui %533 : vector<8x128xi1> to vector<8x128xi32>
    %535 = arith.sitofp %534 : vector<8x128xi32> to vector<8x128xf32>
    %536 = arith.addf %516, %535 : vector<8x128xf32>
    %c208 = arith.constant 208 : index
    %c0_173 = arith.constant 0 : index
    %537 = vector.load %arg7[%c208, %c0_173] : memref<312x512xf32, #tpu.memory_space<vmem>>, vector<8x512xf32>
    %cst_174 = arith.constant 2.000000e-01 : f32
    %538 = vector.broadcast %cst_174 : f32 to vector<8x512xf32>
    %539 = arith.mulf %538, %521 : vector<8x512xf32>
    %540 = arith.addf %539, %537 : vector<8x512xf32>
    %541 = arith.select %523, %537, %540 : vector<8x512xi1>, vector<8x512xf32>
    %cst_175 = arith.constant 5.000000e-01 : f32
    %542 = vector.broadcast %cst_175 : f32 to vector<8x512xf32>
    %543 = arith.cmpf ogt, %541, %542 : vector<8x512xf32>
    %544 = arith.extui %543 : vector<8x512xi1> to vector<8x512xi32>
    %545 = arith.sitofp %544 : vector<8x512xi32> to vector<8x512xf32>
    %cst_176 = arith.constant dense<0.000000e+00> : vector<8x128xf32>
    %546 = tpu.matmul %545, %8, %cst_176 {dimension_numbers = #tpu.dot_dimension_numbers<[1], [0], [0], [1], [0, 0, 1, 1], [], []>} : vector<8x512xf32>, vector<512x128xf32>, vector<8x128xf32> -> vector<8x128xf32>
    %547 = arith.addf %546, %11 : vector<8x128xf32>
    %cst_177 = arith.constant 2.000000e-01 : f32
    %548 = vector.broadcast %cst_177 : f32 to vector<8x128xf32>
    %549 = arith.mulf %548, %531 : vector<8x128xf32>
    %550 = arith.addf %549, %547 : vector<8x128xf32>
    %551 = arith.select %533, %547, %550 : vector<8x128xi1>, vector<8x128xf32>
    %cst_178 = arith.constant 5.000000e-01 : f32
    %552 = vector.broadcast %cst_178 : f32 to vector<8x128xf32>
    %553 = arith.cmpf ogt, %551, %552 : vector<8x128xf32>
    %554 = arith.extui %553 : vector<8x128xi1> to vector<8x128xi32>
    %555 = arith.sitofp %554 : vector<8x128xi32> to vector<8x128xf32>
    %556 = arith.addf %536, %555 : vector<8x128xf32>
    %c216 = arith.constant 216 : index
    %c0_179 = arith.constant 0 : index
    %557 = vector.load %arg7[%c216, %c0_179] : memref<312x512xf32, #tpu.memory_space<vmem>>, vector<8x512xf32>
    %cst_180 = arith.constant 2.000000e-01 : f32
    %558 = vector.broadcast %cst_180 : f32 to vector<8x512xf32>
    %559 = arith.mulf %558, %541 : vector<8x512xf32>
    %560 = arith.addf %559, %557 : vector<8x512xf32>
    %561 = arith.select %543, %557, %560 : vector<8x512xi1>, vector<8x512xf32>
    %cst_181 = arith.constant 5.000000e-01 : f32
    %562 = vector.broadcast %cst_181 : f32 to vector<8x512xf32>
    %563 = arith.cmpf ogt, %561, %562 : vector<8x512xf32>
    %564 = arith.extui %563 : vector<8x512xi1> to vector<8x512xi32>
    %565 = arith.sitofp %564 : vector<8x512xi32> to vector<8x512xf32>
    %cst_182 = arith.constant dense<0.000000e+00> : vector<8x128xf32>
    %566 = tpu.matmul %565, %8, %cst_182 {dimension_numbers = #tpu.dot_dimension_numbers<[1], [0], [0], [1], [0, 0, 1, 1], [], []>} : vector<8x512xf32>, vector<512x128xf32>, vector<8x128xf32> -> vector<8x128xf32>
    %567 = arith.addf %566, %11 : vector<8x128xf32>
    %cst_183 = arith.constant 2.000000e-01 : f32
    %568 = vector.broadcast %cst_183 : f32 to vector<8x128xf32>
    %569 = arith.mulf %568, %551 : vector<8x128xf32>
    %570 = arith.addf %569, %567 : vector<8x128xf32>
    %571 = arith.select %553, %567, %570 : vector<8x128xi1>, vector<8x128xf32>
    %cst_184 = arith.constant 5.000000e-01 : f32
    %572 = vector.broadcast %cst_184 : f32 to vector<8x128xf32>
    %573 = arith.cmpf ogt, %571, %572 : vector<8x128xf32>
    %574 = arith.extui %573 : vector<8x128xi1> to vector<8x128xi32>
    %575 = arith.sitofp %574 : vector<8x128xi32> to vector<8x128xf32>
    %576 = arith.addf %556, %575 : vector<8x128xf32>
    %c224 = arith.constant 224 : index
    %c0_185 = arith.constant 0 : index
    %577 = vector.load %arg7[%c224, %c0_185] : memref<312x512xf32, #tpu.memory_space<vmem>>, vector<8x512xf32>
    %cst_186 = arith.constant 2.000000e-01 : f32
    %578 = vector.broadcast %cst_186 : f32 to vector<8x512xf32>
    %579 = arith.mulf %578, %561 : vector<8x512xf32>
    %580 = arith.addf %579, %577 : vector<8x512xf32>
    %581 = arith.select %563, %577, %580 : vector<8x512xi1>, vector<8x512xf32>
    %cst_187 = arith.constant 5.000000e-01 : f32
    %582 = vector.broadcast %cst_187 : f32 to vector<8x512xf32>
    %583 = arith.cmpf ogt, %581, %582 : vector<8x512xf32>
    %584 = arith.extui %583 : vector<8x512xi1> to vector<8x512xi32>
    %585 = arith.sitofp %584 : vector<8x512xi32> to vector<8x512xf32>
    %cst_188 = arith.constant dense<0.000000e+00> : vector<8x128xf32>
    %586 = tpu.matmul %585, %8, %cst_188 {dimension_numbers = #tpu.dot_dimension_numbers<[1], [0], [0], [1], [0, 0, 1, 1], [], []>} : vector<8x512xf32>, vector<512x128xf32>, vector<8x128xf32> -> vector<8x128xf32>
    %587 = arith.addf %586, %11 : vector<8x128xf32>
    %cst_189 = arith.constant 2.000000e-01 : f32
    %588 = vector.broadcast %cst_189 : f32 to vector<8x128xf32>
    %589 = arith.mulf %588, %571 : vector<8x128xf32>
    %590 = arith.addf %589, %587 : vector<8x128xf32>
    %591 = arith.select %573, %587, %590 : vector<8x128xi1>, vector<8x128xf32>
    %cst_190 = arith.constant 5.000000e-01 : f32
    %592 = vector.broadcast %cst_190 : f32 to vector<8x128xf32>
    %593 = arith.cmpf ogt, %591, %592 : vector<8x128xf32>
    %594 = arith.extui %593 : vector<8x128xi1> to vector<8x128xi32>
    %595 = arith.sitofp %594 : vector<8x128xi32> to vector<8x128xf32>
    %596 = arith.addf %576, %595 : vector<8x128xf32>
    %c232 = arith.constant 232 : index
    %c0_191 = arith.constant 0 : index
    %597 = vector.load %arg7[%c232, %c0_191] : memref<312x512xf32, #tpu.memory_space<vmem>>, vector<8x512xf32>
    %cst_192 = arith.constant 2.000000e-01 : f32
    %598 = vector.broadcast %cst_192 : f32 to vector<8x512xf32>
    %599 = arith.mulf %598, %581 : vector<8x512xf32>
    %600 = arith.addf %599, %597 : vector<8x512xf32>
    %601 = arith.select %583, %597, %600 : vector<8x512xi1>, vector<8x512xf32>
    %cst_193 = arith.constant 5.000000e-01 : f32
    %602 = vector.broadcast %cst_193 : f32 to vector<8x512xf32>
    %603 = arith.cmpf ogt, %601, %602 : vector<8x512xf32>
    %604 = arith.extui %603 : vector<8x512xi1> to vector<8x512xi32>
    %605 = arith.sitofp %604 : vector<8x512xi32> to vector<8x512xf32>
    %cst_194 = arith.constant dense<0.000000e+00> : vector<8x128xf32>
    %606 = tpu.matmul %605, %8, %cst_194 {dimension_numbers = #tpu.dot_dimension_numbers<[1], [0], [0], [1], [0, 0, 1, 1], [], []>} : vector<8x512xf32>, vector<512x128xf32>, vector<8x128xf32> -> vector<8x128xf32>
    %607 = arith.addf %606, %11 : vector<8x128xf32>
    %cst_195 = arith.constant 2.000000e-01 : f32
    %608 = vector.broadcast %cst_195 : f32 to vector<8x128xf32>
    %609 = arith.mulf %608, %591 : vector<8x128xf32>
    %610 = arith.addf %609, %607 : vector<8x128xf32>
    %611 = arith.select %593, %607, %610 : vector<8x128xi1>, vector<8x128xf32>
    %cst_196 = arith.constant 5.000000e-01 : f32
    %612 = vector.broadcast %cst_196 : f32 to vector<8x128xf32>
    %613 = arith.cmpf ogt, %611, %612 : vector<8x128xf32>
    %614 = arith.extui %613 : vector<8x128xi1> to vector<8x128xi32>
    %615 = arith.sitofp %614 : vector<8x128xi32> to vector<8x128xf32>
    %616 = arith.addf %596, %615 : vector<8x128xf32>
    %c240 = arith.constant 240 : index
    %c0_197 = arith.constant 0 : index
    %617 = vector.load %arg7[%c240, %c0_197] : memref<312x512xf32, #tpu.memory_space<vmem>>, vector<8x512xf32>
    %cst_198 = arith.constant 2.000000e-01 : f32
    %618 = vector.broadcast %cst_198 : f32 to vector<8x512xf32>
    %619 = arith.mulf %618, %601 : vector<8x512xf32>
    %620 = arith.addf %619, %617 : vector<8x512xf32>
    %621 = arith.select %603, %617, %620 : vector<8x512xi1>, vector<8x512xf32>
    %cst_199 = arith.constant 5.000000e-01 : f32
    %622 = vector.broadcast %cst_199 : f32 to vector<8x512xf32>
    %623 = arith.cmpf ogt, %621, %622 : vector<8x512xf32>
    %624 = arith.extui %623 : vector<8x512xi1> to vector<8x512xi32>
    %625 = arith.sitofp %624 : vector<8x512xi32> to vector<8x512xf32>
    %cst_200 = arith.constant dense<0.000000e+00> : vector<8x128xf32>
    %626 = tpu.matmul %625, %8, %cst_200 {dimension_numbers = #tpu.dot_dimension_numbers<[1], [0], [0], [1], [0, 0, 1, 1], [], []>} : vector<8x512xf32>, vector<512x128xf32>, vector<8x128xf32> -> vector<8x128xf32>
    %627 = arith.addf %626, %11 : vector<8x128xf32>
    %cst_201 = arith.constant 2.000000e-01 : f32
    %628 = vector.broadcast %cst_201 : f32 to vector<8x128xf32>
    %629 = arith.mulf %628, %611 : vector<8x128xf32>
    %630 = arith.addf %629, %627 : vector<8x128xf32>
    %631 = arith.select %613, %627, %630 : vector<8x128xi1>, vector<8x128xf32>
    %cst_202 = arith.constant 5.000000e-01 : f32
    %632 = vector.broadcast %cst_202 : f32 to vector<8x128xf32>
    %633 = arith.cmpf ogt, %631, %632 : vector<8x128xf32>
    %634 = arith.extui %633 : vector<8x128xi1> to vector<8x128xi32>
    %635 = arith.sitofp %634 : vector<8x128xi32> to vector<8x128xf32>
    %636 = arith.addf %616, %635 : vector<8x128xf32>
    %c248 = arith.constant 248 : index
    %c0_203 = arith.constant 0 : index
    %637 = vector.load %arg7[%c248, %c0_203] : memref<312x512xf32, #tpu.memory_space<vmem>>, vector<8x512xf32>
    %cst_204 = arith.constant 2.000000e-01 : f32
    %638 = vector.broadcast %cst_204 : f32 to vector<8x512xf32>
    %639 = arith.mulf %638, %621 : vector<8x512xf32>
    %640 = arith.addf %639, %637 : vector<8x512xf32>
    %641 = arith.select %623, %637, %640 : vector<8x512xi1>, vector<8x512xf32>
    %cst_205 = arith.constant 5.000000e-01 : f32
    %642 = vector.broadcast %cst_205 : f32 to vector<8x512xf32>
    %643 = arith.cmpf ogt, %641, %642 : vector<8x512xf32>
    %644 = arith.extui %643 : vector<8x512xi1> to vector<8x512xi32>
    %645 = arith.sitofp %644 : vector<8x512xi32> to vector<8x512xf32>
    %cst_206 = arith.constant dense<0.000000e+00> : vector<8x128xf32>
    %646 = tpu.matmul %645, %8, %cst_206 {dimension_numbers = #tpu.dot_dimension_numbers<[1], [0], [0], [1], [0, 0, 1, 1], [], []>} : vector<8x512xf32>, vector<512x128xf32>, vector<8x128xf32> -> vector<8x128xf32>
    %647 = arith.addf %646, %11 : vector<8x128xf32>
    %cst_207 = arith.constant 2.000000e-01 : f32
    %648 = vector.broadcast %cst_207 : f32 to vector<8x128xf32>
    %649 = arith.mulf %648, %631 : vector<8x128xf32>
    %650 = arith.addf %649, %647 : vector<8x128xf32>
    %651 = arith.select %633, %647, %650 : vector<8x128xi1>, vector<8x128xf32>
    %cst_208 = arith.constant 5.000000e-01 : f32
    %652 = vector.broadcast %cst_208 : f32 to vector<8x128xf32>
    %653 = arith.cmpf ogt, %651, %652 : vector<8x128xf32>
    %654 = arith.extui %653 : vector<8x128xi1> to vector<8x128xi32>
    %655 = arith.sitofp %654 : vector<8x128xi32> to vector<8x128xf32>
    %656 = arith.addf %636, %655 : vector<8x128xf32>
    %c256 = arith.constant 256 : index
    %c0_209 = arith.constant 0 : index
    %657 = vector.load %arg7[%c256, %c0_209] : memref<312x512xf32, #tpu.memory_space<vmem>>, vector<8x512xf32>
    %cst_210 = arith.constant 2.000000e-01 : f32
    %658 = vector.broadcast %cst_210 : f32 to vector<8x512xf32>
    %659 = arith.mulf %658, %641 : vector<8x512xf32>
    %660 = arith.addf %659, %657 : vector<8x512xf32>
    %661 = arith.select %643, %657, %660 : vector<8x512xi1>, vector<8x512xf32>
    %cst_211 = arith.constant 5.000000e-01 : f32
    %662 = vector.broadcast %cst_211 : f32 to vector<8x512xf32>
    %663 = arith.cmpf ogt, %661, %662 : vector<8x512xf32>
    %664 = arith.extui %663 : vector<8x512xi1> to vector<8x512xi32>
    %665 = arith.sitofp %664 : vector<8x512xi32> to vector<8x512xf32>
    %cst_212 = arith.constant dense<0.000000e+00> : vector<8x128xf32>
    %666 = tpu.matmul %665, %8, %cst_212 {dimension_numbers = #tpu.dot_dimension_numbers<[1], [0], [0], [1], [0, 0, 1, 1], [], []>} : vector<8x512xf32>, vector<512x128xf32>, vector<8x128xf32> -> vector<8x128xf32>
    %667 = arith.addf %666, %11 : vector<8x128xf32>
    %cst_213 = arith.constant 2.000000e-01 : f32
    %668 = vector.broadcast %cst_213 : f32 to vector<8x128xf32>
    %669 = arith.mulf %668, %651 : vector<8x128xf32>
    %670 = arith.addf %669, %667 : vector<8x128xf32>
    %671 = arith.select %653, %667, %670 : vector<8x128xi1>, vector<8x128xf32>
    %cst_214 = arith.constant 5.000000e-01 : f32
    %672 = vector.broadcast %cst_214 : f32 to vector<8x128xf32>
    %673 = arith.cmpf ogt, %671, %672 : vector<8x128xf32>
    %674 = arith.extui %673 : vector<8x128xi1> to vector<8x128xi32>
    %675 = arith.sitofp %674 : vector<8x128xi32> to vector<8x128xf32>
    %676 = arith.addf %656, %675 : vector<8x128xf32>
    %c264 = arith.constant 264 : index
    %c0_215 = arith.constant 0 : index
    %677 = vector.load %arg7[%c264, %c0_215] : memref<312x512xf32, #tpu.memory_space<vmem>>, vector<8x512xf32>
    %cst_216 = arith.constant 2.000000e-01 : f32
    %678 = vector.broadcast %cst_216 : f32 to vector<8x512xf32>
    %679 = arith.mulf %678, %661 : vector<8x512xf32>
    %680 = arith.addf %679, %677 : vector<8x512xf32>
    %681 = arith.select %663, %677, %680 : vector<8x512xi1>, vector<8x512xf32>
    %cst_217 = arith.constant 5.000000e-01 : f32
    %682 = vector.broadcast %cst_217 : f32 to vector<8x512xf32>
    %683 = arith.cmpf ogt, %681, %682 : vector<8x512xf32>
    %684 = arith.extui %683 : vector<8x512xi1> to vector<8x512xi32>
    %685 = arith.sitofp %684 : vector<8x512xi32> to vector<8x512xf32>
    %cst_218 = arith.constant dense<0.000000e+00> : vector<8x128xf32>
    %686 = tpu.matmul %685, %8, %cst_218 {dimension_numbers = #tpu.dot_dimension_numbers<[1], [0], [0], [1], [0, 0, 1, 1], [], []>} : vector<8x512xf32>, vector<512x128xf32>, vector<8x128xf32> -> vector<8x128xf32>
    %687 = arith.addf %686, %11 : vector<8x128xf32>
    %cst_219 = arith.constant 2.000000e-01 : f32
    %688 = vector.broadcast %cst_219 : f32 to vector<8x128xf32>
    %689 = arith.mulf %688, %671 : vector<8x128xf32>
    %690 = arith.addf %689, %687 : vector<8x128xf32>
    %691 = arith.select %673, %687, %690 : vector<8x128xi1>, vector<8x128xf32>
    %cst_220 = arith.constant 5.000000e-01 : f32
    %692 = vector.broadcast %cst_220 : f32 to vector<8x128xf32>
    %693 = arith.cmpf ogt, %691, %692 : vector<8x128xf32>
    %694 = arith.extui %693 : vector<8x128xi1> to vector<8x128xi32>
    %695 = arith.sitofp %694 : vector<8x128xi32> to vector<8x128xf32>
    %696 = arith.addf %676, %695 : vector<8x128xf32>
    %c272 = arith.constant 272 : index
    %c0_221 = arith.constant 0 : index
    %697 = vector.load %arg7[%c272, %c0_221] : memref<312x512xf32, #tpu.memory_space<vmem>>, vector<8x512xf32>
    %cst_222 = arith.constant 2.000000e-01 : f32
    %698 = vector.broadcast %cst_222 : f32 to vector<8x512xf32>
    %699 = arith.mulf %698, %681 : vector<8x512xf32>
    %700 = arith.addf %699, %697 : vector<8x512xf32>
    %701 = arith.select %683, %697, %700 : vector<8x512xi1>, vector<8x512xf32>
    %cst_223 = arith.constant 5.000000e-01 : f32
    %702 = vector.broadcast %cst_223 : f32 to vector<8x512xf32>
    %703 = arith.cmpf ogt, %701, %702 : vector<8x512xf32>
    %704 = arith.extui %703 : vector<8x512xi1> to vector<8x512xi32>
    %705 = arith.sitofp %704 : vector<8x512xi32> to vector<8x512xf32>
    %cst_224 = arith.constant dense<0.000000e+00> : vector<8x128xf32>
    %706 = tpu.matmul %705, %8, %cst_224 {dimension_numbers = #tpu.dot_dimension_numbers<[1], [0], [0], [1], [0, 0, 1, 1], [], []>} : vector<8x512xf32>, vector<512x128xf32>, vector<8x128xf32> -> vector<8x128xf32>
    %707 = arith.addf %706, %11 : vector<8x128xf32>
    %cst_225 = arith.constant 2.000000e-01 : f32
    %708 = vector.broadcast %cst_225 : f32 to vector<8x128xf32>
    %709 = arith.mulf %708, %691 : vector<8x128xf32>
    %710 = arith.addf %709, %707 : vector<8x128xf32>
    %711 = arith.select %693, %707, %710 : vector<8x128xi1>, vector<8x128xf32>
    %cst_226 = arith.constant 5.000000e-01 : f32
    %712 = vector.broadcast %cst_226 : f32 to vector<8x128xf32>
    %713 = arith.cmpf ogt, %711, %712 : vector<8x128xf32>
    %714 = arith.extui %713 : vector<8x128xi1> to vector<8x128xi32>
    %715 = arith.sitofp %714 : vector<8x128xi32> to vector<8x128xf32>
    %716 = arith.addf %696, %715 : vector<8x128xf32>
    %c280 = arith.constant 280 : index
    %c0_227 = arith.constant 0 : index
    %717 = vector.load %arg7[%c280, %c0_227] : memref<312x512xf32, #tpu.memory_space<vmem>>, vector<8x512xf32>
    %cst_228 = arith.constant 2.000000e-01 : f32
    %718 = vector.broadcast %cst_228 : f32 to vector<8x512xf32>
    %719 = arith.mulf %718, %701 : vector<8x512xf32>
    %720 = arith.addf %719, %717 : vector<8x512xf32>
    %721 = arith.select %703, %717, %720 : vector<8x512xi1>, vector<8x512xf32>
    %cst_229 = arith.constant 5.000000e-01 : f32
    %722 = vector.broadcast %cst_229 : f32 to vector<8x512xf32>
    %723 = arith.cmpf ogt, %721, %722 : vector<8x512xf32>
    %724 = arith.extui %723 : vector<8x512xi1> to vector<8x512xi32>
    %725 = arith.sitofp %724 : vector<8x512xi32> to vector<8x512xf32>
    %cst_230 = arith.constant dense<0.000000e+00> : vector<8x128xf32>
    %726 = tpu.matmul %725, %8, %cst_230 {dimension_numbers = #tpu.dot_dimension_numbers<[1], [0], [0], [1], [0, 0, 1, 1], [], []>} : vector<8x512xf32>, vector<512x128xf32>, vector<8x128xf32> -> vector<8x128xf32>
    %727 = arith.addf %726, %11 : vector<8x128xf32>
    %cst_231 = arith.constant 2.000000e-01 : f32
    %728 = vector.broadcast %cst_231 : f32 to vector<8x128xf32>
    %729 = arith.mulf %728, %711 : vector<8x128xf32>
    %730 = arith.addf %729, %727 : vector<8x128xf32>
    %731 = arith.select %713, %727, %730 : vector<8x128xi1>, vector<8x128xf32>
    %cst_232 = arith.constant 5.000000e-01 : f32
    %732 = vector.broadcast %cst_232 : f32 to vector<8x128xf32>
    %733 = arith.cmpf ogt, %731, %732 : vector<8x128xf32>
    %734 = arith.extui %733 : vector<8x128xi1> to vector<8x128xi32>
    %735 = arith.sitofp %734 : vector<8x128xi32> to vector<8x128xf32>
    %736 = arith.addf %716, %735 : vector<8x128xf32>
    %c288 = arith.constant 288 : index
    %c0_233 = arith.constant 0 : index
    %737 = vector.load %arg7[%c288, %c0_233] : memref<312x512xf32, #tpu.memory_space<vmem>>, vector<8x512xf32>
    %cst_234 = arith.constant 2.000000e-01 : f32
    %738 = vector.broadcast %cst_234 : f32 to vector<8x512xf32>
    %739 = arith.mulf %738, %721 : vector<8x512xf32>
    %740 = arith.addf %739, %737 : vector<8x512xf32>
    %741 = arith.select %723, %737, %740 : vector<8x512xi1>, vector<8x512xf32>
    %cst_235 = arith.constant 5.000000e-01 : f32
    %742 = vector.broadcast %cst_235 : f32 to vector<8x512xf32>
    %743 = arith.cmpf ogt, %741, %742 : vector<8x512xf32>
    %744 = arith.extui %743 : vector<8x512xi1> to vector<8x512xi32>
    %745 = arith.sitofp %744 : vector<8x512xi32> to vector<8x512xf32>
    %cst_236 = arith.constant dense<0.000000e+00> : vector<8x128xf32>
    %746 = tpu.matmul %745, %8, %cst_236 {dimension_numbers = #tpu.dot_dimension_numbers<[1], [0], [0], [1], [0, 0, 1, 1], [], []>} : vector<8x512xf32>, vector<512x128xf32>, vector<8x128xf32> -> vector<8x128xf32>
    %747 = arith.addf %746, %11 : vector<8x128xf32>
    %cst_237 = arith.constant 2.000000e-01 : f32
    %748 = vector.broadcast %cst_237 : f32 to vector<8x128xf32>
    %749 = arith.mulf %748, %731 : vector<8x128xf32>
    %750 = arith.addf %749, %747 : vector<8x128xf32>
    %751 = arith.select %733, %747, %750 : vector<8x128xi1>, vector<8x128xf32>
    %cst_238 = arith.constant 5.000000e-01 : f32
    %752 = vector.broadcast %cst_238 : f32 to vector<8x128xf32>
    %753 = arith.cmpf ogt, %751, %752 : vector<8x128xf32>
    %754 = arith.extui %753 : vector<8x128xi1> to vector<8x128xi32>
    %755 = arith.sitofp %754 : vector<8x128xi32> to vector<8x128xf32>
    %756 = arith.addf %736, %755 : vector<8x128xf32>
    %c296 = arith.constant 296 : index
    %c0_239 = arith.constant 0 : index
    %757 = vector.load %arg7[%c296, %c0_239] : memref<312x512xf32, #tpu.memory_space<vmem>>, vector<8x512xf32>
    %cst_240 = arith.constant 2.000000e-01 : f32
    %758 = vector.broadcast %cst_240 : f32 to vector<8x512xf32>
    %759 = arith.mulf %758, %741 : vector<8x512xf32>
    %760 = arith.addf %759, %757 : vector<8x512xf32>
    %761 = arith.select %743, %757, %760 : vector<8x512xi1>, vector<8x512xf32>
    %cst_241 = arith.constant 5.000000e-01 : f32
    %762 = vector.broadcast %cst_241 : f32 to vector<8x512xf32>
    %763 = arith.cmpf ogt, %761, %762 : vector<8x512xf32>
    %764 = arith.extui %763 : vector<8x512xi1> to vector<8x512xi32>
    %765 = arith.sitofp %764 : vector<8x512xi32> to vector<8x512xf32>
    %cst_242 = arith.constant dense<0.000000e+00> : vector<8x128xf32>
    %766 = tpu.matmul %765, %8, %cst_242 {dimension_numbers = #tpu.dot_dimension_numbers<[1], [0], [0], [1], [0, 0, 1, 1], [], []>} : vector<8x512xf32>, vector<512x128xf32>, vector<8x128xf32> -> vector<8x128xf32>
    %767 = arith.addf %766, %11 : vector<8x128xf32>
    %cst_243 = arith.constant 2.000000e-01 : f32
    %768 = vector.broadcast %cst_243 : f32 to vector<8x128xf32>
    %769 = arith.mulf %768, %751 : vector<8x128xf32>
    %770 = arith.addf %769, %767 : vector<8x128xf32>
    %771 = arith.select %753, %767, %770 : vector<8x128xi1>, vector<8x128xf32>
    %cst_244 = arith.constant 5.000000e-01 : f32
    %772 = vector.broadcast %cst_244 : f32 to vector<8x128xf32>
    %773 = arith.cmpf ogt, %771, %772 : vector<8x128xf32>
    %774 = arith.extui %773 : vector<8x128xi1> to vector<8x128xi32>
    %775 = arith.sitofp %774 : vector<8x128xi32> to vector<8x128xf32>
    %776 = arith.addf %756, %775 : vector<8x128xf32>
    %c304 = arith.constant 304 : index
    %c0_245 = arith.constant 0 : index
    %777 = vector.load %arg7[%c304, %c0_245] : memref<312x512xf32, #tpu.memory_space<vmem>>, vector<8x512xf32>
    %cst_246 = arith.constant 2.000000e-01 : f32
    %778 = vector.broadcast %cst_246 : f32 to vector<8x512xf32>
    %779 = arith.mulf %778, %761 : vector<8x512xf32>
    %780 = arith.addf %779, %777 : vector<8x512xf32>
    %781 = arith.select %763, %777, %780 : vector<8x512xi1>, vector<8x512xf32>
    %cst_247 = arith.constant 5.000000e-01 : f32
    %782 = vector.broadcast %cst_247 : f32 to vector<8x512xf32>
    %783 = arith.cmpf ogt, %781, %782 : vector<8x512xf32>
    %784 = arith.extui %783 : vector<8x512xi1> to vector<8x512xi32>
    %785 = arith.sitofp %784 : vector<8x512xi32> to vector<8x512xf32>
    %cst_248 = arith.constant dense<0.000000e+00> : vector<8x128xf32>
    %786 = tpu.matmul %785, %8, %cst_248 {dimension_numbers = #tpu.dot_dimension_numbers<[1], [0], [0], [1], [0, 0, 1, 1], [], []>} : vector<8x512xf32>, vector<512x128xf32>, vector<8x128xf32> -> vector<8x128xf32>
    %787 = arith.addf %786, %11 : vector<8x128xf32>
    %cst_249 = arith.constant 2.000000e-01 : f32
    %788 = vector.broadcast %cst_249 : f32 to vector<8x128xf32>
    %789 = arith.mulf %788, %771 : vector<8x128xf32>
    %790 = arith.addf %789, %787 : vector<8x128xf32>
    %791 = arith.select %773, %787, %790 : vector<8x128xi1>, vector<8x128xf32>
    %cst_250 = arith.constant 5.000000e-01 : f32
    %792 = vector.broadcast %cst_250 : f32 to vector<8x128xf32>
    %793 = arith.cmpf ogt, %791, %792 : vector<8x128xf32>
    %794 = arith.extui %793 : vector<8x128xi1> to vector<8x128xi32>
    %795 = arith.sitofp %794 : vector<8x128xi32> to vector<8x128xf32>
    %796 = arith.addf %776, %795 : vector<8x128xf32>
    %cst_251 = arith.constant 0.025641026 : f32
    %797 = vector.broadcast %cst_251 : f32 to vector<8x128xf32>
    %798 = arith.mulf %796, %797 : vector<8x128xf32>
    %c0_252 = arith.constant 0 : index
    %c0_253 = arith.constant 0 : index
    %c0_254 = arith.constant 0 : index
    %799 = vector.load %arg6[%c0_252, %c0_253, %c0_254] : memref<1x8x128xf32, #tpu.memory_space<vmem>>, vector<1x8x128xf32>
    %800 = vector.shape_cast %799 : vector<1x8x128xf32> to vector<8x128xf32>
    %801 = vector.shape_cast %798 : vector<8x128xf32> to vector<1x8x128xf32>
    tpu.vector_store %arg6[%c0_252, %c0_253, %c0_254], %801 {strides = array<i32>} : memref<1x8x128xf32, #tpu.memory_space<vmem>>, vector<1x8x128xf32>,
    return
  }
  func.func @transform_0(%arg0: i32) -> (i32, i32, i32) {
    %c0_i32 = arith.constant 0 : i32
    %c0_i32_0 = arith.constant 0 : i32
    %c0_i32_1 = arith.constant 0 : i32
    return %arg0, %c0_i32, %c0_i32_0 : i32, i32, i32
  }
  func.func @transform_1(%arg0: i32) -> (i32, i32) {
    %c0_i32 = arith.constant 0 : i32
    %c0_i32_0 = arith.constant 0 : i32
    %c0_i32_1 = arith.constant 0 : i32
    return %c0_i32, %c0_i32_0 : i32, i32
  }
  func.func @transform_2(%arg0: i32) -> (i32, i32) {
    %c0_i32 = arith.constant 0 : i32
    %c0_i32_0 = arith.constant 0 : i32
    %c0_i32_1 = arith.constant 0 : i32
    return %c0_i32, %c0_i32_0 : i32, i32
  }
  func.func @transform_3(%arg0: i32) -> (i32, i32) {
    %c0_i32 = arith.constant 0 : i32
    %c0_i32_0 = arith.constant 0 : i32
    %c0_i32_1 = arith.constant 0 : i32
    return %c0_i32, %c0_i32_0 : i32, i32
  }
  func.func @transform_4(%arg0: i32) -> (i32, i32) {
    %c0_i32 = arith.constant 0 : i32
    %c0_i32_0 = arith.constant 0 : i32
    %c0_i32_1 = arith.constant 0 : i32
    return %c0_i32, %c0_i32_0 : i32, i32
  }
  func.func @transform_5(%arg0: i32) -> (i32, i32, i32) {
    %c0_i32 = arith.constant 0 : i32
    %c0_i32_0 = arith.constant 0 : i32
    %c0_i32_1 = arith.constant 0 : i32
    return %arg0, %c0_i32, %c0_i32_0 : i32, i32, i32
  }
}

</mosaic_0001>

<llo_original>
// kernel: hybrid_lif_gnn_only_location.1
$region0: #{hybrid_lif_gnn_only_location.1}
  #allocation0 [shape = 'u32[]', space=smem, size = 0x4, offset = 0x4, fixed_abs, tag = 'smem constant byte address 0x4 - core index']
  #allocation1 [shape = 'u32[144,128]{1,0:T(1,128)}', space=vmem, size = 0x12000, scoped, tag = 'internal scratch']
  #allocation2 [shape = 'f32[312,512]{1,0:T(8,128)}', space=vmem, size = 0x9c000, scoped, tag = 'scratch operand']
  %s0 = inlined_call_operand.vmem [shape: f32[1,312,32], index: 0, kind: input, shape index: {}]
  %s1 = inlined_call_operand.vmem [shape: f32[32,512], index: 1, kind: input, shape index: {}]
  %s2 = inlined_call_operand.vmem [shape: f32[1,512], index: 2, kind: input, shape index: {}]
  %s3 = inlined_call_operand.vmem [shape: f32[512,128], index: 3, kind: input, shape index: {}]
  %s4 = inlined_call_operand.vmem [shape: f32[1,128], index: 4, kind: input, shape index: {}]
  %s5 = inlined_call_operand.vmem [shape: f32[1,8,128], index: 5, kind: output, shape index: {}]
  %s6 = sld [smem:[#allocation0]]
  $region30: #{hybrid_lif_gnn_only_location.1} parent=0
    _
  %s8 = ssub.s32 1, %s6
  %s9 = scalar_select 0, %s8, %s6
  // Predicated region
  $region2: #{hybrid_lif_gnn_only_location.1} parent=0 // pred_check
    _
  $region3: #{hybrid_lif_gnn_only_location.1} parent=0 // pred_check_branch
    %11 = sbr.rel (0) target = $region5
  $region4: #{hybrid_lif_gnn_only_location.1} parent=0 // pred_region
    _
  $region5: #{hybrid_lif_gnn_only_location.1} parent=0 // pred_fallthru
    _
  // Predicated region
  $region6: #{hybrid_lif_gnn_only_location.1} parent=0 // pred_check
    _
  $region7: #{hybrid_lif_gnn_only_location.1} parent=0 // pred_check_branch
    %13 = sbr.rel (0) target = $region9
  $region8: #{hybrid_lif_gnn_only_location.1} parent=0 // pred_region
    _
  $region9: #{hybrid_lif_gnn_only_location.1} parent=0 // pred_fallthru
    _
  // Predicated region
  $region10: #{hybrid_lif_gnn_only_location.1} parent=0 // pred_check
    _
  $region11: #{hybrid_lif_gnn_only_location.1} parent=0 // pred_check_branch
    %15 = sbr.rel (0) target = $region13
  $region12: #{hybrid_lif_gnn_only_location.1} parent=0 // pred_region
    _
  $region13: #{hybrid_lif_gnn_only_location.1} parent=0 // pred_fallthru
    _
  // Predicated region
  $region14: #{hybrid_lif_gnn_only_location.1} parent=0 // pred_check
    _
  $region15: #{hybrid_lif_gnn_only_location.1} parent=0 // pred_check_branch
    %17 = sbr.rel (0) target = $region17
  $region16: #{hybrid_lif_gnn_only_location.1} parent=0 // pred_region
    _
  $region17: #{hybrid_lif_gnn_only_location.1} parent=0 // pred_fallthru
    _
  // Predicated region
  $region18: #{hybrid_lif_gnn_only_location.1} parent=0 // pred_check
    _
  $region19: #{hybrid_lif_gnn_only_location.1} parent=0 // pred_check_branch
    %19 = sbr.rel (0) target = $region21
  $region20: #{hybrid_lif_gnn_only_location.1} parent=0 // pred_region
    _
  $region21: #{hybrid_lif_gnn_only_location.1} parent=0 // pred_fallthru
    _
  %v20 = vld [vmem:[%s0] sm:$0xff]
  %v21 = vld [vmem:[%s0 + $0x8] sm:$0xff]
  %v22 = vld [vmem:[%s0 + $0x10] sm:$0xff]
  %v23 = vld [vmem:[%s0 + $0x18] sm:$0xff]
  %v24 = vld [vmem:[%s0 + $0x20] sm:$0xff]
  %v25 = vld [vmem:[%s0 + $0x28] sm:$0xff]
  %v26 = vld [vmem:[%s0 + $0x30] sm:$0xff]
  %v27 = vld [vmem:[%s0 + $0x38] sm:$0xff]
  %v28 = vld [vmem:[%s0 + $0x40] sm:$0xff]
  %v29 = vld [vmem:[%s0 + $0x48] sm:$0xff]
  %v30 = vld [vmem:[%s0 + $0x50] sm:$0xff]
  %v31 = vld [vmem:[%s0 + $0x58] sm:$0xff]
  %v32 = vld [vmem:[%s0 + $0x60] sm:$0xff]
  %v33 = vld [vmem:[%s0 + $0x68] sm:$0xff]
  %v34 = vld [vmem:[%s0 + $0x70] sm:$0xff]
  %v35 = vld [vmem:[%s0 + $0x78] sm:$0xff]
  %v36 = vld [vmem:[%s0 + $0x80] sm:$0xff]
  %v37 = vld [vmem:[%s0 + $0x88] sm:$0xff]
  %v38 = vld [vmem:[%s0 + $0x90] sm:$0xff]
  %v39 = vld [vmem:[%s0 + $0x98] sm:$0xff]
  %v40 = vld [vmem:[%s0 + $0xa0] sm:$0xff]
  %v41 = vld [vmem:[%s0 + $0xa8] sm:$0xff]
  %v42 = vld [vmem:[%s0 + $0xb0] sm:$0xff]
  %v43 = vld [vmem:[%s0 + $0xb8] sm:$0xff]
  %v44 = vld [vmem:[%s0 + $0xc0] sm:$0xff]
  %v45 = vld [vmem:[%s0 + $0xc8] sm:$0xff]
  %v46 = vld [vmem:[%s0 + $0xd0] sm:$0xff]
  %v47 = vld [vmem:[%s0 + $0xd8] sm:$0xff]
  %v48 = vld [vmem:[%s0 + $0xe0] sm:$0xff]
  %v49 = vld [vmem:[%s0 + $0xe8] sm:$0xff]
  %v50 = vld [vmem:[%s0 + $0xf0] sm:$0xff]
  %v51 = vld [vmem:[%s0 + $0xf8] sm:$0xff]
  %v52 = vld [vmem:[%s0 + $0x100] sm:$0xff]
  %v53 = vld [vmem:[%s0 + $0x108] sm:$0xff]
  %v54 = vld [vmem:[%s0 + $0x110] sm:$0xff]
  %v55 = vld [vmem:[%s0 + $0x118] sm:$0xff]
  %v56 = vld [vmem:[%s0 + $0x120] sm:$0xff]
  %v57 = vld [vmem:[%s0 + $0x128] sm:$0xff]
  %v58 = vld [vmem:[%s0 + $0x130] sm:$0xff]
  %v59 = vld [vmem:[%s1] sm:$0xff]
  %v60 = vld [vmem:[%s1 + $0x8] sm:$0xff]
  %v61 = vld [vmem:[%s1 + $0x10] sm:$0xff]
  %v62 = vld [vmem:[%s1 + $0x18] sm:$0xff]
  %v63 = vld [vmem:[%s1 + $0x20] sm:$0xff]
  %v64 = vld [vmem:[%s1 + $0x28] sm:$0xff]
  %v65 = vld [vmem:[%s1 + $0x30] sm:$0xff]
  %v66 = vld [vmem:[%s1 + $0x38] sm:$0xff]
  %v67 = vld [vmem:[%s1 + $0x40] sm:$0xff]
  %v68 = vld [vmem:[%s1 + $0x48] sm:$0xff]
  %v69 = vld [vmem:[%s1 + $0x50] sm:$0xff]
  %v70 = vld [vmem:[%s1 + $0x58] sm:$0xff]
  %v71 = vld [vmem:[%s1 + $0x60] sm:$0xff]
  %v72 = vld [vmem:[%s1 + $0x68] sm:$0xff]
  %v73 = vld [vmem:[%s1 + $0x70] sm:$0xff]
  %v74 = vld [vmem:[%s1 + $0x78] sm:$0xff]
  %v75 = vld [vmem:[%s2] sm:$0xf]
  %v77 = vlaneseq
  %v78 = vshrl.u32 %v77, 7
  %v79 = vsub.s32 0, %v78
  %v80 = vrot.slane %v75, %v79
  %v81 = vlaneseq
  %v82 = vshrl.u32 %v81, 7
  %v83 = vsub.s32 1, %v82
  %v84 = vrot.slane %v75, %v83
  %v85 = vlaneseq
  %v86 = vshrl.u32 %v85, 7
  %v87 = vsub.s32 2, %v86
  %v88 = vrot.slane %v75, %v87
  %v89 = vlaneseq
  %v90 = vshrl.u32 %v89, 7
  %v91 = vsub.s32 3, %v90
  %v92 = vrot.slane %v75, %v91
  %vm97 = vcmask 261120
  %v99 = vsel %vm97, %v20, 0
  %v102 = vsel %vm97, %v21, 0
  %v105 = vsel %vm97, %v22, 0
  %v108 = vsel %vm97, %v23, 0
  %v111 = vsel %vm97, %v24, 0
  %v114 = vsel %vm97, %v25, 0
  %v117 = vsel %vm97, %v26, 0
  %v120 = vsel %vm97, %v27, 0
  %v123 = vsel %vm97, %v28, 0
  %v126 = vsel %vm97, %v29, 0
  %v129 = vsel %vm97, %v30, 0
  %v132 = vsel %vm97, %v31, 0
  %v135 = vsel %vm97, %v32, 0
  %v138 = vsel %vm97, %v33, 0
  %v141 = vsel %vm97, %v34, 0
  %v144 = vsel %vm97, %v35, 0
  %v147 = vsel %vm97, %v36, 0
  %v150 = vsel %vm97, %v37, 0
  %v153 = vsel %vm97, %v38, 0
  %v156 = vsel %vm97, %v39, 0
  %v159 = vsel %vm97, %v40, 0
  %v162 = vsel %vm97, %v41, 0
  %v165 = vsel %vm97, %v42, 0
  %v168 = vsel %vm97, %v43, 0
  %v171 = vsel %vm97, %v44, 0
  %v174 = vsel %vm97, %v45, 0
  %v177 = vsel %vm97, %v46, 0
  %v180 = vsel %vm97, %v47, 0
  %v183 = vsel %vm97, %v48, 0
  %v186 = vsel %vm97, %v49, 0
  %v189 = vsel %vm97, %v50, 0
  %v192 = vsel %vm97, %v51, 0
  %v195 = vsel %vm97, %v52, 0
  %v198 = vsel %vm97, %v53, 0
  %v201 = vsel %vm97, %v54, 0
  %v204 = vsel %vm97, %v55, 0
  %v207 = vsel %vm97, %v56, 0
  %v210 = vsel %vm97, %v57, 0
  %v213 = vsel %vm97, %v58, 0
  %215 = vmatprep.subr.mxu0 %v60
  %216 = vmatpush1.msra.mxu0 %v59
  %217 = vmatprep.subr.mxu0 %v64
  %218 = vmatpush1.msra.mxu0 %v63
  %219 = vmatprep.subr.mxu0 %v68
  %220 = vmatpush1.msra.mxu0 %v67
  %221 = vmatprep.subr.mxu0 %v72
  %222 = vmatpush1.msra.mxu0 %v71
  %223 = vmatprep.subr.mxu0 0.0
  %224 = vmatpush1.msra.mxu0 0.0
  %225 = vmatprep.subr.mxu0 0.0
  %226 = vmatpush1.msra.mxu0 0.0
  %227 = vmatprep.subr.mxu0 0.0
  %228 = vmatpush1.msra.mxu0 0.0
  %229 = vmatprep.subr.mxu0 0.0
  %230 = vmatpush1.msra.mxu0 0.0
  %231 = vmatprep.subr.mxu0 0.0
  %232 = vmatpush1.msra.mxu0 0.0
  %233 = vmatprep.subr.mxu0 0.0
  %234 = vmatpush1.msra.mxu0 0.0
  %235 = vmatprep.subr.mxu0 0.0
  %236 = vmatpush1.msra.mxu0 0.0
  %237 = vmatprep.subr.mxu0 0.0
  %238 = vmatpush1.msra.mxu0 0.0
  %239 = vmatprep.subr.mxu0 0.0
  %240 = vmatpush1.msra.mxu0 0.0
  %241 = vmatprep.subr.mxu0 0.0
  %242 = vmatpush1.msra.mxu0 0.0
  %243 = vmatprep.subr.mxu0 0.0
  %244 = vmatpush1.msra.mxu0 0.0
  %245 = vmatprep.subr.mxu0 0.0
  %246 = vmatpush1.msra.mxu0 0.0
  %247 = vmatprep.subr.mxu0 0.0
  %248 = vmatpush1.msra.mxu0 0.0
  %249 = vmatprep.subr.mxu0 0.0
  %250 = vmatpush1.msra.mxu0 0.0
  %251 = vmatprep.subr.mxu0 0.0
  %252 = vmatpush1.msra.mxu0 0.0
  %253 = vmatprep.subr.mxu0 0.0
  %254 = vmatpush1.msra.mxu0 0.0
  %255 = vmatprep.subr.mxu0 0.0
  %256 = vmatpush1.msra.mxu0 0.0
  %257 = vmatprep.subr.mxu0 0.0
  %258 = vmatpush1.msra.mxu0 0.0
  %259 = vmatprep.subr.mxu0 0.0
  %260 = vmatpush1.msra.mxu0 0.0
  %261 = vmatprep.subr.mxu0 0.0
  %262 = vmatpush1.msra.mxu0 0.0
  %263 = vmatprep.subr.mxu0 0.0
  %264 = vmatpush1.msra.mxu0 0.0
  %265 = vmatprep.subr.mxu0 0.0
  %266 = vmatpush1.msra.mxu0 0.0
  %267 = vmatprep.subr.mxu0 0.0
  %268 = vmatpush1.msra.mxu0 0.0
  %269 = vmatprep.subr.mxu0 0.0
  %270 = vmatpush1.msra.mxu0 0.0
  %271 = vmatprep.subr.mxu0 0.0
  %272 = vmatpush1.msra.mxu0 0.0
  %273 = vmatprep.subr.mxu0 0.0
  %274 = vmatpush1.msra.mxu0 0.0
  %275 = vmatprep.subr.mxu0 0.0
  %276 = vmatpush1.msra.mxu0 0.0
  %277 = vmatprep.subr.mxu0 0.0
  %278 = vmatpush1.msra.mxu0 0.0
  %279 = vmatprep.mubr.f32.mxu0 0.0
  %280 = vmatmul.mubr.f32.gmra.mrb[0].mxu0 %v99
  %v281 = vpop.f32.mrb[0].mxu0
  %v282 = vadd.f32 %v80, %v281
  %v283 = vpop.f32.mrb[0].mxu0
  %v284 = vadd.f32 %v84, %v283
  %285 = vmatprep.mubr.f32.mxu0 0.0
  %286 = vmatmul.mubr.f32.gmra.mrb[0].mxu0 %v102
  %v287 = vpop.f32.mrb[0].mxu0
  %v288 = vadd.f32 %v80, %v287
  %v289 = vpop.f32.mrb[0].mxu0
  %v290 = vadd.f32 %v84, %v289
  %291 = vmatprep.mubr.f32.mxu0 0.0
  %292 = vmatmul.mubr.f32.gmra.mrb[0].mxu0 %v105
  %v293 = vpop.f32.mrb[0].mxu0
  %v294 = vadd.f32 %v80, %v293
  %v295 = vpop.f32.mrb[0].mxu0
  %v296 = vadd.f32 %v84, %v295
  %297 = vmatprep.mubr.f32.mxu0 0.0
  %298 = vmatmul.mubr.f32.gmra.mrb[0].mxu0 %v108
  %v299 = vpop.f32.mrb[0].mxu0
  %v300 = vadd.f32 %v80, %v299
  %v301 = vpop.f32.mrb[0].mxu0
  %v302 = vadd.f32 %v84, %v301
  %303 = vmatprep.mubr.f32.mxu0 0.0
  %304 = vmatmul.mubr.f32.gmra.mrb[0].mxu0 %v111
  %v305 = vpop.f32.mrb[0].mxu0
  %v306 = vadd.f32 %v80, %v305
  %v307 = vpop.f32.mrb[0].mxu0
  %v308 = vadd.f32 %v84, %v307
  %309 = vmatprep.mubr.f32.mxu0 0.0
  %310 = vmatmul.mubr.f32.gmra.mrb[0].mxu0 %v114
  %v311 = vpop.f32.mrb[0].mxu0
  %v312 = vadd.f32 %v80, %v311
  %v313 = vpop.f32.mrb[0].mxu0
  %v314 = vadd.f32 %v84, %v313
  %315 = vmatprep.mubr.f32.mxu0 0.0
  %316 = vmatmul.mubr.f32.gmra.mrb[0].mxu0 %v117
  %v317 = vpop.f32.mrb[0].mxu0
  %v318 = vadd.f32 %v80, %v317
  %v319 = vpop.f32.mrb[0].mxu0
  %v320 = vadd.f32 %v84, %v319
  %321 = vmatprep.mubr.f32.mxu0 0.0
  %322 = vmatmul.mubr.f32.gmra.mrb[0].mxu0 %v120
  %v323 = vpop.f32.mrb[0].mxu0
  %v324 = vadd.f32 %v80, %v323
  %v325 = vpop.f32.mrb[0].mxu0
  %v326 = vadd.f32 %v84, %v325
  %327 = vmatprep.mubr.f32.mxu0 0.0
  %328 = vmatmul.mubr.f32.gmra.mrb[0].mxu0 %v123
  %v329 = vpop.f32.mrb[0].mxu0
  %v330 = vadd.f32 %v80, %v329
  %v331 = vpop.f32.mrb[0].mxu0
  %v332 = vadd.f32 %v84, %v331
  %333 = vmatprep.mubr.f32.mxu0 0.0
  %334 = vmatmul.mubr.f32.gmra.mrb[0].mxu0 %v126
  %v335 = vpop.f32.mrb[0].mxu0
  %v336 = vadd.f32 %v80, %v335
  %v337 = vpop.f32.mrb[0].mxu0
  %v338 = vadd.f32 %v84, %v337
  %339 = vmatprep.mubr.f32.mxu0 0.0
  %340 = vmatmul.mubr.f32.gmra.mrb[0].mxu0 %v129
  %v341 = vpop.f32.mrb[0].mxu0
  %v342 = vadd.f32 %v80, %v341
  %v343 = vpop.f32.mrb[0].mxu0
  %v344 = vadd.f32 %v84, %v343
  %345 = vmatprep.mubr.f32.mxu0 0.0
  %346 = vmatmul.mubr.f32.gmra.mrb[0].mxu0 %v132
  %v347 = vpop.f32.mrb[0].mxu0
  %v348 = vadd.f32 %v80, %v347
  %v349 = vpop.f32.mrb[0].mxu0
  %v350 = vadd.f32 %v84, %v349
  %351 = vmatprep.mubr.f32.mxu0 0.0
  %352 = vmatmul.mubr.f32.gmra.mrb[0].mxu0 %v135
  %v353 = vpop.f32.mrb[0].mxu0
  %v354 = vadd.f32 %v80, %v353
  %v355 = vpop.f32.mrb[0].mxu0
  %v356 = vadd.f32 %v84, %v355
  %357 = vmatprep.mubr.f32.mxu0 0.0
  %358 = vmatmul.mubr.f32.gmra.mrb[0].mxu0 %v138
  %v359 = vpop.f32.mrb[0].mxu0
  %v360 = vadd.f32 %v80, %v359
  %v361 = vpop.f32.mrb[0].mxu0
  %v362 = vadd.f32 %v84, %v361
  %363 = vmatprep.mubr.f32.mxu0 0.0
  %364 = vmatmul.mubr.f32.gmra.mrb[0].mxu0 %v141
  %v365 = vpop.f32.mrb[0].mxu0
  %v366 = vadd.f32 %v80, %v365
  %v367 = vpop.f32.mrb[0].mxu0
  %v368 = vadd.f32 %v84, %v367
  %369 = vmatprep.mubr.f32.mxu0 0.0
  %370 = vmatmul.mubr.f32.gmra.mrb[0].mxu0 %v144
  %v371 = vpop.f32.mrb[0].mxu0
  %v372 = vadd.f32 %v80, %v371
  %v373 = vpop.f32.mrb[0].mxu0
  %v374 = vadd.f32 %v84, %v373
  %375 = vmatprep.mubr.f32.mxu0 0.0
  %376 = vmatmul.mubr.f32.gmra.mrb[0].mxu0 %v147
  %v377 = vpop.f32.mrb[0].mxu0
  %v378 = vadd.f32 %v80, %v377
  %v379 = vpop.f32.mrb[0].mxu0
  %v380 = vadd.f32 %v84, %v379
  %381 = vmatprep.mubr.f32.mxu0 0.0
  %382 = vmatmul.mubr.f32.gmra.mrb[0].mxu0 %v150
  %v383 = vpop.f32.mrb[0].mxu0
  %v384 = vadd.f32 %v80, %v383
  %v385 = vpop.f32.mrb[0].mxu0
  %v386 = vadd.f32 %v84, %v385
  %387 = vmatprep.mubr.f32.mxu0 0.0
  %388 = vmatmul.mubr.f32.gmra.mrb[0].mxu0 %v153
  %v389 = vpop.f32.mrb[0].mxu0
  %v390 = vadd.f32 %v80, %v389
  %v391 = vpop.f32.mrb[0].mxu0
  %v392 = vadd.f32 %v84, %v391
  %393 = vmatprep.mubr.f32.mxu0 0.0
  %394 = vmatmul.mubr.f32.gmra.mrb[0].mxu0 %v156
  %v395 = vpop.f32.mrb[0].mxu0
  %v396 = vadd.f32 %v80, %v395
  %v397 = vpop.f32.mrb[0].mxu0
  %v398 = vadd.f32 %v84, %v397
  %399 = vmatprep.mubr.f32.mxu0 0.0
  %400 = vmatmul.mubr.f32.gmra.mrb[0].mxu0 %v159
  %v401 = vpop.f32.mrb[0].mxu0
  %v402 = vadd.f32 %v80, %v401
  %v403 = vpop.f32.mrb[0].mxu0
  %v404 = vadd.f32 %v84, %v403
  %405 = vmatprep.mubr.f32.mxu0 0.0
  %406 = vmatmul.mubr.f32.gmra.mrb[0].mxu0 %v162
  %v407 = vpop.f32.mrb[0].mxu0
  %v408 = vadd.f32 %v80, %v407
  %v409 = vpop.f32.mrb[0].mxu0
  %v410 = vadd.f32 %v84, %v409
  %411 = vmatprep.mubr.f32.mxu0 0.0
  %412 = vmatmul.mubr.f32.gmra.mrb[0].mxu0 %v165
  %v413 = vpop.f32.mrb[0].mxu0
  %v414 = vadd.f32 %v80, %v413
  %v415 = vpop.f32.mrb[0].mxu0
  %v416 = vadd.f32 %v84, %v415
  %417 = vmatprep.mubr.f32.mxu0 0.0
  %418 = vmatmul.mubr.f32.gmra.mrb[0].mxu0 %v168
  %v419 = vpop.f32.mrb[0].mxu0
  %v420 = vadd.f32 %v80, %v419
  %v421 = vpop.f32.mrb[0].mxu0
  %v422 = vadd.f32 %v84, %v421
  %423 = vmatprep.mubr.f32.mxu0 0.0
  %424 = vmatmul.mubr.f32.gmra.mrb[0].mxu0 %v171
  %v425 = vpop.f32.mrb[0].mxu0
  %v426 = vadd.f32 %v80, %v425
  %v427 = vpop.f32.mrb[0].mxu0
  %v428 = vadd.f32 %v84, %v427
  %429 = vmatprep.mubr.f32.mxu0 0.0
  %430 = vmatmul.mubr.f32.gmra.mrb[0].mxu0 %v174
  %v431 = vpop.f32.mrb[0].mxu0
  %v432 = vadd.f32 %v80, %v431
  %v433 = vpop.f32.mrb[0].mxu0
  %v434 = vadd.f32 %v84, %v433
  %435 = vmatprep.mubr.f32.mxu0 0.0
  %436 = vmatmul.mubr.f32.gmra.mrb[0].mxu0 %v177
  %v437 = vpop.f32.mrb[0].mxu0
  %v438 = vadd.f32 %v80, %v437
  %v439 = vpop.f32.mrb[0].mxu0
  %v440 = vadd.f32 %v84, %v439
  %441 = vmatprep.mubr.f32.mxu0 0.0
  %442 = vmatmul.mubr.f32.gmra.mrb[0].mxu0 %v180
  %v443 = vpop.f32.mrb[0].mxu0
  %v444 = vadd.f32 %v80, %v443
  %v445 = vpop.f32.mrb[0].mxu0
  %v446 = vadd.f32 %v84, %v445
  %447 = vmatprep.mubr.f32.mxu0 0.0
  %448 = vmatmul.mubr.f32.gmra.mrb[0].mxu0 %v183
  %v449 = vpop.f32.mrb[0].mxu0
  %v450 = vadd.f32 %v80, %v449
  %v451 = vpop.f32.mrb[0].mxu0
  %v452 = vadd.f32 %v84, %v451
  %453 = vmatprep.mubr.f32.mxu0 0.0
  %454 = vmatmul.mubr.f32.gmra.mrb[0].mxu0 %v186
  %v455 = vpop.f32.mrb[0].mxu0
  %v456 = vadd.f32 %v80, %v455
  %v457 = vpop.f32.mrb[0].mxu0
  %v458 = vadd.f32 %v84, %v457
  %459 = vmatprep.mubr.f32.mxu0 0.0
  %460 = vmatmul.mubr.f32.gmra.mrb[0].mxu0 %v189
  %v461 = vpop.f32.mrb[0].mxu0
  %v462 = vadd.f32 %v80, %v461
  %v463 = vpop.f32.mrb[0].mxu0
  %v464 = vadd.f32 %v84, %v463
  %465 = vmatprep.mubr.f32.mxu0 0.0
  %466 = vmatmul.mubr.f32.gmra.mrb[0].mxu0 %v192
  %v467 = vpop.f32.mrb[0].mxu0
  %v468 = vadd.f32 %v80, %v467
  %v469 = vpop.f32.mrb[0].mxu0
  %v470 = vadd.f32 %v84, %v469
  %471 = vmatprep.mubr.f32.mxu0 0.0
  %472 = vmatmul.mubr.f32.gmra.mrb[0].mxu0 %v195
  %v473 = vpop.f32.mrb[0].mxu0
  %v474 = vadd.f32 %v80, %v473
  %v475 = vpop.f32.mrb[0].mxu0
  %v476 = vadd.f32 %v84, %v475
  %477 = vmatprep.mubr.f32.mxu0 0.0
  %478 = vmatmul.mubr.f32.gmra.mrb[0].mxu0 %v198
  %v479 = vpop.f32.mrb[0].mxu0
  %v480 = vadd.f32 %v80, %v479
  %v481 = vpop.f32.mrb[0].mxu0
  %v482 = vadd.f32 %v84, %v481
  %483 = vmatprep.mubr.f32.mxu0 0.0
  %484 = vmatmul.mubr.f32.gmra.mrb[0].mxu0 %v201
  %v485 = vpop.f32.mrb[0].mxu0
  %v486 = vadd.f32 %v80, %v485
  %v487 = vpop.f32.mrb[0].mxu0
  %v488 = vadd.f32 %v84, %v487
  %489 = vmatprep.mubr.f32.mxu0 0.0
  %490 = vmatmul.mubr.f32.gmra.mrb[0].mxu0 %v204
  %v491 = vpop.f32.mrb[0].mxu0
  %v492 = vadd.f32 %v80, %v491
  %v493 = vpop.f32.mrb[0].mxu0
  %v494 = vadd.f32 %v84, %v493
  %495 = vmatprep.mubr.f32.mxu0 0.0
  %496 = vmatmul.mubr.f32.gmra.mrb[0].mxu0 %v207
  %v497 = vpop.f32.mrb[0].mxu0
  %v498 = vadd.f32 %v80, %v497
  %v499 = vpop.f32.mrb[0].mxu0
  %v500 = vadd.f32 %v84, %v499
  %501 = vmatprep.mubr.f32.mxu0 0.0
  %502 = vmatmul.mubr.f32.gmra.mrb[0].mxu0 %v210
  %v503 = vpop.f32.mrb[0].mxu0
  %v504 = vadd.f32 %v80, %v503
  %v505 = vpop.f32.mrb[0].mxu0
  %v506 = vadd.f32 %v84, %v505
  %507 = vmatprep.mubr.f32.mxu0 0.0
  %508 = vmatmul.mubr.f32.gmra.mrb[0].mxu0 %v213
  %v509 = vpop.f32.mrb[0].mxu0
  %v510 = vadd.f32 %v80, %v509
  %v511 = vpop.f32.mrb[0].mxu0
  %v512 = vadd.f32 %v84, %v511
  %513 = vdwg.mxu0
  %514 = vmatprep.subr.mxu0 %v62
  %515 = vmatpush1.msra.mxu0 %v61
  %516 = vmatprep.subr.mxu0 %v66
  %517 = vmatpush1.msra.mxu0 %v65
  %518 = vmatprep.subr.mxu0 %v70
  %519 = vmatpush1.msra.mxu0 %v69
  %520 = vmatprep.subr.mxu0 %v74
  %521 = vmatpush1.msra.mxu0 %v73
  %522 = vmatprep.subr.mxu0 0.0
  %523 = vmatpush1.msra.mxu0 0.0
  %524 = vmatprep.subr.mxu0 0.0
  %525 = vmatpush1.msra.mxu0 0.0
  %526 = vmatprep.subr.mxu0 0.0
  %527 = vmatpush1.msra.mxu0 0.0
  %528 = vmatprep.subr.mxu0 0.0
  %529 = vmatpush1.msra.mxu0 0.0
  %530 = vmatprep.subr.mxu0 0.0
  %531 = vmatpush1.msra.mxu0 0.0
  %532 = vmatprep.subr.mxu0 0.0
  %533 = vmatpush1.msra.mxu0 0.0
  %534 = vmatprep.subr.mxu0 0.0
  %535 = vmatpush1.msra.mxu0 0.0
  %536 = vmatprep.subr.mxu0 0.0
  %537 = vmatpush1.msra.mxu0 0.0
  %538 = vmatprep.subr.mxu0 0.0
  %539 = vmatpush1.msra.mxu0 0.0
  %540 = vmatprep.subr.mxu0 0.0
  %541 = vmatpush1.msra.mxu0 0.0
  %542 = vmatprep.subr.mxu0 0.0
  %543 = vmatpush1.msra.mxu0 0.0
  %544 = vmatprep.subr.mxu0 0.0
  %545 = vmatpush1.msra.mxu0 0.0
  %546 = vmatprep.subr.mxu0 0.0
  %547 = vmatpush1.msra.mxu0 0.0
  %548 = vmatprep.subr.mxu0 0.0
  %549 = vmatpush1.msra.mxu0 0.0
  %550 = vmatprep.subr.mxu0 0.0
  %551 = vmatpush1.msra.mxu0 0.0
  %552 = vmatprep.subr.mxu0 0.0
  %553 = vmatpush1.msra.mxu0 0.0
  %554 = vmatprep.subr.mxu0 0.0
  %555 = vmatpush1.msra.mxu0 0.0
  %556 = vmatprep.subr.mxu0 0.0
  %557 = vmatpush1.msra.mxu0 0.0
  %558 = vmatprep.subr.mxu0 0.0
  %559 = vmatpush1.msra.mxu0 0.0
  %560 = vmatprep.subr.mxu0 0.0
  %561 = vmatpush1.msra.mxu0 0.0
  %562 = vmatprep.subr.mxu0 0.0
  %563 = vmatpush1.msra.mxu0 0.0
  %564 = vmatprep.subr.mxu0 0.0
  %565 = vmatpush1.msra.mxu0 0.0
  %566 = vmatprep.subr.mxu0 0.0
  %567 = vmatpush1.msra.mxu0 0.0
  %568 = vmatprep.subr.mxu0 0.0
  %569 = vmatpush1.msra.mxu0 0.0
  %570 = vmatprep.subr.mxu0 0.0
  %571 = vmatpush1.msra.mxu0 0.0
  %572 = vmatprep.subr.mxu0 0.0
  %573 = vmatpush1.msra.mxu0 0.0
  %574 = vmatprep.subr.mxu0 0.0
  %575 = vmatpush1.msra.mxu0 0.0
  %576 = vmatprep.subr.mxu0 0.0
  %577 = vmatpush1.msra.mxu0 0.0
  %578 = vmatprep.mubr.f32.mxu0 0.0
  %579 = vmatmul.mubr.f32.gmra.mrb[0].mxu0 %v99
  %v580 = vpop.f32.mrb[0].mxu0
  %v581 = vadd.f32 %v88, %v580
  %v582 = vpop.f32.mrb[0].mxu0
  %v583 = vadd.f32 %v92, %v582
  %584 = vmatprep.mubr.f32.mxu0 0.0
  %585 = vmatmul.mubr.f32.gmra.mrb[0].mxu0 %v102
  %v586 = vpop.f32.mrb[0].mxu0
  %v587 = vadd.f32 %v88, %v586
  %v588 = vpop.f32.mrb[0].mxu0
  %v589 = vadd.f32 %v92, %v588
  %590 = vmatprep.mubr.f32.mxu0 0.0
  %591 = vmatmul.mubr.f32.gmra.mrb[0].mxu0 %v105
  %v592 = vpop.f32.mrb[0].mxu0
  %v593 = vadd.f32 %v88, %v592
  %v594 = vpop.f32.mrb[0].mxu0
  %v595 = vadd.f32 %v92, %v594
  %596 = vmatprep.mubr.f32.mxu0 0.0
  %597 = vmatmul.mubr.f32.gmra.mrb[0].mxu0 %v108
  %v598 = vpop.f32.mrb[0].mxu0
  %v599 = vadd.f32 %v88, %v598
  %v600 = vpop.f32.mrb[0].mxu0
  %v601 = vadd.f32 %v92, %v600
  %602 = vmatprep.mubr.f32.mxu0 0.0
  %603 = vmatmul.mubr.f32.gmra.mrb[0].mxu0 %v111
  %v604 = vpop.f32.mrb[0].mxu0
  %v605 = vadd.f32 %v88, %v604
  %v606 = vpop.f32.mrb[0].mxu0
  %v607 = vadd.f32 %v92, %v606
  %608 = vmatprep.mubr.f32.mxu0 0.0
  %609 = vmatmul.mubr.f32.gmra.mrb[0].mxu0 %v114
  %v610 = vpop.f32.mrb[0].mxu0
  %v611 = vadd.f32 %v88, %v610
  %v612 = vpop.f32.mrb[0].mxu0
  %v613 = vadd.f32 %v92, %v612
  %614 = vmatprep.mubr.f32.mxu0 0.0
  %615 = vmatmul.mubr.f32.gmra.mrb[0].mxu0 %v117
  %v616 = vpop.f32.mrb[0].mxu0
  %v617 = vadd.f32 %v88, %v616
  %v618 = vpop.f32.mrb[0].mxu0
  %v619 = vadd.f32 %v92, %v618
  %620 = vmatprep.mubr.f32.mxu0 0.0
  %621 = vmatmul.mubr.f32.gmra.mrb[0].mxu0 %v120
  %v622 = vpop.f32.mrb[0].mxu0
  %v623 = vadd.f32 %v88, %v622
  %v624 = vpop.f32.mrb[0].mxu0
  %v625 = vadd.f32 %v92, %v624
  %626 = vmatprep.mubr.f32.mxu0 0.0
  %627 = vmatmul.mubr.f32.gmra.mrb[0].mxu0 %v123
  %v628 = vpop.f32.mrb[0].mxu0
  %v629 = vadd.f32 %v88, %v628
  %v630 = vpop.f32.mrb[0].mxu0
  %v631 = vadd.f32 %v92, %v630
  %632 = vmatprep.mubr.f32.mxu0 0.0
  %633 = vmatmul.mubr.f32.gmra.mrb[0].mxu0 %v126
  %v634 = vpop.f32.mrb[0].mxu0
  %v635 = vadd.f32 %v88, %v634
  %v636 = vpop.f32.mrb[0].mxu0
  %v637 = vadd.f32 %v92, %v636
  %638 = vmatprep.mubr.f32.mxu0 0.0
  %639 = vmatmul.mubr.f32.gmra.mrb[0].mxu0 %v129
  %v640 = vpop.f32.mrb[0].mxu0
  %v641 = vadd.f32 %v88, %v640
  %v642 = vpop.f32.mrb[0].mxu0
  %v643 = vadd.f32 %v92, %v642
  %644 = vmatprep.mubr.f32.mxu0 0.0
  %645 = vmatmul.mubr.f32.gmra.mrb[0].mxu0 %v132
  %v646 = vpop.f32.mrb[0].mxu0
  %v647 = vadd.f32 %v88, %v646
  %v648 = vpop.f32.mrb[0].mxu0
  %v649 = vadd.f32 %v92, %v648
  %650 = vmatprep.mubr.f32.mxu0 0.0
  %651 = vmatmul.mubr.f32.gmra.mrb[0].mxu0 %v135
  %v652 = vpop.f32.mrb[0].mxu0
  %v653 = vadd.f32 %v88, %v652
  %v654 = vpop.f32.mrb[0].mxu0
  %v655 = vadd.f32 %v92, %v654
  %656 = vmatprep.mubr.f32.mxu0 0.0
  %657 = vmatmul.mubr.f32.gmra.mrb[0].mxu0 %v138
  %v658 = vpop.f32.mrb[0].mxu0
  %v659 = vadd.f32 %v88, %v658
  %v660 = vpop.f32.mrb[0].mxu0
  %v661 = vadd.f32 %v92, %v660
  %662 = vmatprep.mubr.f32.mxu0 0.0
  %663 = vmatmul.mubr.f32.gmra.mrb[0].mxu0 %v141
  %v664 = vpop.f32.mrb[0].mxu0
  %v665 = vadd.f32 %v88, %v664
  %v666 = vpop.f32.mrb[0].mxu0
  %v667 = vadd.f32 %v92, %v666
  %668 = vmatprep.mubr.f32.mxu0 0.0
  %669 = vmatmul.mubr.f32.gmra.mrb[0].mxu0 %v144
  %v670 = vpop.f32.mrb[0].mxu0
  %v671 = vadd.f32 %v88, %v670
  %v672 = vpop.f32.mrb[0].mxu0
  %v673 = vadd.f32 %v92, %v672
  %674 = vmatprep.mubr.f32.mxu0 0.0
  %675 = vmatmul.mubr.f32.gmra.mrb[0].mxu0 %v147
  %v676 = vpop.f32.mrb[0].mxu0
  %v677 = vadd.f32 %v88, %v676
  %v678 = vpop.f32.mrb[0].mxu0
  %v679 = vadd.f32 %v92, %v678
  %680 = vmatprep.mubr.f32.mxu0 0.0
  %681 = vmatmul.mubr.f32.gmra.mrb[0].mxu0 %v150
  %v682 = vpop.f32.mrb[0].mxu0
  %v683 = vadd.f32 %v88, %v682
  %v684 = vpop.f32.mrb[0].mxu0
  %v685 = vadd.f32 %v92, %v684
  %686 = vmatprep.mubr.f32.mxu0 0.0
  %687 = vmatmul.mubr.f32.gmra.mrb[0].mxu0 %v153
  %v688 = vpop.f32.mrb[0].mxu0
  %v689 = vadd.f32 %v88, %v688
  %v690 = vpop.f32.mrb[0].mxu0
  %v691 = vadd.f32 %v92, %v690
  %692 = vmatprep.mubr.f32.mxu0 0.0
  %693 = vmatmul.mubr.f32.gmra.mrb[0].mxu0 %v156
  %v694 = vpop.f32.mrb[0].mxu0
  %v695 = vadd.f32 %v88, %v694
  %v696 = vpop.f32.mrb[0].mxu0
  %v697 = vadd.f32 %v92, %v696
  %698 = vmatprep.mubr.f32.mxu0 0.0
  %699 = vmatmul.mubr.f32.gmra.mrb[0].mxu0 %v159
  %v700 = vpop.f32.mrb[0].mxu0
  %v701 = vadd.f32 %v88, %v700
  %v702 = vpop.f32.mrb[0].mxu0
  %v703 = vadd.f32 %v92, %v702
  %704 = vmatprep.mubr.f32.mxu0 0.0
  %705 = vmatmul.mubr.f32.gmra.mrb[0].mxu0 %v162
  %v706 = vpop.f32.mrb[0].mxu0
  %v707 = vadd.f32 %v88, %v706
  %v708 = vpop.f32.mrb[0].mxu0
  %v709 = vadd.f32 %v92, %v708
  %710 = vmatprep.mubr.f32.mxu0 0.0
  %711 = vmatmul.mubr.f32.gmra.mrb[0].mxu0 %v165
  %v712 = vpop.f32.mrb[0].mxu0
  %v713 = vadd.f32 %v88, %v712
  %v714 = vpop.f32.mrb[0].mxu0
  %v715 = vadd.f32 %v92, %v714
  %716 = vmatprep.mubr.f32.mxu0 0.0
  %717 = vmatmul.mubr.f32.gmra.mrb[0].mxu0 %v168
  %v718 = vpop.f32.mrb[0].mxu0
  %v719 = vadd.f32 %v88, %v718
  %v720 = vpop.f32.mrb[0].mxu0
  %v721 = vadd.f32 %v92, %v720
  %722 = vmatprep.mubr.f32.mxu0 0.0
  %723 = vmatmul.mubr.f32.gmra.mrb[0].mxu0 %v171
  %v724 = vpop.f32.mrb[0].mxu0
  %v725 = vadd.f32 %v88, %v724
  %v726 = vpop.f32.mrb[0].mxu0
  %v727 = vadd.f32 %v92, %v726
  %728 = vmatprep.mubr.f32.mxu0 0.0
  %729 = vmatmul.mubr.f32.gmra.mrb[0].mxu0 %v174
  %v730 = vpop.f32.mrb[0].mxu0
  %v731 = vadd.f32 %v88, %v730
  %v732 = vpop.f32.mrb[0].mxu0
  %v733 = vadd.f32 %v92, %v732
  %734 = vmatprep.mubr.f32.mxu0 0.0
  %735 = vmatmul.mubr.f32.gmra.mrb[0].mxu0 %v177
  %v736 = vpop.f32.mrb[0].mxu0
  %v737 = vadd.f32 %v88, %v736
  %v738 = vpop.f32.mrb[0].mxu0
  %v739 = vadd.f32 %v92, %v738
  %740 = vmatprep.mubr.f32.mxu0 0.0
  %741 = vmatmul.mubr.f32.gmra.mrb[0].mxu0 %v180
  %v742 = vpop.f32.mrb[0].mxu0
  %v743 = vadd.f32 %v88, %v742
  %v744 = vpop.f32.mrb[0].mxu0
  %v745 = vadd.f32 %v92, %v744
  %746 = vmatprep.mubr.f32.mxu0 0.0
  %747 = vmatmul.mubr.f32.gmra.mrb[0].mxu0 %v183
  %v748 = vpop.f32.mrb[0].mxu0
  %v749 = vadd.f32 %v88, %v748
  %v750 = vpop.f32.mrb[0].mxu0
  %v751 = vadd.f32 %v92, %v750
  %752 = vmatprep.mubr.f32.mxu0 0.0
  %753 = vmatmul.mubr.f32.gmra.mrb[0].mxu0 %v186
  %v754 = vpop.f32.mrb[0].mxu0
  %v755 = vadd.f32 %v88, %v754
  %v756 = vpop.f32.mrb[0].mxu0
  %v757 = vadd.f32 %v92, %v756
  %758 = vmatprep.mubr.f32.mxu0 0.0
  %759 = vmatmul.mubr.f32.gmra.mrb[0].mxu0 %v189
  %v760 = vpop.f32.mrb[0].mxu0
  %v761 = vadd.f32 %v88, %v760
  %v762 = vpop.f32.mrb[0].mxu0
  %v763 = vadd.f32 %v92, %v762
  %764 = vmatprep.mubr.f32.mxu0 0.0
  %765 = vmatmul.mubr.f32.gmra.mrb[0].mxu0 %v192
  %v766 = vpop.f32.mrb[0].mxu0
  %v767 = vadd.f32 %v88, %v766
  %v768 = vpop.f32.mrb[0].mxu0
  %v769 = vadd.f32 %v92, %v768
  %770 = vmatprep.mubr.f32.mxu0 0.0
  %771 = vmatmul.mubr.f32.gmra.mrb[0].mxu0 %v195
  %v772 = vpop.f32.mrb[0].mxu0
  %v773 = vadd.f32 %v88, %v772
  %v774 = vpop.f32.mrb[0].mxu0
  %v775 = vadd.f32 %v92, %v774
  %776 = vmatprep.mubr.f32.mxu0 0.0
  %777 = vmatmul.mubr.f32.gmra.mrb[0].mxu0 %v198
  %v778 = vpop.f32.mrb[0].mxu0
  %v779 = vadd.f32 %v88, %v778
  %v780 = vpop.f32.mrb[0].mxu0
  %v781 = vadd.f32 %v92, %v780
  %782 = vmatprep.mubr.f32.mxu0 0.0
  %783 = vmatmul.mubr.f32.gmra.mrb[0].mxu0 %v201
  %v784 = vpop.f32.mrb[0].mxu0
  %v785 = vadd.f32 %v88, %v784
  %v786 = vpop.f32.mrb[0].mxu0
  %v787 = vadd.f32 %v92, %v786
  %788 = vmatprep.mubr.f32.mxu0 0.0
  %789 = vmatmul.mubr.f32.gmra.mrb[0].mxu0 %v204
  %v790 = vpop.f32.mrb[0].mxu0
  %v791 = vadd.f32 %v88, %v790
  %v792 = vpop.f32.mrb[0].mxu0
  %v793 = vadd.f32 %v92, %v792
  %794 = vmatprep.mubr.f32.mxu0 0.0
  %795 = vmatmul.mubr.f32.gmra.mrb[0].mxu0 %v207
  %v796 = vpop.f32.mrb[0].mxu0
  %v797 = vadd.f32 %v88, %v796
  %v798 = vpop.f32.mrb[0].mxu0
  %v799 = vadd.f32 %v92, %v798
  %800 = vmatprep.mubr.f32.mxu0 0.0
  %801 = vmatmul.mubr.f32.gmra.mrb[0].mxu0 %v210
  %v802 = vpop.f32.mrb[0].mxu0
  %v803 = vadd.f32 %v88, %v802
  %v804 = vpop.f32.mrb[0].mxu0
  %v805 = vadd.f32 %v92, %v804
  %806 = vmatprep.mubr.f32.mxu0 0.0
  %807 = vmatmul.mubr.f32.gmra.mrb[0].mxu0 %v213
  %v808 = vpop.f32.mrb[0].mxu0
  %v809 = vadd.f32 %v88, %v808
  %v810 = vpop.f32.mrb[0].mxu0
  %v811 = vadd.f32 %v92, %v810
  %812 = vdwg.mxu0
  %813 = vst [vmem:[#allocation2] sm:$0xff] %v282
  %814 = vst [vmem:[#allocation2 + $0x8] sm:$0xff] %v284
  %815 = vst [vmem:[#allocation2 + $0x10] sm:$0xff] %v581
  %816 = vst [vmem:[#allocation2 + $0x18] sm:$0xff] %v583
  %817 = vst [vmem:[#allocation2 + $0x20] sm:$0xff] %v288
  %818 = vst [vmem:[#allocation2 + $0x28] sm:$0xff] %v290
  %819 = vst [vmem:[#allocation2 + $0x30] sm:$0xff] %v587
  %820 = vst [vmem:[#allocation2 + $0x38] sm:$0xff] %v589
  %821 = vst [vmem:[#allocation2 + $0x40] sm:$0xff] %v294
  %822 = vst [vmem:[#allocation2 + $0x48] sm:$0xff] %v296
  %823 = vst [vmem:[#allocation2 + $0x50] sm:$0xff] %v593
  %824 = vst [vmem:[#allocation2 + $0x58] sm:$0xff] %v595
  %825 = vst [vmem:[#allocation2 + $0x60] sm:$0xff] %v300
  %826 = vst [vmem:[#allocation2 + $0x68] sm:$0xff] %v302
  %827 = vst [vmem:[#allocation2 + $0x70] sm:$0xff] %v599
  %828 = vst [vmem:[#allocation2 + $0x78] sm:$0xff] %v601
  %829 = vst [vmem:[#allocation2 + $0x80] sm:$0xff] %v306
  %830 = vst [vmem:[#allocation2 + $0x88] sm:$0xff] %v308
  %831 = vst [vmem:[#allocation2 + $0x90] sm:$0xff] %v605
  %832 = vst [vmem:[#allocation2 + $0x98] sm:$0xff] %v607
  %833 = vst [vmem:[#allocation2 + $0xa0] sm:$0xff] %v312
  %834 = vst [vmem:[#allocation2 + $0xa8] sm:$0xff] %v314
  %835 = vst [vmem:[#allocation2 + $0xb0] sm:$0xff] %v611
  %836 = vst [vmem:[#allocation2 + $0xb8] sm:$0xff] %v613
  %837 = vst [vmem:[#allocation2 + $0xc0] sm:$0xff] %v318
  %838 = vst [vmem:[#allocation2 + $0xc8] sm:$0xff] %v320
  %839 = vst [vmem:[#allocation2 + $0xd0] sm:$0xff] %v617
  %840 = vst [vmem:[#allocation2 + $0xd8] sm:$0xff] %v619
  %841 = vst [vmem:[#allocation2 + $0xe0] sm:$0xff] %v324
  %842 = vst [vmem:[#allocation2 + $0xe8] sm:$0xff] %v326
  %843 = vst [vmem:[#allocation2 + $0xf0] sm:$0xff] %v623
  %844 = vst [vmem:[#allocation2 + $0xf8] sm:$0xff] %v625
  %845 = vst [vmem:[#allocation2 + $0x100] sm:$0xff] %v330
  %846 = vst [vmem:[#allocation2 + $0x108] sm:$0xff] %v332
  %847 = vst [vmem:[#allocation2 + $0x110] sm:$0xff] %v629
  %848 = vst [vmem:[#allocation2 + $0x118] sm:$0xff] %v631
  %849 = vst [vmem:[#allocation2 + $0x120] sm:$0xff] %v336
  %850 = vst [vmem:[#allocation2 + $0x128] sm:$0xff] %v338
  %851 = vst [vmem:[#allocation2 + $0x130] sm:$0xff] %v635
  %852 = vst [vmem:[#allocation2 + $0x138] sm:$0xff] %v637
  %853 = vst [vmem:[#allocation2 + $0x140] sm:$0xff] %v342
  %854 = vst [vmem:[#allocation2 + $0x148] sm:$0xff] %v344
  %855 = vst [vmem:[#allocation2 + $0x150] sm:$0xff] %v641
  %856 = vst [vmem:[#allocation2 + $0x158] sm:$0xff] %v643
  %857 = vst [vmem:[#allocation2 + $0x160] sm:$0xff] %v348
  %858 = vst [vmem:[#allocation2 + $0x168] sm:$0xff] %v350
  %859 = vst [vmem:[#allocation2 + $0x170] sm:$0xff] %v647
  %860 = vst [vmem:[#allocation2 + $0x178] sm:$0xff] %v649
  %861 = vst [vmem:[#allocation2 + $0x180] sm:$0xff] %v354
  %862 = vst [vmem:[#allocation2 + $0x188] sm:$0xff] %v356
  %863 = vst [vmem:[#allocation2 + $0x190] sm:$0xff] %v653
  %864 = vst [vmem:[#allocation2 + $0x198] sm:$0xff] %v655
  %865 = vst [vmem:[#allocation2 + $0x1a0] sm:$0xff] %v360
  %866 = vst [vmem:[#allocation2 + $0x1a8] sm:$0xff] %v362
  %867 = vst [vmem:[#allocation2 + $0x1b0] sm:$0xff] %v659
  %868 = vst [vmem:[#allocation2 + $0x1b8] sm:$0xff] %v661
  %869 = vst [vmem:[#allocation2 + $0x1c0] sm:$0xff] %v366
  %870 = vst [vmem:[#allocation2 + $0x1c8] sm:$0xff] %v368
  %871 = vst [vmem:[#allocation2 + $0x1d0] sm:$0xff] %v665
  %872 = vst [vmem:[#allocation2 + $0x1d8] sm:$0xff] %v667
  %873 = vst [vmem:[#allocation2 + $0x1e0] sm:$0xff] %v372
  %874 = vst [vmem:[#allocation2 + $0x1e8] sm:$0xff] %v374
  %875 = vst [vmem:[#allocation2 + $0x1f0] sm:$0xff] %v671
  %876 = vst [vmem:[#allocation2 + $0x1f8] sm:$0xff] %v673
  %877 = vst [vmem:[#allocation2 + $0x200] sm:$0xff] %v378
  %878 = vst [vmem:[#allocation2 + $0x208] sm:$0xff] %v380
  %879 = vst [vmem:[#allocation2 + $0x210] sm:$0xff] %v677
  %880 = vst [vmem:[#allocation2 + $0x218] sm:$0xff] %v679
  %881 = vst [vmem:[#allocation2 + $0x220] sm:$0xff] %v384
  %882 = vst [vmem:[#allocation2 + $0x228] sm:$0xff] %v386
  %883 = vst [vmem:[#allocation2 + $0x230] sm:$0xff] %v683
  %884 = vst [vmem:[#allocation2 + $0x238] sm:$0xff] %v685
  %885 = vst [vmem:[#allocation2 + $0x240] sm:$0xff] %v390
  %886 = vst [vmem:[#allocation2 + $0x248] sm:$0xff] %v392
  %887 = vst [vmem:[#allocation2 + $0x250] sm:$0xff] %v689
  %888 = vst [vmem:[#allocation2 + $0x258] sm:$0xff] %v691
  %889 = vst [vmem:[#allocation2 + $0x260] sm:$0xff] %v396
  %890 = vst [vmem:[#allocation2 + $0x268] sm:$0xff] %v398
  %891 = vst [vmem:[#allocation2 + $0x270] sm:$0xff] %v695
  %892 = vst [vmem:[#allocation2 + $0x278] sm:$0xff] %v697
  %893 = vst [vmem:[#allocation2 + $0x280] sm:$0xff] %v402
  %894 = vst [vmem:[#allocation2 + $0x288] sm:$0xff] %v404
  %895 = vst [vmem:[#allocation2 + $0x290] sm:$0xff] %v701
  %896 = vst [vmem:[#allocation2 + $0x298] sm:$0xff] %v703
  %897 = vst [vmem:[#allocation2 + $0x2a0] sm:$0xff] %v408
  %898 = vst [vmem:[#allocation2 + $0x2a8] sm:$0xff] %v410
  %899 = vst [vmem:[#allocation2 + $0x2b0] sm:$0xff] %v707
  %900 = vst [vmem:[#allocation2 + $0x2b8] sm:$0xff] %v709
  %901 = vst [vmem:[#allocation2 + $0x2c0] sm:$0xff] %v414
  %902 = vst [vmem:[#allocation2 + $0x2c8] sm:$0xff] %v416
  %903 = vst [vmem:[#allocation2 + $0x2d0] sm:$0xff] %v713
  %904 = vst [vmem:[#allocation2 + $0x2d8] sm:$0xff] %v715
  %905 = vst [vmem:[#allocation2 + $0x2e0] sm:$0xff] %v420
  %906 = vst [vmem:[#allocation2 + $0x2e8] sm:$0xff] %v422
  %907 = vst [vmem:[#allocation2 + $0x2f0] sm:$0xff] %v719
  %908 = vst [vmem:[#allocation2 + $0x2f8] sm:$0xff] %v721
  %909 = vst [vmem:[#allocation2 + $0x300] sm:$0xff] %v426
  %910 = vst [vmem:[#allocation2 + $0x308] sm:$0xff] %v428
  %911 = vst [vmem:[#allocation2 + $0x310] sm:$0xff] %v725
  %912 = vst [vmem:[#allocation2 + $0x318] sm:$0xff] %v727
  %913 = vst [vmem:[#allocation2 + $0x320] sm:$0xff] %v432
  %914 = vst [vmem:[#allocation2 + $0x328] sm:$0xff] %v434
  %915 = vst [vmem:[#allocation2 + $0x330] sm:$0xff] %v731
  %916 = vst [vmem:[#allocation2 + $0x338] sm:$0xff] %v733
  %917 = vst [vmem:[#allocation2 + $0x340] sm:$0xff] %v438
  %918 = vst [vmem:[#allocation2 + $0x348] sm:$0xff] %v440
  %919 = vst [vmem:[#allocation2 + $0x350] sm:$0xff] %v737
  %920 = vst [vmem:[#allocation2 + $0x358] sm:$0xff] %v739
  %921 = vst [vmem:[#allocation2 + $0x360] sm:$0xff] %v444
  %922 = vst [vmem:[#allocation2 + $0x368] sm:$0xff] %v446
  %923 = vst [vmem:[#allocation2 + $0x370] sm:$0xff] %v743
  %924 = vst [vmem:[#allocation2 + $0x378] sm:$0xff] %v745
  %925 = vst [vmem:[#allocation2 + $0x380] sm:$0xff] %v450
  %926 = vst [vmem:[#allocation2 + $0x388] sm:$0xff] %v452
  %927 = vst [vmem:[#allocation2 + $0x390] sm:$0xff] %v749
  %928 = vst [vmem:[#allocation2 + $0x398] sm:$0xff] %v751
  %929 = vst [vmem:[#allocation2 + $0x3a0] sm:$0xff] %v456
  %930 = vst [vmem:[#allocation2 + $0x3a8] sm:$0xff] %v458
  %931 = vst [vmem:[#allocation2 + $0x3b0] sm:$0xff] %v755
  %932 = vst [vmem:[#allocation2 + $0x3b8] sm:$0xff] %v757
  %933 = vst [vmem:[#allocation2 + $0x3c0] sm:$0xff] %v462
  %934 = vst [vmem:[#allocation2 + $0x3c8] sm:$0xff] %v464
  %935 = vst [vmem:[#allocation2 + $0x3d0] sm:$0xff] %v761
  %936 = vst [vmem:[#allocation2 + $0x3d8] sm:$0xff] %v763
  %937 = vst [vmem:[#allocation2 + $0x3e0] sm:$0xff] %v468
  %938 = vst [vmem:[#allocation2 + $0x3e8] sm:$0xff] %v470
  %939 = vst [vmem:[#allocation2 + $0x3f0] sm:$0xff] %v767
  %940 = vst [vmem:[#allocation2 + $0x3f8] sm:$0xff] %v769
  %941 = vst [vmem:[#allocation2 + $0x400] sm:$0xff] %v474
  %942 = vst [vmem:[#allocation2 + $0x408] sm:$0xff] %v476
  %943 = vst [vmem:[#allocation2 + $0x410] sm:$0xff] %v773
  %944 = vst [vmem:[#allocation2 + $0x418] sm:$0xff] %v775
  %945 = vst [vmem:[#allocation2 + $0x420] sm:$0xff] %v480
  %946 = vst [vmem:[#allocation2 + $0x428] sm:$0xff] %v482
  %947 = vst [vmem:[#allocation2 + $0x430] sm:$0xff] %v779
  %948 = vst [vmem:[#allocation2 + $0x438] sm:$0xff] %v781
  %949 = vst [vmem:[#allocation2 + $0x440] sm:$0xff] %v486
  %950 = vst [vmem:[#allocation2 + $0x448] sm:$0xff] %v488
  %951 = vst [vmem:[#allocation2 + $0x450] sm:$0xff] %v785
  %952 = vst [vmem:[#allocation2 + $0x458] sm:$0xff] %v787
  %953 = vst [vmem:[#allocation2 + $0x460] sm:$0xff] %v492
  %954 = vst [vmem:[#allocation2 + $0x468] sm:$0xff] %v494
  %955 = vst [vmem:[#allocation2 + $0x470] sm:$0xff] %v791
  %956 = vst [vmem:[#allocation2 + $0x478] sm:$0xff] %v793
  %957 = vst [vmem:[#allocation2 + $0x480] sm:$0xff] %v498
  %958 = vst [vmem:[#allocation2 + $0x488] sm:$0xff] %v500
  %959 = vst [vmem:[#allocation2 + $0x490] sm:$0xff] %v797
  %960 = vst [vmem:[#allocation2 + $0x498] sm:$0xff] %v799
  %961 = vst [vmem:[#allocation2 + $0x4a0] sm:$0xff] %v504
  %962 = vst [vmem:[#allocation2 + $0x4a8] sm:$0xff] %v506
  %963 = vst [vmem:[#allocation2 + $0x4b0] sm:$0xff] %v803
  %964 = vst [vmem:[#allocation2 + $0x4b8] sm:$0xff] %v805
  %965 = vst [vmem:[#allocation2 + $0x4c0] sm:$0xff] %v510
  %966 = vst [vmem:[#allocation2 + $0x4c8] sm:$0xff] %v512
  %967 = vst [vmem:[#allocation2 + $0x4d0] sm:$0xff] %v809
  %968 = vst [vmem:[#allocation2 + $0x4d8] sm:$0xff] %v811
  %v969 = vld [vmem:[%s3] sm:$0xff]
  %v970 = vld [vmem:[%s3 + $0x8] sm:$0xff]
  %v971 = vld [vmem:[%s3 + $0x10] sm:$0xff]
  %v972 = vld [vmem:[%s3 + $0x18] sm:$0xff]
  %v973 = vld [vmem:[%s3 + $0x20] sm:$0xff]
  %v974 = vld [vmem:[%s3 + $0x28] sm:$0xff]
  %v975 = vld [vmem:[%s3 + $0x30] sm:$0xff]
  %v976 = vld [vmem:[%s3 + $0x38] sm:$0xff]
  %v977 = vld [vmem:[%s3 + $0x40] sm:$0xff]
  %v978 = vld [vmem:[%s3 + $0x48] sm:$0xff]
  %v979 = vld [vmem:[%s3 + $0x50] sm:$0xff]
  %v980 = vld [vmem:[%s3 + $0x58] sm:$0xff]
  %v981 = vld [vmem:[%s3 + $0x60] sm:$0xff]
  %v982 = vld [vmem:[%s3 + $0x68] sm:$0xff]
  %v983 = vld [vmem:[%s3 + $0x70] sm:$0xff]
  %v984 = vld [vmem:[%s3 + $0x78] sm:$0xff]
  %v985 = vld [vmem:[%s3 + $0x80] sm:$0xff]
  %v986 = vld [vmem:[%s3 + $0x88] sm:$0xff]
  %v987 = vld [vmem:[%s3 + $0x90] sm:$0xff]
  %v988 = vld [vmem:[%s3 + $0x98] sm:$0xff]
  %v989 = vld [vmem:[%s3 + $0xa0] sm:$0xff]
  %v990 = vld [vmem:[%s3 + $0xa8] sm:$0xff]
  %v991 = vld [vmem:[%s3 + $0xb0] sm:$0xff]
  %v992 = vld [vmem:[%s3 + $0xb8] sm:$0xff]
  %v993 = vld [vmem:[%s3 + $0xc0] sm:$0xff]
  %v994 = vld [vmem:[%s3 + $0xc8] sm:$0xff]
  %v995 = vld [vmem:[%s3 + $0xd0] sm:$0xff]
  %v996 = vld [vmem:[%s3 + $0xd8] sm:$0xff]
  %v997 = vld [vmem:[%s3 + $0xe0] sm:$0xff]
  %v998 = vld [vmem:[%s3 + $0xe8] sm:$0xff]
  %v999 = vld [vmem:[%s3 + $0xf0] sm:$0xff]
  %v1000 = vld [vmem:[%s3 + $0xf8] sm:$0xff]
  %v1001 = vld [vmem:[%s3 + $0x100] sm:$0xff]
  %v1002 = vld [vmem:[%s3 + $0x108] sm:$0xff]
  %v1003 = vld [vmem:[%s3 + $0x110] sm:$0xff]
  %v1004 = vld [vmem:[%s3 + $0x118] sm:$0xff]
  %v1005 = vld [vmem:[%s3 + $0x120] sm:$0xff]
  %v1006 = vld [vmem:[%s3 + $0x128] sm:$0xff]
  %v1007 = vld [vmem:[%s3 + $0x130] sm:$0xff]
  %v1008 = vld [vmem:[%s3 + $0x138] sm:$0xff]
  %v1009 = vld [vmem:[%s3 + $0x140] sm:$0xff]
  %v1010 = vld [vmem:[%s3 + $0x148] sm:$0xff]
  %v1011 = vld [vmem:[%s3 + $0x150] sm:$0xff]
  %v1012 = vld [vmem:[%s3 + $0x158] sm:$0xff]
  %v1013 = vld [vmem:[%s3 + $0x160] sm:$0xff]
  %v1014 = vld [vmem:[%s3 + $0x168] sm:$0xff]
  %v1015 = vld [vmem:[%s3 + $0x170] sm:$0xff]
  %v1016 = vld [vmem:[%s3 + $0x178] sm:$0xff]
  %v1017 = vld [vmem:[%s3 + $0x180] sm:$0xff]
  %v1018 = vld [vmem:[%s3 + $0x188] sm:$0xff]
  %v1019 = vld [vmem:[%s3 + $0x190] sm:$0xff]
  %v1020 = vld [vmem:[%s3 + $0x198] sm:$0xff]
  %v1021 = vld [vmem:[%s3 + $0x1a0] sm:$0xff]
  %v1022 = vld [vmem:[%s3 + $0x1a8] sm:$0xff]
  %v1023 = vld [vmem:[%s3 + $0x1b0] sm:$0xff]
  %v1024 = vld [vmem:[%s3 + $0x1b8] sm:$0xff]
  %v1025 = vld [vmem:[%s3 + $0x1c0] sm:$0xff]
  %v1026 = vld [vmem:[%s3 + $0x1c8] sm:$0xff]
  %v1027 = vld [vmem:[%s3 + $0x1d0] sm:$0xff]
  %v1028 = vld [vmem:[%s3 + $0x1d8] sm:$0xff]
  %v1029 = vld [vmem:[%s3 + $0x1e0] sm:$0xff]
  %v1030 = vld [vmem:[%s3 + $0x1e8] sm:$0xff]
  %v1031 = vld [vmem:[%s3 + $0x1f0] sm:$0xff]
  %v1032 = vld [vmem:[%s3 + $0x1f8] sm:$0xff]
  %v1033 = vld [vmem:[%s4] sm:$0x1]
  %v1035 = vlaneseq
  %v1036 = vshrl.u32 %v1035, 7
  %v1037 = vsub.s32 0, %v1036
  %v1038 = vrot.slane %v1033, %v1037
  %v1040 = vld [vmem:[#allocation2] sm:$0xff]
  %v1041 = vld [vmem:[#allocation2 + $0x8] sm:$0xff]
  %v1042 = vld [vmem:[#allocation2 + $0x10] sm:$0xff]
  %v1043 = vld [vmem:[#allocation2 + $0x18] sm:$0xff]
  %v1044 = vadd.f32 %v1040, 0.0
  %v1045 = vadd.f32 %v1041, 0.0
  %v1046 = vadd.f32 %v1042, 0.0
  %v1047 = vadd.f32 %v1043, 0.0
  %vm1048 = vcmp.gt.f32.partialorder %v1044, 0.5
  %vm1049 = vcmp.gt.f32.partialorder %v1045, 0.5
  %vm1050 = vcmp.gt.f32.partialorder %v1046, 0.5
  %vm1051 = vcmp.gt.f32.partialorder %v1047, 0.5
  %v1052 = vsel %vm1048, 1, 0
  %v1053 = vsel %vm1049, 1, 0
  %v1054 = vsel %vm1050, 1, 0
  %v1055 = vsel %vm1051, 1, 0
  %v1056 = vcvt.s32.f32 %v1052
  %v1057 = vcvt.s32.f32 %v1053
  %v1058 = vcvt.s32.f32 %v1054
  %v1059 = vcvt.s32.f32 %v1055
  %1060 = vmatprep.subr.mxu0 0.0
  %1061 = vmatpush1.msra.mxu0 %v969
  %1062 = vmatprep.subr.mxu0 0.0
  %1063 = vmatpush1.msra.mxu0 %v970
  %1064 = vmatprep.subr.mxu0 0.0
  %1065 = vmatpush1.msra.mxu0 %v971
  %1066 = vmatprep.subr.mxu0 0.0
  %1067 = vmatpush1.msra.mxu0 %v972
  %1068 = vmatprep.subr.mxu0 0.0
  %1069 = vmatpush1.msra.mxu0 %v973
  %1070 = vmatprep.subr.mxu0 0.0
  %1071 = vmatpush1.msra.mxu0 %v974
  %1072 = vmatprep.subr.mxu0 0.0
  %1073 = vmatpush1.msra.mxu0 %v975
  %1074 = vmatprep.subr.mxu0 0.0
  %1075 = vmatpush1.msra.mxu0 %v976
  %1076 = vmatprep.subr.mxu0 0.0
  %1077 = vmatpush1.msra.mxu0 %v977
  %1078 = vmatprep.subr.mxu0 0.0
  %1079 = vmatpush1.msra.mxu0 %v978
  %1080 = vmatprep.subr.mxu0 0.0
  %1081 = vmatpush1.msra.mxu0 %v979
  %1082 = vmatprep.subr.mxu0 0.0
  %1083 = vmatpush1.msra.mxu0 %v980
  %1084 = vmatprep.subr.mxu0 0.0
  %1085 = vmatpush1.msra.mxu0 %v981
  %1086 = vmatprep.subr.mxu0 0.0
  %1087 = vmatpush1.msra.mxu0 %v982
  %1088 = vmatprep.subr.mxu0 0.0
  %1089 = vmatpush1.msra.mxu0 %v983
  %1090 = vmatprep.subr.mxu0 0.0
  %1091 = vmatpush1.msra.mxu0 %v984
  %1092 = vmatprep.subr.mxu0 0.0
  %1093 = vmatpush1.msra.mxu0 %v985
  %1094 = vmatprep.subr.mxu0 0.0
  %1095 = vmatpush1.msra.mxu0 %v986
  %1096 = vmatprep.subr.mxu0 0.0
  %1097 = vmatpush1.msra.mxu0 %v987
  %1098 = vmatprep.subr.mxu0 0.0
  %1099 = vmatpush1.msra.mxu0 %v988
  %1100 = vmatprep.subr.mxu0 0.0
  %1101 = vmatpush1.msra.mxu0 %v989
  %1102 = vmatprep.subr.mxu0 0.0
  %1103 = vmatpush1.msra.mxu0 %v990
  %1104 = vmatprep.subr.mxu0 0.0
  %1105 = vmatpush1.msra.mxu0 %v991
  %1106 = vmatprep.subr.mxu0 0.0
  %1107 = vmatpush1.msra.mxu0 %v992
  %1108 = vmatprep.subr.mxu0 0.0
  %1109 = vmatpush1.msra.mxu0 %v993
  %1110 = vmatprep.subr.mxu0 0.0
  %1111 = vmatpush1.msra.mxu0 %v994
  %1112 = vmatprep.subr.mxu0 0.0
  %1113 = vmatpush1.msra.mxu0 %v995
  %1114 = vmatprep.subr.mxu0 0.0
  %1115 = vmatpush1.msra.mxu0 %v996
  %1116 = vmatprep.subr.mxu0 0.0
  %1117 = vmatpush1.msra.mxu0 %v997
  %1118 = vmatprep.subr.mxu0 0.0
  %1119 = vmatpush1.msra.mxu0 %v998
  %1120 = vmatprep.subr.mxu0 0.0
  %1121 = vmatpush1.msra.mxu0 %v999
  %1122 = vmatprep.subr.mxu0 0.0
  %1123 = vmatpush1.msra.mxu0 %v1000
  %1124 = vmatprep.mubr.f32.mxu0 %v1057
  %1125 = vmatmul.mubr.f32.gmra.mrb[0].mxu0 %v1056
  %v1126 = vpop.f32.mrb[0].mxu0
  %v1127 = vadd.f32 %v1038, %v1126
  %v1128 = vpop.f32.mrb[0].mxu0
  %1129 = vdwg.mxu0
  %1130 = vmatprep.subr.mxu0 0.0
  %1131 = vmatpush1.msra.mxu0 %v1001
  %1132 = vmatprep.subr.mxu0 0.0
  %1133 = vmatpush1.msra.mxu0 %v1002
  %1134 = vmatprep.subr.mxu0 0.0
  %1135 = vmatpush1.msra.mxu0 %v1003
  %1136 = vmatprep.subr.mxu0 0.0
  %1137 = vmatpush1.msra.mxu0 %v1004
  %1138 = vmatprep.subr.mxu0 0.0
  %1139 = vmatpush1.msra.mxu0 %v1005
  %1140 = vmatprep.subr.mxu0 0.0
  %1141 = vmatpush1.msra.mxu0 %v1006
  %1142 = vmatprep.subr.mxu0 0.0
  %1143 = vmatpush1.msra.mxu0 %v1007
  %1144 = vmatprep.subr.mxu0 0.0
  %1145 = vmatpush1.msra.mxu0 %v1008
  %1146 = vmatprep.subr.mxu0 0.0
  %1147 = vmatpush1.msra.mxu0 %v1009
  %1148 = vmatprep.subr.mxu0 0.0
  %1149 = vmatpush1.msra.mxu0 %v1010
  %1150 = vmatprep.subr.mxu0 0.0
  %1151 = vmatpush1.msra.mxu0 %v1011
  %1152 = vmatprep.subr.mxu0 0.0
  %1153 = vmatpush1.msra.mxu0 %v1012
  %1154 = vmatprep.subr.mxu0 0.0
  %1155 = vmatpush1.msra.mxu0 %v1013
  %1156 = vmatprep.subr.mxu0 0.0
  %1157 = vmatpush1.msra.mxu0 %v1014
  %1158 = vmatprep.subr.mxu0 0.0
  %1159 = vmatpush1.msra.mxu0 %v1015
  %1160 = vmatprep.subr.mxu0 0.0
  %1161 = vmatpush1.msra.mxu0 %v1016
  %1162 = vmatprep.subr.mxu0 0.0
  %1163 = vmatpush1.msra.mxu0 %v1017
  %1164 = vmatprep.subr.mxu0 0.0
  %1165 = vmatpush1.msra.mxu0 %v1018
  %1166 = vmatprep.subr.mxu0 0.0
  %1167 = vmatpush1.msra.mxu0 %v1019
  %1168 = vmatprep.subr.mxu0 0.0
  %1169 = vmatpush1.msra.mxu0 %v1020
  %1170 = vmatprep.subr.mxu0 0.0
  %1171 = vmatpush1.msra.mxu0 %v1021
  %1172 = vmatprep.subr.mxu0 0.0
  %1173 = vmatpush1.msra.mxu0 %v1022
  %1174 = vmatprep.subr.mxu0 0.0
  %1175 = vmatpush1.msra.mxu0 %v1023
  %1176 = vmatprep.subr.mxu0 0.0
  %1177 = vmatpush1.msra.mxu0 %v1024
  %1178 = vmatprep.subr.mxu0 0.0
  %1179 = vmatpush1.msra.mxu0 %v1025
  %1180 = vmatprep.subr.mxu0 0.0
  %1181 = vmatpush1.msra.mxu0 %v1026
  %1182 = vmatprep.subr.mxu0 0.0
  %1183 = vmatpush1.msra.mxu0 %v1027
  %1184 = vmatprep.subr.mxu0 0.0
  %1185 = vmatpush1.msra.mxu0 %v1028
  %1186 = vmatprep.subr.mxu0 0.0
  %1187 = vmatpush1.msra.mxu0 %v1029
  %1188 = vmatprep.subr.mxu0 0.0
  %1189 = vmatpush1.msra.mxu0 %v1030
  %1190 = vmatprep.subr.mxu0 0.0
  %1191 = vmatpush1.msra.mxu0 %v1031
  %1192 = vmatprep.subr.mxu0 0.0
  %1193 = vmatpush1.msra.mxu0 %v1032
  %1194 = vmatprep.mubr.f32.mxu0 %v1059
  %1195 = vmatmul.mubr.f32.gmra.mrb[0].mxu0 %v1058
  %v1196 = vpop.f32.mrb[0].mxu0
  %v1197 = vadd.f32 %v1127, %v1196
  %v1198 = vpop.f32.mrb[0].mxu0
  %1199 = vdwg.mxu0
  %v1200 = vadd.f32 %v1197, 0.0
  %vm1201 = vcmp.gt.f32.partialorder %v1200, 0.5
  %v1202 = vsel %vm1201, 1, 0
  %v1203 = vcvt.s32.f32 %v1202
  %v1204 = vadd.f32 %v1203, 0.0
  %v1205 = vld [vmem:[#allocation2 + $0x20] sm:$0xff]
  %v1206 = vld [vmem:[#allocation2 + $0x28] sm:$0xff]
  %v1207 = vld [vmem:[#allocation2 + $0x30] sm:$0xff]
  %v1208 = vld [vmem:[#allocation2 + $0x38] sm:$0xff]
  %v1209 = vmul.f32 %v1044, 0.2
  %v1210 = vmul.f32 %v1045, 0.2
  %v1211 = vmul.f32 %v1046, 0.2
  %v1212 = vmul.f32 %v1047, 0.2
  %v1213 = vadd.f32 %v1209, %v1205
  %v1214 = vadd.f32 %v1210, %v1206
  %v1215 = vadd.f32 %v1211, %v1207
  %v1216 = vadd.f32 %v1212, %v1208
  %v1217 = vsel %vm1048, %v1205, %v1213
  %v1218 = vsel %vm1049, %v1206, %v1214
  %v1219 = vsel %vm1050, %v1207, %v1215
  %v1220 = vsel %vm1051, %v1208, %v1216
  %vm1221 = vcmp.gt.f32.partialorder %v1217, 0.5
  %vm1222 = vcmp.gt.f32.partialorder %v1218, 0.5
  %vm1223 = vcmp.gt.f32.partialorder %v1219, 0.5
  %vm1224 = vcmp.gt.f32.partialorder %v1220, 0.5
  %v1225 = vsel %vm1221, 1, 0
  %v1226 = vsel %vm1222, 1, 0
  %v1227 = vsel %vm1223, 1, 0
  %v1228 = vsel %vm1224, 1, 0
  %v1229 = vcvt.s32.f32 %v1225
  %v1230 = vcvt.s32.f32 %v1226
  %v1231 = vcvt.s32.f32 %v1227
  %v1232 = vcvt.s32.f32 %v1228
  %1233 = vmatprep.subr.mxu0 0.0
  %1234 = vmatpush1.msra.mxu0 %v969
  %1235 = vmatprep.subr.mxu0 0.0
  %1236 = vmatpush1.msra.mxu0 %v970
  %1237 = vmatprep.subr.mxu0 0.0
  %1238 = vmatpush1.msra.mxu0 %v971
  %1239 = vmatprep.subr.mxu0 0.0
  %1240 = vmatpush1.msra.mxu0 %v972
  %1241 = vmatprep.subr.mxu0 0.0
  %1242 = vmatpush1.msra.mxu0 %v973
  %1243 = vmatprep.subr.mxu0 0.0
  %1244 = vmatpush1.msra.mxu0 %v974
  %1245 = vmatprep.subr.mxu0 0.0
  %1246 = vmatpush1.msra.mxu0 %v975
  %1247 = vmatprep.subr.mxu0 0.0
  %1248 = vmatpush1.msra.mxu0 %v976
  %1249 = vmatprep.subr.mxu0 0.0
  %1250 = vmatpush1.msra.mxu0 %v977
  %1251 = vmatprep.subr.mxu0 0.0
  %1252 = vmatpush1.msra.mxu0 %v978
  %1253 = vmatprep.subr.mxu0 0.0
  %1254 = vmatpush1.msra.mxu0 %v979
  %1255 = vmatprep.subr.mxu0 0.0
  %1256 = vmatpush1.msra.mxu0 %v980
  %1257 = vmatprep.subr.mxu0 0.0
  %1258 = vmatpush1.msra.mxu0 %v981
  %1259 = vmatprep.subr.mxu0 0.0
  %1260 = vmatpush1.msra.mxu0 %v982
  %1261 = vmatprep.subr.mxu0 0.0
  %1262 = vmatpush1.msra.mxu0 %v983
  %1263 = vmatprep.subr.mxu0 0.0
  %1264 = vmatpush1.msra.mxu0 %v984
  %1265 = vmatprep.subr.mxu0 0.0
  %1266 = vmatpush1.msra.mxu0 %v985
  %1267 = vmatprep.subr.mxu0 0.0
  %1268 = vmatpush1.msra.mxu0 %v986
  %1269 = vmatprep.subr.mxu0 0.0
  %1270 = vmatpush1.msra.mxu0 %v987
  %1271 = vmatprep.subr.mxu0 0.0
  %1272 = vmatpush1.msra.mxu0 %v988
  %1273 = vmatprep.subr.mxu0 0.0
  %1274 = vmatpush1.msra.mxu0 %v989
  %1275 = vmatprep.subr.mxu0 0.0
  %1276 = vmatpush1.msra.mxu0 %v990
  %1277 = vmatprep.subr.mxu0 0.0
  %1278 = vmatpush1.msra.mxu0 %v991
  %1279 = vmatprep.subr.mxu0 0.0
  %1280 = vmatpush1.msra.mxu0 %v992
  %1281 = vmatprep.subr.mxu0 0.0
  %1282 = vmatpush1.msra.mxu0 %v993
  %1283 = vmatprep.subr.mxu0 0.0
  %1284 = vmatpush1.msra.mxu0 %v994
  %1285 = vmatprep.subr.mxu0 0.0
  %1286 = vmatpush1.msra.mxu0 %v995
  %1287 = vmatprep.subr.mxu0 0.0
  %1288 = vmatpush1.msra.mxu0 %v996
  %1289 = vmatprep.subr.mxu0 0.0
  %1290 = vmatpush1.msra.mxu0 %v997
  %1291 = vmatprep.subr.mxu0 0.0
  %1292 = vmatpush1.msra.mxu0 %v998
  %1293 = vmatprep.subr.mxu0 0.0
  %1294 = vmatpush1.msra.mxu0 %v999
  %1295 = vmatprep.subr.mxu0 0.0
  %1296 = vmatpush1.msra.mxu0 %v1000
  %1297 = vmatprep.mubr.f32.mxu0 %v1230
  %1298 = vmatmul.mubr.f32.gmra.mrb[0].mxu0 %v1229
  %v1299 = vpop.f32.mrb[0].mxu0
  %v1300 = vadd.f32 %v1038, %v1299
  %v1301 = vpop.f32.mrb[0].mxu0
  %1302 = vdwg.mxu0
  %1303 = vmatprep.subr.mxu0 0.0
  %1304 = vmatpush1.msra.mxu0 %v1001
  %1305 = vmatprep.subr.mxu0 0.0
  %1306 = vmatpush1.msra.mxu0 %v1002
  %1307 = vmatprep.subr.mxu0 0.0
  %1308 = vmatpush1.msra.mxu0 %v1003
  %1309 = vmatprep.subr.mxu0 0.0
  %1310 = vmatpush1.msra.mxu0 %v1004
  %1311 = vmatprep.subr.mxu0 0.0
  %1312 = vmatpush1.msra.mxu0 %v1005
  %1313 = vmatprep.subr.mxu0 0.0
  %1314 = vmatpush1.msra.mxu0 %v1006
  %1315 = vmatprep.subr.mxu0 0.0
  %1316 = vmatpush1.msra.mxu0 %v1007
  %1317 = vmatprep.subr.mxu0 0.0
  %1318 = vmatpush1.msra.mxu0 %v1008
  %1319 = vmatprep.subr.mxu0 0.0
  %1320 = vmatpush1.msra.mxu0 %v1009
  %1321 = vmatprep.subr.mxu0 0.0
  %1322 = vmatpush1.msra.mxu0 %v1010
  %1323 = vmatprep.subr.mxu0 0.0
  %1324 = vmatpush1.msra.mxu0 %v1011
  %1325 = vmatprep.subr.mxu0 0.0
  %1326 = vmatpush1.msra.mxu0 %v1012
  %1327 = vmatprep.subr.mxu0 0.0
  %1328 = vmatpush1.msra.mxu0 %v1013
  %1329 = vmatprep.subr.mxu0 0.0
  %1330 = vmatpush1.msra.mxu0 %v1014
  %1331 = vmatprep.subr.mxu0 0.0
  %1332 = vmatpush1.msra.mxu0 %v1015
  %1333 = vmatprep.subr.mxu0 0.0
  %1334 = vmatpush1.msra.mxu0 %v1016
  %1335 = vmatprep.subr.mxu0 0.0
  %1336 = vmatpush1.msra.mxu0 %v1017
  %1337 = vmatprep.subr.mxu0 0.0
  %1338 = vmatpush1.msra.mxu0 %v1018
  %1339 = vmatprep.subr.mxu0 0.0
  %1340 = vmatpush1.msra.mxu0 %v1019
  %1341 = vmatprep.subr.mxu0 0.0
  %1342 = vmatpush1.msra.mxu0 %v1020
  %1343 = vmatprep.subr.mxu0 0.0
  %1344 = vmatpush1.msra.mxu0 %v1021
  %1345 = vmatprep.subr.mxu0 0.0
  %1346 = vmatpush1.msra.mxu0 %v1022
  %1347 = vmatprep.subr.mxu0 0.0
  %1348 = vmatpush1.msra.mxu0 %v1023
  %1349 = vmatprep.subr.mxu0 0.0
  %1350 = vmatpush1.msra.mxu0 %v1024
  %1351 = vmatprep.subr.mxu0 0.0
  %1352 = vmatpush1.msra.mxu0 %v1025
  %1353 = vmatprep.subr.mxu0 0.0
  %1354 = vmatpush1.msra.mxu0 %v1026
  %1355 = vmatprep.subr.mxu0 0.0
  %1356 = vmatpush1.msra.mxu0 %v1027
  %1357 = vmatprep.subr.mxu0 0.0
  %1358 = vmatpush1.msra.mxu0 %v1028
  %1359 = vmatprep.subr.mxu0 0.0
  %1360 = vmatpush1.msra.mxu0 %v1029
  %1361 = vmatprep.subr.mxu0 0.0
  %1362 = vmatpush1.msra.mxu0 %v1030
  %1363 = vmatprep.subr.mxu0 0.0
  %1364 = vmatpush1.msra.mxu0 %v1031
  %1365 = vmatprep.subr.mxu0 0.0
  %1366 = vmatpush1.msra.mxu0 %v1032
  %1367 = vmatprep.mubr.f32.mxu0 %v1232
  %1368 = vmatmul.mubr.f32.gmra.mrb[0].mxu0 %v1231
  %v1369 = vpop.f32.mrb[0].mxu0
  %v1370 = vadd.f32 %v1300, %v1369
  %v1371 = vpop.f32.mrb[0].mxu0
  %1372 = vdwg.mxu0
  %v1373 = vmul.f32 %v1200, 0.2
  %v1374 = vadd.f32 %v1373, %v1370
  %v1375 = vsel %vm1201, %v1370, %v1374
  %vm1376 = vcmp.gt.f32.partialorder %v1375, 0.5
  %v1377 = vsel %vm1376, 1, 0
  %v1378 = vcvt.s32.f32 %v1377
  %v1379 = vadd.f32 %v1204, %v1378
  %v1380 = vld [vmem:[#allocation2 + $0x40] sm:$0xff]
  %v1381 = vld [vmem:[#allocation2 + $0x48] sm:$0xff]
  %v1382 = vld [vmem:[#allocation2 + $0x50] sm:$0xff]
  %v1383 = vld [vmem:[#allocation2 + $0x58] sm:$0xff]
  %v1384 = vmul.f32 %v1217, 0.2
  %v1385 = vmul.f32 %v1218, 0.2
  %v1386 = vmul.f32 %v1219, 0.2
  %v1387 = vmul.f32 %v1220, 0.2
  %v1388 = vadd.f32 %v1384, %v1380
  %v1389 = vadd.f32 %v1385, %v1381
  %v1390 = vadd.f32 %v1386, %v1382
  %v1391 = vadd.f32 %v1387, %v1383
  %v1392 = vsel %vm1221, %v1380, %v1388
  %v1393 = vsel %vm1222, %v1381, %v1389
  %v1394 = vsel %vm1223, %v1382, %v1390
  %v1395 = vsel %vm1224, %v1383, %v1391
  %vm1396 = vcmp.gt.f32.partialorder %v1392, 0.5
  %vm1397 = vcmp.gt.f32.partialorder %v1393, 0.5
  %vm1398 = vcmp.gt.f32.partialorder %v1394, 0.5
  %vm1399 = vcmp.gt.f32.partialorder %v1395, 0.5
  %v1400 = vsel %vm1396, 1, 0
  %v1401 = vsel %vm1397, 1, 0
  %v1402 = vsel %vm1398, 1, 0
  %v1403 = vsel %vm1399, 1, 0
  %v1404 = vcvt.s32.f32 %v1400
  %v1405 = vcvt.s32.f32 %v1401
  %v1406 = vcvt.s32.f32 %v1402
  %v1407 = vcvt.s32.f32 %v1403
  %1408 = vmatprep.subr.mxu0 0.0
  %1409 = vmatpush1.msra.mxu0 %v969
  %1410 = vmatprep.subr.mxu0 0.0
  %1411 = vmatpush1.msra.mxu0 %v970
  %1412 = vmatprep.subr.mxu0 0.0
  %1413 = vmatpush1.msra.mxu0 %v971
  %1414 = vmatprep.subr.mxu0 0.0
  %1415 = vmatpush1.msra.mxu0 %v972
  %1416 = vmatprep.subr.mxu0 0.0
  %1417 = vmatpush1.msra.mxu0 %v973
  %1418 = vmatprep.subr.mxu0 0.0
  %1419 = vmatpush1.msra.mxu0 %v974
  %1420 = vmatprep.subr.mxu0 0.0
  %1421 = vmatpush1.msra.mxu0 %v975
  %1422 = vmatprep.subr.mxu0 0.0
  %1423 = vmatpush1.msra.mxu0 %v976
  %1424 = vmatprep.subr.mxu0 0.0
  %1425 = vmatpush1.msra.mxu0 %v977
  %1426 = vmatprep.subr.mxu0 0.0
  %1427 = vmatpush1.msra.mxu0 %v978
  %1428 = vmatprep.subr.mxu0 0.0
  %1429 = vmatpush1.msra.mxu0 %v979
  %1430 = vmatprep.subr.mxu0 0.0
  %1431 = vmatpush1.msra.mxu0 %v980
  %1432 = vmatprep.subr.mxu0 0.0
  %1433 = vmatpush1.msra.mxu0 %v981
  %1434 = vmatprep.subr.mxu0 0.0
  %1435 = vmatpush1.msra.mxu0 %v982
  %1436 = vmatprep.subr.mxu0 0.0
  %1437 = vmatpush1.msra.mxu0 %v983
  %1438 = vmatprep.subr.mxu0 0.0
  %1439 = vmatpush1.msra.mxu0 %v984
  %1440 = vmatprep.subr.mxu0 0.0
  %1441 = vmatpush1.msra.mxu0 %v985
  %1442 = vmatprep.subr.mxu0 0.0
  %1443 = vmatpush1.msra.mxu0 %v986
  %1444 = vmatprep.subr.mxu0 0.0
  %1445 = vmatpush1.msra.mxu0 %v987
  %1446 = vmatprep.subr.mxu0 0.0
  %1447 = vmatpush1.msra.mxu0 %v988
  %1448 = vmatprep.subr.mxu0 0.0
  %1449 = vmatpush1.msra.mxu0 %v989
  %1450 = vmatprep.subr.mxu0 0.0
  %1451 = vmatpush1.msra.mxu0 %v990
  %1452 = vmatprep.subr.mxu0 0.0
  %1453 = vmatpush1.msra.mxu0 %v991
  %1454 = vmatprep.subr.mxu0 0.0
  %1455 = vmatpush1.msra.mxu0 %v992
  %1456 = vmatprep.subr.mxu0 0.0
  %1457 = vmatpush1.msra.mxu0 %v993
  %1458 = vmatprep.subr.mxu0 0.0
  %1459 = vmatpush1.msra.mxu0 %v994
  %1460 = vmatprep.subr.mxu0 0.0
  %1461 = vmatpush1.msra.mxu0 %v995
  %1462 = vmatprep.subr.mxu0 0.0
  %1463 = vmatpush1.msra.mxu0 %v996
  %1464 = vmatprep.subr.mxu0 0.0
  %1465 = vmatpush1.msra.mxu0 %v997
  %1466 = vmatprep.subr.mxu0 0.0
  %1467 = vmatpush1.msra.mxu0 %v998
  %1468 = vmatprep.subr.mxu0 0.0
  %1469 = vmatpush1.msra.mxu0 %v999
  %1470 = vmatprep.subr.mxu0 0.0
  %1471 = vmatpush1.msra.mxu0 %v1000
  %1472 = vmatprep.mubr.f32.mxu0 %v1405
  %1473 = vmatmul.mubr.f32.gmra.mrb[0].mxu0 %v1404
  %v1474 = vpop.f32.mrb[0].mxu0
  %v1475 = vadd.f32 %v1038, %v1474
  %v1476 = vpop.f32.mrb[0].mxu0
  %1477 = vdwg.mxu0
  %1478 = vmatprep.subr.mxu0 0.0
  %1479 = vmatpush1.msra.mxu0 %v1001
  %1480 = vmatprep.subr.mxu0 0.0
  %1481 = vmatpush1.msra.mxu0 %v1002
  %1482 = vmatprep.subr.mxu0 0.0
  %1483 = vmatpush1.msra.mxu0 %v1003
  %1484 = vmatprep.subr.mxu0 0.0
  %1485 = vmatpush1.msra.mxu0 %v1004
  %1486 = vmatprep.subr.mxu0 0.0
  %1487 = vmatpush1.msra.mxu0 %v1005
  %1488 = vmatprep.subr.mxu0 0.0
  %1489 = vmatpush1.msra.mxu0 %v1006
  %1490 = vmatprep.subr.mxu0 0.0
  %1491 = vmatpush1.msra.mxu0 %v1007
  %1492 = vmatprep.subr.mxu0 0.0
  %1493 = vmatpush1.msra.mxu0 %v1008
  %1494 = vmatprep.subr.mxu0 0.0
  %1495 = vmatpush1.msra.mxu0 %v1009
  %1496 = vmatprep.subr.mxu0 0.0
  %1497 = vmatpush1.msra.mxu0 %v1010
  %1498 = vmatprep.subr.mxu0 0.0
  %1499 = vmatpush1.msra.mxu0 %v1011
  %1500 = vmatprep.subr.mxu0 0.0
  %1501 = vmatpush1.msra.mxu0 %v1012
  %1502 = vmatprep.subr.mxu0 0.0
  %1503 = vmatpush1.msra.mxu0 %v1013
  %1504 = vmatprep.subr.mxu0 0.0
  %1505 = vmatpush1.msra.mxu0 %v1014
  %1506 = vmatprep.subr.mxu0 0.0
  %1507 = vmatpush1.msra.mxu0 %v1015
  %1508 = vmatprep.subr.mxu0 0.0
  %1509 = vmatpush1.msra.mxu0 %v1016
  %1510 = vmatprep.subr.mxu0 0.0
  %1511 = vmatpush1.msra.mxu0 %v1017
  %1512 = vmatprep.subr.mxu0 0.0
  %1513 = vmatpush1.msra.mxu0 %v1018
  %1514 = vmatprep.subr.mxu0 0.0
  %1515 = vmatpush1.msra.mxu0 %v1019
  %1516 = vmatprep.subr.mxu0 0.0
  %1517 = vmatpush1.msra.mxu0 %v1020
  %1518 = vmatprep.subr.mxu0 0.0
  %1519 = vmatpush1.msra.mxu0 %v1021
  %1520 = vmatprep.subr.mxu0 0.0
  %1521 = vmatpush1.msra.mxu0 %v1022
  %1522 = vmatprep.subr.mxu0 0.0
  %1523 = vmatpush1.msra.mxu0 %v1023
  %1524 = vmatprep.subr.mxu0 0.0
  %1525 = vmatpush1.msra.mxu0 %v1024
  %1526 = vmatprep.subr.mxu0 0.0
  %1527 = vmatpush1.msra.mxu0 %v1025
  %1528 = vmatprep.subr.mxu0 0.0
  %1529 = vmatpush1.msra.mxu0 %v1026
  %1530 = vmatprep.subr.mxu0 0.0
  %1531 = vmatpush1.msra.mxu0 %v1027
  %1532 = vmatprep.subr.mxu0 0.0
  %1533 = vmatpush1.msra.mxu0 %v1028
  %1534 = vmatprep.subr.mxu0 0.0
  %1535 = vmatpush1.msra.mxu0 %v1029
  %1536 = vmatprep.subr.mxu0 0.0
  %1537 = vmatpush1.msra.mxu0 %v1030
  %1538 = vmatprep.subr.mxu0 0.0
  %1539 = vmatpush1.msra.mxu0 %v1031
  %1540 = vmatprep.subr.mxu0 0.0
  %1541 = vmatpush1.msra.mxu0 %v1032
  %1542 = vmatprep.mubr.f32.mxu0 %v1407
  %1543 = vmatmul.mubr.f32.gmra.mrb[0].mxu0 %v1406
  %v1544 = vpop.f32.mrb[0].mxu0
  %v1545 = vadd.f32 %v1475, %v1544
  %v1546 = vpop.f32.mrb[0].mxu0
  %1547 = vdwg.mxu0
  %v1548 = vmul.f32 %v1375, 0.2
  %v1549 = vadd.f32 %v1548, %v1545
  %v1550 = vsel %vm1376, %v1545, %v1549
  %vm1551 = vcmp.gt.f32.partialorder %v1550, 0.5
  %v1552 = vsel %vm1551, 1, 0
  %v1553 = vcvt.s32.f32 %v1552
  %v1554 = vadd.f32 %v1379, %v1553
  %v1555 = vld [vmem:[#allocation2 + $0x60] sm:$0xff]
  %v1556 = vld [vmem:[#allocation2 + $0x68] sm:$0xff]
  %v1557 = vld [vmem:[#allocation2 + $0x70] sm:$0xff]
  %v1558 = vld [vmem:[#allocation2 + $0x78] sm:$0xff]
  %v1559 = vmul.f32 %v1392, 0.2
  %v1560 = vmul.f32 %v1393, 0.2
  %v1561 = vmul.f32 %v1394, 0.2
  %v1562 = vmul.f32 %v1395, 0.2
  %v1563 = vadd.f32 %v1559, %v1555
  %v1564 = vadd.f32 %v1560, %v1556
  %v1565 = vadd.f32 %v1561, %v1557
  %v1566 = vadd.f32 %v1562, %v1558
  %v1567 = vsel %vm1396, %v1555, %v1563
  %v1568 = vsel %vm1397, %v1556, %v1564
  %v1569 = vsel %vm1398, %v1557, %v1565
  %v1570 = vsel %vm1399, %v1558, %v1566
  %vm1571 = vcmp.gt.f32.partialorder %v1567, 0.5
  %vm1572 = vcmp.gt.f32.partialorder %v1568, 0.5
  %vm1573 = vcmp.gt.f32.partialorder %v1569, 0.5
  %vm1574 = vcmp.gt.f32.partialorder %v1570, 0.5
  %v1575 = vsel %vm1571, 1, 0
  %v1576 = vsel %vm1572, 1, 0
  %v1577 = vsel %vm1573, 1, 0
  %v1578 = vsel %vm1574, 1, 0
  %v1579 = vcvt.s32.f32 %v1575
  %v1580 = vcvt.s32.f32 %v1576
  %v1581 = vcvt.s32.f32 %v1577
  %v1582 = vcvt.s32.f32 %v1578
  %1583 = vmatprep.subr.mxu0 0.0
  %1584 = vmatpush1.msra.mxu0 %v969
  %1585 = vmatprep.subr.mxu0 0.0
  %1586 = vmatpush1.msra.mxu0 %v970
  %1587 = vmatprep.subr.mxu0 0.0
  %1588 = vmatpush1.msra.mxu0 %v971
  %1589 = vmatprep.subr.mxu0 0.0
  %1590 = vmatpush1.msra.mxu0 %v972
  %1591 = vmatprep.subr.mxu0 0.0
  %1592 = vmatpush1.msra.mxu0 %v973
  %1593 = vmatprep.subr.mxu0 0.0
  %1594 = vmatpush1.msra.mxu0 %v974
  %1595 = vmatprep.subr.mxu0 0.0
  %1596 = vmatpush1.msra.mxu0 %v975
  %1597 = vmatprep.subr.mxu0 0.0
  %1598 = vmatpush1.msra.mxu0 %v976
  %1599 = vmatprep.subr.mxu0 0.0
  %1600 = vmatpush1.msra.mxu0 %v977
  %1601 = vmatprep.subr.mxu0 0.0
  %1602 = vmatpush1.msra.mxu0 %v978
  %1603 = vmatprep.subr.mxu0 0.0
  %1604 = vmatpush1.msra.mxu0 %v979
  %1605 = vmatprep.subr.mxu0 0.0
  %1606 = vmatpush1.msra.mxu0 %v980
  %1607 = vmatprep.subr.mxu0 0.0
  %1608 = vmatpush1.msra.mxu0 %v981
  %1609 = vmatprep.subr.mxu0 0.0
  %1610 = vmatpush1.msra.mxu0 %v982
  %1611 = vmatprep.subr.mxu0 0.0
  %1612 = vmatpush1.msra.mxu0 %v983
  %1613 = vmatprep.subr.mxu0 0.0
  %1614 = vmatpush1.msra.mxu0 %v984
  %1615 = vmatprep.subr.mxu0 0.0
  %1616 = vmatpush1.msra.mxu0 %v985
  %1617 = vmatprep.subr.mxu0 0.0
  %1618 = vmatpush1.msra.mxu0 %v986
  %1619 = vmatprep.subr.mxu0 0.0
  %1620 = vmatpush1.msra.mxu0 %v987
  %1621 = vmatprep.subr.mxu0 0.0
  %1622 = vmatpush1.msra.mxu0 %v988
  %1623 = vmatprep.subr.mxu0 0.0
  %1624 = vmatpush1.msra.mxu0 %v989
  %1625 = vmatprep.subr.mxu0 0.0
  %1626 = vmatpush1.msra.mxu0 %v990
  %1627 = vmatprep.subr.mxu0 0.0
  %1628 = vmatpush1.msra.mxu0 %v991
  %1629 = vmatprep.subr.mxu0 0.0
  %1630 = vmatpush1.msra.mxu0 %v992
  %1631 = vmatprep.subr.mxu0 0.0
  %1632 = vmatpush1.msra.mxu0 %v993
  %1633 = vmatprep.subr.mxu0 0.0
  %1634 = vmatpush1.msra.mxu0 %v994
  %1635 = vmatprep.subr.mxu0 0.0
  %1636 = vmatpush1.msra.mxu0 %v995
  %1637 = vmatprep.subr.mxu0 0.0
  %1638 = vmatpush1.msra.mxu0 %v996
  %1639 = vmatprep.subr.mxu0 0.0
  %1640 = vmatpush1.msra.mxu0 %v997
  %1641 = vmatprep.subr.mxu0 0.0
  %1642 = vmatpush1.msra.mxu0 %v998
  %1643 = vmatprep.subr.mxu0 0.0
  %1644 = vmatpush1.msra.mxu0 %v999
  %1645 = vmatprep.subr.mxu0 0.0
  %1646 = vmatpush1.msra.mxu0 %v1000
  %1647 = vmatprep.mubr.f32.mxu0 %v1580
  %1648 = vmatmul.mubr.f32.gmra.mrb[0].mxu0 %v1579
  %v1649 = vpop.f32.mrb[0].mxu0
  %v1650 = vadd.f32 %v1038, %v1649
  %v1651 = vpop.f32.mrb[0].mxu0
  %1652 = vdwg.mxu0
  %1653 = vmatprep.subr.mxu0 0.0
  %1654 = vmatpush1.msra.mxu0 %v1001
  %1655 = vmatprep.subr.mxu0 0.0
  %1656 = vmatpush1.msra.mxu0 %v1002
  %1657 = vmatprep.subr.mxu0 0.0
  %1658 = vmatpush1.msra.mxu0 %v1003
  %1659 = vmatprep.subr.mxu0 0.0
  %1660 = vmatpush1.msra.mxu0 %v1004
  %1661 = vmatprep.subr.mxu0 0.0
  %1662 = vmatpush1.msra.mxu0 %v1005
  %1663 = vmatprep.subr.mxu0 0.0
  %1664 = vmatpush1.msra.mxu0 %v1006
  %1665 = vmatprep.subr.mxu0 0.0
  %1666 = vmatpush1.msra.mxu0 %v1007
  %1667 = vmatprep.subr.mxu0 0.0
  %1668 = vmatpush1.msra.mxu0 %v1008
  %1669 = vmatprep.subr.mxu0 0.0
  %1670 = vmatpush1.msra.mxu0 %v1009
  %1671 = vmatprep.subr.mxu0 0.0
  %1672 = vmatpush1.msra.mxu0 %v1010
  %1673 = vmatprep.subr.mxu0 0.0
  %1674 = vmatpush1.msra.mxu0 %v1011
  %1675 = vmatprep.subr.mxu0 0.0
  %1676 = vmatpush1.msra.mxu0 %v1012
  %1677 = vmatprep.subr.mxu0 0.0
  %1678 = vmatpush1.msra.mxu0 %v1013
  %1679 = vmatprep.subr.mxu0 0.0
  %1680 = vmatpush1.msra.mxu0 %v1014
  %1681 = vmatprep.subr.mxu0 0.0
  %1682 = vmatpush1.msra.mxu0 %v1015
  %1683 = vmatprep.subr.mxu0 0.0
  %1684 = vmatpush1.msra.mxu0 %v1016
  %1685 = vmatprep.subr.mxu0 0.0
  %1686 = vmatpush1.msra.mxu0 %v1017
  %1687 = vmatprep.subr.mxu0 0.0
  %1688 = vmatpush1.msra.mxu0 %v1018
  %1689 = vmatprep.subr.mxu0 0.0
  %1690 = vmatpush1.msra.mxu0 %v1019
  %1691 = vmatprep.subr.mxu0 0.0
  %1692 = vmatpush1.msra.mxu0 %v1020
  %1693 = vmatprep.subr.mxu0 0.0
  %1694 = vmatpush1.msra.mxu0 %v1021
  %1695 = vmatprep.subr.mxu0 0.0
  %1696 = vmatpush1.msra.mxu0 %v1022
  %1697 = vmatprep.subr.mxu0 0.0
  %1698 = vmatpush1.msra.mxu0 %v1023
  %1699 = vmatprep.subr.mxu0 0.0
  %1700 = vmatpush1.msra.mxu0 %v1024
  %1701 = vmatprep.subr.mxu0 0.0
  %1702 = vmatpush1.msra.mxu0 %v1025
  %1703 = vmatprep.subr.mxu0 0.0
  %1704 = vmatpush1.msra.mxu0 %v1026
  %1705 = vmatprep.subr.mxu0 0.0
  %1706 = vmatpush1.msra.mxu0 %v1027
  %1707 = vmatprep.subr.mxu0 0.0
  %1708 = vmatpush1.msra.mxu0 %v1028
  %1709 = vmatprep.subr.mxu0 0.0
  %1710 = vmatpush1.msra.mxu0 %v1029
  %1711 = vmatprep.subr.mxu0 0.0
  %1712 = vmatpush1.msra.mxu0 %v1030
  %1713 = vmatprep.subr.mxu0 0.0
  %1714 = vmatpush1.msra.mxu0 %v1031
  %1715 = vmatprep.subr.mxu0 0.0
  %1716 = vmatpush1.msra.mxu0 %v1032
  %1717 = vmatprep.mubr.f32.mxu0 %v1582
  %1718 = vmatmul.mubr.f32.gmra.mrb[0].mxu0 %v1581
  %v1719 = vpop.f32.mrb[0].mxu0
  %v1720 = vadd.f32 %v1650, %v1719
  %v1721 = vpop.f32.mrb[0].mxu0
  %1722 = vdwg.mxu0
  %v1723 = vmul.f32 %v1550, 0.2
  %v1724 = vadd.f32 %v1723, %v1720
  %v1725 = vsel %vm1551, %v1720, %v1724
  %vm1726 = vcmp.gt.f32.partialorder %v1725, 0.5
  %v1727 = vsel %vm1726, 1, 0
  %v1728 = vcvt.s32.f32 %v1727
  %v1729 = vadd.f32 %v1554, %v1728
  %v1730 = vld [vmem:[#allocation2 + $0x80] sm:$0xff]
  %v1731 = vld [vmem:[#allocation2 + $0x88] sm:$0xff]
  %v1732 = vld [vmem:[#allocation2 + $0x90] sm:$0xff]
  %v1733 = vld [vmem:[#allocation2 + $0x98] sm:$0xff]
  %v1734 = vmul.f32 %v1567, 0.2
  %v1735 = vmul.f32 %v1568, 0.2
  %v1736 = vmul.f32 %v1569, 0.2
  %v1737 = vmul.f32 %v1570, 0.2
  %v1738 = vadd.f32 %v1734, %v1730
  %v1739 = vadd.f32 %v1735, %v1731
  %v1740 = vadd.f32 %v1736, %v1732
  %v1741 = vadd.f32 %v1737, %v1733
  %v1742 = vsel %vm1571, %v1730, %v1738
  %v1743 = vsel %vm1572, %v1731, %v1739
  %v1744 = vsel %vm1573, %v1732, %v1740
  %v1745 = vsel %vm1574, %v1733, %v1741
  %vm1746 = vcmp.gt.f32.partialorder %v1742, 0.5
  %vm1747 = vcmp.gt.f32.partialorder %v1743, 0.5
  %vm1748 = vcmp.gt.f32.partialorder %v1744, 0.5
  %vm1749 = vcmp.gt.f32.partialorder %v1745, 0.5
  %v1750 = vsel %vm1746, 1, 0
  %v1751 = vsel %vm1747, 1, 0
  %v1752 = vsel %vm1748, 1, 0
  %v1753 = vsel %vm1749, 1, 0
  %v1754 = vcvt.s32.f32 %v1750
  %v1755 = vcvt.s32.f32 %v1751
  %v1756 = vcvt.s32.f32 %v1752
  %v1757 = vcvt.s32.f32 %v1753
  %1758 = vmatprep.subr.mxu0 0.0
  %1759 = vmatpush1.msra.mxu0 %v969
  %1760 = vmatprep.subr.mxu0 0.0
  %1761 = vmatpush1.msra.mxu0 %v970
  %1762 = vmatprep.subr.mxu0 0.0
  %1763 = vmatpush1.msra.mxu0 %v971
  %1764 = vmatprep.subr.mxu0 0.0
  %1765 = vmatpush1.msra.mxu0 %v972
  %1766 = vmatprep.subr.mxu0 0.0
  %1767 = vmatpush1.msra.mxu0 %v973
  %1768 = vmatprep.subr.mxu0 0.0
  %1769 = vmatpush1.msra.mxu0 %v974
  %1770 = vmatprep.subr.mxu0 0.0
  %1771 = vmatpush1.msra.mxu0 %v975
  %1772 = vmatprep.subr.mxu0 0.0
  %1773 = vmatpush1.msra.mxu0 %v976
  %1774 = vmatprep.subr.mxu0 0.0
  %1775 = vmatpush1.msra.mxu0 %v977
  %1776 = vmatprep.subr.mxu0 0.0
  %1777 = vmatpush1.msra.mxu0 %v978
  %1778 = vmatprep.subr.mxu0 0.0
  %1779 = vmatpush1.msra.mxu0 %v979
  %1780 = vmatprep.subr.mxu0 0.0
  %1781 = vmatpush1.msra.mxu0 %v980
  %1782 = vmatprep.subr.mxu0 0.0
  %1783 = vmatpush1.msra.mxu0 %v981
  %1784 = vmatprep.subr.mxu0 0.0
  %1785 = vmatpush1.msra.mxu0 %v982
  %1786 = vmatprep.subr.mxu0 0.0
  %1787 = vmatpush1.msra.mxu0 %v983
  %1788 = vmatprep.subr.mxu0 0.0
  %1789 = vmatpush1.msra.mxu0 %v984
  %1790 = vmatprep.subr.mxu0 0.0
  %1791 = vmatpush1.msra.mxu0 %v985
  %1792 = vmatprep.subr.mxu0 0.0
  %1793 = vmatpush1.msra.mxu0 %v986
  %1794 = vmatprep.subr.mxu0 0.0
  %1795 = vmatpush1.msra.mxu0 %v987
  %1796 = vmatprep.subr.mxu0 0.0
  %1797 = vmatpush1.msra.mxu0 %v988
  %1798 = vmatprep.subr.mxu0 0.0
  %1799 = vmatpush1.msra.mxu0 %v989
  %1800 = vmatprep.subr.mxu0 0.0
  %1801 = vmatpush1.msra.mxu0 %v990
  %1802 = vmatprep.subr.mxu0 0.0
  %1803 = vmatpush1.msra.mxu0 %v991
  %1804 = vmatprep.subr.mxu0 0.0
  %1805 = vmatpush1.msra.mxu0 %v992
  %1806 = vmatprep.subr.mxu0 0.0
  %1807 = vmatpush1.msra.mxu0 %v993
  %1808 = vmatprep.subr.mxu0 0.0
  %1809 = vmatpush1.msra.mxu0 %v994
  %1810 = vmatprep.subr.mxu0 0.0
  %1811 = vmatpush1.msra.mxu0 %v995
  %1812 = vmatprep.subr.mxu0 0.0
  %1813 = vmatpush1.msra.mxu0 %v996
  %1814 = vmatprep.subr.mxu0 0.0
  %1815 = vmatpush1.msra.mxu0 %v997
  %1816 = vmatprep.subr.mxu0 0.0
  %1817 = vmatpush1.msra.mxu0 %v998
  %1818 = vmatprep.subr.mxu0 0.0
  %1819 = vmatpush1.msra.mxu0 %v999
  %1820 = vmatprep.subr.mxu0 0.0
  %1821 = vmatpush1.msra.mxu0 %v1000
  %1822 = vmatprep.mubr.f32.mxu0 %v1755
  %1823 = vmatmul.mubr.f32.gmra.mrb[0].mxu0 %v1754
  %v1824 = vpop.f32.mrb[0].mxu0
  %v1825 = vadd.f32 %v1038, %v1824
  %v1826 = vpop.f32.mrb[0].mxu0
  %1827 = vdwg.mxu0
  %1828 = vmatprep.subr.mxu0 0.0
  %1829 = vmatpush1.msra.mxu0 %v1001
  %1830 = vmatprep.subr.mxu0 0.0
  %1831 = vmatpush1.msra.mxu0 %v1002
  %1832 = vmatprep.subr.mxu0 0.0
  %1833 = vmatpush1.msra.mxu0 %v1003
  %1834 = vmatprep.subr.mxu0 0.0
  %1835 = vmatpush1.msra.mxu0 %v1004
  %1836 = vmatprep.subr.mxu0 0.0
  %1837 = vmatpush1.msra.mxu0 %v1005
  %1838 = vmatprep.subr.mxu0 0.0
  %1839 = vmatpush1.msra.mxu0 %v1006
  %1840 = vmatprep.subr.mxu0 0.0
  %1841 = vmatpush1.msra.mxu0 %v1007
  %1842 = vmatprep.subr.mxu0 0.0
  %1843 = vmatpush1.msra.mxu0 %v1008
  %1844 = vmatprep.subr.mxu0 0.0
  %1845 = vmatpush1.msra.mxu0 %v1009
  %1846 = vmatprep.subr.mxu0 0.0
  %1847 = vmatpush1.msra.mxu0 %v1010
  %1848 = vmatprep.subr.mxu0 0.0
  %1849 = vmatpush1.msra.mxu0 %v1011
  %1850 = vmatprep.subr.mxu0 0.0
  %1851 = vmatpush1.msra.mxu0 %v1012
  %1852 = vmatprep.subr.mxu0 0.0
  %1853 = vmatpush1.msra.mxu0 %v1013
  %1854 = vmatprep.subr.mxu0 0.0
  %1855 = vmatpush1.msra.mxu0 %v1014
  %1856 = vmatprep.subr.mxu0 0.0
  %1857 = vmatpush1.msra.mxu0 %v1015
  %1858 = vmatprep.subr.mxu0 0.0
  %1859 = vmatpush1.msra.mxu0 %v1016
  %1860 = vmatprep.subr.mxu0 0.0
  %1861 = vmatpush1.msra.mxu0 %v1017
  %1862 = vmatprep.subr.mxu0 0.0
  %1863 = vmatpush1.msra.mxu0 %v1018
  %1864 = vmatprep.subr.mxu0 0.0
  %1865 = vmatpush1.msra.mxu0 %v1019
  %1866 = vmatprep.subr.mxu0 0.0
  %1867 = vmatpush1.msra.mxu0 %v1020
  %1868 = vmatprep.subr.mxu0 0.0
  %1869 = vmatpush1.msra.mxu0 %v1021
  %1870 = vmatprep.subr.mxu0 0.0
  %1871 = vmatpush1.msra.mxu0 %v1022
  %1872 = vmatprep.subr.mxu0 0.0
  %1873 = vmatpush1.msra.mxu0 %v1023
  %1874 = vmatprep.subr.mxu0 0.0
  %1875 = vmatpush1.msra.mxu0 %v1024
  %1876 = vmatprep.subr.mxu0 0.0
  %1877 = vmatpush1.msra.mxu0 %v1025
  %1878 = vmatprep.subr.mxu0 0.0
  %1879 = vmatpush1.msra.mxu0 %v1026
  %1880 = vmatprep.subr.mxu0 0.0
  %1881 = vmatpush1.msra.mxu0 %v1027
  %1882 = vmatprep.subr.mxu0 0.0
  %1883 = vmatpush1.msra.mxu0 %v1028
  %1884 = vmatprep.subr.mxu0 0.0
  %1885 = vmatpush1.msra.mxu0 %v1029
  %1886 = vmatprep.subr.mxu0 0.0
  %1887 = vmatpush1.msra.mxu0 %v1030
  %1888 = vmatprep.subr.mxu0 0.0
  %1889 = vmatpush1.msra.mxu0 %v1031
  %1890 = vmatprep.subr.mxu0 0.0
  %1891 = vmatpush1.msra.mxu0 %v1032
  %1892 = vmatprep.mubr.f32.mxu0 %v1757
  %1893 = vmatmul.mubr.f32.gmra.mrb[0].mxu0 %v1756
  %v1894 = vpop.f32.mrb[0].mxu0
  %v1895 = vadd.f32 %v1825, %v1894
  %v1896 = vpop.f32.mrb[0].mxu0
  %1897 = vdwg.mxu0
  %v1898 = vmul.f32 %v1725, 0.2
  %v1899 = vadd.f32 %v1898, %v1895
  %v1900 = vsel %vm1726, %v1895, %v1899
  %vm1901 = vcmp.gt.f32.partialorder %v1900, 0.5
  %v1902 = vsel %vm1901, 1, 0
  %v1903 = vcvt.s32.f32 %v1902
  %v1904 = vadd.f32 %v1729, %v1903
  %v1905 = vld [vmem:[#allocation2 + $0xa0] sm:$0xff]
  %v1906 = vld [vmem:[#allocation2 + $0xa8] sm:$0xff]
  %v1907 = vld [vmem:[#allocation2 + $0xb0] sm:$0xff]
  %v1908 = vld [vmem:[#allocation2 + $0xb8] sm:$0xff]
  %v1909 = vmul.f32 %v1742, 0.2
  %v1910 = vmul.f32 %v1743, 0.2
  %v1911 = vmul.f32 %v1744, 0.2
  %v1912 = vmul.f32 %v1745, 0.2
  %v1913 = vadd.f32 %v1909, %v1905
  %v1914 = vadd.f32 %v1910, %v1906
  %v1915 = vadd.f32 %v1911, %v1907
  %v1916 = vadd.f32 %v1912, %v1908
  %v1917 = vsel %vm1746, %v1905, %v1913
  %v1918 = vsel %vm1747, %v1906, %v1914
  %v1919 = vsel %vm1748, %v1907, %v1915
  %v1920 = vsel %vm1749, %v1908, %v1916
  %vm1921 = vcmp.gt.f32.partialorder %v1917, 0.5
  %vm1922 = vcmp.gt.f32.partialorder %v1918, 0.5
  %vm1923 = vcmp.gt.f32.partialorder %v1919, 0.5
  %vm1924 = vcmp.gt.f32.partialorder %v1920, 0.5
  %v1925 = vsel %vm1921, 1, 0
  %v1926 = vsel %vm1922, 1, 0
  %v1927 = vsel %vm1923, 1, 0
  %v1928 = vsel %vm1924, 1, 0
  %v1929 = vcvt.s32.f32 %v1925
  %v1930 = vcvt.s32.f32 %v1926
  %v1931 = vcvt.s32.f32 %v1927
  %v1932 = vcvt.s32.f32 %v1928
  %1933 = vmatprep.subr.mxu0 0.0
  %1934 = vmatpush1.msra.mxu0 %v969
  %1935 = vmatprep.subr.mxu0 0.0
  %1936 = vmatpush1.msra.mxu0 %v970
  %1937 = vmatprep.subr.mxu0 0.0
  %1938 = vmatpush1.msra.mxu0 %v971
  %1939 = vmatprep.subr.mxu0 0.0
  %1940 = vmatpush1.msra.mxu0 %v972
  %1941 = vmatprep.subr.mxu0 0.0
  %1942 = vmatpush1.msra.mxu0 %v973
  %1943 = vmatprep.subr.mxu0 0.0
  %1944 = vmatpush1.msra.mxu0 %v974
  %1945 = vmatprep.subr.mxu0 0.0
  %1946 = vmatpush1.msra.mxu0 %v975
  %1947 = vmatprep.subr.mxu0 0.0
  %1948 = vmatpush1.msra.mxu0 %v976
  %1949 = vmatprep.subr.mxu0 0.0
  %1950 = vmatpush1.msra.mxu0 %v977
  %1951 = vmatprep.subr.mxu0 0.0
  %1952 = vmatpush1.msra.mxu0 %v978
  %1953 = vmatprep.subr.mxu0 0.0
  %1954 = vmatpush1.msra.mxu0 %v979
  %1955 = vmatprep.subr.mxu0 0.0
  %1956 = vmatpush1.msra.mxu0 %v980
  %1957 = vmatprep.subr.mxu0 0.0
  %1958 = vmatpush1.msra.mxu0 %v981
  %1959 = vmatprep.subr.mxu0 0.0
  %1960 = vmatpush1.msra.mxu0 %v982
  %1961 = vmatprep.subr.mxu0 0.0
  %1962 = vmatpush1.msra.mxu0 %v983
  %1963 = vmatprep.subr.mxu0 0.0
  %1964 = vmatpush1.msra.mxu0 %v984
  %1965 = vmatprep.subr.mxu0 0.0
  %1966 = vmatpush1.msra.mxu0 %v985
  %1967 = vmatprep.subr.mxu0 0.0
  %1968 = vmatpush1.msra.mxu0 %v986
  %1969 = vmatprep.subr.mxu0 0.0
  %1970 = vmatpush1.msra.mxu0 %v987
  %1971 = vmatprep.subr.mxu0 0.0
  %1972 = vmatpush1.msra.mxu0 %v988
  %1973 = vmatprep.subr.mxu0 0.0
  %1974 = vmatpush1.msra.mxu0 %v989
  %1975 = vmatprep.subr.mxu0 0.0
  %1976 = vmatpush1.msra.mxu0 %v990
  %1977 = vmatprep.subr.mxu0 0.0
  %1978 = vmatpush1.msra.mxu0 %v991
  %1979 = vmatprep.subr.mxu0 0.0
  %1980 = vmatpush1.msra.mxu0 %v992
  %1981 = vmatprep.subr.mxu0 0.0
  %1982 = vmatpush1.msra.mxu0 %v993
  %1983 = vmatprep.subr.mxu0 0.0
  %1984 = vmatpush1.msra.mxu0 %v994
  %1985 = vmatprep.subr.mxu0 0.0
  %1986 = vmatpush1.msra.mxu0 %v995
  %1987 = vmatprep.subr.mxu0 0.0
  %1988 = vmatpush1.msra.mxu0 %v996
  %1989 = vmatprep.subr.mxu0 0.0
  %1990 = vmatpush1.msra.mxu0 %v997
  %1991 = vmatprep.subr.mxu0 0.0
  %1992 = vmatpush1.msra.mxu0 %v998
  %1993 = vmatprep.subr.mxu0 0.0
  %1994 = vmatpush1.msra.mxu0 %v999
  %1995 = vmatprep.subr.mxu0 0.0
  %1996 = vmatpush1.msra.mxu0 %v1000
  %1997 = vmatprep.mubr.f32.mxu0 %v1930
  %1998 = vmatmul.mubr.f32.gmra.mrb[0].mxu0 %v1929
  %v1999 = vpop.f32.mrb[0].mxu0
  %v2000 = vadd.f32 %v1038, %v1999
  %v2001 = vpop.f32.mrb[0].mxu0
  %2002 = vdwg.mxu0
  %2003 = vmatprep.subr.mxu0 0.0
  %2004 = vmatpush1.msra.mxu0 %v1001
  %2005 = vmatprep.subr.mxu0 0.0
  %2006 = vmatpush1.msra.mxu0 %v1002
  %2007 = vmatprep.subr.mxu0 0.0
  %2008 = vmatpush1.msra.mxu0 %v1003
  %2009 = vmatprep.subr.mxu0 0.0
  %2010 = vmatpush1.msra.mxu0 %v1004
  %2011 = vmatprep.subr.mxu0 0.0
  %2012 = vmatpush1.msra.mxu0 %v1005
  %2013 = vmatprep.subr.mxu0 0.0
  %2014 = vmatpush1.msra.mxu0 %v1006
  %2015 = vmatprep.subr.mxu0 0.0
  %2016 = vmatpush1.msra.mxu0 %v1007
  %2017 = vmatprep.subr.mxu0 0.0
  %2018 = vmatpush1.msra.mxu0 %v1008
  %2019 = vmatprep.subr.mxu0 0.0
  %2020 = vmatpush1.msra.mxu0 %v1009
  %2021 = vmatprep.subr.mxu0 0.0
  %2022 = vmatpush1.msra.mxu0 %v1010
  %2023 = vmatprep.subr.mxu0 0.0
  %2024 = vmatpush1.msra.mxu0 %v1011
  %2025 = vmatprep.subr.mxu0 0.0
  %2026 = vmatpush1.msra.mxu0 %v1012
  %2027 = vmatprep.subr.mxu0 0.0
  %2028 = vmatpush1.msra.mxu0 %v1013
  %2029 = vmatprep.subr.mxu0 0.0
  %2030 = vmatpush1.msra.mxu0 %v1014
  %2031 = vmatprep.subr.mxu0 0.0
  %2032 = vmatpush1.msra.mxu0 %v1015
  %2033 = vmatprep.subr.mxu0 0.0
  %2034 = vmatpush1.msra.mxu0 %v1016
  %2035 = vmatprep.subr.mxu0 0.0
  %2036 = vmatpush1.msra.mxu0 %v1017
  %2037 = vmatprep.subr.mxu0 0.0
  %2038 = vmatpush1.msra.mxu0 %v1018
  %2039 = vmatprep.subr.mxu0 0.0
  %2040 = vmatpush1.msra.mxu0 %v1019
  %2041 = vmatprep.subr.mxu0 0.0
  %2042 = vmatpush1.msra.mxu0 %v1020
  %2043 = vmatprep.subr.mxu0 0.0
  %2044 = vmatpush1.msra.mxu0 %v1021
  %2045 = vmatprep.subr.mxu0 0.0
  %2046 = vmatpush1.msra.mxu0 %v1022
  %2047 = vmatprep.subr.mxu0 0.0
  %2048 = vmatpush1.msra.mxu0 %v1023
  %2049 = vmatprep.subr.mxu0 0.0
  %2050 = vmatpush1.msra.mxu0 %v1024
  %2051 = vmatprep.subr.mxu0 0.0
  %2052 = vmatpush1.msra.mxu0 %v1025
  %2053 = vmatprep.subr.mxu0 0.0
  %2054 = vmatpush1.msra.mxu0 %v1026
  %2055 = vmatprep.subr.mxu0 0.0
  %2056 = vmatpush1.msra.mxu0 %v1027
  %2057 = vmatprep.subr.mxu0 0.0
  %2058 = vmatpush1.msra.mxu0 %v1028
  %2059 = vmatprep.subr.mxu0 0.0
  %2060 = vmatpush1.msra.mxu0 %v1029
  %2061 = vmatprep.subr.mxu0 0.0
  %2062 = vmatpush1.msra.mxu0 %v1030
  %2063 = vmatprep.subr.mxu0 0.0
  %2064 = vmatpush1.msra.mxu0 %v1031
  %2065 = vmatprep.subr.mxu0 0.0
  %2066 = vmatpush1.msra.mxu0 %v1032
  %2067 = vmatprep.mubr.f32.mxu0 %v1932
  %2068 = vmatmul.mubr.f32.gmra.mrb[0].mxu0 %v1931
  %v2069 = vpop.f32.mrb[0].mxu0
  %v2070 = vadd.f32 %v2000, %v2069
  %v2071 = vpop.f32.mrb[0].mxu0
  %2072 = vdwg.mxu0
  %v2073 = vmul.f32 %v1900, 0.2
  %v2074 = vadd.f32 %v2073, %v2070
  %v2075 = vsel %vm1901, %v2070, %v2074
  %vm2076 = vcmp.gt.f32.partialorder %v2075, 0.5
  %v2077 = vsel %vm2076, 1, 0
  %v2078 = vcvt.s32.f32 %v2077
  %v2079 = vadd.f32 %v1904, %v2078
  %v2080 = vld [vmem:[#allocation2 + $0xc0] sm:$0xff]
  %v2081 = vld [vmem:[#allocation2 + $0xc8] sm:$0xff]
  %v2082 = vld [vmem:[#allocation2 + $0xd0] sm:$0xff]
  %v2083 = vld [vmem:[#allocation2 + $0xd8] sm:$0xff]
  %v2084 = vmul.f32 %v1917, 0.2
  %v2085 = vmul.f32 %v1918, 0.2
  %v2086 = vmul.f32 %v1919, 0.2
  %v2087 = vmul.f32 %v1920, 0.2
  %v2088 = vadd.f32 %v2084, %v2080
  %v2089 = vadd.f32 %v2085, %v2081
  %v2090 = vadd.f32 %v2086, %v2082
  %v2091 = vadd.f32 %v2087, %v2083
  %v2092 = vsel %vm1921, %v2080, %v2088
  %v2093 = vsel %vm1922, %v2081, %v2089
  %v2094 = vsel %vm1923, %v2082, %v2090
  %v2095 = vsel %vm1924, %v2083, %v2091
  %vm2096 = vcmp.gt.f32.partialorder %v2092, 0.5
  %vm2097 = vcmp.gt.f32.partialorder %v2093, 0.5
  %vm2098 = vcmp.gt.f32.partialorder %v2094, 0.5
  %vm2099 = vcmp.gt.f32.partialorder %v2095, 0.5
  %v2100 = vsel %vm2096, 1, 0
  %v2101 = vsel %vm2097, 1, 0
  %v2102 = vsel %vm2098, 1, 0
  %v2103 = vsel %vm2099, 1, 0
  %v2104 = vcvt.s32.f32 %v2100
  %v2105 = vcvt.s32.f32 %v2101
  %v2106 = vcvt.s32.f32 %v2102
  %v2107 = vcvt.s32.f32 %v2103
  %2108 = vmatprep.subr.mxu0 0.0
  %2109 = vmatpush1.msra.mxu0 %v969
  %2110 = vmatprep.subr.mxu0 0.0
  %2111 = vmatpush1.msra.mxu0 %v970
  %2112 = vmatprep.subr.mxu0 0.0
  %2113 = vmatpush1.msra.mxu0 %v971
  %2114 = vmatprep.subr.mxu0 0.0
  %2115 = vmatpush1.msra.mxu0 %v972
  %2116 = vmatprep.subr.mxu0 0.0
  %2117 = vmatpush1.msra.mxu0 %v973
  %2118 = vmatprep.subr.mxu0 0.0
  %2119 = vmatpush1.msra.mxu0 %v974
  %2120 = vmatprep.subr.mxu0 0.0
  %2121 = vmatpush1.msra.mxu0 %v975
  %2122 = vmatprep.subr.mxu0 0.0
  %2123 = vmatpush1.msra.mxu0 %v976
  %2124 = vmatprep.subr.mxu0 0.0
  %2125 = vmatpush1.msra.mxu0 %v977
  %2126 = vmatprep.subr.mxu0 0.0
  %2127 = vmatpush1.msra.mxu0 %v978
  %2128 = vmatprep.subr.mxu0 0.0
  %2129 = vmatpush1.msra.mxu0 %v979
  %2130 = vmatprep.subr.mxu0 0.0
  %2131 = vmatpush1.msra.mxu0 %v980
  %2132 = vmatprep.subr.mxu0 0.0
  %2133 = vmatpush1.msra.mxu0 %v981
  %2134 = vmatprep.subr.mxu0 0.0
  %2135 = vmatpush1.msra.mxu0 %v982
  %2136 = vmatprep.subr.mxu0 0.0
  %2137 = vmatpush1.msra.mxu0 %v983
  %2138 = vmatprep.subr.mxu0 0.0
  %2139 = vmatpush1.msra.mxu0 %v984
  %2140 = vmatprep.subr.mxu0 0.0
  %2141 = vmatpush1.msra.mxu0 %v985
  %2142 = vmatprep.subr.mxu0 0.0
  %2143 = vmatpush1.msra.mxu0 %v986
  %2144 = vmatprep.subr.mxu0 0.0
  %2145 = vmatpush1.msra.mxu0 %v987
  %2146 = vmatprep.subr.mxu0 0.0
  %2147 = vmatpush1.msra.mxu0 %v988
  %2148 = vmatprep.subr.mxu0 0.0
  %2149 = vmatpush1.msra.mxu0 %v989
  %2150 = vmatprep.subr.mxu0 0.0
  %2151 = vmatpush1.msra.mxu0 %v990
  %2152 = vmatprep.subr.mxu0 0.0
  %2153 = vmatpush1.msra.mxu0 %v991
  %2154 = vmatprep.subr.mxu0 0.0
  %2155 = vmatpush1.msra.mxu0 %v992
  %2156 = vmatprep.subr.mxu0 0.0
  %2157 = vmatpush1.msra.mxu0 %v993
  %2158 = vmatprep.subr.mxu0 0.0
  %2159 = vmatpush1.msra.mxu0 %v994
  %2160 = vmatprep.subr.mxu0 0.0
  %2161 = vmatpush1.msra.mxu0 %v995
  %2162 = vmatprep.subr.mxu0 0.0
  %2163 = vmatpush1.msra.mxu0 %v996
  %2164 = vmatprep.subr.mxu0 0.0
  %2165 = vmatpush1.msra.mxu0 %v997
  %2166 = vmatprep.subr.mxu0 0.0
  %2167 = vmatpush1.msra.mxu0 %v998
  %2168 = vmatprep.subr.mxu0 0.0
  %2169 = vmatpush1.msra.mxu0 %v999
  %2170 = vmatprep.subr.mxu0 0.0
  %2171 = vmatpush1.msra.mxu0 %v1000
  %2172 = vmatprep.mubr.f32.mxu0 %v2105
  %2173 = vmatmul.mubr.f32.gmra.mrb[0].mxu0 %v2104
  %v2174 = vpop.f32.mrb[0].mxu0
  %v2175 = vadd.f32 %v1038, %v2174
  %v2176 = vpop.f32.mrb[0].mxu0
  %2177 = vdwg.mxu0
  %2178 = vmatprep.subr.mxu0 0.0
  %2179 = vmatpush1.msra.mxu0 %v1001
  %2180 = vmatprep.subr.mxu0 0.0
  %2181 = vmatpush1.msra.mxu0 %v1002
  %2182 = vmatprep.subr.mxu0 0.0
  %2183 = vmatpush1.msra.mxu0 %v1003
  %2184 = vmatprep.subr.mxu0 0.0
  %2185 = vmatpush1.msra.mxu0 %v1004
  %2186 = vmatprep.subr.mxu0 0.0
  %2187 = vmatpush1.msra.mxu0 %v1005
  %2188 = vmatprep.subr.mxu0 0.0
  %2189 = vmatpush1.msra.mxu0 %v1006
  %2190 = vmatprep.subr.mxu0 0.0
  %2191 = vmatpush1.msra.mxu0 %v1007
  %2192 = vmatprep.subr.mxu0 0.0
  %2193 = vmatpush1.msra.mxu0 %v1008
  %2194 = vmatprep.subr.mxu0 0.0
  %2195 = vmatpush1.msra.mxu0 %v1009
  %2196 = vmatprep.subr.mxu0 0.0
  %2197 = vmatpush1.msra.mxu0 %v1010
  %2198 = vmatprep.subr.mxu0 0.0
  %2199 = vmatpush1.msra.mxu0 %v1011
  %2200 = vmatprep.subr.mxu0 0.0
  %2201 = vmatpush1.msra.mxu0 %v1012
  %2202 = vmatprep.subr.mxu0 0.0
  %2203 = vmatpush1.msra.mxu0 %v1013
  %2204 = vmatprep.subr.mxu0 0.0
  %2205 = vmatpush1.msra.mxu0 %v1014
  %2206 = vmatprep.subr.mxu0 0.0
  %2207 = vmatpush1.msra.mxu0 %v1015
  %2208 = vmatprep.subr.mxu0 0.0
  %2209 = vmatpush1.msra.mxu0 %v1016
  %2210 = vmatprep.subr.mxu0 0.0
  %2211 = vmatpush1.msra.mxu0 %v1017
  %2212 = vmatprep.subr.mxu0 0.0
  %2213 = vmatpush1.msra.mxu0 %v1018
  %2214 = vmatprep.subr.mxu0 0.0
  %2215 = vmatpush1.msra.mxu0 %v1019
  %2216 = vmatprep.subr.mxu0 0.0
  %2217 = vmatpush1.msra.mxu0 %v1020
  %2218 = vmatprep.subr.mxu0 0.0
  %2219 = vmatpush1.msra.mxu0 %v1021
  %2220 = vmatprep.subr.mxu0 0.0
  %2221 = vmatpush1.msra.mxu0 %v1022
  %2222 = vmatprep.subr.mxu0 0.0
  %2223 = vmatpush1.msra.mxu0 %v1023
  %2224 = vmatprep.subr.mxu0 0.0
  %2225 = vmatpush1.msra.mxu0 %v1024
  %2226 = vmatprep.subr.mxu0 0.0
  %2227 = vmatpush1.msra.mxu0 %v1025
  %2228 = vmatprep.subr.mxu0 0.0
  %2229 = vmatpush1.msra.mxu0 %v1026
  %2230 = vmatprep.subr.mxu0 0.0
  %2231 = vmatpush1.msra.mxu0 %v1027
  %2232 = vmatprep.subr.mxu0 0.0
  %2233 = vmatpush1.msra.mxu0 %v1028
  %2234 = vmatprep.subr.mxu0 0.0
  %2235 = vmatpush1.msra.mxu0 %v1029
  %2236 = vmatprep.subr.mxu0 0.0
  %2237 = vmatpush1.msra.mxu0 %v1030
  %2238 = vmatprep.subr.mxu0 0.0
  %2239 = vmatpush1.msra.mxu0 %v1031
  %2240 = vmatprep.subr.mxu0 0.0
  %2241 = vmatpush1.msra.mxu0 %v1032
  %2242 = vmatprep.mubr.f32.mxu0 %v2107
  %2243 = vmatmul.mubr.f32.gmra.mrb[0].mxu0 %v2106
  %v2244 = vpop.f32.mrb[0].mxu0
  %v2245 = vadd.f32 %v2175, %v2244
  %v2246 = vpop.f32.mrb[0].mxu0
  %2247 = vdwg.mxu0
  %v2248 = vmul.f32 %v2075, 0.2
  %v2249 = vadd.f32 %v2248, %v2245
  %v2250 = vsel %vm2076, %v2245, %v2249
  %vm2251 = vcmp.gt.f32.partialorder %v2250, 0.5
  %v2252 = vsel %vm2251, 1, 0
  %v2253 = vcvt.s32.f32 %v2252
  %v2254 = vadd.f32 %v2079, %v2253
  %v2255 = vld [vmem:[#allocation2 + $0xe0] sm:$0xff]
  %v2256 = vld [vmem:[#allocation2 + $0xe8] sm:$0xff]
  %v2257 = vld [vmem:[#allocation2 + $0xf0] sm:$0xff]
  %v2258 = vld [vmem:[#allocation2 + $0xf8] sm:$0xff]
  %v2259 = vmul.f32 %v2092, 0.2
  %v2260 = vmul.f32 %v2093, 0.2
  %v2261 = vmul.f32 %v2094, 0.2
  %v2262 = vmul.f32 %v2095, 0.2
  %v2263 = vadd.f32 %v2259, %v2255
  %v2264 = vadd.f32 %v2260, %v2256
  %v2265 = vadd.f32 %v2261, %v2257
  %v2266 = vadd.f32 %v2262, %v2258
  %v2267 = vsel %vm2096, %v2255, %v2263
  %v2268 = vsel %vm2097, %v2256, %v2264
  %v2269 = vsel %vm2098, %v2257, %v2265
  %v2270 = vsel %vm2099, %v2258, %v2266
  %vm2271 = vcmp.gt.f32.partialorder %v2267, 0.5
  %vm2272 = vcmp.gt.f32.partialorder %v2268, 0.5
  %vm2273 = vcmp.gt.f32.partialorder %v2269, 0.5
  %vm2274 = vcmp.gt.f32.partialorder %v2270, 0.5
  %v2275 = vsel %vm2271, 1, 0
  %v2276 = vsel %vm2272, 1, 0
  %v2277 = vsel %vm2273, 1, 0
  %v2278 = vsel %vm2274, 1, 0
  %v2279 = vcvt.s32.f32 %v2275
  %v2280 = vcvt.s32.f32 %v2276
  %v2281 = vcvt.s32.f32 %v2277
  %v2282 = vcvt.s32.f32 %v2278
  %2283 = vmatprep.subr.mxu0 0.0
  %2284 = vmatpush1.msra.mxu0 %v969
  %2285 = vmatprep.subr.mxu0 0.0
  %2286 = vmatpush1.msra.mxu0 %v970
  %2287 = vmatprep.subr.mxu0 0.0
  %2288 = vmatpush1.msra.mxu0 %v971
  %2289 = vmatprep.subr.mxu0 0.0
  %2290 = vmatpush1.msra.mxu0 %v972
  %2291 = vmatprep.subr.mxu0 0.0
  %2292 = vmatpush1.msra.mxu0 %v973
  %2293 = vmatprep.subr.mxu0 0.0
  %2294 = vmatpush1.msra.mxu0 %v974
  %2295 = vmatprep.subr.mxu0 0.0
  %2296 = vmatpush1.msra.mxu0 %v975
  %2297 = vmatprep.subr.mxu0 0.0
  %2298 = vmatpush1.msra.mxu0 %v976
  %2299 = vmatprep.subr.mxu0 0.0
  %2300 = vmatpush1.msra.mxu0 %v977
  %2301 = vmatprep.subr.mxu0 0.0
  %2302 = vmatpush1.msra.mxu0 %v978
  %2303 = vmatprep.subr.mxu0 0.0
  %2304 = vmatpush1.msra.mxu0 %v979
  %2305 = vmatprep.subr.mxu0 0.0
  %2306 = vmatpush1.msra.mxu0 %v980
  %2307 = vmatprep.subr.mxu0 0.0
  %2308 = vmatpush1.msra.mxu0 %v981
  %2309 = vmatprep.subr.mxu0 0.0
  %2310 = vmatpush1.msra.mxu0 %v982
  %2311 = vmatprep.subr.mxu0 0.0
  %2312 = vmatpush1.msra.mxu0 %v983
  %2313 = vmatprep.subr.mxu0 0.0
  %2314 = vmatpush1.msra.mxu0 %v984
  %2315 = vmatprep.subr.mxu0 0.0
  %2316 = vmatpush1.msra.mxu0 %v985
  %2317 = vmatprep.subr.mxu0 0.0
  %2318 = vmatpush1.msra.mxu0 %v986
  %2319 = vmatprep.subr.mxu0 0.0
  %2320 = vmatpush1.msra.mxu0 %v987
  %2321 = vmatprep.subr.mxu0 0.0
  %2322 = vmatpush1.msra.mxu0 %v988
  %2323 = vmatprep.subr.mxu0 0.0
  %2324 = vmatpush1.msra.mxu0 %v989
  %2325 = vmatprep.subr.mxu0 0.0
  %2326 = vmatpush1.msra.mxu0 %v990
  %2327 = vmatprep.subr.mxu0 0.0
  %2328 = vmatpush1.msra.mxu0 %v991
  %2329 = vmatprep.subr.mxu0 0.0
  %2330 = vmatpush1.msra.mxu0 %v992
  %2331 = vmatprep.subr.mxu0 0.0
  %2332 = vmatpush1.msra.mxu0 %v993
  %2333 = vmatprep.subr.mxu0 0.0
  %2334 = vmatpush1.msra.mxu0 %v994
  %2335 = vmatprep.subr.mxu0 0.0
  %2336 = vmatpush1.msra.mxu0 %v995
  %2337 = vmatprep.subr.mxu0 0.0
  %2338 = vmatpush1.msra.mxu0 %v996
  %2339 = vmatprep.subr.mxu0 0.0
  %2340 = vmatpush1.msra.mxu0 %v997
  %2341 = vmatprep.subr.mxu0 0.0
  %2342 = vmatpush1.msra.mxu0 %v998
  %2343 = vmatprep.subr.mxu0 0.0
  %2344 = vmatpush1.msra.mxu0 %v999
  %2345 = vmatprep.subr.mxu0 0.0
  %2346 = vmatpush1.msra.mxu0 %v1000
  %2347 = vmatprep.mubr.f32.mxu0 %v2280
  %2348 = vmatmul.mubr.f32.gmra.mrb[0].mxu0 %v2279
  %v2349 = vpop.f32.mrb[0].mxu0
  %v2350 = vadd.f32 %v1038, %v2349
  %v2351 = vpop.f32.mrb[0].mxu0
  %2352 = vdwg.mxu0
  %2353 = vmatprep.subr.mxu0 0.0
  %2354 = vmatpush1.msra.mxu0 %v1001
  %2355 = vmatprep.subr.mxu0 0.0
  %2356 = vmatpush1.msra.mxu0 %v1002
  %2357 = vmatprep.subr.mxu0 0.0
  %2358 = vmatpush1.msra.mxu0 %v1003
  %2359 = vmatprep.subr.mxu0 0.0
  %2360 = vmatpush1.msra.mxu0 %v1004
  %2361 = vmatprep.subr.mxu0 0.0
  %2362 = vmatpush1.msra.mxu0 %v1005
  %2363 = vmatprep.subr.mxu0 0.0
  %2364 = vmatpush1.msra.mxu0 %v1006
  %2365 = vmatprep.subr.mxu0 0.0
  %2366 = vmatpush1.msra.mxu0 %v1007
  %2367 = vmatprep.subr.mxu0 0.0
  %2368 = vmatpush1.msra.mxu0 %v1008
  %2369 = vmatprep.subr.mxu0 0.0
  %2370 = vmatpush1.msra.mxu0 %v1009
  %2371 = vmatprep.subr.mxu0 0.0
  %2372 = vmatpush1.msra.mxu0 %v1010
  %2373 = vmatprep.subr.mxu0 0.0
  %2374 = vmatpush1.msra.mxu0 %v1011
  %2375 = vmatprep.subr.mxu0 0.0
  %2376 = vmatpush1.msra.mxu0 %v1012
  %2377 = vmatprep.subr.mxu0 0.0
  %2378 = vmatpush1.msra.mxu0 %v1013
  %2379 = vmatprep.subr.mxu0 0.0
  %2380 = vmatpush1.msra.mxu0 %v1014
  %2381 = vmatprep.subr.mxu0 0.0
  %2382 = vmatpush1.msra.mxu0 %v1015
  %2383 = vmatprep.subr.mxu0 0.0
  %2384 = vmatpush1.msra.mxu0 %v1016
  %2385 = vmatprep.subr.mxu0 0.0
  %2386 = vmatpush1.msra.mxu0 %v1017
  %2387 = vmatprep.subr.mxu0 0.0
  %2388 = vmatpush1.msra.mxu0 %v1018
  %2389 = vmatprep.subr.mxu0 0.0
  %2390 = vmatpush1.msra.mxu0 %v1019
  %2391 = vmatprep.subr.mxu0 0.0
  %2392 = vmatpush1.msra.mxu0 %v1020
  %2393 = vmatprep.subr.mxu0 0.0
  %2394 = vmatpush1.msra.mxu0 %v1021
  %2395 = vmatprep.subr.mxu0 0.0
  %2396 = vmatpush1.msra.mxu0 %v1022
  %2397 = vmatprep.subr.mxu0 0.0
  %2398 = vmatpush1.msra.mxu0 %v1023
  %2399 = vmatprep.subr.mxu0 0.0
  %2400 = vmatpush1.msra.mxu0 %v1024
  %2401 = vmatprep.subr.mxu0 0.0
  %2402 = vmatpush1.msra.mxu0 %v1025
  %2403 = vmatprep.subr.mxu0 0.0
  %2404 = vmatpush1.msra.mxu0 %v1026
  %2405 = vmatprep.subr.mxu0 0.0
  %2406 = vmatpush1.msra.mxu0 %v1027
  %2407 = vmatprep.subr.mxu0 0.0
  %2408 = vmatpush1.msra.mxu0 %v1028
  %2409 = vmatprep.subr.mxu0 0.0
  %2410 = vmatpush1.msra.mxu0 %v1029
  %2411 = vmatprep.subr.mxu0 0.0
  %2412 = vmatpush1.msra.mxu0 %v1030
  %2413 = vmatprep.subr.mxu0 0.0
  %2414 = vmatpush1.msra.mxu0 %v1031
  %2415 = vmatprep.subr.mxu0 0.0
  %2416 = vmatpush1.msra.mxu0 %v1032
  %2417 = vmatprep.mubr.f32.mxu0 %v2282
  %2418 = vmatmul.mubr.f32.gmra.mrb[0].mxu0 %v2281
  %v2419 = vpop.f32.mrb[0].mxu0
  %v2420 = vadd.f32 %v2350, %v2419
  %v2421 = vpop.f32.mrb[0].mxu0
  %2422 = vdwg.mxu0
  %v2423 = vmul.f32 %v2250, 0.2
  %v2424 = vadd.f32 %v2423, %v2420
  %v2425 = vsel %vm2251, %v2420, %v2424
  %vm2426 = vcmp.gt.f32.partialorder %v2425, 0.5
  %v2427 = vsel %vm2426, 1, 0
  %v2428 = vcvt.s32.f32 %v2427
  %v2429 = vadd.f32 %v2254, %v2428
  %v2430 = vld [vmem:[#allocation2 + $0x100] sm:$0xff]
  %v2431 = vld [vmem:[#allocation2 + $0x108] sm:$0xff]
  %v2432 = vld [vmem:[#allocation2 + $0x110] sm:$0xff]
  %v2433 = vld [vmem:[#allocation2 + $0x118] sm:$0xff]
  %v2434 = vmul.f32 %v2267, 0.2
  %v2435 = vmul.f32 %v2268, 0.2
  %v2436 = vmul.f32 %v2269, 0.2
  %v2437 = vmul.f32 %v2270, 0.2
  %v2438 = vadd.f32 %v2434, %v2430
  %v2439 = vadd.f32 %v2435, %v2431
  %v2440 = vadd.f32 %v2436, %v2432
  %v2441 = vadd.f32 %v2437, %v2433
  %v2442 = vsel %vm2271, %v2430, %v2438
  %v2443 = vsel %vm2272, %v2431, %v2439
  %v2444 = vsel %vm2273, %v2432, %v2440
  %v2445 = vsel %vm2274, %v2433, %v2441
  %vm2446 = vcmp.gt.f32.partialorder %v2442, 0.5
  %vm2447 = vcmp.gt.f32.partialorder %v2443, 0.5
  %vm2448 = vcmp.gt.f32.partialorder %v2444, 0.5
  %vm2449 = vcmp.gt.f32.partialorder %v2445, 0.5
  %v2450 = vsel %vm2446, 1, 0
  %v2451 = vsel %vm2447, 1, 0
  %v2452 = vsel %vm2448, 1, 0
  %v2453 = vsel %vm2449, 1, 0
  %v2454 = vcvt.s32.f32 %v2450
  %v2455 = vcvt.s32.f32 %v2451
  %v2456 = vcvt.s32.f32 %v2452
  %v2457 = vcvt.s32.f32 %v2453
  %2458 = vmatprep.subr.mxu0 0.0
  %2459 = vmatpush1.msra.mxu0 %v969
  %2460 = vmatprep.subr.mxu0 0.0
  %2461 = vmatpush1.msra.mxu0 %v970
  %2462 = vmatprep.subr.mxu0 0.0
  %2463 = vmatpush1.msra.mxu0 %v971
  %2464 = vmatprep.subr.mxu0 0.0
  %2465 = vmatpush1.msra.mxu0 %v972
  %2466 = vmatprep.subr.mxu0 0.0
  %2467 = vmatpush1.msra.mxu0 %v973
  %2468 = vmatprep.subr.mxu0 0.0
  %2469 = vmatpush1.msra.mxu0 %v974
  %2470 = vmatprep.subr.mxu0 0.0
  %2471 = vmatpush1.msra.mxu0 %v975
  %2472 = vmatprep.subr.mxu0 0.0
  %2473 = vmatpush1.msra.mxu0 %v976
  %2474 = vmatprep.subr.mxu0 0.0
  %2475 = vmatpush1.msra.mxu0 %v977
  %2476 = vmatprep.subr.mxu0 0.0
  %2477 = vmatpush1.msra.mxu0 %v978
  %2478 = vmatprep.subr.mxu0 0.0
  %2479 = vmatpush1.msra.mxu0 %v979
  %2480 = vmatprep.subr.mxu0 0.0
  %2481 = vmatpush1.msra.mxu0 %v980
  %2482 = vmatprep.subr.mxu0 0.0
  %2483 = vmatpush1.msra.mxu0 %v981
  %2484 = vmatprep.subr.mxu0 0.0
  %2485 = vmatpush1.msra.mxu0 %v982
  %2486 = vmatprep.subr.mxu0 0.0
  %2487 = vmatpush1.msra.mxu0 %v983
  %2488 = vmatprep.subr.mxu0 0.0
  %2489 = vmatpush1.msra.mxu0 %v984
  %2490 = vmatprep.subr.mxu0 0.0
  %2491 = vmatpush1.msra.mxu0 %v985
  %2492 = vmatprep.subr.mxu0 0.0
  %2493 = vmatpush1.msra.mxu0 %v986
  %2494 = vmatprep.subr.mxu0 0.0
  %2495 = vmatpush1.msra.mxu0 %v987
  %2496 = vmatprep.subr.mxu0 0.0
  %2497 = vmatpush1.msra.mxu0 %v988
  %2498 = vmatprep.subr.mxu0 0.0
  %2499 = vmatpush1.msra.mxu0 %v989
  %2500 = vmatprep.subr.mxu0 0.0
  %2501 = vmatpush1.msra.mxu0 %v990
  %2502 = vmatprep.subr.mxu0 0.0
  %2503 = vmatpush1.msra.mxu0 %v991
  %2504 = vmatprep.subr.mxu0 0.0
  %2505 = vmatpush1.msra.mxu0 %v992
  %2506 = vmatprep.subr.mxu0 0.0
  %2507 = vmatpush1.msra.mxu0 %v993
  %2508 = vmatprep.subr.mxu0 0.0
  %2509 = vmatpush1.msra.mxu0 %v994
  %2510 = vmatprep.subr.mxu0 0.0
  %2511 = vmatpush1.msra.mxu0 %v995
  %2512 = vmatprep.subr.mxu0 0.0
  %2513 = vmatpush1.msra.mxu0 %v996
  %2514 = vmatprep.subr.mxu0 0.0
  %2515 = vmatpush1.msra.mxu0 %v997
  %2516 = vmatprep.subr.mxu0 0.0
  %2517 = vmatpush1.msra.mxu0 %v998
  %2518 = vmatprep.subr.mxu0 0.0
  %2519 = vmatpush1.msra.mxu0 %v999
  %2520 = vmatprep.subr.mxu0 0.0
  %2521 = vmatpush1.msra.mxu0 %v1000
  %2522 = vmatprep.mubr.f32.mxu0 %v2455
  %2523 = vmatmul.mubr.f32.gmra.mrb[0].mxu0 %v2454
  %v2524 = vpop.f32.mrb[0].mxu0
  %v2525 = vadd.f32 %v1038, %v2524
  %v2526 = vpop.f32.mrb[0].mxu0
  %2527 = vdwg.mxu0
  %2528 = vmatprep.subr.mxu0 0.0
  %2529 = vmatpush1.msra.mxu0 %v1001
  %2530 = vmatprep.subr.mxu0 0.0
  %2531 = vmatpush1.msra.mxu0 %v1002
  %2532 = vmatprep.subr.mxu0 0.0
  %2533 = vmatpush1.msra.mxu0 %v1003
  %2534 = vmatprep.subr.mxu0 0.0
  %2535 = vmatpush1.msra.mxu0 %v1004
  %2536 = vmatprep.subr.mxu0 0.0
  %2537 = vmatpush1.msra.mxu0 %v1005
  %2538 = vmatprep.subr.mxu0 0.0
  %2539 = vmatpush1.msra.mxu0 %v1006
  %2540 = vmatprep.subr.mxu0 0.0
  %2541 = vmatpush1.msra.mxu0 %v1007
  %2542 = vmatprep.subr.mxu0 0.0
  %2543 = vmatpush1.msra.mxu0 %v1008
  %2544 = vmatprep.subr.mxu0 0.0
  %2545 = vmatpush1.msra.mxu0 %v1009
  %2546 = vmatprep.subr.mxu0 0.0
  %2547 = vmatpush1.msra.mxu0 %v1010
  %2548 = vmatprep.subr.mxu0 0.0
  %2549 = vmatpush1.msra.mxu0 %v1011
  %2550 = vmatprep.subr.mxu0 0.0
  %2551 = vmatpush1.msra.mxu0 %v1012
  %2552 = vmatprep.subr.mxu0 0.0
  %2553 = vmatpush1.msra.mxu0 %v1013
  %2554 = vmatprep.subr.mxu0 0.0
  %2555 = vmatpush1.msra.mxu0 %v1014
  %2556 = vmatprep.subr.mxu0 0.0
  %2557 = vmatpush1.msra.mxu0 %v1015
  %2558 = vmatprep.subr.mxu0 0.0
  %2559 = vmatpush1.msra.mxu0 %v1016
  %2560 = vmatprep.subr.mxu0 0.0
  %2561 = vmatpush1.msra.mxu0 %v1017
  %2562 = vmatprep.subr.mxu0 0.0
  %2563 = vmatpush1.msra.mxu0 %v1018
  %2564 = vmatprep.subr.mxu0 0.0
  %2565 = vmatpush1.msra.mxu0 %v1019
  %2566 = vmatprep.subr.mxu0 0.0
  %2567 = vmatpush1.msra.mxu0 %v1020
  %2568 = vmatprep.subr.mxu0 0.0
  %2569 = vmatpush1.msra.mxu0 %v1021
  %2570 = vmatprep.subr.mxu0 0.0
  %2571 = vmatpush1.msra.mxu0 %v1022
  %2572 = vmatprep.subr.mxu0 0.0
  %2573 = vmatpush1.msra.mxu0 %v1023
  %2574 = vmatprep.subr.mxu0 0.0
  %2575 = vmatpush1.msra.mxu0 %v1024
  %2576 = vmatprep.subr.mxu0 0.0
  %2577 = vmatpush1.msra.mxu0 %v1025
  %2578 = vmatprep.subr.mxu0 0.0
  %2579 = vmatpush1.msra.mxu0 %v1026
  %2580 = vmatprep.subr.mxu0 0.0
  %2581 = vmatpush1.msra.mxu0 %v1027
  %2582 = vmatprep.subr.mxu0 0.0
  %2583 = vmatpush1.msra.mxu0 %v1028
  %2584 = vmatprep.subr.mxu0 0.0
  %2585 = vmatpush1.msra.mxu0 %v1029
  %2586 = vmatprep.subr.mxu0 0.0
  %2587 = vmatpush1.msra.mxu0 %v1030
  %2588 = vmatprep.subr.mxu0 0.0
  %2589 = vmatpush1.msra.mxu0 %v1031
  %2590 = vmatprep.subr.mxu0 0.0
  %2591 = vmatpush1.msra.mxu0 %v1032
  %2592 = vmatprep.mubr.f32.mxu0 %v2457
  %2593 = vmatmul.mubr.f32.gmra.mrb[0].mxu0 %v2456
  %v2594 = vpop.f32.mrb[0].mxu0
  %v2595 = vadd.f32 %v2525, %v2594
  %v2596 = vpop.f32.mrb[0].mxu0
  %2597 = vdwg.mxu0
  %v2598 = vmul.f32 %v2425, 0.2
  %v2599 = vadd.f32 %v2598, %v2595
  %v2600 = vsel %vm2426, %v2595, %v2599
  %vm2601 = vcmp.gt.f32.partialorder %v2600, 0.5
  %v2602 = vsel %vm2601, 1, 0
  %v2603 = vcvt.s32.f32 %v2602
  %v2604 = vadd.f32 %v2429, %v2603
  %v2605 = vld [vmem:[#allocation2 + $0x120] sm:$0xff]
  %v2606 = vld [vmem:[#allocation2 + $0x128] sm:$0xff]
  %v2607 = vld [vmem:[#allocation2 + $0x130] sm:$0xff]
  %v2608 = vld [vmem:[#allocation2 + $0x138] sm:$0xff]
  %v2609 = vmul.f32 %v2442, 0.2
  %v2610 = vmul.f32 %v2443, 0.2
  %v2611 = vmul.f32 %v2444, 0.2
  %v2612 = vmul.f32 %v2445, 0.2
  %v2613 = vadd.f32 %v2609, %v2605
  %v2614 = vadd.f32 %v2610, %v2606
  %v2615 = vadd.f32 %v2611, %v2607
  %v2616 = vadd.f32 %v2612, %v2608
  %v2617 = vsel %vm2446, %v2605, %v2613
  %v2618 = vsel %vm2447, %v2606, %v2614
  %v2619 = vsel %vm2448, %v2607, %v2615
  %v2620 = vsel %vm2449, %v2608, %v2616
  %vm2621 = vcmp.gt.f32.partialorder %v2617, 0.5
  %vm2622 = vcmp.gt.f32.partialorder %v2618, 0.5
  %vm2623 = vcmp.gt.f32.partialorder %v2619, 0.5
  %vm2624 = vcmp.gt.f32.partialorder %v2620, 0.5
  %v2625 = vsel %vm2621, 1, 0
  %v2626 = vsel %vm2622, 1, 0
  %v2627 = vsel %vm2623, 1, 0
  %v2628 = vsel %vm2624, 1, 0
  %v2629 = vcvt.s32.f32 %v2625
  %v2630 = vcvt.s32.f32 %v2626
  %v2631 = vcvt.s32.f32 %v2627
  %v2632 = vcvt.s32.f32 %v2628
  %2633 = vmatprep.subr.mxu0 0.0
  %2634 = vmatpush1.msra.mxu0 %v969
  %2635 = vmatprep.subr.mxu0 0.0
  %2636 = vmatpush1.msra.mxu0 %v970
  %2637 = vmatprep.subr.mxu0 0.0
  %2638 = vmatpush1.msra.mxu0 %v971
  %2639 = vmatprep.subr.mxu0 0.0
  %2640 = vmatpush1.msra.mxu0 %v972
  %2641 = vmatprep.subr.mxu0 0.0
  %2642 = vmatpush1.msra.mxu0 %v973
  %2643 = vmatprep.subr.mxu0 0.0
  %2644 = vmatpush1.msra.mxu0 %v974
  %2645 = vmatprep.subr.mxu0 0.0
  %2646 = vmatpush1.msra.mxu0 %v975
  %2647 = vmatprep.subr.mxu0 0.0
  %2648 = vmatpush1.msra.mxu0 %v976
  %2649 = vmatprep.subr.mxu0 0.0
  %2650 = vmatpush1.msra.mxu0 %v977
  %2651 = vmatprep.subr.mxu0 0.0
  %2652 = vmatpush1.msra.mxu0 %v978
  %2653 = vmatprep.subr.mxu0 0.0
  %2654 = vmatpush1.msra.mxu0 %v979
  %2655 = vmatprep.subr.mxu0 0.0
  %2656 = vmatpush1.msra.mxu0 %v980
  %2657 = vmatprep.subr.mxu0 0.0
  %2658 = vmatpush1.msra.mxu0 %v981
  %2659 = vmatprep.subr.mxu0 0.0
  %2660 = vmatpush1.msra.mxu0 %v982
  %2661 = vmatprep.subr.mxu0 0.0
  %2662 = vmatpush1.msra.mxu0 %v983
  %2663 = vmatprep.subr.mxu0 0.0
  %2664 = vmatpush1.msra.mxu0 %v984
  %2665 = vmatprep.subr.mxu0 0.0
  %2666 = vmatpush1.msra.mxu0 %v985
  %2667 = vmatprep.subr.mxu0 0.0
  %2668 = vmatpush1.msra.mxu0 %v986
  %2669 = vmatprep.subr.mxu0 0.0
  %2670 = vmatpush1.msra.mxu0 %v987
  %2671 = vmatprep.subr.mxu0 0.0
  %2672 = vmatpush1.msra.mxu0 %v988
  %2673 = vmatprep.subr.mxu0 0.0
  %2674 = vmatpush1.msra.mxu0 %v989
  %2675 = vmatprep.subr.mxu0 0.0
  %2676 = vmatpush1.msra.mxu0 %v990
  %2677 = vmatprep.subr.mxu0 0.0
  %2678 = vmatpush1.msra.mxu0 %v991
  %2679 = vmatprep.subr.mxu0 0.0
  %2680 = vmatpush1.msra.mxu0 %v992
  %2681 = vmatprep.subr.mxu0 0.0
  %2682 = vmatpush1.msra.mxu0 %v993
  %2683 = vmatprep.subr.mxu0 0.0
  %2684 = vmatpush1.msra.mxu0 %v994
  %2685 = vmatprep.subr.mxu0 0.0
  %2686 = vmatpush1.msra.mxu0 %v995
  %2687 = vmatprep.subr.mxu0 0.0
  %2688 = vmatpush1.msra.mxu0 %v996
  %2689 = vmatprep.subr.mxu0 0.0
  %2690 = vmatpush1.msra.mxu0 %v997
  %2691 = vmatprep.subr.mxu0 0.0
  %2692 = vmatpush1.msra.mxu0 %v998
  %2693 = vmatprep.subr.mxu0 0.0
  %2694 = vmatpush1.msra.mxu0 %v999
  %2695 = vmatprep.subr.mxu0 0.0
  %2696 = vmatpush1.msra.mxu0 %v1000
  %2697 = vmatprep.mubr.f32.mxu0 %v2630
  %2698 = vmatmul.mubr.f32.gmra.mrb[0].mxu0 %v2629
  %v2699 = vpop.f32.mrb[0].mxu0
  %v2700 = vadd.f32 %v1038, %v2699
  %v2701 = vpop.f32.mrb[0].mxu0
  %2702 = vdwg.mxu0
  %2703 = vmatprep.subr.mxu0 0.0
  %2704 = vmatpush1.msra.mxu0 %v1001
  %2705 = vmatprep.subr.mxu0 0.0
  %2706 = vmatpush1.msra.mxu0 %v1002
  %2707 = vmatprep.subr.mxu0 0.0
  %2708 = vmatpush1.msra.mxu0 %v1003
  %2709 = vmatprep.subr.mxu0 0.0
  %2710 = vmatpush1.msra.mxu0 %v1004
  %2711 = vmatprep.subr.mxu0 0.0
  %2712 = vmatpush1.msra.mxu0 %v1005
  %2713 = vmatprep.subr.mxu0 0.0
  %2714 = vmatpush1.msra.mxu0 %v1006
  %2715 = vmatprep.subr.mxu0 0.0
  %2716 = vmatpush1.msra.mxu0 %v1007
  %2717 = vmatprep.subr.mxu0 0.0
  %2718 = vmatpush1.msra.mxu0 %v1008
  %2719 = vmatprep.subr.mxu0 0.0
  %2720 = vmatpush1.msra.mxu0 %v1009
  %2721 = vmatprep.subr.mxu0 0.0
  %2722 = vmatpush1.msra.mxu0 %v1010
  %2723 = vmatprep.subr.mxu0 0.0
  %2724 = vmatpush1.msra.mxu0 %v1011
  %2725 = vmatprep.subr.mxu0 0.0
  %2726 = vmatpush1.msra.mxu0 %v1012
  %2727 = vmatprep.subr.mxu0 0.0
  %2728 = vmatpush1.msra.mxu0 %v1013
  %2729 = vmatprep.subr.mxu0 0.0
  %2730 = vmatpush1.msra.mxu0 %v1014
  %2731 = vmatprep.subr.mxu0 0.0
  %2732 = vmatpush1.msra.mxu0 %v1015
  %2733 = vmatprep.subr.mxu0 0.0
  %2734 = vmatpush1.msra.mxu0 %v1016
  %2735 = vmatprep.subr.mxu0 0.0
  %2736 = vmatpush1.msra.mxu0 %v1017
  %2737 = vmatprep.subr.mxu0 0.0
  %2738 = vmatpush1.msra.mxu0 %v1018
  %2739 = vmatprep.subr.mxu0 0.0
  %2740 = vmatpush1.msra.mxu0 %v1019
  %2741 = vmatprep.subr.mxu0 0.0
  %2742 = vmatpush1.msra.mxu0 %v1020
  %2743 = vmatprep.subr.mxu0 0.0
  %2744 = vmatpush1.msra.mxu0 %v1021
  %2745 = vmatprep.subr.mxu0 0.0
  %2746 = vmatpush1.msra.mxu0 %v1022
  %2747 = vmatprep.subr.mxu0 0.0
  %2748 = vmatpush1.msra.mxu0 %v1023
  %2749 = vmatprep.subr.mxu0 0.0
  %2750 = vmatpush1.msra.mxu0 %v1024
  %2751 = vmatprep.subr.mxu0 0.0
  %2752 = vmatpush1.msra.mxu0 %v1025
  %2753 = vmatprep.subr.mxu0 0.0
  %2754 = vmatpush1.msra.mxu0 %v1026
  %2755 = vmatprep.subr.mxu0 0.0
  %2756 = vmatpush1.msra.mxu0 %v1027
  %2757 = vmatprep.subr.mxu0 0.0
  %2758 = vmatpush1.msra.mxu0 %v1028
  %2759 = vmatprep.subr.mxu0 0.0
  %2760 = vmatpush1.msra.mxu0 %v1029
  %2761 = vmatprep.subr.mxu0 0.0
  %2762 = vmatpush1.msra.mxu0 %v1030
  %2763 = vmatprep.subr.mxu0 0.0
  %2764 = vmatpush1.msra.mxu0 %v1031
  %2765 = vmatprep.subr.mxu0 0.0
  %2766 = vmatpush1.msra.mxu0 %v1032
  %2767 = vmatprep.mubr.f32.mxu0 %v2632
  %2768 = vmatmul.mubr.f32.gmra.mrb[0].mxu0 %v2631
  %v2769 = vpop.f32.mrb[0].mxu0
  %v2770 = vadd.f32 %v2700, %v2769
  %v2771 = vpop.f32.mrb[0].mxu0
  %2772 = vdwg.mxu0
  %v2773 = vmul.f32 %v2600, 0.2
  %v2774 = vadd.f32 %v2773, %v2770
  %v2775 = vsel %vm2601, %v2770, %v2774
  %vm2776 = vcmp.gt.f32.partialorder %v2775, 0.5
  %v2777 = vsel %vm2776, 1, 0
  %v2778 = vcvt.s32.f32 %v2777
  %v2779 = vadd.f32 %v2604, %v2778
  %v2780 = vld [vmem:[#allocation2 + $0x140] sm:$0xff]
  %v2781 = vld [vmem:[#allocation2 + $0x148] sm:$0xff]
  %v2782 = vld [vmem:[#allocation2 + $0x150] sm:$0xff]
  %v2783 = vld [vmem:[#allocation2 + $0x158] sm:$0xff]
  %v2784 = vmul.f32 %v2617, 0.2
  %v2785 = vmul.f32 %v2618, 0.2
  %v2786 = vmul.f32 %v2619, 0.2
  %v2787 = vmul.f32 %v2620, 0.2
  %v2788 = vadd.f32 %v2784, %v2780
  %v2789 = vadd.f32 %v2785, %v2781
  %v2790 = vadd.f32 %v2786, %v2782
  %v2791 = vadd.f32 %v2787, %v2783
  %v2792 = vsel %vm2621, %v2780, %v2788
  %v2793 = vsel %vm2622, %v2781, %v2789
  %v2794 = vsel %vm2623, %v2782, %v2790
  %v2795 = vsel %vm2624, %v2783, %v2791
  %vm2796 = vcmp.gt.f32.partialorder %v2792, 0.5
  %vm2797 = vcmp.gt.f32.partialorder %v2793, 0.5
  %vm2798 = vcmp.gt.f32.partialorder %v2794, 0.5
  %vm2799 = vcmp.gt.f32.partialorder %v2795, 0.5
  %v2800 = vsel %vm2796, 1, 0
  %v2801 = vsel %vm2797, 1, 0
  %v2802 = vsel %vm2798, 1, 0
  %v2803 = vsel %vm2799, 1, 0
  %v2804 = vcvt.s32.f32 %v2800
  %v2805 = vcvt.s32.f32 %v2801
  %v2806 = vcvt.s32.f32 %v2802
  %v2807 = vcvt.s32.f32 %v2803
  %2808 = vmatprep.subr.mxu0 0.0
  %2809 = vmatpush1.msra.mxu0 %v969
  %2810 = vmatprep.subr.mxu0 0.0
  %2811 = vmatpush1.msra.mxu0 %v970
  %2812 = vmatprep.subr.mxu0 0.0
  %2813 = vmatpush1.msra.mxu0 %v971
  %2814 = vmatprep.subr.mxu0 0.0
  %2815 = vmatpush1.msra.mxu0 %v972
  %2816 = vmatprep.subr.mxu0 0.0
  %2817 = vmatpush1.msra.mxu0 %v973
  %2818 = vmatprep.subr.mxu0 0.0
  %2819 = vmatpush1.msra.mxu0 %v974
  %2820 = vmatprep.subr.mxu0 0.0
  %2821 = vmatpush1.msra.mxu0 %v975
  %2822 = vmatprep.subr.mxu0 0.0
  %2823 = vmatpush1.msra.mxu0 %v976
  %2824 = vmatprep.subr.mxu0 0.0
  %2825 = vmatpush1.msra.mxu0 %v977
  %2826 = vmatprep.subr.mxu0 0.0
  %2827 = vmatpush1.msra.mxu0 %v978
  %2828 = vmatprep.subr.mxu0 0.0
  %2829 = vmatpush1.msra.mxu0 %v979
  %2830 = vmatprep.subr.mxu0 0.0
  %2831 = vmatpush1.msra.mxu0 %v980
  %2832 = vmatprep.subr.mxu0 0.0
  %2833 = vmatpush1.msra.mxu0 %v981
  %2834 = vmatprep.subr.mxu0 0.0
  %2835 = vmatpush1.msra.mxu0 %v982
  %2836 = vmatprep.subr.mxu0 0.0
  %2837 = vmatpush1.msra.mxu0 %v983
  %2838 = vmatprep.subr.mxu0 0.0
  %2839 = vmatpush1.msra.mxu0 %v984
  %2840 = vmatprep.subr.mxu0 0.0
  %2841 = vmatpush1.msra.mxu0 %v985
  %2842 = vmatprep.subr.mxu0 0.0
  %2843 = vmatpush1.msra.mxu0 %v986
  %2844 = vmatprep.subr.mxu0 0.0
  %2845 = vmatpush1.msra.mxu0 %v987
  %2846 = vmatprep.subr.mxu0 0.0
  %2847 = vmatpush1.msra.mxu0 %v988
  %2848 = vmatprep.subr.mxu0 0.0
  %2849 = vmatpush1.msra.mxu0 %v989
  %2850 = vmatprep.subr.mxu0 0.0
  %2851 = vmatpush1.msra.mxu0 %v990
  %2852 = vmatprep.subr.mxu0 0.0
  %2853 = vmatpush1.msra.mxu0 %v991
  %2854 = vmatprep.subr.mxu0 0.0
  %2855 = vmatpush1.msra.mxu0 %v992
  %2856 = vmatprep.subr.mxu0 0.0
  %2857 = vmatpush1.msra.mxu0 %v993
  %2858 = vmatprep.subr.mxu0 0.0
  %2859 = vmatpush1.msra.mxu0 %v994
  %2860 = vmatprep.subr.mxu0 0.0
  %2861 = vmatpush1.msra.mxu0 %v995
  %2862 = vmatprep.subr.mxu0 0.0
  %2863 = vmatpush1.msra.mxu0 %v996
  %2864 = vmatprep.subr.mxu0 0.0
  %2865 = vmatpush1.msra.mxu0 %v997
  %2866 = vmatprep.subr.mxu0 0.0
  %2867 = vmatpush1.msra.mxu0 %v998
  %2868 = vmatprep.subr.mxu0 0.0
  %2869 = vmatpush1.msra.mxu0 %v999
  %2870 = vmatprep.subr.mxu0 0.0
  %2871 = vmatpush1.msra.mxu0 %v1000
  %2872 = vmatprep.mubr.f32.mxu0 %v2805
  %2873 = vmatmul.mubr.f32.gmra.mrb[0].mxu0 %v2804
  %v2874 = vpop.f32.mrb[0].mxu0
  %v2875 = vadd.f32 %v1038, %v2874
  %v2876 = vpop.f32.mrb[0].mxu0
  %2877 = vdwg.mxu0
  %2878 = vmatprep.subr.mxu0 0.0
  %2879 = vmatpush1.msra.mxu0 %v1001
  %2880 = vmatprep.subr.mxu0 0.0
  %2881 = vmatpush1.msra.mxu0 %v1002
  %2882 = vmatprep.subr.mxu0 0.0
  %2883 = vmatpush1.msra.mxu0 %v1003
  %2884 = vmatprep.subr.mxu0 0.0
  %2885 = vmatpush1.msra.mxu0 %v1004
  %2886 = vmatprep.subr.mxu0 0.0
  %2887 = vmatpush1.msra.mxu0 %v1005
  %2888 = vmatprep.subr.mxu0 0.0
  %2889 = vmatpush1.msra.mxu0 %v1006
  %2890 = vmatprep.subr.mxu0 0.0
  %2891 = vmatpush1.msra.mxu0 %v1007
  %2892 = vmatprep.subr.mxu0 0.0
  %2893 = vmatpush1.msra.mxu0 %v1008
  %2894 = vmatprep.subr.mxu0 0.0
  %2895 = vmatpush1.msra.mxu0 %v1009
  %2896 = vmatprep.subr.mxu0 0.0
  %2897 = vmatpush1.msra.mxu0 %v1010
  %2898 = vmatprep.subr.mxu0 0.0
  %2899 = vmatpush1.msra.mxu0 %v1011
  %2900 = vmatprep.subr.mxu0 0.0
  %2901 = vmatpush1.msra.mxu0 %v1012
  %2902 = vmatprep.subr.mxu0 0.0
  %2903 = vmatpush1.msra.mxu0 %v1013
  %2904 = vmatprep.subr.mxu0 0.0
  %2905 = vmatpush1.msra.mxu0 %v1014
  %2906 = vmatprep.subr.mxu0 0.0
  %2907 = vmatpush1.msra.mxu0 %v1015
  %2908 = vmatprep.subr.mxu0 0.0
  %2909 = vmatpush1.msra.mxu0 %v1016
  %2910 = vmatprep.subr.mxu0 0.0
  %2911 = vmatpush1.msra.mxu0 %v1017
  %2912 = vmatprep.subr.mxu0 0.0
  %2913 = vmatpush1.msra.mxu0 %v1018
  %2914 = vmatprep.subr.mxu0 0.0
  %2915 = vmatpush1.msra.mxu0 %v1019
  %2916 = vmatprep.subr.mxu0 0.0
  %2917 = vmatpush1.msra.mxu0 %v1020
  %2918 = vmatprep.subr.mxu0 0.0
  %2919 = vmatpush1.msra.mxu0 %v1021
  %2920 = vmatprep.subr.mxu0 0.0
  %2921 = vmatpush1.msra.mxu0 %v1022
  %2922 = vmatprep.subr.mxu0 0.0
  %2923 = vmatpush1.msra.mxu0 %v1023
  %2924 = vmatprep.subr.mxu0 0.0
  %2925 = vmatpush1.msra.mxu0 %v1024
  %2926 = vmatprep.subr.mxu0 0.0
  %2927 = vmatpush1.msra.mxu0 %v1025
  %2928 = vmatprep.subr.mxu0 0.0
  %2929 = vmatpush1.msra.mxu0 %v1026
  %2930 = vmatprep.subr.mxu0 0.0
  %2931 = vmatpush1.msra.mxu0 %v1027
  %2932 = vmatprep.subr.mxu0 0.0
  %2933 = vmatpush1.msra.mxu0 %v1028
  %2934 = vmatprep.subr.mxu0 0.0
  %2935 = vmatpush1.msra.mxu0 %v1029
  %2936 = vmatprep.subr.mxu0 0.0
  %2937 = vmatpush1.msra.mxu0 %v1030
  %2938 = vmatprep.subr.mxu0 0.0
  %2939 = vmatpush1.msra.mxu0 %v1031
  %2940 = vmatprep.subr.mxu0 0.0
  %2941 = vmatpush1.msra.mxu0 %v1032
  %2942 = vmatprep.mubr.f32.mxu0 %v2807
  %2943 = vmatmul.mubr.f32.gmra.mrb[0].mxu0 %v2806
  %v2944 = vpop.f32.mrb[0].mxu0
  %v2945 = vadd.f32 %v2875, %v2944
  %v2946 = vpop.f32.mrb[0].mxu0
  %2947 = vdwg.mxu0
  %v2948 = vmul.f32 %v2775, 0.2
  %v2949 = vadd.f32 %v2948, %v2945
  %v2950 = vsel %vm2776, %v2945, %v2949
  %vm2951 = vcmp.gt.f32.partialorder %v2950, 0.5
  %v2952 = vsel %vm2951, 1, 0
  %v2953 = vcvt.s32.f32 %v2952
  %v2954 = vadd.f32 %v2779, %v2953
  %v2955 = vld [vmem:[#allocation2 + $0x160] sm:$0xff]
  %v2956 = vld [vmem:[#allocation2 + $0x168] sm:$0xff]
  %v2957 = vld [vmem:[#allocation2 + $0x170] sm:$0xff]
  %v2958 = vld [vmem:[#allocation2 + $0x178] sm:$0xff]
  %v2959 = vmul.f32 %v2792, 0.2
  %v2960 = vmul.f32 %v2793, 0.2
  %v2961 = vmul.f32 %v2794, 0.2
  %v2962 = vmul.f32 %v2795, 0.2
  %v2963 = vadd.f32 %v2959, %v2955
  %v2964 = vadd.f32 %v2960, %v2956
  %v2965 = vadd.f32 %v2961, %v2957
  %v2966 = vadd.f32 %v2962, %v2958
  %v2967 = vsel %vm2796, %v2955, %v2963
  %v2968 = vsel %vm2797, %v2956, %v2964
  %v2969 = vsel %vm2798, %v2957, %v2965
  %v2970 = vsel %vm2799, %v2958, %v2966
  %vm2971 = vcmp.gt.f32.partialorder %v2967, 0.5
  %vm2972 = vcmp.gt.f32.partialorder %v2968, 0.5
  %vm2973 = vcmp.gt.f32.partialorder %v2969, 0.5
  %vm2974 = vcmp.gt.f32.partialorder %v2970, 0.5
  %v2975 = vsel %vm2971, 1, 0
  %v2976 = vsel %vm2972, 1, 0
  %v2977 = vsel %vm2973, 1, 0
  %v2978 = vsel %vm2974, 1, 0
  %v2979 = vcvt.s32.f32 %v2975
  %v2980 = vcvt.s32.f32 %v2976
  %v2981 = vcvt.s32.f32 %v2977
  %v2982 = vcvt.s32.f32 %v2978
  %2983 = vmatprep.subr.mxu0 0.0
  %2984 = vmatpush1.msra.mxu0 %v969
  %2985 = vmatprep.subr.mxu0 0.0
  %2986 = vmatpush1.msra.mxu0 %v970
  %2987 = vmatprep.subr.mxu0 0.0
  %2988 = vmatpush1.msra.mxu0 %v971
  %2989 = vmatprep.subr.mxu0 0.0
  %2990 = vmatpush1.msra.mxu0 %v972
  %2991 = vmatprep.subr.mxu0 0.0
  %2992 = vmatpush1.msra.mxu0 %v973
  %2993 = vmatprep.subr.mxu0 0.0
  %2994 = vmatpush1.msra.mxu0 %v974
  %2995 = vmatprep.subr.mxu0 0.0
  %2996 = vmatpush1.msra.mxu0 %v975
  %2997 = vmatprep.subr.mxu0 0.0
  %2998 = vmatpush1.msra.mxu0 %v976
  %2999 = vmatprep.subr.mxu0 0.0
  %3000 = vmatpush1.msra.mxu0 %v977
  %3001 = vmatprep.subr.mxu0 0.0
  %3002 = vmatpush1.msra.mxu0 %v978
  %3003 = vmatprep.subr.mxu0 0.0
  %3004 = vmatpush1.msra.mxu0 %v979
  %3005 = vmatprep.subr.mxu0 0.0
  %3006 = vmatpush1.msra.mxu0 %v980
  %3007 = vmatprep.subr.mxu0 0.0
  %3008 = vmatpush1.msra.mxu0 %v981
  %3009 = vmatprep.subr.mxu0 0.0
  %3010 = vmatpush1.msra.mxu0 %v982
  %3011 = vmatprep.subr.mxu0 0.0
  %3012 = vmatpush1.msra.mxu0 %v983
  %3013 = vmatprep.subr.mxu0 0.0
  %3014 = vmatpush1.msra.mxu0 %v984
  %3015 = vmatprep.subr.mxu0 0.0
  %3016 = vmatpush1.msra.mxu0 %v985
  %3017 = vmatprep.subr.mxu0 0.0
  %3018 = vmatpush1.msra.mxu0 %v986
  %3019 = vmatprep.subr.mxu0 0.0
  %3020 = vmatpush1.msra.mxu0 %v987
  %3021 = vmatprep.subr.mxu0 0.0
  %3022 = vmatpush1.msra.mxu0 %v988
  %3023 = vmatprep.subr.mxu0 0.0
  %3024 = vmatpush1.msra.mxu0 %v989
  %3025 = vmatprep.subr.mxu0 0.0
  %3026 = vmatpush1.msra.mxu0 %v990
  %3027 = vmatprep.subr.mxu0 0.0
  %3028 = vmatpush1.msra.mxu0 %v991
  %3029 = vmatprep.subr.mxu0 0.0
  %3030 = vmatpush1.msra.mxu0 %v992
  %3031 = vmatprep.subr.mxu0 0.0
  %3032 = vmatpush1.msra.mxu0 %v993
  %3033 = vmatprep.subr.mxu0 0.0
  %3034 = vmatpush1.msra.mxu0 %v994
  %3035 = vmatprep.subr.mxu0 0.0
  %3036 = vmatpush1.msra.mxu0 %v995
  %3037 = vmatprep.subr.mxu0 0.0
  %3038 = vmatpush1.msra.mxu0 %v996
  %3039 = vmatprep.subr.mxu0 0.0
  %3040 = vmatpush1.msra.mxu0 %v997
  %3041 = vmatprep.subr.mxu0 0.0
  %3042 = vmatpush1.msra.mxu0 %v998
  %3043 = vmatprep.subr.mxu0 0.0
  %3044 = vmatpush1.msra.mxu0 %v999
  %3045 = vmatprep.subr.mxu0 0.0
  %3046 = vmatpush1.msra.mxu0 %v1000
  %3047 = vmatprep.mubr.f32.mxu0 %v2980
  %3048 = vmatmul.mubr.f32.gmra.mrb[0].mxu0 %v2979
  %v3049 = vpop.f32.mrb[0].mxu0
  %v3050 = vadd.f32 %v1038, %v3049
  %v3051 = vpop.f32.mrb[0].mxu0
  %3052 = vdwg.mxu0
  %3053 = vmatprep.subr.mxu0 0.0
  %3054 = vmatpush1.msra.mxu0 %v1001
  %3055 = vmatprep.subr.mxu0 0.0
  %3056 = vmatpush1.msra.mxu0 %v1002
  %3057 = vmatprep.subr.mxu0 0.0
  %3058 = vmatpush1.msra.mxu0 %v1003
  %3059 = vmatprep.subr.mxu0 0.0
  %3060 = vmatpush1.msra.mxu0 %v1004
  %3061 = vmatprep.subr.mxu0 0.0
  %3062 = vmatpush1.msra.mxu0 %v1005
  %3063 = vmatprep.subr.mxu0 0.0
  %3064 = vmatpush1.msra.mxu0 %v1006
  %3065 = vmatprep.subr.mxu0 0.0
  %3066 = vmatpush1.msra.mxu0 %v1007
  %3067 = vmatprep.subr.mxu0 0.0
  %3068 = vmatpush1.msra.mxu0 %v1008
  %3069 = vmatprep.subr.mxu0 0.0
  %3070 = vmatpush1.msra.mxu0 %v1009
  %3071 = vmatprep.subr.mxu0 0.0
  %3072 = vmatpush1.msra.mxu0 %v1010
  %3073 = vmatprep.subr.mxu0 0.0
  %3074 = vmatpush1.msra.mxu0 %v1011
  %3075 = vmatprep.subr.mxu0 0.0
  %3076 = vmatpush1.msra.mxu0 %v1012
  %3077 = vmatprep.subr.mxu0 0.0
  %3078 = vmatpush1.msra.mxu0 %v1013
  %3079 = vmatprep.subr.mxu0 0.0
  %3080 = vmatpush1.msra.mxu0 %v1014
  %3081 = vmatprep.subr.mxu0 0.0
  %3082 = vmatpush1.msra.mxu0 %v1015
  %3083 = vmatprep.subr.mxu0 0.0
  %3084 = vmatpush1.msra.mxu0 %v1016
  %3085 = vmatprep.subr.mxu0 0.0
  %3086 = vmatpush1.msra.mxu0 %v1017
  %3087 = vmatprep.subr.mxu0 0.0
  %3088 = vmatpush1.msra.mxu0 %v1018
  %3089 = vmatprep.subr.mxu0 0.0
  %3090 = vmatpush1.msra.mxu0 %v1019
  %3091 = vmatprep.subr.mxu0 0.0
  %3092 = vmatpush1.msra.mxu0 %v1020
  %3093 = vmatprep.subr.mxu0 0.0
  %3094 = vmatpush1.msra.mxu0 %v1021
  %3095 = vmatprep.subr.mxu0 0.0
  %3096 = vmatpush1.msra.mxu0 %v1022
  %3097 = vmatprep.subr.mxu0 0.0
  %3098 = vmatpush1.msra.mxu0 %v1023
  %3099 = vmatprep.subr.mxu0 0.0
  %3100 = vmatpush1.msra.mxu0 %v1024
  %3101 = vmatprep.subr.mxu0 0.0
  %3102 = vmatpush1.msra.mxu0 %v1025
  %3103 = vmatprep.subr.mxu0 0.0
  %3104 = vmatpush1.msra.mxu0 %v1026
  %3105 = vmatprep.subr.mxu0 0.0
  %3106 = vmatpush1.msra.mxu0 %v1027
  %3107 = vmatprep.subr.mxu0 0.0
  %3108 = vmatpush1.msra.mxu0 %v1028
  %3109 = vmatprep.subr.mxu0 0.0
  %3110 = vmatpush1.msra.mxu0 %v1029
  %3111 = vmatprep.subr.mxu0 0.0
  %3112 = vmatpush1.msra.mxu0 %v1030
  %3113 = vmatprep.subr.mxu0 0.0
  %3114 = vmatpush1.msra.mxu0 %v1031
  %3115 = vmatprep.subr.mxu0 0.0
  %3116 = vmatpush1.msra.mxu0 %v1032
  %3117 = vmatprep.mubr.f32.mxu0 %v2982
  %3118 = vmatmul.mubr.f32.gmra.mrb[0].mxu0 %v2981
  %v3119 = vpop.f32.mrb[0].mxu0
  %v3120 = vadd.f32 %v3050, %v3119
  %v3121 = vpop.f32.mrb[0].mxu0
  %3122 = vdwg.mxu0
  %v3123 = vmul.f32 %v2950, 0.2
  %v3124 = vadd.f32 %v3123, %v3120
  %v3125 = vsel %vm2951, %v3120, %v3124
  %vm3126 = vcmp.gt.f32.partialorder %v3125, 0.5
  %v3127 = vsel %vm3126, 1, 0
  %v3128 = vcvt.s32.f32 %v3127
  %v3129 = vadd.f32 %v2954, %v3128
  %v3130 = vld [vmem:[#allocation2 + $0x180] sm:$0xff]
  %v3131 = vld [vmem:[#allocation2 + $0x188] sm:$0xff]
  %v3132 = vld [vmem:[#allocation2 + $0x190] sm:$0xff]
  %v3133 = vld [vmem:[#allocation2 + $0x198] sm:$0xff]
  %v3134 = vmul.f32 %v2967, 0.2
  %v3135 = vmul.f32 %v2968, 0.2
  %v3136 = vmul.f32 %v2969, 0.2
  %v3137 = vmul.f32 %v2970, 0.2
  %v3138 = vadd.f32 %v3134, %v3130
  %v3139 = vadd.f32 %v3135, %v3131
  %v3140 = vadd.f32 %v3136, %v3132
  %v3141 = vadd.f32 %v3137, %v3133
  %v3142 = vsel %vm2971, %v3130, %v3138
  %v3143 = vsel %vm2972, %v3131, %v3139
  %v3144 = vsel %vm2973, %v3132, %v3140
  %v3145 = vsel %vm2974, %v3133, %v3141
  %vm3146 = vcmp.gt.f32.partialorder %v3142, 0.5
  %vm3147 = vcmp.gt.f32.partialorder %v3143, 0.5
  %vm3148 = vcmp.gt.f32.partialorder %v3144, 0.5
  %vm3149 = vcmp.gt.f32.partialorder %v3145, 0.5
  %v3150 = vsel %vm3146, 1, 0
  %v3151 = vsel %vm3147, 1, 0
  %v3152 = vsel %vm3148, 1, 0
  %v3153 = vsel %vm3149, 1, 0
  %v3154 = vcvt.s32.f32 %v3150
  %v3155 = vcvt.s32.f32 %v3151
  %v3156 = vcvt.s32.f32 %v3152
  %v3157 = vcvt.s32.f32 %v3153
  %3158 = vmatprep.subr.mxu0 0.0
  %3159 = vmatpush1.msra.mxu0 %v969
  %3160 = vmatprep.subr.mxu0 0.0
  %3161 = vmatpush1.msra.mxu0 %v970
  %3162 = vmatprep.subr.mxu0 0.0
  %3163 = vmatpush1.msra.mxu0 %v971
  %3164 = vmatprep.subr.mxu0 0.0
  %3165 = vmatpush1.msra.mxu0 %v972
  %3166 = vmatprep.subr.mxu0 0.0
  %3167 = vmatpush1.msra.mxu0 %v973
  %3168 = vmatprep.subr.mxu0 0.0
  %3169 = vmatpush1.msra.mxu0 %v974
  %3170 = vmatprep.subr.mxu0 0.0
  %3171 = vmatpush1.msra.mxu0 %v975
  %3172 = vmatprep.subr.mxu0 0.0
  %3173 = vmatpush1.msra.mxu0 %v976
  %3174 = vmatprep.subr.mxu0 0.0
  %3175 = vmatpush1.msra.mxu0 %v977
  %3176 = vmatprep.subr.mxu0 0.0
  %3177 = vmatpush1.msra.mxu0 %v978
  %3178 = vmatprep.subr.mxu0 0.0
  %3179 = vmatpush1.msra.mxu0 %v979
  %3180 = vmatprep.subr.mxu0 0.0
  %3181 = vmatpush1.msra.mxu0 %v980
  %3182 = vmatprep.subr.mxu0 0.0
  %3183 = vmatpush1.msra.mxu0 %v981
  %3184 = vmatprep.subr.mxu0 0.0
  %3185 = vmatpush1.msra.mxu0 %v982
  %3186 = vmatprep.subr.mxu0 0.0
  %3187 = vmatpush1.msra.mxu0 %v983
  %3188 = vmatprep.subr.mxu0 0.0
  %3189 = vmatpush1.msra.mxu0 %v984
  %3190 = vmatprep.subr.mxu0 0.0
  %3191 = vmatpush1.msra.mxu0 %v985
  %3192 = vmatprep.subr.mxu0 0.0
  %3193 = vmatpush1.msra.mxu0 %v986
  %3194 = vmatprep.subr.mxu0 0.0
  %3195 = vmatpush1.msra.mxu0 %v987
  %3196 = vmatprep.subr.mxu0 0.0
  %3197 = vmatpush1.msra.mxu0 %v988
  %3198 = vmatprep.subr.mxu0 0.0
  %3199 = vmatpush1.msra.mxu0 %v989
  %3200 = vmatprep.subr.mxu0 0.0
  %3201 = vmatpush1.msra.mxu0 %v990
  %3202 = vmatprep.subr.mxu0 0.0
  %3203 = vmatpush1.msra.mxu0 %v991
  %3204 = vmatprep.subr.mxu0 0.0
  %3205 = vmatpush1.msra.mxu0 %v992
  %3206 = vmatprep.subr.mxu0 0.0
  %3207 = vmatpush1.msra.mxu0 %v993
  %3208 = vmatprep.subr.mxu0 0.0
  %3209 = vmatpush1.msra.mxu0 %v994
  %3210 = vmatprep.subr.mxu0 0.0
  %3211 = vmatpush1.msra.mxu0 %v995
  %3212 = vmatprep.subr.mxu0 0.0
  %3213 = vmatpush1.msra.mxu0 %v996
  %3214 = vmatprep.subr.mxu0 0.0
  %3215 = vmatpush1.msra.mxu0 %v997
  %3216 = vmatprep.subr.mxu0 0.0
  %3217 = vmatpush1.msra.mxu0 %v998
  %3218 = vmatprep.subr.mxu0 0.0
  %3219 = vmatpush1.msra.mxu0 %v999
  %3220 = vmatprep.subr.mxu0 0.0
  %3221 = vmatpush1.msra.mxu0 %v1000
  %3222 = vmatprep.mubr.f32.mxu0 %v3155
  %3223 = vmatmul.mubr.f32.gmra.mrb[0].mxu0 %v3154
  %v3224 = vpop.f32.mrb[0].mxu0
  %v3225 = vadd.f32 %v1038, %v3224
  %v3226 = vpop.f32.mrb[0].mxu0
  %3227 = vdwg.mxu0
  %3228 = vmatprep.subr.mxu0 0.0
  %3229 = vmatpush1.msra.mxu0 %v1001
  %3230 = vmatprep.subr.mxu0 0.0
  %3231 = vmatpush1.msra.mxu0 %v1002
  %3232 = vmatprep.subr.mxu0 0.0
  %3233 = vmatpush1.msra.mxu0 %v1003
  %3234 = vmatprep.subr.mxu0 0.0
  %3235 = vmatpush1.msra.mxu0 %v1004
  %3236 = vmatprep.subr.mxu0 0.0
  %3237 = vmatpush1.msra.mxu0 %v1005
  %3238 = vmatprep.subr.mxu0 0.0
  %3239 = vmatpush1.msra.mxu0 %v1006
  %3240 = vmatprep.subr.mxu0 0.0
  %3241 = vmatpush1.msra.mxu0 %v1007
  %3242 = vmatprep.subr.mxu0 0.0
  %3243 = vmatpush1.msra.mxu0 %v1008
  %3244 = vmatprep.subr.mxu0 0.0
  %3245 = vmatpush1.msra.mxu0 %v1009
  %3246 = vmatprep.subr.mxu0 0.0
  %3247 = vmatpush1.msra.mxu0 %v1010
  %3248 = vmatprep.subr.mxu0 0.0
  %3249 = vmatpush1.msra.mxu0 %v1011
  %3250 = vmatprep.subr.mxu0 0.0
  %3251 = vmatpush1.msra.mxu0 %v1012
  %3252 = vmatprep.subr.mxu0 0.0
  %3253 = vmatpush1.msra.mxu0 %v1013
  %3254 = vmatprep.subr.mxu0 0.0
  %3255 = vmatpush1.msra.mxu0 %v1014
  %3256 = vmatprep.subr.mxu0 0.0
  %3257 = vmatpush1.msra.mxu0 %v1015
  %3258 = vmatprep.subr.mxu0 0.0
  %3259 = vmatpush1.msra.mxu0 %v1016
  %3260 = vmatprep.subr.mxu0 0.0
  %3261 = vmatpush1.msra.mxu0 %v1017
  %3262 = vmatprep.subr.mxu0 0.0
  %3263 = vmatpush1.msra.mxu0 %v1018
  %3264 = vmatprep.subr.mxu0 0.0
  %3265 = vmatpush1.msra.mxu0 %v1019
  %3266 = vmatprep.subr.mxu0 0.0
  %3267 = vmatpush1.msra.mxu0 %v1020
  %3268 = vmatprep.subr.mxu0 0.0
  %3269 = vmatpush1.msra.mxu0 %v1021
  %3270 = vmatprep.subr.mxu0 0.0
  %3271 = vmatpush1.msra.mxu0 %v1022
  %3272 = vmatprep.subr.mxu0 0.0
  %3273 = vmatpush1.msra.mxu0 %v1023
  %3274 = vmatprep.subr.mxu0 0.0
  %3275 = vmatpush1.msra.mxu0 %v1024
  %3276 = vmatprep.subr.mxu0 0.0
  %3277 = vmatpush1.msra.mxu0 %v1025
  %3278 = vmatprep.subr.mxu0 0.0
  %3279 = vmatpush1.msra.mxu0 %v1026
  %3280 = vmatprep.subr.mxu0 0.0
  %3281 = vmatpush1.msra.mxu0 %v1027
  %3282 = vmatprep.subr.mxu0 0.0
  %3283 = vmatpush1.msra.mxu0 %v1028
  %3284 = vmatprep.subr.mxu0 0.0
  %3285 = vmatpush1.msra.mxu0 %v1029
  %3286 = vmatprep.subr.mxu0 0.0
  %3287 = vmatpush1.msra.mxu0 %v1030
  %3288 = vmatprep.subr.mxu0 0.0
  %3289 = vmatpush1.msra.mxu0 %v1031
  %3290 = vmatprep.subr.mxu0 0.0
  %3291 = vmatpush1.msra.mxu0 %v1032
  %3292 = vmatprep.mubr.f32.mxu0 %v3157
  %3293 = vmatmul.mubr.f32.gmra.mrb[0].mxu0 %v3156
  %v3294 = vpop.f32.mrb[0].mxu0
  %v3295 = vadd.f32 %v3225, %v3294
  %v3296 = vpop.f32.mrb[0].mxu0
  %3297 = vdwg.mxu0
  %v3298 = vmul.f32 %v3125, 0.2
  %v3299 = vadd.f32 %v3298, %v3295
  %v3300 = vsel %vm3126, %v3295, %v3299
  %vm3301 = vcmp.gt.f32.partialorder %v3300, 0.5
  %v3302 = vsel %vm3301, 1, 0
  %v3303 = vcvt.s32.f32 %v3302
  %v3304 = vadd.f32 %v3129, %v3303
  %v3305 = vld [vmem:[#allocation2 + $0x1a0] sm:$0xff]
  %v3306 = vld [vmem:[#allocation2 + $0x1a8] sm:$0xff]
  %v3307 = vld [vmem:[#allocation2 + $0x1b0] sm:$0xff]
  %v3308 = vld [vmem:[#allocation2 + $0x1b8] sm:$0xff]
  %v3309 = vmul.f32 %v3142, 0.2
  %v3310 = vmul.f32 %v3143, 0.2
  %v3311 = vmul.f32 %v3144, 0.2
  %v3312 = vmul.f32 %v3145, 0.2
  %v3313 = vadd.f32 %v3309, %v3305
  %v3314 = vadd.f32 %v3310, %v3306
  %v3315 = vadd.f32 %v3311, %v3307
  %v3316 = vadd.f32 %v3312, %v3308
  %v3317 = vsel %vm3146, %v3305, %v3313
  %v3318 = vsel %vm3147, %v3306, %v3314
  %v3319 = vsel %vm3148, %v3307, %v3315
  %v3320 = vsel %vm3149, %v3308, %v3316
  %vm3321 = vcmp.gt.f32.partialorder %v3317, 0.5
  %vm3322 = vcmp.gt.f32.partialorder %v3318, 0.5
  %vm3323 = vcmp.gt.f32.partialorder %v3319, 0.5
  %vm3324 = vcmp.gt.f32.partialorder %v3320, 0.5
  %v3325 = vsel %vm3321, 1, 0
  %v3326 = vsel %vm3322, 1, 0
  %v3327 = vsel %vm3323, 1, 0
  %v3328 = vsel %vm3324, 1, 0
  %v3329 = vcvt.s32.f32 %v3325
  %v3330 = vcvt.s32.f32 %v3326
  %v3331 = vcvt.s32.f32 %v3327
  %v3332 = vcvt.s32.f32 %v3328
  %3333 = vmatprep.subr.mxu0 0.0
  %3334 = vmatpush1.msra.mxu0 %v969
  %3335 = vmatprep.subr.mxu0 0.0
  %3336 = vmatpush1.msra.mxu0 %v970
  %3337 = vmatprep.subr.mxu0 0.0
  %3338 = vmatpush1.msra.mxu0 %v971
  %3339 = vmatprep.subr.mxu0 0.0
  %3340 = vmatpush1.msra.mxu0 %v972
  %3341 = vmatprep.subr.mxu0 0.0
  %3342 = vmatpush1.msra.mxu0 %v973
  %3343 = vmatprep.subr.mxu0 0.0
  %3344 = vmatpush1.msra.mxu0 %v974
  %3345 = vmatprep.subr.mxu0 0.0
  %3346 = vmatpush1.msra.mxu0 %v975
  %3347 = vmatprep.subr.mxu0 0.0
  %3348 = vmatpush1.msra.mxu0 %v976
  %3349 = vmatprep.subr.mxu0 0.0
  %3350 = vmatpush1.msra.mxu0 %v977
  %3351 = vmatprep.subr.mxu0 0.0
  %3352 = vmatpush1.msra.mxu0 %v978
  %3353 = vmatprep.subr.mxu0 0.0
  %3354 = vmatpush1.msra.mxu0 %v979
  %3355 = vmatprep.subr.mxu0 0.0
  %3356 = vmatpush1.msra.mxu0 %v980
  %3357 = vmatprep.subr.mxu0 0.0
  %3358 = vmatpush1.msra.mxu0 %v981
  %3359 = vmatprep.subr.mxu0 0.0
  %3360 = vmatpush1.msra.mxu0 %v982
  %3361 = vmatprep.subr.mxu0 0.0
  %3362 = vmatpush1.msra.mxu0 %v983
  %3363 = vmatprep.subr.mxu0 0.0
  %3364 = vmatpush1.msra.mxu0 %v984
  %3365 = vmatprep.subr.mxu0 0.0
  %3366 = vmatpush1.msra.mxu0 %v985
  %3367 = vmatprep.subr.mxu0 0.0
  %3368 = vmatpush1.msra.mxu0 %v986
  %3369 = vmatprep.subr.mxu0 0.0
  %3370 = vmatpush1.msra.mxu0 %v987
  %3371 = vmatprep.subr.mxu0 0.0
  %3372 = vmatpush1.msra.mxu0 %v988
  %3373 = vmatprep.subr.mxu0 0.0
  %3374 = vmatpush1.msra.mxu0 %v989
  %3375 = vmatprep.subr.mxu0 0.0
  %3376 = vmatpush1.msra.mxu0 %v990
  %3377 = vmatprep.subr.mxu0 0.0
  %3378 = vmatpush1.msra.mxu0 %v991
  %3379 = vmatprep.subr.mxu0 0.0
  %3380 = vmatpush1.msra.mxu0 %v992
  %3381 = vmatprep.subr.mxu0 0.0
  %3382 = vmatpush1.msra.mxu0 %v993
  %3383 = vmatprep.subr.mxu0 0.0
  %3384 = vmatpush1.msra.mxu0 %v994
  %3385 = vmatprep.subr.mxu0 0.0
  %3386 = vmatpush1.msra.mxu0 %v995
  %3387 = vmatprep.subr.mxu0 0.0
  %3388 = vmatpush1.msra.mxu0 %v996
  %3389 = vmatprep.subr.mxu0 0.0
  %3390 = vmatpush1.msra.mxu0 %v997
  %3391 = vmatprep.subr.mxu0 0.0
  %3392 = vmatpush1.msra.mxu0 %v998
  %3393 = vmatprep.subr.mxu0 0.0
  %3394 = vmatpush1.msra.mxu0 %v999
  %3395 = vmatprep.subr.mxu0 0.0
  %3396 = vmatpush1.msra.mxu0 %v1000
  %3397 = vmatprep.mubr.f32.mxu0 %v3330
  %3398 = vmatmul.mubr.f32.gmra.mrb[0].mxu0 %v3329
  %v3399 = vpop.f32.mrb[0].mxu0
  %v3400 = vadd.f32 %v1038, %v3399
  %v3401 = vpop.f32.mrb[0].mxu0
  %3402 = vdwg.mxu0
  %3403 = vmatprep.subr.mxu0 0.0
  %3404 = vmatpush1.msra.mxu0 %v1001
  %3405 = vmatprep.subr.mxu0 0.0
  %3406 = vmatpush1.msra.mxu0 %v1002
  %3407 = vmatprep.subr.mxu0 0.0
  %3408 = vmatpush1.msra.mxu0 %v1003
  %3409 = vmatprep.subr.mxu0 0.0
  %3410 = vmatpush1.msra.mxu0 %v1004
  %3411 = vmatprep.subr.mxu0 0.0
  %3412 = vmatpush1.msra.mxu0 %v1005
  %3413 = vmatprep.subr.mxu0 0.0
  %3414 = vmatpush1.msra.mxu0 %v1006
  %3415 = vmatprep.subr.mxu0 0.0
  %3416 = vmatpush1.msra.mxu0 %v1007
  %3417 = vmatprep.subr.mxu0 0.0
  %3418 = vmatpush1.msra.mxu0 %v1008
  %3419 = vmatprep.subr.mxu0 0.0
  %3420 = vmatpush1.msra.mxu0 %v1009
  %3421 = vmatprep.subr.mxu0 0.0
  %3422 = vmatpush1.msra.mxu0 %v1010
  %3423 = vmatprep.subr.mxu0 0.0
  %3424 = vmatpush1.msra.mxu0 %v1011
  %3425 = vmatprep.subr.mxu0 0.0
  %3426 = vmatpush1.msra.mxu0 %v1012
  %3427 = vmatprep.subr.mxu0 0.0
  %3428 = vmatpush1.msra.mxu0 %v1013
  %3429 = vmatprep.subr.mxu0 0.0
  %3430 = vmatpush1.msra.mxu0 %v1014
  %3431 = vmatprep.subr.mxu0 0.0
  %3432 = vmatpush1.msra.mxu0 %v1015
  %3433 = vmatprep.subr.mxu0 0.0
  %3434 = vmatpush1.msra.mxu0 %v1016
  %3435 = vmatprep.subr.mxu0 0.0
  %3436 = vmatpush1.msra.mxu0 %v1017
  %3437 = vmatprep.subr.mxu0 0.0
  %3438 = vmatpush1.msra.mxu0 %v1018
  %3439 = vmatprep.subr.mxu0 0.0
  %3440 = vmatpush1.msra.mxu0 %v1019
  %3441 = vmatprep.subr.mxu0 0.0
  %3442 = vmatpush1.msra.mxu0 %v1020
  %3443 = vmatprep.subr.mxu0 0.0
  %3444 = vmatpush1.msra.mxu0 %v1021
  %3445 = vmatprep.subr.mxu0 0.0
  %3446 = vmatpush1.msra.mxu0 %v1022
  %3447 = vmatprep.subr.mxu0 0.0
  %3448 = vmatpush1.msra.mxu0 %v1023
  %3449 = vmatprep.subr.mxu0 0.0
  %3450 = vmatpush1.msra.mxu0 %v1024
  %3451 = vmatprep.subr.mxu0 0.0
  %3452 = vmatpush1.msra.mxu0 %v1025
  %3453 = vmatprep.subr.mxu0 0.0
  %3454 = vmatpush1.msra.mxu0 %v1026
  %3455 = vmatprep.subr.mxu0 0.0
  %3456 = vmatpush1.msra.mxu0 %v1027
  %3457 = vmatprep.subr.mxu0 0.0
  %3458 = vmatpush1.msra.mxu0 %v1028
  %3459 = vmatprep.subr.mxu0 0.0
  %3460 = vmatpush1.msra.mxu0 %v1029
  %3461 = vmatprep.subr.mxu0 0.0
  %3462 = vmatpush1.msra.mxu0 %v1030
  %3463 = vmatprep.subr.mxu0 0.0
  %3464 = vmatpush1.msra.mxu0 %v1031
  %3465 = vmatprep.subr.mxu0 0.0
  %3466 = vmatpush1.msra.mxu0 %v1032
  %3467 = vmatprep.mubr.f32.mxu0 %v3332
  %3468 = vmatmul.mubr.f32.gmra.mrb[0].mxu0 %v3331
  %v3469 = vpop.f32.mrb[0].mxu0
  %v3470 = vadd.f32 %v3400, %v3469
  %v3471 = vpop.f32.mrb[0].mxu0
  %3472 = vdwg.mxu0
  %v3473 = vmul.f32 %v3300, 0.2
  %v3474 = vadd.f32 %v3473, %v3470
  %v3475 = vsel %vm3301, %v3470, %v3474
  %vm3476 = vcmp.gt.f32.partialorder %v3475, 0.5
  %v3477 = vsel %vm3476, 1, 0
  %v3478 = vcvt.s32.f32 %v3477
  %v3479 = vadd.f32 %v3304, %v3478
  %v3480 = vld [vmem:[#allocation2 + $0x1c0] sm:$0xff]
  %v3481 = vld [vmem:[#allocation2 + $0x1c8] sm:$0xff]
  %v3482 = vld [vmem:[#allocation2 + $0x1d0] sm:$0xff]
  %v3483 = vld [vmem:[#allocation2 + $0x1d8] sm:$0xff]
  %v3484 = vmul.f32 %v3317, 0.2
  %v3485 = vmul.f32 %v3318, 0.2
  %v3486 = vmul.f32 %v3319, 0.2
  %v3487 = vmul.f32 %v3320, 0.2
  %v3488 = vadd.f32 %v3484, %v3480
  %v3489 = vadd.f32 %v3485, %v3481
  %v3490 = vadd.f32 %v3486, %v3482
  %v3491 = vadd.f32 %v3487, %v3483
  %v3492 = vsel %vm3321, %v3480, %v3488
  %v3493 = vsel %vm3322, %v3481, %v3489
  %v3494 = vsel %vm3323, %v3482, %v3490
  %v3495 = vsel %vm3324, %v3483, %v3491
  %vm3496 = vcmp.gt.f32.partialorder %v3492, 0.5
  %vm3497 = vcmp.gt.f32.partialorder %v3493, 0.5
  %vm3498 = vcmp.gt.f32.partialorder %v3494, 0.5
  %vm3499 = vcmp.gt.f32.partialorder %v3495, 0.5
  %v3500 = vsel %vm3496, 1, 0
  %v3501 = vsel %vm3497, 1, 0
  %v3502 = vsel %vm3498, 1, 0
  %v3503 = vsel %vm3499, 1, 0
  %v3504 = vcvt.s32.f32 %v3500
  %v3505 = vcvt.s32.f32 %v3501
  %v3506 = vcvt.s32.f32 %v3502
  %v3507 = vcvt.s32.f32 %v3503
  %3508 = vmatprep.subr.mxu0 0.0
  %3509 = vmatpush1.msra.mxu0 %v969
  %3510 = vmatprep.subr.mxu0 0.0
  %3511 = vmatpush1.msra.mxu0 %v970
  %3512 = vmatprep.subr.mxu0 0.0
  %3513 = vmatpush1.msra.mxu0 %v971
  %3514 = vmatprep.subr.mxu0 0.0
  %3515 = vmatpush1.msra.mxu0 %v972
  %3516 = vmatprep.subr.mxu0 0.0
  %3517 = vmatpush1.msra.mxu0 %v973
  %3518 = vmatprep.subr.mxu0 0.0
  %3519 = vmatpush1.msra.mxu0 %v974
  %3520 = vmatprep.subr.mxu0 0.0
  %3521 = vmatpush1.msra.mxu0 %v975
  %3522 = vmatprep.subr.mxu0 0.0
  %3523 = vmatpush1.msra.mxu0 %v976
  %3524 = vmatprep.subr.mxu0 0.0
  %3525 = vmatpush1.msra.mxu0 %v977
  %3526 = vmatprep.subr.mxu0 0.0
  %3527 = vmatpush1.msra.mxu0 %v978
  %3528 = vmatprep.subr.mxu0 0.0
  %3529 = vmatpush1.msra.mxu0 %v979
  %3530 = vmatprep.subr.mxu0 0.0
  %3531 = vmatpush1.msra.mxu0 %v980
  %3532 = vmatprep.subr.mxu0 0.0
  %3533 = vmatpush1.msra.mxu0 %v981
  %3534 = vmatprep.subr.mxu0 0.0
  %3535 = vmatpush1.msra.mxu0 %v982
  %3536 = vmatprep.subr.mxu0 0.0
  %3537 = vmatpush1.msra.mxu0 %v983
  %3538 = vmatprep.subr.mxu0 0.0
  %3539 = vmatpush1.msra.mxu0 %v984
  %3540 = vmatprep.subr.mxu0 0.0
  %3541 = vmatpush1.msra.mxu0 %v985
  %3542 = vmatprep.subr.mxu0 0.0
  %3543 = vmatpush1.msra.mxu0 %v986
  %3544 = vmatprep.subr.mxu0 0.0
  %3545 = vmatpush1.msra.mxu0 %v987
  %3546 = vmatprep.subr.mxu0 0.0
  %3547 = vmatpush1.msra.mxu0 %v988
  %3548 = vmatprep.subr.mxu0 0.0
  %3549 = vmatpush1.msra.mxu0 %v989
  %3550 = vmatprep.subr.mxu0 0.0
  %3551 = vmatpush1.msra.mxu0 %v990
  %3552 = vmatprep.subr.mxu0 0.0
  %3553 = vmatpush1.msra.mxu0 %v991
  %3554 = vmatprep.subr.mxu0 0.0
  %3555 = vmatpush1.msra.mxu0 %v992
  %3556 = vmatprep.subr.mxu0 0.0
  %3557 = vmatpush1.msra.mxu0 %v993
  %3558 = vmatprep.subr.mxu0 0.0
  %3559 = vmatpush1.msra.mxu0 %v994
  %3560 = vmatprep.subr.mxu0 0.0
  %3561 = vmatpush1.msra.mxu0 %v995
  %3562 = vmatprep.subr.mxu0 0.0
  %3563 = vmatpush1.msra.mxu0 %v996
  %3564 = vmatprep.subr.mxu0 0.0
  %3565 = vmatpush1.msra.mxu0 %v997
  %3566 = vmatprep.subr.mxu0 0.0
  %3567 = vmatpush1.msra.mxu0 %v998
  %3568 = vmatprep.subr.mxu0 0.0
  %3569 = vmatpush1.msra.mxu0 %v999
  %3570 = vmatprep.subr.mxu0 0.0
  %3571 = vmatpush1.msra.mxu0 %v1000
  %3572 = vmatprep.mubr.f32.mxu0 %v3505
  %3573 = vmatmul.mubr.f32.gmra.mrb[0].mxu0 %v3504
  %v3574 = vpop.f32.mrb[0].mxu0
  %v3575 = vadd.f32 %v1038, %v3574
  %v3576 = vpop.f32.mrb[0].mxu0
  %3577 = vdwg.mxu0
  %3578 = vmatprep.subr.mxu0 0.0
  %3579 = vmatpush1.msra.mxu0 %v1001
  %3580 = vmatprep.subr.mxu0 0.0
  %3581 = vmatpush1.msra.mxu0 %v1002
  %3582 = vmatprep.subr.mxu0 0.0
  %3583 = vmatpush1.msra.mxu0 %v1003
  %3584 = vmatprep.subr.mxu0 0.0
  %3585 = vmatpush1.msra.mxu0 %v1004
  %3586 = vmatprep.subr.mxu0 0.0
  %3587 = vmatpush1.msra.mxu0 %v1005
  %3588 = vmatprep.subr.mxu0 0.0
  %3589 = vmatpush1.msra.mxu0 %v1006
  %3590 = vmatprep.subr.mxu0 0.0
  %3591 = vmatpush1.msra.mxu0 %v1007
  %3592 = vmatprep.subr.mxu0 0.0
  %3593 = vmatpush1.msra.mxu0 %v1008
  %3594 = vmatprep.subr.mxu0 0.0
  %3595 = vmatpush1.msra.mxu0 %v1009
  %3596 = vmatprep.subr.mxu0 0.0
  %3597 = vmatpush1.msra.mxu0 %v1010
  %3598 = vmatprep.subr.mxu0 0.0
  %3599 = vmatpush1.msra.mxu0 %v1011
  %3600 = vmatprep.subr.mxu0 0.0
  %3601 = vmatpush1.msra.mxu0 %v1012
  %3602 = vmatprep.subr.mxu0 0.0
  %3603 = vmatpush1.msra.mxu0 %v1013
  %3604 = vmatprep.subr.mxu0 0.0
  %3605 = vmatpush1.msra.mxu0 %v1014
  %3606 = vmatprep.subr.mxu0 0.0
  %3607 = vmatpush1.msra.mxu0 %v1015
  %3608 = vmatprep.subr.mxu0 0.0
  %3609 = vmatpush1.msra.mxu0 %v1016
  %3610 = vmatprep.subr.mxu0 0.0
  %3611 = vmatpush1.msra.mxu0 %v1017
  %3612 = vmatprep.subr.mxu0 0.0
  %3613 = vmatpush1.msra.mxu0 %v1018
  %3614 = vmatprep.subr.mxu0 0.0
  %3615 = vmatpush1.msra.mxu0 %v1019
  %3616 = vmatprep.subr.mxu0 0.0
  %3617 = vmatpush1.msra.mxu0 %v1020
  %3618 = vmatprep.subr.mxu0 0.0
  %3619 = vmatpush1.msra.mxu0 %v1021
  %3620 = vmatprep.subr.mxu0 0.0
  %3621 = vmatpush1.msra.mxu0 %v1022
  %3622 = vmatprep.subr.mxu0 0.0
  %3623 = vmatpush1.msra.mxu0 %v1023
  %3624 = vmatprep.subr.mxu0 0.0
  %3625 = vmatpush1.msra.mxu0 %v1024
  %3626 = vmatprep.subr.mxu0 0.0
  %3627 = vmatpush1.msra.mxu0 %v1025
  %3628 = vmatprep.subr.mxu0 0.0
  %3629 = vmatpush1.msra.mxu0 %v1026
  %3630 = vmatprep.subr.mxu0 0.0
  %3631 = vmatpush1.msra.mxu0 %v1027
  %3632 = vmatprep.subr.mxu0 0.0
  %3633 = vmatpush1.msra.mxu0 %v1028
  %3634 = vmatprep.subr.mxu0 0.0
  %3635 = vmatpush1.msra.mxu0 %v1029
  %3636 = vmatprep.subr.mxu0 0.0
  %3637 = vmatpush1.msra.mxu0 %v1030
  %3638 = vmatprep.subr.mxu0 0.0
  %3639 = vmatpush1.msra.mxu0 %v1031
  %3640 = vmatprep.subr.mxu0 0.0
  %3641 = vmatpush1.msra.mxu0 %v1032
  %3642 = vmatprep.mubr.f32.mxu0 %v3507
  %3643 = vmatmul.mubr.f32.gmra.mrb[0].mxu0 %v3506
  %v3644 = vpop.f32.mrb[0].mxu0
  %v3645 = vadd.f32 %v3575, %v3644
  %v3646 = vpop.f32.mrb[0].mxu0
  %3647 = vdwg.mxu0
  %v3648 = vmul.f32 %v3475, 0.2
  %v3649 = vadd.f32 %v3648, %v3645
  %v3650 = vsel %vm3476, %v3645, %v3649
  %vm3651 = vcmp.gt.f32.partialorder %v3650, 0.5
  %v3652 = vsel %vm3651, 1, 0
  %v3653 = vcvt.s32.f32 %v3652
  %v3654 = vadd.f32 %v3479, %v3653
  %v3655 = vld [vmem:[#allocation2 + $0x1e0] sm:$0xff]
  %v3656 = vld [vmem:[#allocation2 + $0x1e8] sm:$0xff]
  %v3657 = vld [vmem:[#allocation2 + $0x1f0] sm:$0xff]
  %v3658 = vld [vmem:[#allocation2 + $0x1f8] sm:$0xff]
  %v3659 = vmul.f32 %v3492, 0.2
  %v3660 = vmul.f32 %v3493, 0.2
  %v3661 = vmul.f32 %v3494, 0.2
  %v3662 = vmul.f32 %v3495, 0.2
  %v3663 = vadd.f32 %v3659, %v3655
  %v3664 = vadd.f32 %v3660, %v3656
  %v3665 = vadd.f32 %v3661, %v3657
  %v3666 = vadd.f32 %v3662, %v3658
  %v3667 = vsel %vm3496, %v3655, %v3663
  %v3668 = vsel %vm3497, %v3656, %v3664
  %v3669 = vsel %vm3498, %v3657, %v3665
  %v3670 = vsel %vm3499, %v3658, %v3666
  %vm3671 = vcmp.gt.f32.partialorder %v3667, 0.5
  %vm3672 = vcmp.gt.f32.partialorder %v3668, 0.5
  %vm3673 = vcmp.gt.f32.partialorder %v3669, 0.5
  %vm3674 = vcmp.gt.f32.partialorder %v3670, 0.5
  %v3675 = vsel %vm3671, 1, 0
  %v3676 = vsel %vm3672, 1, 0
  %v3677 = vsel %vm3673, 1, 0
  %v3678 = vsel %vm3674, 1, 0
  %v3679 = vcvt.s32.f32 %v3675
  %v3680 = vcvt.s32.f32 %v3676
  %v3681 = vcvt.s32.f32 %v3677
  %v3682 = vcvt.s32.f32 %v3678
  %3683 = vmatprep.subr.mxu0 0.0
  %3684 = vmatpush1.msra.mxu0 %v969
  %3685 = vmatprep.subr.mxu0 0.0
  %3686 = vmatpush1.msra.mxu0 %v970
  %3687 = vmatprep.subr.mxu0 0.0
  %3688 = vmatpush1.msra.mxu0 %v971
  %3689 = vmatprep.subr.mxu0 0.0
  %3690 = vmatpush1.msra.mxu0 %v972
  %3691 = vmatprep.subr.mxu0 0.0
  %3692 = vmatpush1.msra.mxu0 %v973
  %3693 = vmatprep.subr.mxu0 0.0
  %3694 = vmatpush1.msra.mxu0 %v974
  %3695 = vmatprep.subr.mxu0 0.0
  %3696 = vmatpush1.msra.mxu0 %v975
  %3697 = vmatprep.subr.mxu0 0.0
  %3698 = vmatpush1.msra.mxu0 %v976
  %3699 = vmatprep.subr.mxu0 0.0
  %3700 = vmatpush1.msra.mxu0 %v977
  %3701 = vmatprep.subr.mxu0 0.0
  %3702 = vmatpush1.msra.mxu0 %v978
  %3703 = vmatprep.subr.mxu0 0.0
  %3704 = vmatpush1.msra.mxu0 %v979
  %3705 = vmatprep.subr.mxu0 0.0
  %3706 = vmatpush1.msra.mxu0 %v980
  %3707 = vmatprep.subr.mxu0 0.0
  %3708 = vmatpush1.msra.mxu0 %v981
  %3709 = vmatprep.subr.mxu0 0.0
  %3710 = vmatpush1.msra.mxu0 %v982
  %3711 = vmatprep.subr.mxu0 0.0
  %3712 = vmatpush1.msra.mxu0 %v983
  %3713 = vmatprep.subr.mxu0 0.0
  %3714 = vmatpush1.msra.mxu0 %v984
  %3715 = vmatprep.subr.mxu0 0.0
  %3716 = vmatpush1.msra.mxu0 %v985
  %3717 = vmatprep.subr.mxu0 0.0
  %3718 = vmatpush1.msra.mxu0 %v986
  %3719 = vmatprep.subr.mxu0 0.0
  %3720 = vmatpush1.msra.mxu0 %v987
  %3721 = vmatprep.subr.mxu0 0.0
  %3722 = vmatpush1.msra.mxu0 %v988
  %3723 = vmatprep.subr.mxu0 0.0
  %3724 = vmatpush1.msra.mxu0 %v989
  %3725 = vmatprep.subr.mxu0 0.0
  %3726 = vmatpush1.msra.mxu0 %v990
  %3727 = vmatprep.subr.mxu0 0.0
  %3728 = vmatpush1.msra.mxu0 %v991
  %3729 = vmatprep.subr.mxu0 0.0
  %3730 = vmatpush1.msra.mxu0 %v992
  %3731 = vmatprep.subr.mxu0 0.0
  %3732 = vmatpush1.msra.mxu0 %v993
  %3733 = vmatprep.subr.mxu0 0.0
  %3734 = vmatpush1.msra.mxu0 %v994
  %3735 = vmatprep.subr.mxu0 0.0
  %3736 = vmatpush1.msra.mxu0 %v995
  %3737 = vmatprep.subr.mxu0 0.0
  %3738 = vmatpush1.msra.mxu0 %v996
  %3739 = vmatprep.subr.mxu0 0.0
  %3740 = vmatpush1.msra.mxu0 %v997
  %3741 = vmatprep.subr.mxu0 0.0
  %3742 = vmatpush1.msra.mxu0 %v998
  %3743 = vmatprep.subr.mxu0 0.0
  %3744 = vmatpush1.msra.mxu0 %v999
  %3745 = vmatprep.subr.mxu0 0.0
  %3746 = vmatpush1.msra.mxu0 %v1000
  %3747 = vmatprep.mubr.f32.mxu0 %v3680
  %3748 = vmatmul.mubr.f32.gmra.mrb[0].mxu0 %v3679
  %v3749 = vpop.f32.mrb[0].mxu0
  %v3750 = vadd.f32 %v1038, %v3749
  %v3751 = vpop.f32.mrb[0].mxu0
  %3752 = vdwg.mxu0
  %3753 = vmatprep.subr.mxu0 0.0
  %3754 = vmatpush1.msra.mxu0 %v1001
  %3755 = vmatprep.subr.mxu0 0.0
  %3756 = vmatpush1.msra.mxu0 %v1002
  %3757 = vmatprep.subr.mxu0 0.0
  %3758 = vmatpush1.msra.mxu0 %v1003
  %3759 = vmatprep.subr.mxu0 0.0
  %3760 = vmatpush1.msra.mxu0 %v1004
  %3761 = vmatprep.subr.mxu0 0.0
  %3762 = vmatpush1.msra.mxu0 %v1005
  %3763 = vmatprep.subr.mxu0 0.0
  %3764 = vmatpush1.msra.mxu0 %v1006
  %3765 = vmatprep.subr.mxu0 0.0
  %3766 = vmatpush1.msra.mxu0 %v1007
  %3767 = vmatprep.subr.mxu0 0.0
  %3768 = vmatpush1.msra.mxu0 %v1008
  %3769 = vmatprep.subr.mxu0 0.0
  %3770 = vmatpush1.msra.mxu0 %v1009
  %3771 = vmatprep.subr.mxu0 0.0
  %3772 = vmatpush1.msra.mxu0 %v1010
  %3773 = vmatprep.subr.mxu0 0.0
  %3774 = vmatpush1.msra.mxu0 %v1011
  %3775 = vmatprep.subr.mxu0 0.0
  %3776 = vmatpush1.msra.mxu0 %v1012
  %3777 = vmatprep.subr.mxu0 0.0
  %3778 = vmatpush1.msra.mxu0 %v1013
  %3779 = vmatprep.subr.mxu0 0.0
  %3780 = vmatpush1.msra.mxu0 %v1014
  %3781 = vmatprep.subr.mxu0 0.0
  %3782 = vmatpush1.msra.mxu0 %v1015
  %3783 = vmatprep.subr.mxu0 0.0
  %3784 = vmatpush1.msra.mxu0 %v1016
  %3785 = vmatprep.subr.mxu0 0.0
  %3786 = vmatpush1.msra.mxu0 %v1017
  %3787 = vmatprep.subr.mxu0 0.0
  %3788 = vmatpush1.msra.mxu0 %v1018
  %3789 = vmatprep.subr.mxu0 0.0
  %3790 = vmatpush1.msra.mxu0 %v1019
  %3791 = vmatprep.subr.mxu0 0.0
  %3792 = vmatpush1.msra.mxu0 %v1020
  %3793 = vmatprep.subr.mxu0 0.0
  %3794 = vmatpush1.msra.mxu0 %v1021
  %3795 = vmatprep.subr.mxu0 0.0
  %3796 = vmatpush1.msra.mxu0 %v1022
  %3797 = vmatprep.subr.mxu0 0.0
  %3798 = vmatpush1.msra.mxu0 %v1023
  %3799 = vmatprep.subr.mxu0 0.0
  %3800 = vmatpush1.msra.mxu0 %v1024
  %3801 = vmatprep.subr.mxu0 0.0
  %3802 = vmatpush1.msra.mxu0 %v1025
  %3803 = vmatprep.subr.mxu0 0.0
  %3804 = vmatpush1.msra.mxu0 %v1026
  %3805 = vmatprep.subr.mxu0 0.0
  %3806 = vmatpush1.msra.mxu0 %v1027
  %3807 = vmatprep.subr.mxu0 0.0
  %3808 = vmatpush1.msra.mxu0 %v1028
  %3809 = vmatprep.subr.mxu0 0.0
  %3810 = vmatpush1.msra.mxu0 %v1029
  %3811 = vmatprep.subr.mxu0 0.0
  %3812 = vmatpush1.msra.mxu0 %v1030
  %3813 = vmatprep.subr.mxu0 0.0
  %3814 = vmatpush1.msra.mxu0 %v1031
  %3815 = vmatprep.subr.mxu0 0.0
  %3816 = vmatpush1.msra.mxu0 %v1032
  %3817 = vmatprep.mubr.f32.mxu0 %v3682
  %3818 = vmatmul.mubr.f32.gmra.mrb[0].mxu0 %v3681
  %v3819 = vpop.f32.mrb[0].mxu0
  %v3820 = vadd.f32 %v3750, %v3819
  %v3821 = vpop.f32.mrb[0].mxu0
  %3822 = vdwg.mxu0
  %v3823 = vmul.f32 %v3650, 0.2
  %v3824 = vadd.f32 %v3823, %v3820
  %v3825 = vsel %vm3651, %v3820, %v3824
  %vm3826 = vcmp.gt.f32.partialorder %v3825, 0.5
  %v3827 = vsel %vm3826, 1, 0
  %v3828 = vcvt.s32.f32 %v3827
  %v3829 = vadd.f32 %v3654, %v3828
  %v3830 = vld [vmem:[#allocation2 + $0x200] sm:$0xff]
  %v3831 = vld [vmem:[#allocation2 + $0x208] sm:$0xff]
  %v3832 = vld [vmem:[#allocation2 + $0x210] sm:$0xff]
  %v3833 = vld [vmem:[#allocation2 + $0x218] sm:$0xff]
  %v3834 = vmul.f32 %v3667, 0.2
  %v3835 = vmul.f32 %v3668, 0.2
  %v3836 = vmul.f32 %v3669, 0.2
  %v3837 = vmul.f32 %v3670, 0.2
  %v3838 = vadd.f32 %v3834, %v3830
  %v3839 = vadd.f32 %v3835, %v3831
  %v3840 = vadd.f32 %v3836, %v3832
  %v3841 = vadd.f32 %v3837, %v3833
  %v3842 = vsel %vm3671, %v3830, %v3838
  %v3843 = vsel %vm3672, %v3831, %v3839
  %v3844 = vsel %vm3673, %v3832, %v3840
  %v3845 = vsel %vm3674, %v3833, %v3841
  %vm3846 = vcmp.gt.f32.partialorder %v3842, 0.5
  %vm3847 = vcmp.gt.f32.partialorder %v3843, 0.5
  %vm3848 = vcmp.gt.f32.partialorder %v3844, 0.5
  %vm3849 = vcmp.gt.f32.partialorder %v3845, 0.5
  %v3850 = vsel %vm3846, 1, 0
  %v3851 = vsel %vm3847, 1, 0
  %v3852 = vsel %vm3848, 1, 0
  %v3853 = vsel %vm3849, 1, 0
  %v3854 = vcvt.s32.f32 %v3850
  %v3855 = vcvt.s32.f32 %v3851
  %v3856 = vcvt.s32.f32 %v3852
  %v3857 = vcvt.s32.f32 %v3853
  %3858 = vmatprep.subr.mxu0 0.0
  %3859 = vmatpush1.msra.mxu0 %v969
  %3860 = vmatprep.subr.mxu0 0.0
  %3861 = vmatpush1.msra.mxu0 %v970
  %3862 = vmatprep.subr.mxu0 0.0
  %3863 = vmatpush1.msra.mxu0 %v971
  %3864 = vmatprep.subr.mxu0 0.0
  %3865 = vmatpush1.msra.mxu0 %v972
  %3866 = vmatprep.subr.mxu0 0.0
  %3867 = vmatpush1.msra.mxu0 %v973
  %3868 = vmatprep.subr.mxu0 0.0
  %3869 = vmatpush1.msra.mxu0 %v974
  %3870 = vmatprep.subr.mxu0 0.0
  %3871 = vmatpush1.msra.mxu0 %v975
  %3872 = vmatprep.subr.mxu0 0.0
  %3873 = vmatpush1.msra.mxu0 %v976
  %3874 = vmatprep.subr.mxu0 0.0
  %3875 = vmatpush1.msra.mxu0 %v977
  %3876 = vmatprep.subr.mxu0 0.0
  %3877 = vmatpush1.msra.mxu0 %v978
  %3878 = vmatprep.subr.mxu0 0.0
  %3879 = vmatpush1.msra.mxu0 %v979
  %3880 = vmatprep.subr.mxu0 0.0
  %3881 = vmatpush1.msra.mxu0 %v980
  %3882 = vmatprep.subr.mxu0 0.0
  %3883 = vmatpush1.msra.mxu0 %v981
  %3884 = vmatprep.subr.mxu0 0.0
  %3885 = vmatpush1.msra.mxu0 %v982
  %3886 = vmatprep.subr.mxu0 0.0
  %3887 = vmatpush1.msra.mxu0 %v983
  %3888 = vmatprep.subr.mxu0 0.0
  %3889 = vmatpush1.msra.mxu0 %v984
  %3890 = vmatprep.subr.mxu0 0.0
  %3891 = vmatpush1.msra.mxu0 %v985
  %3892 = vmatprep.subr.mxu0 0.0
  %3893 = vmatpush1.msra.mxu0 %v986
  %3894 = vmatprep.subr.mxu0 0.0
  %3895 = vmatpush1.msra.mxu0 %v987
  %3896 = vmatprep.subr.mxu0 0.0
  %3897 = vmatpush1.msra.mxu0 %v988
  %3898 = vmatprep.subr.mxu0 0.0
  %3899 = vmatpush1.msra.mxu0 %v989
  %3900 = vmatprep.subr.mxu0 0.0
  %3901 = vmatpush1.msra.mxu0 %v990
  %3902 = vmatprep.subr.mxu0 0.0
  %3903 = vmatpush1.msra.mxu0 %v991
  %3904 = vmatprep.subr.mxu0 0.0
  %3905 = vmatpush1.msra.mxu0 %v992
  %3906 = vmatprep.subr.mxu0 0.0
  %3907 = vmatpush1.msra.mxu0 %v993
  %3908 = vmatprep.subr.mxu0 0.0
  %3909 = vmatpush1.msra.mxu0 %v994
  %3910 = vmatprep.subr.mxu0 0.0
  %3911 = vmatpush1.msra.mxu0 %v995
  %3912 = vmatprep.subr.mxu0 0.0
  %3913 = vmatpush1.msra.mxu0 %v996
  %3914 = vmatprep.subr.mxu0 0.0
  %3915 = vmatpush1.msra.mxu0 %v997
  %3916 = vmatprep.subr.mxu0 0.0
  %3917 = vmatpush1.msra.mxu0 %v998
  %3918 = vmatprep.subr.mxu0 0.0
  %3919 = vmatpush1.msra.mxu0 %v999
  %3920 = vmatprep.subr.mxu0 0.0
  %3921 = vmatpush1.msra.mxu0 %v1000
  %3922 = vmatprep.mubr.f32.mxu0 %v3855
  %3923 = vmatmul.mubr.f32.gmra.mrb[0].mxu0 %v3854
  %v3924 = vpop.f32.mrb[0].mxu0
  %v3925 = vadd.f32 %v1038, %v3924
  %v3926 = vpop.f32.mrb[0].mxu0
  %3927 = vdwg.mxu0
  %3928 = vmatprep.subr.mxu0 0.0
  %3929 = vmatpush1.msra.mxu0 %v1001
  %3930 = vmatprep.subr.mxu0 0.0
  %3931 = vmatpush1.msra.mxu0 %v1002
  %3932 = vmatprep.subr.mxu0 0.0
  %3933 = vmatpush1.msra.mxu0 %v1003
  %3934 = vmatprep.subr.mxu0 0.0
  %3935 = vmatpush1.msra.mxu0 %v1004
  %3936 = vmatprep.subr.mxu0 0.0
  %3937 = vmatpush1.msra.mxu0 %v1005
  %3938 = vmatprep.subr.mxu0 0.0
  %3939 = vmatpush1.msra.mxu0 %v1006
  %3940 = vmatprep.subr.mxu0 0.0
  %3941 = vmatpush1.msra.mxu0 %v1007
  %3942 = vmatprep.subr.mxu0 0.0
  %3943 = vmatpush1.msra.mxu0 %v1008
  %3944 = vmatprep.subr.mxu0 0.0
  %3945 = vmatpush1.msra.mxu0 %v1009
  %3946 = vmatprep.subr.mxu0 0.0
  %3947 = vmatpush1.msra.mxu0 %v1010
  %3948 = vmatprep.subr.mxu0 0.0
  %3949 = vmatpush1.msra.mxu0 %v1011
  %3950 = vmatprep.subr.mxu0 0.0
  %3951 = vmatpush1.msra.mxu0 %v1012
  %3952 = vmatprep.subr.mxu0 0.0
  %3953 = vmatpush1.msra.mxu0 %v1013
  %3954 = vmatprep.subr.mxu0 0.0
  %3955 = vmatpush1.msra.mxu0 %v1014
  %3956 = vmatprep.subr.mxu0 0.0
  %3957 = vmatpush1.msra.mxu0 %v1015
  %3958 = vmatprep.subr.mxu0 0.0
  %3959 = vmatpush1.msra.mxu0 %v1016
  %3960 = vmatprep.subr.mxu0 0.0
  %3961 = vmatpush1.msra.mxu0 %v1017
  %3962 = vmatprep.subr.mxu0 0.0
  %3963 = vmatpush1.msra.mxu0 %v1018
  %3964 = vmatprep.subr.mxu0 0.0
  %3965 = vmatpush1.msra.mxu0 %v1019
  %3966 = vmatprep.subr.mxu0 0.0
  %3967 = vmatpush1.msra.mxu0 %v1020
  %3968 = vmatprep.subr.mxu0 0.0
  %3969 = vmatpush1.msra.mxu0 %v1021
  %3970 = vmatprep.subr.mxu0 0.0
  %3971 = vmatpush1.msra.mxu0 %v1022
  %3972 = vmatprep.subr.mxu0 0.0
  %3973 = vmatpush1.msra.mxu0 %v1023
  %3974 = vmatprep.subr.mxu0 0.0
  %3975 = vmatpush1.msra.mxu0 %v1024
  %3976 = vmatprep.subr.mxu0 0.0
  %3977 = vmatpush1.msra.mxu0 %v1025
  %3978 = vmatprep.subr.mxu0 0.0
  %3979 = vmatpush1.msra.mxu0 %v1026
  %3980 = vmatprep.subr.mxu0 0.0
  %3981 = vmatpush1.msra.mxu0 %v1027
  %3982 = vmatprep.subr.mxu0 0.0
  %3983 = vmatpush1.msra.mxu0 %v1028
  %3984 = vmatprep.subr.mxu0 0.0
  %3985 = vmatpush1.msra.mxu0 %v1029
  %3986 = vmatprep.subr.mxu0 0.0
  %3987 = vmatpush1.msra.mxu0 %v1030
  %3988 = vmatprep.subr.mxu0 0.0
  %3989 = vmatpush1.msra.mxu0 %v1031
  %3990 = vmatprep.subr.mxu0 0.0
  %3991 = vmatpush1.msra.mxu0 %v1032
  %3992 = vmatprep.mubr.f32.mxu0 %v3857
  %3993 = vmatmul.mubr.f32.gmra.mrb[0].mxu0 %v3856
  %v3994 = vpop.f32.mrb[0].mxu0
  %v3995 = vadd.f32 %v3925, %v3994
  %v3996 = vpop.f32.mrb[0].mxu0
  %3997 = vdwg.mxu0
  %v3998 = vmul.f32 %v3825, 0.2
  %v3999 = vadd.f32 %v3998, %v3995
  %v4000 = vsel %vm3826, %v3995, %v3999
  %vm4001 = vcmp.gt.f32.partialorder %v4000, 0.5
  %v4002 = vsel %vm4001, 1, 0
  %v4003 = vcvt.s32.f32 %v4002
  %v4004 = vadd.f32 %v3829, %v4003
  %v4005 = vld [vmem:[#allocation2 + $0x220] sm:$0xff]
  %v4006 = vld [vmem:[#allocation2 + $0x228] sm:$0xff]
  %v4007 = vld [vmem:[#allocation2 + $0x230] sm:$0xff]
  %v4008 = vld [vmem:[#allocation2 + $0x238] sm:$0xff]
  %v4009 = vmul.f32 %v3842, 0.2
  %v4010 = vmul.f32 %v3843, 0.2
  %v4011 = vmul.f32 %v3844, 0.2
  %v4012 = vmul.f32 %v3845, 0.2
  %v4013 = vadd.f32 %v4009, %v4005
  %v4014 = vadd.f32 %v4010, %v4006
  %v4015 = vadd.f32 %v4011, %v4007
  %v4016 = vadd.f32 %v4012, %v4008
  %v4017 = vsel %vm3846, %v4005, %v4013
  %v4018 = vsel %vm3847, %v4006, %v4014
  %v4019 = vsel %vm3848, %v4007, %v4015
  %v4020 = vsel %vm3849, %v4008, %v4016
  %vm4021 = vcmp.gt.f32.partialorder %v4017, 0.5
  %vm4022 = vcmp.gt.f32.partialorder %v4018, 0.5
  %vm4023 = vcmp.gt.f32.partialorder %v4019, 0.5
  %vm4024 = vcmp.gt.f32.partialorder %v4020, 0.5
  %v4025 = vsel %vm4021, 1, 0
  %v4026 = vsel %vm4022, 1, 0
  %v4027 = vsel %vm4023, 1, 0
  %v4028 = vsel %vm4024, 1, 0
  %v4029 = vcvt.s32.f32 %v4025
  %v4030 = vcvt.s32.f32 %v4026
  %v4031 = vcvt.s32.f32 %v4027
  %v4032 = vcvt.s32.f32 %v4028
  %4033 = vmatprep.subr.mxu0 0.0
  %4034 = vmatpush1.msra.mxu0 %v969
  %4035 = vmatprep.subr.mxu0 0.0
  %4036 = vmatpush1.msra.mxu0 %v970
  %4037 = vmatprep.subr.mxu0 0.0
  %4038 = vmatpush1.msra.mxu0 %v971
  %4039 = vmatprep.subr.mxu0 0.0
  %4040 = vmatpush1.msra.mxu0 %v972
  %4041 = vmatprep.subr.mxu0 0.0
  %4042 = vmatpush1.msra.mxu0 %v973
  %4043 = vmatprep.subr.mxu0 0.0
  %4044 = vmatpush1.msra.mxu0 %v974
  %4045 = vmatprep.subr.mxu0 0.0
  %4046 = vmatpush1.msra.mxu0 %v975
  %4047 = vmatprep.subr.mxu0 0.0
  %4048 = vmatpush1.msra.mxu0 %v976
  %4049 = vmatprep.subr.mxu0 0.0
  %4050 = vmatpush1.msra.mxu0 %v977
  %4051 = vmatprep.subr.mxu0 0.0
  %4052 = vmatpush1.msra.mxu0 %v978
  %4053 = vmatprep.subr.mxu0 0.0
  %4054 = vmatpush1.msra.mxu0 %v979
  %4055 = vmatprep.subr.mxu0 0.0
  %4056 = vmatpush1.msra.mxu0 %v980
  %4057 = vmatprep.subr.mxu0 0.0
  %4058 = vmatpush1.msra.mxu0 %v981
  %4059 = vmatprep.subr.mxu0 0.0
  %4060 = vmatpush1.msra.mxu0 %v982
  %4061 = vmatprep.subr.mxu0 0.0
  %4062 = vmatpush1.msra.mxu0 %v983
  %4063 = vmatprep.subr.mxu0 0.0
  %4064 = vmatpush1.msra.mxu0 %v984
  %4065 = vmatprep.subr.mxu0 0.0
  %4066 = vmatpush1.msra.mxu0 %v985
  %4067 = vmatprep.subr.mxu0 0.0
  %4068 = vmatpush1.msra.mxu0 %v986
  %4069 = vmatprep.subr.mxu0 0.0
  %4070 = vmatpush1.msra.mxu0 %v987
  %4071 = vmatprep.subr.mxu0 0.0
  %4072 = vmatpush1.msra.mxu0 %v988
  %4073 = vmatprep.subr.mxu0 0.0
  %4074 = vmatpush1.msra.mxu0 %v989
  %4075 = vmatprep.subr.mxu0 0.0
  %4076 = vmatpush1.msra.mxu0 %v990
  %4077 = vmatprep.subr.mxu0 0.0
  %4078 = vmatpush1.msra.mxu0 %v991
  %4079 = vmatprep.subr.mxu0 0.0
  %4080 = vmatpush1.msra.mxu0 %v992
  %4081 = vmatprep.subr.mxu0 0.0
  %4082 = vmatpush1.msra.mxu0 %v993
  %4083 = vmatprep.subr.mxu0 0.0
  %4084 = vmatpush1.msra.mxu0 %v994
  %4085 = vmatprep.subr.mxu0 0.0
  %4086 = vmatpush1.msra.mxu0 %v995
  %4087 = vmatprep.subr.mxu0 0.0
  %4088 = vmatpush1.msra.mxu0 %v996
  %4089 = vmatprep.subr.mxu0 0.0
  %4090 = vmatpush1.msra.mxu0 %v997
  %4091 = vmatprep.subr.mxu0 0.0
  %4092 = vmatpush1.msra.mxu0 %v998
  %4093 = vmatprep.subr.mxu0 0.0
  %4094 = vmatpush1.msra.mxu0 %v999
  %4095 = vmatprep.subr.mxu0 0.0
  %4096 = vmatpush1.msra.mxu0 %v1000
  %4097 = vmatprep.mubr.f32.mxu0 %v4030
  %4098 = vmatmul.mubr.f32.gmra.mrb[0].mxu0 %v4029
  %v4099 = vpop.f32.mrb[0].mxu0
  %v4100 = vadd.f32 %v1038, %v4099
  %v4101 = vpop.f32.mrb[0].mxu0
  %4102 = vdwg.mxu0
  %4103 = vmatprep.subr.mxu0 0.0
  %4104 = vmatpush1.msra.mxu0 %v1001
  %4105 = vmatprep.subr.mxu0 0.0
  %4106 = vmatpush1.msra.mxu0 %v1002
  %4107 = vmatprep.subr.mxu0 0.0
  %4108 = vmatpush1.msra.mxu0 %v1003
  %4109 = vmatprep.subr.mxu0 0.0
  %4110 = vmatpush1.msra.mxu0 %v1004
  %4111 = vmatprep.subr.mxu0 0.0
  %4112 = vmatpush1.msra.mxu0 %v1005
  %4113 = vmatprep.subr.mxu0 0.0
  %4114 = vmatpush1.msra.mxu0 %v1006
  %4115 = vmatprep.subr.mxu0 0.0
  %4116 = vmatpush1.msra.mxu0 %v1007
  %4117 = vmatprep.subr.mxu0 0.0
  %4118 = vmatpush1.msra.mxu0 %v1008
  %4119 = vmatprep.subr.mxu0 0.0
  %4120 = vmatpush1.msra.mxu0 %v1009
  %4121 = vmatprep.subr.mxu0 0.0
  %4122 = vmatpush1.msra.mxu0 %v1010
  %4123 = vmatprep.subr.mxu0 0.0
  %4124 = vmatpush1.msra.mxu0 %v1011
  %4125 = vmatprep.subr.mxu0 0.0
  %4126 = vmatpush1.msra.mxu0 %v1012
  %4127 = vmatprep.subr.mxu0 0.0
  %4128 = vmatpush1.msra.mxu0 %v1013
  %4129 = vmatprep.subr.mxu0 0.0
  %4130 = vmatpush1.msra.mxu0 %v1014
  %4131 = vmatprep.subr.mxu0 0.0
  %4132 = vmatpush1.msra.mxu0 %v1015
  %4133 = vmatprep.subr.mxu0 0.0
  %4134 = vmatpush1.msra.mxu0 %v1016
  %4135 = vmatprep.subr.mxu0 0.0
  %4136 = vmatpush1.msra.mxu0 %v1017
  %4137 = vmatprep.subr.mxu0 0.0
  %4138 = vmatpush1.msra.mxu0 %v1018
  %4139 = vmatprep.subr.mxu0 0.0
  %4140 = vmatpush1.msra.mxu0 %v1019
  %4141 = vmatprep.subr.mxu0 0.0
  %4142 = vmatpush1.msra.mxu0 %v1020
  %4143 = vmatprep.subr.mxu0 0.0
  %4144 = vmatpush1.msra.mxu0 %v1021
  %4145 = vmatprep.subr.mxu0 0.0
  %4146 = vmatpush1.msra.mxu0 %v1022
  %4147 = vmatprep.subr.mxu0 0.0
  %4148 = vmatpush1.msra.mxu0 %v1023
  %4149 = vmatprep.subr.mxu0 0.0
  %4150 = vmatpush1.msra.mxu0 %v1024
  %4151 = vmatprep.subr.mxu0 0.0
  %4152 = vmatpush1.msra.mxu0 %v1025
  %4153 = vmatprep.subr.mxu0 0.0
  %4154 = vmatpush1.msra.mxu0 %v1026
  %4155 = vmatprep.subr.mxu0 0.0
  %4156 = vmatpush1.msra.mxu0 %v1027
  %4157 = vmatprep.subr.mxu0 0.0
  %4158 = vmatpush1.msra.mxu0 %v1028
  %4159 = vmatprep.subr.mxu0 0.0
  %4160 = vmatpush1.msra.mxu0 %v1029
  %4161 = vmatprep.subr.mxu0 0.0
  %4162 = vmatpush1.msra.mxu0 %v1030
  %4163 = vmatprep.subr.mxu0 0.0
  %4164 = vmatpush1.msra.mxu0 %v1031
  %4165 = vmatprep.subr.mxu0 0.0
  %4166 = vmatpush1.msra.mxu0 %v1032
  %4167 = vmatprep.mubr.f32.mxu0 %v4032
  %4168 = vmatmul.mubr.f32.gmra.mrb[0].mxu0 %v4031
  %v4169 = vpop.f32.mrb[0].mxu0
  %v4170 = vadd.f32 %v4100, %v4169
  %v4171 = vpop.f32.mrb[0].mxu0
  %4172 = vdwg.mxu0
  %v4173 = vmul.f32 %v4000, 0.2
  %v4174 = vadd.f32 %v4173, %v4170
  %v4175 = vsel %vm4001, %v4170, %v4174
  %vm4176 = vcmp.gt.f32.partialorder %v4175, 0.5
  %v4177 = vsel %vm4176, 1, 0
  %v4178 = vcvt.s32.f32 %v4177
  %v4179 = vadd.f32 %v4004, %v4178
  %v4180 = vld [vmem:[#allocation2 + $0x240] sm:$0xff]
  %v4181 = vld [vmem:[#allocation2 + $0x248] sm:$0xff]
  %v4182 = vld [vmem:[#allocation2 + $0x250] sm:$0xff]
  %v4183 = vld [vmem:[#allocation2 + $0x258] sm:$0xff]
  %v4184 = vmul.f32 %v4017, 0.2
  %v4185 = vmul.f32 %v4018, 0.2
  %v4186 = vmul.f32 %v4019, 0.2
  %v4187 = vmul.f32 %v4020, 0.2
  %v4188 = vadd.f32 %v4184, %v4180
  %v4189 = vadd.f32 %v4185, %v4181
  %v4190 = vadd.f32 %v4186, %v4182
  %v4191 = vadd.f32 %v4187, %v4183
  %v4192 = vsel %vm4021, %v4180, %v4188
  %v4193 = vsel %vm4022, %v4181, %v4189
  %v4194 = vsel %vm4023, %v4182, %v4190
  %v4195 = vsel %vm4024, %v4183, %v4191
  %vm4196 = vcmp.gt.f32.partialorder %v4192, 0.5
  %vm4197 = vcmp.gt.f32.partialorder %v4193, 0.5
  %vm4198 = vcmp.gt.f32.partialorder %v4194, 0.5
  %vm4199 = vcmp.gt.f32.partialorder %v4195, 0.5
  %v4200 = vsel %vm4196, 1, 0
  %v4201 = vsel %vm4197, 1, 0
  %v4202 = vsel %vm4198, 1, 0
  %v4203 = vsel %vm4199, 1, 0
  %v4204 = vcvt.s32.f32 %v4200
  %v4205 = vcvt.s32.f32 %v4201
  %v4206 = vcvt.s32.f32 %v4202
  %v4207 = vcvt.s32.f32 %v4203
  %4208 = vmatprep.subr.mxu0 0.0
  %4209 = vmatpush1.msra.mxu0 %v969
  %4210 = vmatprep.subr.mxu0 0.0
  %4211 = vmatpush1.msra.mxu0 %v970
  %4212 = vmatprep.subr.mxu0 0.0
  %4213 = vmatpush1.msra.mxu0 %v971
  %4214 = vmatprep.subr.mxu0 0.0
  %4215 = vmatpush1.msra.mxu0 %v972
  %4216 = vmatprep.subr.mxu0 0.0
  %4217 = vmatpush1.msra.mxu0 %v973
  %4218 = vmatprep.subr.mxu0 0.0
  %4219 = vmatpush1.msra.mxu0 %v974
  %4220 = vmatprep.subr.mxu0 0.0
  %4221 = vmatpush1.msra.mxu0 %v975
  %4222 = vmatprep.subr.mxu0 0.0
  %4223 = vmatpush1.msra.mxu0 %v976
  %4224 = vmatprep.subr.mxu0 0.0
  %4225 = vmatpush1.msra.mxu0 %v977
  %4226 = vmatprep.subr.mxu0 0.0
  %4227 = vmatpush1.msra.mxu0 %v978
  %4228 = vmatprep.subr.mxu0 0.0
  %4229 = vmatpush1.msra.mxu0 %v979
  %4230 = vmatprep.subr.mxu0 0.0
  %4231 = vmatpush1.msra.mxu0 %v980
  %4232 = vmatprep.subr.mxu0 0.0
  %4233 = vmatpush1.msra.mxu0 %v981
  %4234 = vmatprep.subr.mxu0 0.0
  %4235 = vmatpush1.msra.mxu0 %v982
  %4236 = vmatprep.subr.mxu0 0.0
  %4237 = vmatpush1.msra.mxu0 %v983
  %4238 = vmatprep.subr.mxu0 0.0
  %4239 = vmatpush1.msra.mxu0 %v984
  %4240 = vmatprep.subr.mxu0 0.0
  %4241 = vmatpush1.msra.mxu0 %v985
  %4242 = vmatprep.subr.mxu0 0.0
  %4243 = vmatpush1.msra.mxu0 %v986
  %4244 = vmatprep.subr.mxu0 0.0
  %4245 = vmatpush1.msra.mxu0 %v987
  %4246 = vmatprep.subr.mxu0 0.0
  %4247 = vmatpush1.msra.mxu0 %v988
  %4248 = vmatprep.subr.mxu0 0.0
  %4249 = vmatpush1.msra.mxu0 %v989
  %4250 = vmatprep.subr.mxu0 0.0
  %4251 = vmatpush1.msra.mxu0 %v990
  %4252 = vmatprep.subr.mxu0 0.0
  %4253 = vmatpush1.msra.mxu0 %v991
  %4254 = vmatprep.subr.mxu0 0.0
  %4255 = vmatpush1.msra.mxu0 %v992
  %4256 = vmatprep.subr.mxu0 0.0
  %4257 = vmatpush1.msra.mxu0 %v993
  %4258 = vmatprep.subr.mxu0 0.0
  %4259 = vmatpush1.msra.mxu0 %v994
  %4260 = vmatprep.subr.mxu0 0.0
  %4261 = vmatpush1.msra.mxu0 %v995
  %4262 = vmatprep.subr.mxu0 0.0
  %4263 = vmatpush1.msra.mxu0 %v996
  %4264 = vmatprep.subr.mxu0 0.0
  %4265 = vmatpush1.msra.mxu0 %v997
  %4266 = vmatprep.subr.mxu0 0.0
  %4267 = vmatpush1.msra.mxu0 %v998
  %4268 = vmatprep.subr.mxu0 0.0
  %4269 = vmatpush1.msra.mxu0 %v999
  %4270 = vmatprep.subr.mxu0 0.0
  %4271 = vmatpush1.msra.mxu0 %v1000
  %4272 = vmatprep.mubr.f32.mxu0 %v4205
  %4273 = vmatmul.mubr.f32.gmra.mrb[0].mxu0 %v4204
  %v4274 = vpop.f32.mrb[0].mxu0
  %v4275 = vadd.f32 %v1038, %v4274
  %v4276 = vpop.f32.mrb[0].mxu0
  %4277 = vdwg.mxu0
  %4278 = vmatprep.subr.mxu0 0.0
  %4279 = vmatpush1.msra.mxu0 %v1001
  %4280 = vmatprep.subr.mxu0 0.0
  %4281 = vmatpush1.msra.mxu0 %v1002
  %4282 = vmatprep.subr.mxu0 0.0
  %4283 = vmatpush1.msra.mxu0 %v1003
  %4284 = vmatprep.subr.mxu0 0.0
  %4285 = vmatpush1.msra.mxu0 %v1004
  %4286 = vmatprep.subr.mxu0 0.0
  %4287 = vmatpush1.msra.mxu0 %v1005
  %4288 = vmatprep.subr.mxu0 0.0
  %4289 = vmatpush1.msra.mxu0 %v1006
  %4290 = vmatprep.subr.mxu0 0.0
  %4291 = vmatpush1.msra.mxu0 %v1007
  %4292 = vmatprep.subr.mxu0 0.0
  %4293 = vmatpush1.msra.mxu0 %v1008
  %4294 = vmatprep.subr.mxu0 0.0
  %4295 = vmatpush1.msra.mxu0 %v1009
  %4296 = vmatprep.subr.mxu0 0.0
  %4297 = vmatpush1.msra.mxu0 %v1010
  %4298 = vmatprep.subr.mxu0 0.0
  %4299 = vmatpush1.msra.mxu0 %v1011
  %4300 = vmatprep.subr.mxu0 0.0
  %4301 = vmatpush1.msra.mxu0 %v1012
  %4302 = vmatprep.subr.mxu0 0.0
  %4303 = vmatpush1.msra.mxu0 %v1013
  %4304 = vmatprep.subr.mxu0 0.0
  %4305 = vmatpush1.msra.mxu0 %v1014
  %4306 = vmatprep.subr.mxu0 0.0
  %4307 = vmatpush1.msra.mxu0 %v1015
  %4308 = vmatprep.subr.mxu0 0.0
  %4309 = vmatpush1.msra.mxu0 %v1016
  %4310 = vmatprep.subr.mxu0 0.0
  %4311 = vmatpush1.msra.mxu0 %v1017
  %4312 = vmatprep.subr.mxu0 0.0
  %4313 = vmatpush1.msra.mxu0 %v1018
  %4314 = vmatprep.subr.mxu0 0.0
  %4315 = vmatpush1.msra.mxu0 %v1019
  %4316 = vmatprep.subr.mxu0 0.0
  %4317 = vmatpush1.msra.mxu0 %v1020
  %4318 = vmatprep.subr.mxu0 0.0
  %4319 = vmatpush1.msra.mxu0 %v1021
  %4320 = vmatprep.subr.mxu0 0.0
  %4321 = vmatpush1.msra.mxu0 %v1022
  %4322 = vmatprep.subr.mxu0 0.0
  %4323 = vmatpush1.msra.mxu0 %v1023
  %4324 = vmatprep.subr.mxu0 0.0
  %4325 = vmatpush1.msra.mxu0 %v1024
  %4326 = vmatprep.subr.mxu0 0.0
  %4327 = vmatpush1.msra.mxu0 %v1025
  %4328 = vmatprep.subr.mxu0 0.0
  %4329 = vmatpush1.msra.mxu0 %v1026
  %4330 = vmatprep.subr.mxu0 0.0
  %4331 = vmatpush1.msra.mxu0 %v1027
  %4332 = vmatprep.subr.mxu0 0.0
  %4333 = vmatpush1.msra.mxu0 %v1028
  %4334 = vmatprep.subr.mxu0 0.0
  %4335 = vmatpush1.msra.mxu0 %v1029
  %4336 = vmatprep.subr.mxu0 0.0
  %4337 = vmatpush1.msra.mxu0 %v1030
  %4338 = vmatprep.subr.mxu0 0.0
  %4339 = vmatpush1.msra.mxu0 %v1031
  %4340 = vmatprep.subr.mxu0 0.0
  %4341 = vmatpush1.msra.mxu0 %v1032
  %4342 = vmatprep.mubr.f32.mxu0 %v4207
  %4343 = vmatmul.mubr.f32.gmra.mrb[0].mxu0 %v4206
  %v4344 = vpop.f32.mrb[0].mxu0
  %v4345 = vadd.f32 %v4275, %v4344
  %v4346 = vpop.f32.mrb[0].mxu0
  %4347 = vdwg.mxu0
  %v4348 = vmul.f32 %v4175, 0.2
  %v4349 = vadd.f32 %v4348, %v4345
  %v4350 = vsel %vm4176, %v4345, %v4349
  %vm4351 = vcmp.gt.f32.partialorder %v4350, 0.5
  %v4352 = vsel %vm4351, 1, 0
  %v4353 = vcvt.s32.f32 %v4352
  %v4354 = vadd.f32 %v4179, %v4353
  %v4355 = vld [vmem:[#allocation2 + $0x260] sm:$0xff]
  %v4356 = vld [vmem:[#allocation2 + $0x268] sm:$0xff]
  %v4357 = vld [vmem:[#allocation2 + $0x270] sm:$0xff]
  %v4358 = vld [vmem:[#allocation2 + $0x278] sm:$0xff]
  %v4359 = vmul.f32 %v4192, 0.2
  %v4360 = vmul.f32 %v4193, 0.2
  %v4361 = vmul.f32 %v4194, 0.2
  %v4362 = vmul.f32 %v4195, 0.2
  %v4363 = vadd.f32 %v4359, %v4355
  %v4364 = vadd.f32 %v4360, %v4356
  %v4365 = vadd.f32 %v4361, %v4357
  %v4366 = vadd.f32 %v4362, %v4358
  %v4367 = vsel %vm4196, %v4355, %v4363
  %v4368 = vsel %vm4197, %v4356, %v4364
  %v4369 = vsel %vm4198, %v4357, %v4365
  %v4370 = vsel %vm4199, %v4358, %v4366
  %vm4371 = vcmp.gt.f32.partialorder %v4367, 0.5
  %vm4372 = vcmp.gt.f32.partialorder %v4368, 0.5
  %vm4373 = vcmp.gt.f32.partialorder %v4369, 0.5
  %vm4374 = vcmp.gt.f32.partialorder %v4370, 0.5
  %v4375 = vsel %vm4371, 1, 0
  %v4376 = vsel %vm4372, 1, 0
  %v4377 = vsel %vm4373, 1, 0
  %v4378 = vsel %vm4374, 1, 0
  %v4379 = vcvt.s32.f32 %v4375
  %v4380 = vcvt.s32.f32 %v4376
  %v4381 = vcvt.s32.f32 %v4377
  %v4382 = vcvt.s32.f32 %v4378
  %4383 = vmatprep.subr.mxu0 0.0
  %4384 = vmatpush1.msra.mxu0 %v969
  %4385 = vmatprep.subr.mxu0 0.0
  %4386 = vmatpush1.msra.mxu0 %v970
  %4387 = vmatprep.subr.mxu0 0.0
  %4388 = vmatpush1.msra.mxu0 %v971
  %4389 = vmatprep.subr.mxu0 0.0
  %4390 = vmatpush1.msra.mxu0 %v972
  %4391 = vmatprep.subr.mxu0 0.0
  %4392 = vmatpush1.msra.mxu0 %v973
  %4393 = vmatprep.subr.mxu0 0.0
  %4394 = vmatpush1.msra.mxu0 %v974
  %4395 = vmatprep.subr.mxu0 0.0
  %4396 = vmatpush1.msra.mxu0 %v975
  %4397 = vmatprep.subr.mxu0 0.0
  %4398 = vmatpush1.msra.mxu0 %v976
  %4399 = vmatprep.subr.mxu0 0.0
  %4400 = vmatpush1.msra.mxu0 %v977
  %4401 = vmatprep.subr.mxu0 0.0
  %4402 = vmatpush1.msra.mxu0 %v978
  %4403 = vmatprep.subr.mxu0 0.0
  %4404 = vmatpush1.msra.mxu0 %v979
  %4405 = vmatprep.subr.mxu0 0.0
  %4406 = vmatpush1.msra.mxu0 %v980
  %4407 = vmatprep.subr.mxu0 0.0
  %4408 = vmatpush1.msra.mxu0 %v981
  %4409 = vmatprep.subr.mxu0 0.0
  %4410 = vmatpush1.msra.mxu0 %v982
  %4411 = vmatprep.subr.mxu0 0.0
  %4412 = vmatpush1.msra.mxu0 %v983
  %4413 = vmatprep.subr.mxu0 0.0
  %4414 = vmatpush1.msra.mxu0 %v984
  %4415 = vmatprep.subr.mxu0 0.0
  %4416 = vmatpush1.msra.mxu0 %v985
  %4417 = vmatprep.subr.mxu0 0.0
  %4418 = vmatpush1.msra.mxu0 %v986
  %4419 = vmatprep.subr.mxu0 0.0
  %4420 = vmatpush1.msra.mxu0 %v987
  %4421 = vmatprep.subr.mxu0 0.0
  %4422 = vmatpush1.msra.mxu0 %v988
  %4423 = vmatprep.subr.mxu0 0.0
  %4424 = vmatpush1.msra.mxu0 %v989
  %4425 = vmatprep.subr.mxu0 0.0
  %4426 = vmatpush1.msra.mxu0 %v990
  %4427 = vmatprep.subr.mxu0 0.0
  %4428 = vmatpush1.msra.mxu0 %v991
  %4429 = vmatprep.subr.mxu0 0.0
  %4430 = vmatpush1.msra.mxu0 %v992
  %4431 = vmatprep.subr.mxu0 0.0
  %4432 = vmatpush1.msra.mxu0 %v993
  %4433 = vmatprep.subr.mxu0 0.0
  %4434 = vmatpush1.msra.mxu0 %v994
  %4435 = vmatprep.subr.mxu0 0.0
  %4436 = vmatpush1.msra.mxu0 %v995
  %4437 = vmatprep.subr.mxu0 0.0
  %4438 = vmatpush1.msra.mxu0 %v996
  %4439 = vmatprep.subr.mxu0 0.0
  %4440 = vmatpush1.msra.mxu0 %v997
  %4441 = vmatprep.subr.mxu0 0.0
  %4442 = vmatpush1.msra.mxu0 %v998
  %4443 = vmatprep.subr.mxu0 0.0
  %4444 = vmatpush1.msra.mxu0 %v999
  %4445 = vmatprep.subr.mxu0 0.0
  %4446 = vmatpush1.msra.mxu0 %v1000
  %4447 = vmatprep.mubr.f32.mxu0 %v4380
  %4448 = vmatmul.mubr.f32.gmra.mrb[0].mxu0 %v4379
  %v4449 = vpop.f32.mrb[0].mxu0
  %v4450 = vadd.f32 %v1038, %v4449
  %v4451 = vpop.f32.mrb[0].mxu0
  %4452 = vdwg.mxu0
  %4453 = vmatprep.subr.mxu0 0.0
  %4454 = vmatpush1.msra.mxu0 %v1001
  %4455 = vmatprep.subr.mxu0 0.0
  %4456 = vmatpush1.msra.mxu0 %v1002
  %4457 = vmatprep.subr.mxu0 0.0
  %4458 = vmatpush1.msra.mxu0 %v1003
  %4459 = vmatprep.subr.mxu0 0.0
  %4460 = vmatpush1.msra.mxu0 %v1004
  %4461 = vmatprep.subr.mxu0 0.0
  %4462 = vmatpush1.msra.mxu0 %v1005
  %4463 = vmatprep.subr.mxu0 0.0
  %4464 = vmatpush1.msra.mxu0 %v1006
  %4465 = vmatprep.subr.mxu0 0.0
  %4466 = vmatpush1.msra.mxu0 %v1007
  %4467 = vmatprep.subr.mxu0 0.0
  %4468 = vmatpush1.msra.mxu0 %v1008
  %4469 = vmatprep.subr.mxu0 0.0
  %4470 = vmatpush1.msra.mxu0 %v1009
  %4471 = vmatprep.subr.mxu0 0.0
  %4472 = vmatpush1.msra.mxu0 %v1010
  %4473 = vmatprep.subr.mxu0 0.0
  %4474 = vmatpush1.msra.mxu0 %v1011
  %4475 = vmatprep.subr.mxu0 0.0
  %4476 = vmatpush1.msra.mxu0 %v1012
  %4477 = vmatprep.subr.mxu0 0.0
  %4478 = vmatpush1.msra.mxu0 %v1013
  %4479 = vmatprep.subr.mxu0 0.0
  %4480 = vmatpush1.msra.mxu0 %v1014
  %4481 = vmatprep.subr.mxu0 0.0
  %4482 = vmatpush1.msra.mxu0 %v1015
  %4483 = vmatprep.subr.mxu0 0.0
  %4484 = vmatpush1.msra.mxu0 %v1016
  %4485 = vmatprep.subr.mxu0 0.0
  %4486 = vmatpush1.msra.mxu0 %v1017
  %4487 = vmatprep.subr.mxu0 0.0
  %4488 = vmatpush1.msra.mxu0 %v1018
  %4489 = vmatprep.subr.mxu0 0.0
  %4490 = vmatpush1.msra.mxu0 %v1019
  %4491 = vmatprep.subr.mxu0 0.0
  %4492 = vmatpush1.msra.mxu0 %v1020
  %4493 = vmatprep.subr.mxu0 0.0
  %4494 = vmatpush1.msra.mxu0 %v1021
  %4495 = vmatprep.subr.mxu0 0.0
  %4496 = vmatpush1.msra.mxu0 %v1022
  %4497 = vmatprep.subr.mxu0 0.0
  %4498 = vmatpush1.msra.mxu0 %v1023
  %4499 = vmatprep.subr.mxu0 0.0
  %4500 = vmatpush1.msra.mxu0 %v1024
  %4501 = vmatprep.subr.mxu0 0.0
  %4502 = vmatpush1.msra.mxu0 %v1025
  %4503 = vmatprep.subr.mxu0 0.0
  %4504 = vmatpush1.msra.mxu0 %v1026
  %4505 = vmatprep.subr.mxu0 0.0
  %4506 = vmatpush1.msra.mxu0 %v1027
  %4507 = vmatprep.subr.mxu0 0.0
  %4508 = vmatpush1.msra.mxu0 %v1028
  %4509 = vmatprep.subr.mxu0 0.0
  %4510 = vmatpush1.msra.mxu0 %v1029
  %4511 = vmatprep.subr.mxu0 0.0
  %4512 = vmatpush1.msra.mxu0 %v1030
  %4513 = vmatprep.subr.mxu0 0.0
  %4514 = vmatpush1.msra.mxu0 %v1031
  %4515 = vmatprep.subr.mxu0 0.0
  %4516 = vmatpush1.msra.mxu0 %v1032
  %4517 = vmatprep.mubr.f32.mxu0 %v4382
  %4518 = vmatmul.mubr.f32.gmra.mrb[0].mxu0 %v4381
  %v4519 = vpop.f32.mrb[0].mxu0
  %v4520 = vadd.f32 %v4450, %v4519
  %v4521 = vpop.f32.mrb[0].mxu0
  %4522 = vdwg.mxu0
  %v4523 = vmul.f32 %v4350, 0.2
  %v4524 = vadd.f32 %v4523, %v4520
  %v4525 = vsel %vm4351, %v4520, %v4524
  %vm4526 = vcmp.gt.f32.partialorder %v4525, 0.5
  %v4527 = vsel %vm4526, 1, 0
  %v4528 = vcvt.s32.f32 %v4527
  %v4529 = vadd.f32 %v4354, %v4528
  %v4530 = vld [vmem:[#allocation2 + $0x280] sm:$0xff]
  %v4531 = vld [vmem:[#allocation2 + $0x288] sm:$0xff]
  %v4532 = vld [vmem:[#allocation2 + $0x290] sm:$0xff]
  %v4533 = vld [vmem:[#allocation2 + $0x298] sm:$0xff]
  %v4534 = vmul.f32 %v4367, 0.2
  %v4535 = vmul.f32 %v4368, 0.2
  %v4536 = vmul.f32 %v4369, 0.2
  %v4537 = vmul.f32 %v4370, 0.2
  %v4538 = vadd.f32 %v4534, %v4530
  %v4539 = vadd.f32 %v4535, %v4531
  %v4540 = vadd.f32 %v4536, %v4532
  %v4541 = vadd.f32 %v4537, %v4533
  %v4542 = vsel %vm4371, %v4530, %v4538
  %v4543 = vsel %vm4372, %v4531, %v4539
  %v4544 = vsel %vm4373, %v4532, %v4540
  %v4545 = vsel %vm4374, %v4533, %v4541
  %vm4546 = vcmp.gt.f32.partialorder %v4542, 0.5
  %vm4547 = vcmp.gt.f32.partialorder %v4543, 0.5
  %vm4548 = vcmp.gt.f32.partialorder %v4544, 0.5
  %vm4549 = vcmp.gt.f32.partialorder %v4545, 0.5
  %v4550 = vsel %vm4546, 1, 0
  %v4551 = vsel %vm4547, 1, 0
  %v4552 = vsel %vm4548, 1, 0
  %v4553 = vsel %vm4549, 1, 0
  %v4554 = vcvt.s32.f32 %v4550
  %v4555 = vcvt.s32.f32 %v4551
  %v4556 = vcvt.s32.f32 %v4552
  %v4557 = vcvt.s32.f32 %v4553
  %4558 = vmatprep.subr.mxu0 0.0
  %4559 = vmatpush1.msra.mxu0 %v969
  %4560 = vmatprep.subr.mxu0 0.0
  %4561 = vmatpush1.msra.mxu0 %v970
  %4562 = vmatprep.subr.mxu0 0.0
  %4563 = vmatpush1.msra.mxu0 %v971
  %4564 = vmatprep.subr.mxu0 0.0
  %4565 = vmatpush1.msra.mxu0 %v972
  %4566 = vmatprep.subr.mxu0 0.0
  %4567 = vmatpush1.msra.mxu0 %v973
  %4568 = vmatprep.subr.mxu0 0.0
  %4569 = vmatpush1.msra.mxu0 %v974
  %4570 = vmatprep.subr.mxu0 0.0
  %4571 = vmatpush1.msra.mxu0 %v975
  %4572 = vmatprep.subr.mxu0 0.0
  %4573 = vmatpush1.msra.mxu0 %v976
  %4574 = vmatprep.subr.mxu0 0.0
  %4575 = vmatpush1.msra.mxu0 %v977
  %4576 = vmatprep.subr.mxu0 0.0
  %4577 = vmatpush1.msra.mxu0 %v978
  %4578 = vmatprep.subr.mxu0 0.0
  %4579 = vmatpush1.msra.mxu0 %v979
  %4580 = vmatprep.subr.mxu0 0.0
  %4581 = vmatpush1.msra.mxu0 %v980
  %4582 = vmatprep.subr.mxu0 0.0
  %4583 = vmatpush1.msra.mxu0 %v981
  %4584 = vmatprep.subr.mxu0 0.0
  %4585 = vmatpush1.msra.mxu0 %v982
  %4586 = vmatprep.subr.mxu0 0.0
  %4587 = vmatpush1.msra.mxu0 %v983
  %4588 = vmatprep.subr.mxu0 0.0
  %4589 = vmatpush1.msra.mxu0 %v984
  %4590 = vmatprep.subr.mxu0 0.0
  %4591 = vmatpush1.msra.mxu0 %v985
  %4592 = vmatprep.subr.mxu0 0.0
  %4593 = vmatpush1.msra.mxu0 %v986
  %4594 = vmatprep.subr.mxu0 0.0
  %4595 = vmatpush1.msra.mxu0 %v987
  %4596 = vmatprep.subr.mxu0 0.0
  %4597 = vmatpush1.msra.mxu0 %v988
  %4598 = vmatprep.subr.mxu0 0.0
  %4599 = vmatpush1.msra.mxu0 %v989
  %4600 = vmatprep.subr.mxu0 0.0
  %4601 = vmatpush1.msra.mxu0 %v990
  %4602 = vmatprep.subr.mxu0 0.0
  %4603 = vmatpush1.msra.mxu0 %v991
  %4604 = vmatprep.subr.mxu0 0.0
  %4605 = vmatpush1.msra.mxu0 %v992
  %4606 = vmatprep.subr.mxu0 0.0
  %4607 = vmatpush1.msra.mxu0 %v993
  %4608 = vmatprep.subr.mxu0 0.0
  %4609 = vmatpush1.msra.mxu0 %v994
  %4610 = vmatprep.subr.mxu0 0.0
  %4611 = vmatpush1.msra.mxu0 %v995
  %4612 = vmatprep.subr.mxu0 0.0
  %4613 = vmatpush1.msra.mxu0 %v996
  %4614 = vmatprep.subr.mxu0 0.0
  %4615 = vmatpush1.msra.mxu0 %v997
  %4616 = vmatprep.subr.mxu0 0.0
  %4617 = vmatpush1.msra.mxu0 %v998
  %4618 = vmatprep.subr.mxu0 0.0
  %4619 = vmatpush1.msra.mxu0 %v999
  %4620 = vmatprep.subr.mxu0 0.0
  %4621 = vmatpush1.msra.mxu0 %v1000
  %4622 = vmatprep.mubr.f32.mxu0 %v4555
  %4623 = vmatmul.mubr.f32.gmra.mrb[0].mxu0 %v4554
  %v4624 = vpop.f32.mrb[0].mxu0
  %v4625 = vadd.f32 %v1038, %v4624
  %v4626 = vpop.f32.mrb[0].mxu0
  %4627 = vdwg.mxu0
  %4628 = vmatprep.subr.mxu0 0.0
  %4629 = vmatpush1.msra.mxu0 %v1001
  %4630 = vmatprep.subr.mxu0 0.0
  %4631 = vmatpush1.msra.mxu0 %v1002
  %4632 = vmatprep.subr.mxu0 0.0
  %4633 = vmatpush1.msra.mxu0 %v1003
  %4634 = vmatprep.subr.mxu0 0.0
  %4635 = vmatpush1.msra.mxu0 %v1004
  %4636 = vmatprep.subr.mxu0 0.0
  %4637 = vmatpush1.msra.mxu0 %v1005
  %4638 = vmatprep.subr.mxu0 0.0
  %4639 = vmatpush1.msra.mxu0 %v1006
  %4640 = vmatprep.subr.mxu0 0.0
  %4641 = vmatpush1.msra.mxu0 %v1007
  %4642 = vmatprep.subr.mxu0 0.0
  %4643 = vmatpush1.msra.mxu0 %v1008
  %4644 = vmatprep.subr.mxu0 0.0
  %4645 = vmatpush1.msra.mxu0 %v1009
  %4646 = vmatprep.subr.mxu0 0.0
  %4647 = vmatpush1.msra.mxu0 %v1010
  %4648 = vmatprep.subr.mxu0 0.0
  %4649 = vmatpush1.msra.mxu0 %v1011
  %4650 = vmatprep.subr.mxu0 0.0
  %4651 = vmatpush1.msra.mxu0 %v1012
  %4652 = vmatprep.subr.mxu0 0.0
  %4653 = vmatpush1.msra.mxu0 %v1013
  %4654 = vmatprep.subr.mxu0 0.0
  %4655 = vmatpush1.msra.mxu0 %v1014
  %4656 = vmatprep.subr.mxu0 0.0
  %4657 = vmatpush1.msra.mxu0 %v1015
  %4658 = vmatprep.subr.mxu0 0.0
  %4659 = vmatpush1.msra.mxu0 %v1016
  %4660 = vmatprep.subr.mxu0 0.0
  %4661 = vmatpush1.msra.mxu0 %v1017
  %4662 = vmatprep.subr.mxu0 0.0
  %4663 = vmatpush1.msra.mxu0 %v1018
  %4664 = vmatprep.subr.mxu0 0.0
  %4665 = vmatpush1.msra.mxu0 %v1019
  %4666 = vmatprep.subr.mxu0 0.0
  %4667 = vmatpush1.msra.mxu0 %v1020
  %4668 = vmatprep.subr.mxu0 0.0
  %4669 = vmatpush1.msra.mxu0 %v1021
  %4670 = vmatprep.subr.mxu0 0.0
  %4671 = vmatpush1.msra.mxu0 %v1022
  %4672 = vmatprep.subr.mxu0 0.0
  %4673 = vmatpush1.msra.mxu0 %v1023
  %4674 = vmatprep.subr.mxu0 0.0
  %4675 = vmatpush1.msra.mxu0 %v1024
  %4676 = vmatprep.subr.mxu0 0.0
  %4677 = vmatpush1.msra.mxu0 %v1025
  %4678 = vmatprep.subr.mxu0 0.0
  %4679 = vmatpush1.msra.mxu0 %v1026
  %4680 = vmatprep.subr.mxu0 0.0
  %4681 = vmatpush1.msra.mxu0 %v1027
  %4682 = vmatprep.subr.mxu0 0.0
  %4683 = vmatpush1.msra.mxu0 %v1028
  %4684 = vmatprep.subr.mxu0 0.0
  %4685 = vmatpush1.msra.mxu0 %v1029
  %4686 = vmatprep.subr.mxu0 0.0
  %4687 = vmatpush1.msra.mxu0 %v1030
  %4688 = vmatprep.subr.mxu0 0.0
  %4689 = vmatpush1.msra.mxu0 %v1031
  %4690 = vmatprep.subr.mxu0 0.0
  %4691 = vmatpush1.msra.mxu0 %v1032
  %4692 = vmatprep.mubr.f32.mxu0 %v4557
  %4693 = vmatmul.mubr.f32.gmra.mrb[0].mxu0 %v4556
  %v4694 = vpop.f32.mrb[0].mxu0
  %v4695 = vadd.f32 %v4625, %v4694
  %v4696 = vpop.f32.mrb[0].mxu0
  %4697 = vdwg.mxu0
  %v4698 = vmul.f32 %v4525, 0.2
  %v4699 = vadd.f32 %v4698, %v4695
  %v4700 = vsel %vm4526, %v4695, %v4699
  %vm4701 = vcmp.gt.f32.partialorder %v4700, 0.5
  %v4702 = vsel %vm4701, 1, 0
  %v4703 = vcvt.s32.f32 %v4702
  %v4704 = vadd.f32 %v4529, %v4703
  %v4705 = vld [vmem:[#allocation2 + $0x2a0] sm:$0xff]
  %v4706 = vld [vmem:[#allocation2 + $0x2a8] sm:$0xff]
  %v4707 = vld [vmem:[#allocation2 + $0x2b0] sm:$0xff]
  %v4708 = vld [vmem:[#allocation2 + $0x2b8] sm:$0xff]
  %v4709 = vmul.f32 %v4542, 0.2
  %v4710 = vmul.f32 %v4543, 0.2
  %v4711 = vmul.f32 %v4544, 0.2
  %v4712 = vmul.f32 %v4545, 0.2
  %v4713 = vadd.f32 %v4709, %v4705
  %v4714 = vadd.f32 %v4710, %v4706
  %v4715 = vadd.f32 %v4711, %v4707
  %v4716 = vadd.f32 %v4712, %v4708
  %v4717 = vsel %vm4546, %v4705, %v4713
  %v4718 = vsel %vm4547, %v4706, %v4714
  %v4719 = vsel %vm4548, %v4707, %v4715
  %v4720 = vsel %vm4549, %v4708, %v4716
  %vm4721 = vcmp.gt.f32.partialorder %v4717, 0.5
  %vm4722 = vcmp.gt.f32.partialorder %v4718, 0.5
  %vm4723 = vcmp.gt.f32.partialorder %v4719, 0.5
  %vm4724 = vcmp.gt.f32.partialorder %v4720, 0.5
  %v4725 = vsel %vm4721, 1, 0
  %v4726 = vsel %vm4722, 1, 0
  %v4727 = vsel %vm4723, 1, 0
  %v4728 = vsel %vm4724, 1, 0
  %v4729 = vcvt.s32.f32 %v4725
  %v4730 = vcvt.s32.f32 %v4726
  %v4731 = vcvt.s32.f32 %v4727
  %v4732 = vcvt.s32.f32 %v4728
  %4733 = vmatprep.subr.mxu0 0.0
  %4734 = vmatpush1.msra.mxu0 %v969
  %4735 = vmatprep.subr.mxu0 0.0
  %4736 = vmatpush1.msra.mxu0 %v970
  %4737 = vmatprep.subr.mxu0 0.0
  %4738 = vmatpush1.msra.mxu0 %v971
  %4739 = vmatprep.subr.mxu0 0.0
  %4740 = vmatpush1.msra.mxu0 %v972
  %4741 = vmatprep.subr.mxu0 0.0
  %4742 = vmatpush1.msra.mxu0 %v973
  %4743 = vmatprep.subr.mxu0 0.0
  %4744 = vmatpush1.msra.mxu0 %v974
  %4745 = vmatprep.subr.mxu0 0.0
  %4746 = vmatpush1.msra.mxu0 %v975
  %4747 = vmatprep.subr.mxu0 0.0
  %4748 = vmatpush1.msra.mxu0 %v976
  %4749 = vmatprep.subr.mxu0 0.0
  %4750 = vmatpush1.msra.mxu0 %v977
  %4751 = vmatprep.subr.mxu0 0.0
  %4752 = vmatpush1.msra.mxu0 %v978
  %4753 = vmatprep.subr.mxu0 0.0
  %4754 = vmatpush1.msra.mxu0 %v979
  %4755 = vmatprep.subr.mxu0 0.0
  %4756 = vmatpush1.msra.mxu0 %v980
  %4757 = vmatprep.subr.mxu0 0.0
  %4758 = vmatpush1.msra.mxu0 %v981
  %4759 = vmatprep.subr.mxu0 0.0
  %4760 = vmatpush1.msra.mxu0 %v982
  %4761 = vmatprep.subr.mxu0 0.0
  %4762 = vmatpush1.msra.mxu0 %v983
  %4763 = vmatprep.subr.mxu0 0.0
  %4764 = vmatpush1.msra.mxu0 %v984
  %4765 = vmatprep.subr.mxu0 0.0
  %4766 = vmatpush1.msra.mxu0 %v985
  %4767 = vmatprep.subr.mxu0 0.0
  %4768 = vmatpush1.msra.mxu0 %v986
  %4769 = vmatprep.subr.mxu0 0.0
  %4770 = vmatpush1.msra.mxu0 %v987
  %4771 = vmatprep.subr.mxu0 0.0
  %4772 = vmatpush1.msra.mxu0 %v988
  %4773 = vmatprep.subr.mxu0 0.0
  %4774 = vmatpush1.msra.mxu0 %v989
  %4775 = vmatprep.subr.mxu0 0.0
  %4776 = vmatpush1.msra.mxu0 %v990
  %4777 = vmatprep.subr.mxu0 0.0
  %4778 = vmatpush1.msra.mxu0 %v991
  %4779 = vmatprep.subr.mxu0 0.0
  %4780 = vmatpush1.msra.mxu0 %v992
  %4781 = vmatprep.subr.mxu0 0.0
  %4782 = vmatpush1.msra.mxu0 %v993
  %4783 = vmatprep.subr.mxu0 0.0
  %4784 = vmatpush1.msra.mxu0 %v994
  %4785 = vmatprep.subr.mxu0 0.0
  %4786 = vmatpush1.msra.mxu0 %v995
  %4787 = vmatprep.subr.mxu0 0.0
  %4788 = vmatpush1.msra.mxu0 %v996
  %4789 = vmatprep.subr.mxu0 0.0
  %4790 = vmatpush1.msra.mxu0 %v997
  %4791 = vmatprep.subr.mxu0 0.0
  %4792 = vmatpush1.msra.mxu0 %v998
  %4793 = vmatprep.subr.mxu0 0.0
  %4794 = vmatpush1.msra.mxu0 %v999
  %4795 = vmatprep.subr.mxu0 0.0
  %4796 = vmatpush1.msra.mxu0 %v1000
  %4797 = vmatprep.mubr.f32.mxu0 %v4730
  %4798 = vmatmul.mubr.f32.gmra.mrb[0].mxu0 %v4729
  %v4799 = vpop.f32.mrb[0].mxu0
  %v4800 = vadd.f32 %v1038, %v4799
  %v4801 = vpop.f32.mrb[0].mxu0
  %4802 = vdwg.mxu0
  %4803 = vmatprep.subr.mxu0 0.0
  %4804 = vmatpush1.msra.mxu0 %v1001
  %4805 = vmatprep.subr.mxu0 0.0
  %4806 = vmatpush1.msra.mxu0 %v1002
  %4807 = vmatprep.subr.mxu0 0.0
  %4808 = vmatpush1.msra.mxu0 %v1003
  %4809 = vmatprep.subr.mxu0 0.0
  %4810 = vmatpush1.msra.mxu0 %v1004
  %4811 = vmatprep.subr.mxu0 0.0
  %4812 = vmatpush1.msra.mxu0 %v1005
  %4813 = vmatprep.subr.mxu0 0.0
  %4814 = vmatpush1.msra.mxu0 %v1006
  %4815 = vmatprep.subr.mxu0 0.0
  %4816 = vmatpush1.msra.mxu0 %v1007
  %4817 = vmatprep.subr.mxu0 0.0
  %4818 = vmatpush1.msra.mxu0 %v1008
  %4819 = vmatprep.subr.mxu0 0.0
  %4820 = vmatpush1.msra.mxu0 %v1009
  %4821 = vmatprep.subr.mxu0 0.0
  %4822 = vmatpush1.msra.mxu0 %v1010
  %4823 = vmatprep.subr.mxu0 0.0
  %4824 = vmatpush1.msra.mxu0 %v1011
  %4825 = vmatprep.subr.mxu0 0.0
  %4826 = vmatpush1.msra.mxu0 %v1012
  %4827 = vmatprep.subr.mxu0 0.0
  %4828 = vmatpush1.msra.mxu0 %v1013
  %4829 = vmatprep.subr.mxu0 0.0
  %4830 = vmatpush1.msra.mxu0 %v1014
  %4831 = vmatprep.subr.mxu0 0.0
  %4832 = vmatpush1.msra.mxu0 %v1015
  %4833 = vmatprep.subr.mxu0 0.0
  %4834 = vmatpush1.msra.mxu0 %v1016
  %4835 = vmatprep.subr.mxu0 0.0
  %4836 = vmatpush1.msra.mxu0 %v1017
  %4837 = vmatprep.subr.mxu0 0.0
  %4838 = vmatpush1.msra.mxu0 %v1018
  %4839 = vmatprep.subr.mxu0 0.0
  %4840 = vmatpush1.msra.mxu0 %v1019
  %4841 = vmatprep.subr.mxu0 0.0
  %4842 = vmatpush1.msra.mxu0 %v1020
  %4843 = vmatprep.subr.mxu0 0.0
  %4844 = vmatpush1.msra.mxu0 %v1021
  %4845 = vmatprep.subr.mxu0 0.0
  %4846 = vmatpush1.msra.mxu0 %v1022
  %4847 = vmatprep.subr.mxu0 0.0
  %4848 = vmatpush1.msra.mxu0 %v1023
  %4849 = vmatprep.subr.mxu0 0.0
  %4850 = vmatpush1.msra.mxu0 %v1024
  %4851 = vmatprep.subr.mxu0 0.0
  %4852 = vmatpush1.msra.mxu0 %v1025
  %4853 = vmatprep.subr.mxu0 0.0
  %4854 = vmatpush1.msra.mxu0 %v1026
  %4855 = vmatprep.subr.mxu0 0.0
  %4856 = vmatpush1.msra.mxu0 %v1027
  %4857 = vmatprep.subr.mxu0 0.0
  %4858 = vmatpush1.msra.mxu0 %v1028
  %4859 = vmatprep.subr.mxu0 0.0
  %4860 = vmatpush1.msra.mxu0 %v1029
  %4861 = vmatprep.subr.mxu0 0.0
  %4862 = vmatpush1.msra.mxu0 %v1030
  %4863 = vmatprep.subr.mxu0 0.0
  %4864 = vmatpush1.msra.mxu0 %v1031
  %4865 = vmatprep.subr.mxu0 0.0
  %4866 = vmatpush1.msra.mxu0 %v1032
  %4867 = vmatprep.mubr.f32.mxu0 %v4732
  %4868 = vmatmul.mubr.f32.gmra.mrb[0].mxu0 %v4731
  %v4869 = vpop.f32.mrb[0].mxu0
  %v4870 = vadd.f32 %v4800, %v4869
  %v4871 = vpop.f32.mrb[0].mxu0
  %4872 = vdwg.mxu0
  %v4873 = vmul.f32 %v4700, 0.2
  %v4874 = vadd.f32 %v4873, %v4870
  %v4875 = vsel %vm4701, %v4870, %v4874
  %vm4876 = vcmp.gt.f32.partialorder %v4875, 0.5
  %v4877 = vsel %vm4876, 1, 0
  %v4878 = vcvt.s32.f32 %v4877
  %v4879 = vadd.f32 %v4704, %v4878
  %v4880 = vld [vmem:[#allocation2 + $0x2c0] sm:$0xff]
  %v4881 = vld [vmem:[#allocation2 + $0x2c8] sm:$0xff]
  %v4882 = vld [vmem:[#allocation2 + $0x2d0] sm:$0xff]
  %v4883 = vld [vmem:[#allocation2 + $0x2d8] sm:$0xff]
  %v4884 = vmul.f32 %v4717, 0.2
  %v4885 = vmul.f32 %v4718, 0.2
  %v4886 = vmul.f32 %v4719, 0.2
  %v4887 = vmul.f32 %v4720, 0.2
  %v4888 = vadd.f32 %v4884, %v4880
  %v4889 = vadd.f32 %v4885, %v4881
  %v4890 = vadd.f32 %v4886, %v4882
  %v4891 = vadd.f32 %v4887, %v4883
  %v4892 = vsel %vm4721, %v4880, %v4888
  %v4893 = vsel %vm4722, %v4881, %v4889
  %v4894 = vsel %vm4723, %v4882, %v4890
  %v4895 = vsel %vm4724, %v4883, %v4891
  %vm4896 = vcmp.gt.f32.partialorder %v4892, 0.5
  %vm4897 = vcmp.gt.f32.partialorder %v4893, 0.5
  %vm4898 = vcmp.gt.f32.partialorder %v4894, 0.5
  %vm4899 = vcmp.gt.f32.partialorder %v4895, 0.5
  %v4900 = vsel %vm4896, 1, 0
  %v4901 = vsel %vm4897, 1, 0
  %v4902 = vsel %vm4898, 1, 0
  %v4903 = vsel %vm4899, 1, 0
  %v4904 = vcvt.s32.f32 %v4900
  %v4905 = vcvt.s32.f32 %v4901
  %v4906 = vcvt.s32.f32 %v4902
  %v4907 = vcvt.s32.f32 %v4903
  %4908 = vmatprep.subr.mxu0 0.0
  %4909 = vmatpush1.msra.mxu0 %v969
  %4910 = vmatprep.subr.mxu0 0.0
  %4911 = vmatpush1.msra.mxu0 %v970
  %4912 = vmatprep.subr.mxu0 0.0
  %4913 = vmatpush1.msra.mxu0 %v971
  %4914 = vmatprep.subr.mxu0 0.0
  %4915 = vmatpush1.msra.mxu0 %v972
  %4916 = vmatprep.subr.mxu0 0.0
  %4917 = vmatpush1.msra.mxu0 %v973
  %4918 = vmatprep.subr.mxu0 0.0
  %4919 = vmatpush1.msra.mxu0 %v974
  %4920 = vmatprep.subr.mxu0 0.0
  %4921 = vmatpush1.msra.mxu0 %v975
  %4922 = vmatprep.subr.mxu0 0.0
  %4923 = vmatpush1.msra.mxu0 %v976
  %4924 = vmatprep.subr.mxu0 0.0
  %4925 = vmatpush1.msra.mxu0 %v977
  %4926 = vmatprep.subr.mxu0 0.0
  %4927 = vmatpush1.msra.mxu0 %v978
  %4928 = vmatprep.subr.mxu0 0.0
  %4929 = vmatpush1.msra.mxu0 %v979
  %4930 = vmatprep.subr.mxu0 0.0
  %4931 = vmatpush1.msra.mxu0 %v980
  %4932 = vmatprep.subr.mxu0 0.0
  %4933 = vmatpush1.msra.mxu0 %v981
  %4934 = vmatprep.subr.mxu0 0.0
  %4935 = vmatpush1.msra.mxu0 %v982
  %4936 = vmatprep.subr.mxu0 0.0
  %4937 = vmatpush1.msra.mxu0 %v983
  %4938 = vmatprep.subr.mxu0 0.0
  %4939 = vmatpush1.msra.mxu0 %v984
  %4940 = vmatprep.subr.mxu0 0.0
  %4941 = vmatpush1.msra.mxu0 %v985
  %4942 = vmatprep.subr.mxu0 0.0
  %4943 = vmatpush1.msra.mxu0 %v986
  %4944 = vmatprep.subr.mxu0 0.0
  %4945 = vmatpush1.msra.mxu0 %v987
  %4946 = vmatprep.subr.mxu0 0.0
  %4947 = vmatpush1.msra.mxu0 %v988
  %4948 = vmatprep.subr.mxu0 0.0
  %4949 = vmatpush1.msra.mxu0 %v989
  %4950 = vmatprep.subr.mxu0 0.0
  %4951 = vmatpush1.msra.mxu0 %v990
  %4952 = vmatprep.subr.mxu0 0.0
  %4953 = vmatpush1.msra.mxu0 %v991
  %4954 = vmatprep.subr.mxu0 0.0
  %4955 = vmatpush1.msra.mxu0 %v992
  %4956 = vmatprep.subr.mxu0 0.0
  %4957 = vmatpush1.msra.mxu0 %v993
  %4958 = vmatprep.subr.mxu0 0.0
  %4959 = vmatpush1.msra.mxu0 %v994
  %4960 = vmatprep.subr.mxu0 0.0
  %4961 = vmatpush1.msra.mxu0 %v995
  %4962 = vmatprep.subr.mxu0 0.0
  %4963 = vmatpush1.msra.mxu0 %v996
  %4964 = vmatprep.subr.mxu0 0.0
  %4965 = vmatpush1.msra.mxu0 %v997
  %4966 = vmatprep.subr.mxu0 0.0
  %4967 = vmatpush1.msra.mxu0 %v998
  %4968 = vmatprep.subr.mxu0 0.0
  %4969 = vmatpush1.msra.mxu0 %v999
  %4970 = vmatprep.subr.mxu0 0.0
  %4971 = vmatpush1.msra.mxu0 %v1000
  %4972 = vmatprep.mubr.f32.mxu0 %v4905
  %4973 = vmatmul.mubr.f32.gmra.mrb[0].mxu0 %v4904
  %v4974 = vpop.f32.mrb[0].mxu0
  %v4975 = vadd.f32 %v1038, %v4974
  %v4976 = vpop.f32.mrb[0].mxu0
  %4977 = vdwg.mxu0
  %4978 = vmatprep.subr.mxu0 0.0
  %4979 = vmatpush1.msra.mxu0 %v1001
  %4980 = vmatprep.subr.mxu0 0.0
  %4981 = vmatpush1.msra.mxu0 %v1002
  %4982 = vmatprep.subr.mxu0 0.0
  %4983 = vmatpush1.msra.mxu0 %v1003
  %4984 = vmatprep.subr.mxu0 0.0
  %4985 = vmatpush1.msra.mxu0 %v1004
  %4986 = vmatprep.subr.mxu0 0.0
  %4987 = vmatpush1.msra.mxu0 %v1005
  %4988 = vmatprep.subr.mxu0 0.0
  %4989 = vmatpush1.msra.mxu0 %v1006
  %4990 = vmatprep.subr.mxu0 0.0
  %4991 = vmatpush1.msra.mxu0 %v1007
  %4992 = vmatprep.subr.mxu0 0.0
  %4993 = vmatpush1.msra.mxu0 %v1008
  %4994 = vmatprep.subr.mxu0 0.0
  %4995 = vmatpush1.msra.mxu0 %v1009
  %4996 = vmatprep.subr.mxu0 0.0
  %4997 = vmatpush1.msra.mxu0 %v1010
  %4998 = vmatprep.subr.mxu0 0.0
  %4999 = vmatpush1.msra.mxu0 %v1011
  %5000 = vmatprep.subr.mxu0 0.0
  %5001 = vmatpush1.msra.mxu0 %v1012
  %5002 = vmatprep.subr.mxu0 0.0
  %5003 = vmatpush1.msra.mxu0 %v1013
  %5004 = vmatprep.subr.mxu0 0.0
  %5005 = vmatpush1.msra.mxu0 %v1014
  %5006 = vmatprep.subr.mxu0 0.0
  %5007 = vmatpush1.msra.mxu0 %v1015
  %5008 = vmatprep.subr.mxu0 0.0
  %5009 = vmatpush1.msra.mxu0 %v1016
  %5010 = vmatprep.subr.mxu0 0.0
  %5011 = vmatpush1.msra.mxu0 %v1017
  %5012 = vmatprep.subr.mxu0 0.0
  %5013 = vmatpush1.msra.mxu0 %v1018
  %5014 = vmatprep.subr.mxu0 0.0
  %5015 = vmatpush1.msra.mxu0 %v1019
  %5016 = vmatprep.subr.mxu0 0.0
  %5017 = vmatpush1.msra.mxu0 %v1020
  %5018 = vmatprep.subr.mxu0 0.0
  %5019 = vmatpush1.msra.mxu0 %v1021
  %5020 = vmatprep.subr.mxu0 0.0
  %5021 = vmatpush1.msra.mxu0 %v1022
  %5022 = vmatprep.subr.mxu0 0.0
  %5023 = vmatpush1.msra.mxu0 %v1023
  %5024 = vmatprep.subr.mxu0 0.0
  %5025 = vmatpush1.msra.mxu0 %v1024
  %5026 = vmatprep.subr.mxu0 0.0
  %5027 = vmatpush1.msra.mxu0 %v1025
  %5028 = vmatprep.subr.mxu0 0.0
  %5029 = vmatpush1.msra.mxu0 %v1026
  %5030 = vmatprep.subr.mxu0 0.0
  %5031 = vmatpush1.msra.mxu0 %v1027
  %5032 = vmatprep.subr.mxu0 0.0
  %5033 = vmatpush1.msra.mxu0 %v1028
  %5034 = vmatprep.subr.mxu0 0.0
  %5035 = vmatpush1.msra.mxu0 %v1029
  %5036 = vmatprep.subr.mxu0 0.0
  %5037 = vmatpush1.msra.mxu0 %v1030
  %5038 = vmatprep.subr.mxu0 0.0
  %5039 = vmatpush1.msra.mxu0 %v1031
  %5040 = vmatprep.subr.mxu0 0.0
  %5041 = vmatpush1.msra.mxu0 %v1032
  %5042 = vmatprep.mubr.f32.mxu0 %v4907
  %5043 = vmatmul.mubr.f32.gmra.mrb[0].mxu0 %v4906
  %v5044 = vpop.f32.mrb[0].mxu0
  %v5045 = vadd.f32 %v4975, %v5044
  %v5046 = vpop.f32.mrb[0].mxu0
  %5047 = vdwg.mxu0
  %v5048 = vmul.f32 %v4875, 0.2
  %v5049 = vadd.f32 %v5048, %v5045
  %v5050 = vsel %vm4876, %v5045, %v5049
  %vm5051 = vcmp.gt.f32.partialorder %v5050, 0.5
  %v5052 = vsel %vm5051, 1, 0
  %v5053 = vcvt.s32.f32 %v5052
  %v5054 = vadd.f32 %v4879, %v5053
  %v5055 = vld [vmem:[#allocation2 + $0x2e0] sm:$0xff]
  %v5056 = vld [vmem:[#allocation2 + $0x2e8] sm:$0xff]
  %v5057 = vld [vmem:[#allocation2 + $0x2f0] sm:$0xff]
  %v5058 = vld [vmem:[#allocation2 + $0x2f8] sm:$0xff]
  %v5059 = vmul.f32 %v4892, 0.2
  %v5060 = vmul.f32 %v4893, 0.2
  %v5061 = vmul.f32 %v4894, 0.2
  %v5062 = vmul.f32 %v4895, 0.2
  %v5063 = vadd.f32 %v5059, %v5055
  %v5064 = vadd.f32 %v5060, %v5056
  %v5065 = vadd.f32 %v5061, %v5057
  %v5066 = vadd.f32 %v5062, %v5058
  %v5067 = vsel %vm4896, %v5055, %v5063
  %v5068 = vsel %vm4897, %v5056, %v5064
  %v5069 = vsel %vm4898, %v5057, %v5065
  %v5070 = vsel %vm4899, %v5058, %v5066
  %vm5071 = vcmp.gt.f32.partialorder %v5067, 0.5
  %vm5072 = vcmp.gt.f32.partialorder %v5068, 0.5
  %vm5073 = vcmp.gt.f32.partialorder %v5069, 0.5
  %vm5074 = vcmp.gt.f32.partialorder %v5070, 0.5
  %v5075 = vsel %vm5071, 1, 0
  %v5076 = vsel %vm5072, 1, 0
  %v5077 = vsel %vm5073, 1, 0
  %v5078 = vsel %vm5074, 1, 0
  %v5079 = vcvt.s32.f32 %v5075
  %v5080 = vcvt.s32.f32 %v5076
  %v5081 = vcvt.s32.f32 %v5077
  %v5082 = vcvt.s32.f32 %v5078
  %5083 = vmatprep.subr.mxu0 0.0
  %5084 = vmatpush1.msra.mxu0 %v969
  %5085 = vmatprep.subr.mxu0 0.0
  %5086 = vmatpush1.msra.mxu0 %v970
  %5087 = vmatprep.subr.mxu0 0.0
  %5088 = vmatpush1.msra.mxu0 %v971
  %5089 = vmatprep.subr.mxu0 0.0
  %5090 = vmatpush1.msra.mxu0 %v972
  %5091 = vmatprep.subr.mxu0 0.0
  %5092 = vmatpush1.msra.mxu0 %v973
  %5093 = vmatprep.subr.mxu0 0.0
  %5094 = vmatpush1.msra.mxu0 %v974
  %5095 = vmatprep.subr.mxu0 0.0
  %5096 = vmatpush1.msra.mxu0 %v975
  %5097 = vmatprep.subr.mxu0 0.0
  %5098 = vmatpush1.msra.mxu0 %v976
  %5099 = vmatprep.subr.mxu0 0.0
  %5100 = vmatpush1.msra.mxu0 %v977
  %5101 = vmatprep.subr.mxu0 0.0
  %5102 = vmatpush1.msra.mxu0 %v978
  %5103 = vmatprep.subr.mxu0 0.0
  %5104 = vmatpush1.msra.mxu0 %v979
  %5105 = vmatprep.subr.mxu0 0.0
  %5106 = vmatpush1.msra.mxu0 %v980
  %5107 = vmatprep.subr.mxu0 0.0
  %5108 = vmatpush1.msra.mxu0 %v981
  %5109 = vmatprep.subr.mxu0 0.0
  %5110 = vmatpush1.msra.mxu0 %v982
  %5111 = vmatprep.subr.mxu0 0.0
  %5112 = vmatpush1.msra.mxu0 %v983
  %5113 = vmatprep.subr.mxu0 0.0
  %5114 = vmatpush1.msra.mxu0 %v984
  %5115 = vmatprep.subr.mxu0 0.0
  %5116 = vmatpush1.msra.mxu0 %v985
  %5117 = vmatprep.subr.mxu0 0.0
  %5118 = vmatpush1.msra.mxu0 %v986
  %5119 = vmatprep.subr.mxu0 0.0
  %5120 = vmatpush1.msra.mxu0 %v987
  %5121 = vmatprep.subr.mxu0 0.0
  %5122 = vmatpush1.msra.mxu0 %v988
  %5123 = vmatprep.subr.mxu0 0.0
  %5124 = vmatpush1.msra.mxu0 %v989
  %5125 = vmatprep.subr.mxu0 0.0
  %5126 = vmatpush1.msra.mxu0 %v990
  %5127 = vmatprep.subr.mxu0 0.0
  %5128 = vmatpush1.msra.mxu0 %v991
  %5129 = vmatprep.subr.mxu0 0.0
  %5130 = vmatpush1.msra.mxu0 %v992
  %5131 = vmatprep.subr.mxu0 0.0
  %5132 = vmatpush1.msra.mxu0 %v993
  %5133 = vmatprep.subr.mxu0 0.0
  %5134 = vmatpush1.msra.mxu0 %v994
  %5135 = vmatprep.subr.mxu0 0.0
  %5136 = vmatpush1.msra.mxu0 %v995
  %5137 = vmatprep.subr.mxu0 0.0
  %5138 = vmatpush1.msra.mxu0 %v996
  %5139 = vmatprep.subr.mxu0 0.0
  %5140 = vmatpush1.msra.mxu0 %v997
  %5141 = vmatprep.subr.mxu0 0.0
  %5142 = vmatpush1.msra.mxu0 %v998
  %5143 = vmatprep.subr.mxu0 0.0
  %5144 = vmatpush1.msra.mxu0 %v999
  %5145 = vmatprep.subr.mxu0 0.0
  %5146 = vmatpush1.msra.mxu0 %v1000
  %5147 = vmatprep.mubr.f32.mxu0 %v5080
  %5148 = vmatmul.mubr.f32.gmra.mrb[0].mxu0 %v5079
  %v5149 = vpop.f32.mrb[0].mxu0
  %v5150 = vadd.f32 %v1038, %v5149
  %v5151 = vpop.f32.mrb[0].mxu0
  %5152 = vdwg.mxu0
  %5153 = vmatprep.subr.mxu0 0.0
  %5154 = vmatpush1.msra.mxu0 %v1001
  %5155 = vmatprep.subr.mxu0 0.0
  %5156 = vmatpush1.msra.mxu0 %v1002
  %5157 = vmatprep.subr.mxu0 0.0
  %5158 = vmatpush1.msra.mxu0 %v1003
  %5159 = vmatprep.subr.mxu0 0.0
  %5160 = vmatpush1.msra.mxu0 %v1004
  %5161 = vmatprep.subr.mxu0 0.0
  %5162 = vmatpush1.msra.mxu0 %v1005
  %5163 = vmatprep.subr.mxu0 0.0
  %5164 = vmatpush1.msra.mxu0 %v1006
  %5165 = vmatprep.subr.mxu0 0.0
  %5166 = vmatpush1.msra.mxu0 %v1007
  %5167 = vmatprep.subr.mxu0 0.0
  %5168 = vmatpush1.msra.mxu0 %v1008
  %5169 = vmatprep.subr.mxu0 0.0
  %5170 = vmatpush1.msra.mxu0 %v1009
  %5171 = vmatprep.subr.mxu0 0.0
  %5172 = vmatpush1.msra.mxu0 %v1010
  %5173 = vmatprep.subr.mxu0 0.0
  %5174 = vmatpush1.msra.mxu0 %v1011
  %5175 = vmatprep.subr.mxu0 0.0
  %5176 = vmatpush1.msra.mxu0 %v1012
  %5177 = vmatprep.subr.mxu0 0.0
  %5178 = vmatpush1.msra.mxu0 %v1013
  %5179 = vmatprep.subr.mxu0 0.0
  %5180 = vmatpush1.msra.mxu0 %v1014
  %5181 = vmatprep.subr.mxu0 0.0
  %5182 = vmatpush1.msra.mxu0 %v1015
  %5183 = vmatprep.subr.mxu0 0.0
  %5184 = vmatpush1.msra.mxu0 %v1016
  %5185 = vmatprep.subr.mxu0 0.0
  %5186 = vmatpush1.msra.mxu0 %v1017
  %5187 = vmatprep.subr.mxu0 0.0
  %5188 = vmatpush1.msra.mxu0 %v1018
  %5189 = vmatprep.subr.mxu0 0.0
  %5190 = vmatpush1.msra.mxu0 %v1019
  %5191 = vmatprep.subr.mxu0 0.0
  %5192 = vmatpush1.msra.mxu0 %v1020
  %5193 = vmatprep.subr.mxu0 0.0
  %5194 = vmatpush1.msra.mxu0 %v1021
  %5195 = vmatprep.subr.mxu0 0.0
  %5196 = vmatpush1.msra.mxu0 %v1022
  %5197 = vmatprep.subr.mxu0 0.0
  %5198 = vmatpush1.msra.mxu0 %v1023
  %5199 = vmatprep.subr.mxu0 0.0
  %5200 = vmatpush1.msra.mxu0 %v1024
  %5201 = vmatprep.subr.mxu0 0.0
  %5202 = vmatpush1.msra.mxu0 %v1025
  %5203 = vmatprep.subr.mxu0 0.0
  %5204 = vmatpush1.msra.mxu0 %v1026
  %5205 = vmatprep.subr.mxu0 0.0
  %5206 = vmatpush1.msra.mxu0 %v1027
  %5207 = vmatprep.subr.mxu0 0.0
  %5208 = vmatpush1.msra.mxu0 %v1028
  %5209 = vmatprep.subr.mxu0 0.0
  %5210 = vmatpush1.msra.mxu0 %v1029
  %5211 = vmatprep.subr.mxu0 0.0
  %5212 = vmatpush1.msra.mxu0 %v1030
  %5213 = vmatprep.subr.mxu0 0.0
  %5214 = vmatpush1.msra.mxu0 %v1031
  %5215 = vmatprep.subr.mxu0 0.0
  %5216 = vmatpush1.msra.mxu0 %v1032
  %5217 = vmatprep.mubr.f32.mxu0 %v5082
  %5218 = vmatmul.mubr.f32.gmra.mrb[0].mxu0 %v5081
  %v5219 = vpop.f32.mrb[0].mxu0
  %v5220 = vadd.f32 %v5150, %v5219
  %v5221 = vpop.f32.mrb[0].mxu0
  %5222 = vdwg.mxu0
  %v5223 = vmul.f32 %v5050, 0.2
  %v5224 = vadd.f32 %v5223, %v5220
  %v5225 = vsel %vm5051, %v5220, %v5224
  %vm5226 = vcmp.gt.f32.partialorder %v5225, 0.5
  %v5227 = vsel %vm5226, 1, 0
  %v5228 = vcvt.s32.f32 %v5227
  %v5229 = vadd.f32 %v5054, %v5228
  %v5230 = vld [vmem:[#allocation2 + $0x300] sm:$0xff]
  %v5231 = vld [vmem:[#allocation2 + $0x308] sm:$0xff]
  %v5232 = vld [vmem:[#allocation2 + $0x310] sm:$0xff]
  %v5233 = vld [vmem:[#allocation2 + $0x318] sm:$0xff]
  %v5234 = vmul.f32 %v5067, 0.2
  %v5235 = vmul.f32 %v5068, 0.2
  %v5236 = vmul.f32 %v5069, 0.2
  %v5237 = vmul.f32 %v5070, 0.2
  %v5238 = vadd.f32 %v5234, %v5230
  %v5239 = vadd.f32 %v5235, %v5231
  %v5240 = vadd.f32 %v5236, %v5232
  %v5241 = vadd.f32 %v5237, %v5233
  %v5242 = vsel %vm5071, %v5230, %v5238
  %v5243 = vsel %vm5072, %v5231, %v5239
  %v5244 = vsel %vm5073, %v5232, %v5240
  %v5245 = vsel %vm5074, %v5233, %v5241
  %vm5246 = vcmp.gt.f32.partialorder %v5242, 0.5
  %vm5247 = vcmp.gt.f32.partialorder %v5243, 0.5
  %vm5248 = vcmp.gt.f32.partialorder %v5244, 0.5
  %vm5249 = vcmp.gt.f32.partialorder %v5245, 0.5
  %v5250 = vsel %vm5246, 1, 0
  %v5251 = vsel %vm5247, 1, 0
  %v5252 = vsel %vm5248, 1, 0
  %v5253 = vsel %vm5249, 1, 0
  %v5254 = vcvt.s32.f32 %v5250
  %v5255 = vcvt.s32.f32 %v5251
  %v5256 = vcvt.s32.f32 %v5252
  %v5257 = vcvt.s32.f32 %v5253
  %5258 = vmatprep.subr.mxu0 0.0
  %5259 = vmatpush1.msra.mxu0 %v969
  %5260 = vmatprep.subr.mxu0 0.0
  %5261 = vmatpush1.msra.mxu0 %v970
  %5262 = vmatprep.subr.mxu0 0.0
  %5263 = vmatpush1.msra.mxu0 %v971
  %5264 = vmatprep.subr.mxu0 0.0
  %5265 = vmatpush1.msra.mxu0 %v972
  %5266 = vmatprep.subr.mxu0 0.0
  %5267 = vmatpush1.msra.mxu0 %v973
  %5268 = vmatprep.subr.mxu0 0.0
  %5269 = vmatpush1.msra.mxu0 %v974
  %5270 = vmatprep.subr.mxu0 0.0
  %5271 = vmatpush1.msra.mxu0 %v975
  %5272 = vmatprep.subr.mxu0 0.0
  %5273 = vmatpush1.msra.mxu0 %v976
  %5274 = vmatprep.subr.mxu0 0.0
  %5275 = vmatpush1.msra.mxu0 %v977
  %5276 = vmatprep.subr.mxu0 0.0
  %5277 = vmatpush1.msra.mxu0 %v978
  %5278 = vmatprep.subr.mxu0 0.0
  %5279 = vmatpush1.msra.mxu0 %v979
  %5280 = vmatprep.subr.mxu0 0.0
  %5281 = vmatpush1.msra.mxu0 %v980
  %5282 = vmatprep.subr.mxu0 0.0
  %5283 = vmatpush1.msra.mxu0 %v981
  %5284 = vmatprep.subr.mxu0 0.0
  %5285 = vmatpush1.msra.mxu0 %v982
  %5286 = vmatprep.subr.mxu0 0.0
  %5287 = vmatpush1.msra.mxu0 %v983
  %5288 = vmatprep.subr.mxu0 0.0
  %5289 = vmatpush1.msra.mxu0 %v984
  %5290 = vmatprep.subr.mxu0 0.0
  %5291 = vmatpush1.msra.mxu0 %v985
  %5292 = vmatprep.subr.mxu0 0.0
  %5293 = vmatpush1.msra.mxu0 %v986
  %5294 = vmatprep.subr.mxu0 0.0
  %5295 = vmatpush1.msra.mxu0 %v987
  %5296 = vmatprep.subr.mxu0 0.0
  %5297 = vmatpush1.msra.mxu0 %v988
  %5298 = vmatprep.subr.mxu0 0.0
  %5299 = vmatpush1.msra.mxu0 %v989
  %5300 = vmatprep.subr.mxu0 0.0
  %5301 = vmatpush1.msra.mxu0 %v990
  %5302 = vmatprep.subr.mxu0 0.0
  %5303 = vmatpush1.msra.mxu0 %v991
  %5304 = vmatprep.subr.mxu0 0.0
  %5305 = vmatpush1.msra.mxu0 %v992
  %5306 = vmatprep.subr.mxu0 0.0
  %5307 = vmatpush1.msra.mxu0 %v993
  %5308 = vmatprep.subr.mxu0 0.0
  %5309 = vmatpush1.msra.mxu0 %v994
  %5310 = vmatprep.subr.mxu0 0.0
  %5311 = vmatpush1.msra.mxu0 %v995
  %5312 = vmatprep.subr.mxu0 0.0
  %5313 = vmatpush1.msra.mxu0 %v996
  %5314 = vmatprep.subr.mxu0 0.0
  %5315 = vmatpush1.msra.mxu0 %v997
  %5316 = vmatprep.subr.mxu0 0.0
  %5317 = vmatpush1.msra.mxu0 %v998
  %5318 = vmatprep.subr.mxu0 0.0
  %5319 = vmatpush1.msra.mxu0 %v999
  %5320 = vmatprep.subr.mxu0 0.0
  %5321 = vmatpush1.msra.mxu0 %v1000
  %5322 = vmatprep.mubr.f32.mxu0 %v5255
  %5323 = vmatmul.mubr.f32.gmra.mrb[0].mxu0 %v5254
  %v5324 = vpop.f32.mrb[0].mxu0
  %v5325 = vadd.f32 %v1038, %v5324
  %v5326 = vpop.f32.mrb[0].mxu0
  %5327 = vdwg.mxu0
  %5328 = vmatprep.subr.mxu0 0.0
  %5329 = vmatpush1.msra.mxu0 %v1001
  %5330 = vmatprep.subr.mxu0 0.0
  %5331 = vmatpush1.msra.mxu0 %v1002
  %5332 = vmatprep.subr.mxu0 0.0
  %5333 = vmatpush1.msra.mxu0 %v1003
  %5334 = vmatprep.subr.mxu0 0.0
  %5335 = vmatpush1.msra.mxu0 %v1004
  %5336 = vmatprep.subr.mxu0 0.0
  %5337 = vmatpush1.msra.mxu0 %v1005
  %5338 = vmatprep.subr.mxu0 0.0
  %5339 = vmatpush1.msra.mxu0 %v1006
  %5340 = vmatprep.subr.mxu0 0.0
  %5341 = vmatpush1.msra.mxu0 %v1007
  %5342 = vmatprep.subr.mxu0 0.0
  %5343 = vmatpush1.msra.mxu0 %v1008
  %5344 = vmatprep.subr.mxu0 0.0
  %5345 = vmatpush1.msra.mxu0 %v1009
  %5346 = vmatprep.subr.mxu0 0.0
  %5347 = vmatpush1.msra.mxu0 %v1010
  %5348 = vmatprep.subr.mxu0 0.0
  %5349 = vmatpush1.msra.mxu0 %v1011
  %5350 = vmatprep.subr.mxu0 0.0
  %5351 = vmatpush1.msra.mxu0 %v1012
  %5352 = vmatprep.subr.mxu0 0.0
  %5353 = vmatpush1.msra.mxu0 %v1013
  %5354 = vmatprep.subr.mxu0 0.0
  %5355 = vmatpush1.msra.mxu0 %v1014
  %5356 = vmatprep.subr.mxu0 0.0
  %5357 = vmatpush1.msra.mxu0 %v1015
  %5358 = vmatprep.subr.mxu0 0.0
  %5359 = vmatpush1.msra.mxu0 %v1016
  %5360 = vmatprep.subr.mxu0 0.0
  %5361 = vmatpush1.msra.mxu0 %v1017
  %5362 = vmatprep.subr.mxu0 0.0
  %5363 = vmatpush1.msra.mxu0 %v1018
  %5364 = vmatprep.subr.mxu0 0.0
  %5365 = vmatpush1.msra.mxu0 %v1019
  %5366 = vmatprep.subr.mxu0 0.0
  %5367 = vmatpush1.msra.mxu0 %v1020
  %5368 = vmatprep.subr.mxu0 0.0
  %5369 = vmatpush1.msra.mxu0 %v1021
  %5370 = vmatprep.subr.mxu0 0.0
  %5371 = vmatpush1.msra.mxu0 %v1022
  %5372 = vmatprep.subr.mxu0 0.0
  %5373 = vmatpush1.msra.mxu0 %v1023
  %5374 = vmatprep.subr.mxu0 0.0
  %5375 = vmatpush1.msra.mxu0 %v1024
  %5376 = vmatprep.subr.mxu0 0.0
  %5377 = vmatpush1.msra.mxu0 %v1025
  %5378 = vmatprep.subr.mxu0 0.0
  %5379 = vmatpush1.msra.mxu0 %v1026
  %5380 = vmatprep.subr.mxu0 0.0
  %5381 = vmatpush1.msra.mxu0 %v1027
  %5382 = vmatprep.subr.mxu0 0.0
  %5383 = vmatpush1.msra.mxu0 %v1028
  %5384 = vmatprep.subr.mxu0 0.0
  %5385 = vmatpush1.msra.mxu0 %v1029
  %5386 = vmatprep.subr.mxu0 0.0
  %5387 = vmatpush1.msra.mxu0 %v1030
  %5388 = vmatprep.subr.mxu0 0.0
  %5389 = vmatpush1.msra.mxu0 %v1031
  %5390 = vmatprep.subr.mxu0 0.0
  %5391 = vmatpush1.msra.mxu0 %v1032
  %5392 = vmatprep.mubr.f32.mxu0 %v5257
  %5393 = vmatmul.mubr.f32.gmra.mrb[0].mxu0 %v5256
  %v5394 = vpop.f32.mrb[0].mxu0
  %v5395 = vadd.f32 %v5325, %v5394
  %v5396 = vpop.f32.mrb[0].mxu0
  %5397 = vdwg.mxu0
  %v5398 = vmul.f32 %v5225, 0.2
  %v5399 = vadd.f32 %v5398, %v5395
  %v5400 = vsel %vm5226, %v5395, %v5399
  %vm5401 = vcmp.gt.f32.partialorder %v5400, 0.5
  %v5402 = vsel %vm5401, 1, 0
  %v5403 = vcvt.s32.f32 %v5402
  %v5404 = vadd.f32 %v5229, %v5403
  %v5405 = vld [vmem:[#allocation2 + $0x320] sm:$0xff]
  %v5406 = vld [vmem:[#allocation2 + $0x328] sm:$0xff]
  %v5407 = vld [vmem:[#allocation2 + $0x330] sm:$0xff]
  %v5408 = vld [vmem:[#allocation2 + $0x338] sm:$0xff]
  %v5409 = vmul.f32 %v5242, 0.2
  %v5410 = vmul.f32 %v5243, 0.2
  %v5411 = vmul.f32 %v5244, 0.2
  %v5412 = vmul.f32 %v5245, 0.2
  %v5413 = vadd.f32 %v5409, %v5405
  %v5414 = vadd.f32 %v5410, %v5406
  %v5415 = vadd.f32 %v5411, %v5407
  %v5416 = vadd.f32 %v5412, %v5408
  %v5417 = vsel %vm5246, %v5405, %v5413
  %v5418 = vsel %vm5247, %v5406, %v5414
  %v5419 = vsel %vm5248, %v5407, %v5415
  %v5420 = vsel %vm5249, %v5408, %v5416
  %vm5421 = vcmp.gt.f32.partialorder %v5417, 0.5
  %vm5422 = vcmp.gt.f32.partialorder %v5418, 0.5
  %vm5423 = vcmp.gt.f32.partialorder %v5419, 0.5
  %vm5424 = vcmp.gt.f32.partialorder %v5420, 0.5
  %v5425 = vsel %vm5421, 1, 0
  %v5426 = vsel %vm5422, 1, 0
  %v5427 = vsel %vm5423, 1, 0
  %v5428 = vsel %vm5424, 1, 0
  %v5429 = vcvt.s32.f32 %v5425
  %v5430 = vcvt.s32.f32 %v5426
  %v5431 = vcvt.s32.f32 %v5427
  %v5432 = vcvt.s32.f32 %v5428
  %5433 = vmatprep.subr.mxu0 0.0
  %5434 = vmatpush1.msra.mxu0 %v969
  %5435 = vmatprep.subr.mxu0 0.0
  %5436 = vmatpush1.msra.mxu0 %v970
  %5437 = vmatprep.subr.mxu0 0.0
  %5438 = vmatpush1.msra.mxu0 %v971
  %5439 = vmatprep.subr.mxu0 0.0
  %5440 = vmatpush1.msra.mxu0 %v972
  %5441 = vmatprep.subr.mxu0 0.0
  %5442 = vmatpush1.msra.mxu0 %v973
  %5443 = vmatprep.subr.mxu0 0.0
  %5444 = vmatpush1.msra.mxu0 %v974
  %5445 = vmatprep.subr.mxu0 0.0
  %5446 = vmatpush1.msra.mxu0 %v975
  %5447 = vmatprep.subr.mxu0 0.0
  %5448 = vmatpush1.msra.mxu0 %v976
  %5449 = vmatprep.subr.mxu0 0.0
  %5450 = vmatpush1.msra.mxu0 %v977
  %5451 = vmatprep.subr.mxu0 0.0
  %5452 = vmatpush1.msra.mxu0 %v978
  %5453 = vmatprep.subr.mxu0 0.0
  %5454 = vmatpush1.msra.mxu0 %v979
  %5455 = vmatprep.subr.mxu0 0.0
  %5456 = vmatpush1.msra.mxu0 %v980
  %5457 = vmatprep.subr.mxu0 0.0
  %5458 = vmatpush1.msra.mxu0 %v981
  %5459 = vmatprep.subr.mxu0 0.0
  %5460 = vmatpush1.msra.mxu0 %v982
  %5461 = vmatprep.subr.mxu0 0.0
  %5462 = vmatpush1.msra.mxu0 %v983
  %5463 = vmatprep.subr.mxu0 0.0
  %5464 = vmatpush1.msra.mxu0 %v984
  %5465 = vmatprep.subr.mxu0 0.0
  %5466 = vmatpush1.msra.mxu0 %v985
  %5467 = vmatprep.subr.mxu0 0.0
  %5468 = vmatpush1.msra.mxu0 %v986
  %5469 = vmatprep.subr.mxu0 0.0
  %5470 = vmatpush1.msra.mxu0 %v987
  %5471 = vmatprep.subr.mxu0 0.0
  %5472 = vmatpush1.msra.mxu0 %v988
  %5473 = vmatprep.subr.mxu0 0.0
  %5474 = vmatpush1.msra.mxu0 %v989
  %5475 = vmatprep.subr.mxu0 0.0
  %5476 = vmatpush1.msra.mxu0 %v990
  %5477 = vmatprep.subr.mxu0 0.0
  %5478 = vmatpush1.msra.mxu0 %v991
  %5479 = vmatprep.subr.mxu0 0.0
  %5480 = vmatpush1.msra.mxu0 %v992
  %5481 = vmatprep.subr.mxu0 0.0
  %5482 = vmatpush1.msra.mxu0 %v993
  %5483 = vmatprep.subr.mxu0 0.0
  %5484 = vmatpush1.msra.mxu0 %v994
  %5485 = vmatprep.subr.mxu0 0.0
  %5486 = vmatpush1.msra.mxu0 %v995
  %5487 = vmatprep.subr.mxu0 0.0
  %5488 = vmatpush1.msra.mxu0 %v996
  %5489 = vmatprep.subr.mxu0 0.0
  %5490 = vmatpush1.msra.mxu0 %v997
  %5491 = vmatprep.subr.mxu0 0.0
  %5492 = vmatpush1.msra.mxu0 %v998
  %5493 = vmatprep.subr.mxu0 0.0
  %5494 = vmatpush1.msra.mxu0 %v999
  %5495 = vmatprep.subr.mxu0 0.0
  %5496 = vmatpush1.msra.mxu0 %v1000
  %5497 = vmatprep.mubr.f32.mxu0 %v5430
  %5498 = vmatmul.mubr.f32.gmra.mrb[0].mxu0 %v5429
  %v5499 = vpop.f32.mrb[0].mxu0
  %v5500 = vadd.f32 %v1038, %v5499
  %v5501 = vpop.f32.mrb[0].mxu0
  %5502 = vdwg.mxu0
  %5503 = vmatprep.subr.mxu0 0.0
  %5504 = vmatpush1.msra.mxu0 %v1001
  %5505 = vmatprep.subr.mxu0 0.0
  %5506 = vmatpush1.msra.mxu0 %v1002
  %5507 = vmatprep.subr.mxu0 0.0
  %5508 = vmatpush1.msra.mxu0 %v1003
  %5509 = vmatprep.subr.mxu0 0.0
  %5510 = vmatpush1.msra.mxu0 %v1004
  %5511 = vmatprep.subr.mxu0 0.0
  %5512 = vmatpush1.msra.mxu0 %v1005
  %5513 = vmatprep.subr.mxu0 0.0
  %5514 = vmatpush1.msra.mxu0 %v1006
  %5515 = vmatprep.subr.mxu0 0.0
  %5516 = vmatpush1.msra.mxu0 %v1007
  %5517 = vmatprep.subr.mxu0 0.0
  %5518 = vmatpush1.msra.mxu0 %v1008
  %5519 = vmatprep.subr.mxu0 0.0
  %5520 = vmatpush1.msra.mxu0 %v1009
  %5521 = vmatprep.subr.mxu0 0.0
  %5522 = vmatpush1.msra.mxu0 %v1010
  %5523 = vmatprep.subr.mxu0 0.0
  %5524 = vmatpush1.msra.mxu0 %v1011
  %5525 = vmatprep.subr.mxu0 0.0
  %5526 = vmatpush1.msra.mxu0 %v1012
  %5527 = vmatprep.subr.mxu0 0.0
  %5528 = vmatpush1.msra.mxu0 %v1013
  %5529 = vmatprep.subr.mxu0 0.0
  %5530 = vmatpush1.msra.mxu0 %v1014
  %5531 = vmatprep.subr.mxu0 0.0
  %5532 = vmatpush1.msra.mxu0 %v1015
  %5533 = vmatprep.subr.mxu0 0.0
  %5534 = vmatpush1.msra.mxu0 %v1016
  %5535 = vmatprep.subr.mxu0 0.0
  %5536 = vmatpush1.msra.mxu0 %v1017
  %5537 = vmatprep.subr.mxu0 0.0
  %5538 = vmatpush1.msra.mxu0 %v1018
  %5539 = vmatprep.subr.mxu0 0.0
  %5540 = vmatpush1.msra.mxu0 %v1019
  %5541 = vmatprep.subr.mxu0 0.0
  %5542 = vmatpush1.msra.mxu0 %v1020
  %5543 = vmatprep.subr.mxu0 0.0
  %5544 = vmatpush1.msra.mxu0 %v1021
  %5545 = vmatprep.subr.mxu0 0.0
  %5546 = vmatpush1.msra.mxu0 %v1022
  %5547 = vmatprep.subr.mxu0 0.0
  %5548 = vmatpush1.msra.mxu0 %v1023
  %5549 = vmatprep.subr.mxu0 0.0
  %5550 = vmatpush1.msra.mxu0 %v1024
  %5551 = vmatprep.subr.mxu0 0.0
  %5552 = vmatpush1.msra.mxu0 %v1025
  %5553 = vmatprep.subr.mxu0 0.0
  %5554 = vmatpush1.msra.mxu0 %v1026
  %5555 = vmatprep.subr.mxu0 0.0
  %5556 = vmatpush1.msra.mxu0 %v1027
  %5557 = vmatprep.subr.mxu0 0.0
  %5558 = vmatpush1.msra.mxu0 %v1028
  %5559 = vmatprep.subr.mxu0 0.0
  %5560 = vmatpush1.msra.mxu0 %v1029
  %5561 = vmatprep.subr.mxu0 0.0
  %5562 = vmatpush1.msra.mxu0 %v1030
  %5563 = vmatprep.subr.mxu0 0.0
  %5564 = vmatpush1.msra.mxu0 %v1031
  %5565 = vmatprep.subr.mxu0 0.0
  %5566 = vmatpush1.msra.mxu0 %v1032
  %5567 = vmatprep.mubr.f32.mxu0 %v5432
  %5568 = vmatmul.mubr.f32.gmra.mrb[0].mxu0 %v5431
  %v5569 = vpop.f32.mrb[0].mxu0
  %v5570 = vadd.f32 %v5500, %v5569
  %v5571 = vpop.f32.mrb[0].mxu0
  %5572 = vdwg.mxu0
  %v5573 = vmul.f32 %v5400, 0.2
  %v5574 = vadd.f32 %v5573, %v5570
  %v5575 = vsel %vm5401, %v5570, %v5574
  %vm5576 = vcmp.gt.f32.partialorder %v5575, 0.5
  %v5577 = vsel %vm5576, 1, 0
  %v5578 = vcvt.s32.f32 %v5577
  %v5579 = vadd.f32 %v5404, %v5578
  %v5580 = vld [vmem:[#allocation2 + $0x340] sm:$0xff]
  %v5581 = vld [vmem:[#allocation2 + $0x348] sm:$0xff]
  %v5582 = vld [vmem:[#allocation2 + $0x350] sm:$0xff]
  %v5583 = vld [vmem:[#allocation2 + $0x358] sm:$0xff]
  %v5584 = vmul.f32 %v5417, 0.2
  %v5585 = vmul.f32 %v5418, 0.2
  %v5586 = vmul.f32 %v5419, 0.2
  %v5587 = vmul.f32 %v5420, 0.2
  %v5588 = vadd.f32 %v5584, %v5580
  %v5589 = vadd.f32 %v5585, %v5581
  %v5590 = vadd.f32 %v5586, %v5582
  %v5591 = vadd.f32 %v5587, %v5583
  %v5592 = vsel %vm5421, %v5580, %v5588
  %v5593 = vsel %vm5422, %v5581, %v5589
  %v5594 = vsel %vm5423, %v5582, %v5590
  %v5595 = vsel %vm5424, %v5583, %v5591
  %vm5596 = vcmp.gt.f32.partialorder %v5592, 0.5
  %vm5597 = vcmp.gt.f32.partialorder %v5593, 0.5
  %vm5598 = vcmp.gt.f32.partialorder %v5594, 0.5
  %vm5599 = vcmp.gt.f32.partialorder %v5595, 0.5
  %v5600 = vsel %vm5596, 1, 0
  %v5601 = vsel %vm5597, 1, 0
  %v5602 = vsel %vm5598, 1, 0
  %v5603 = vsel %vm5599, 1, 0
  %v5604 = vcvt.s32.f32 %v5600
  %v5605 = vcvt.s32.f32 %v5601
  %v5606 = vcvt.s32.f32 %v5602
  %v5607 = vcvt.s32.f32 %v5603
  %5608 = vmatprep.subr.mxu0 0.0
  %5609 = vmatpush1.msra.mxu0 %v969
  %5610 = vmatprep.subr.mxu0 0.0
  %5611 = vmatpush1.msra.mxu0 %v970
  %5612 = vmatprep.subr.mxu0 0.0
  %5613 = vmatpush1.msra.mxu0 %v971
  %5614 = vmatprep.subr.mxu0 0.0
  %5615 = vmatpush1.msra.mxu0 %v972
  %5616 = vmatprep.subr.mxu0 0.0
  %5617 = vmatpush1.msra.mxu0 %v973
  %5618 = vmatprep.subr.mxu0 0.0
  %5619 = vmatpush1.msra.mxu0 %v974
  %5620 = vmatprep.subr.mxu0 0.0
  %5621 = vmatpush1.msra.mxu0 %v975
  %5622 = vmatprep.subr.mxu0 0.0
  %5623 = vmatpush1.msra.mxu0 %v976
  %5624 = vmatprep.subr.mxu0 0.0
  %5625 = vmatpush1.msra.mxu0 %v977
  %5626 = vmatprep.subr.mxu0 0.0
  %5627 = vmatpush1.msra.mxu0 %v978
  %5628 = vmatprep.subr.mxu0 0.0
  %5629 = vmatpush1.msra.mxu0 %v979
  %5630 = vmatprep.subr.mxu0 0.0
  %5631 = vmatpush1.msra.mxu0 %v980
  %5632 = vmatprep.subr.mxu0 0.0
  %5633 = vmatpush1.msra.mxu0 %v981
  %5634 = vmatprep.subr.mxu0 0.0
  %5635 = vmatpush1.msra.mxu0 %v982
  %5636 = vmatprep.subr.mxu0 0.0
  %5637 = vmatpush1.msra.mxu0 %v983
  %5638 = vmatprep.subr.mxu0 0.0
  %5639 = vmatpush1.msra.mxu0 %v984
  %5640 = vmatprep.subr.mxu0 0.0
  %5641 = vmatpush1.msra.mxu0 %v985
  %5642 = vmatprep.subr.mxu0 0.0
  %5643 = vmatpush1.msra.mxu0 %v986
  %5644 = vmatprep.subr.mxu0 0.0
  %5645 = vmatpush1.msra.mxu0 %v987
  %5646 = vmatprep.subr.mxu0 0.0
  %5647 = vmatpush1.msra.mxu0 %v988
  %5648 = vmatprep.subr.mxu0 0.0
  %5649 = vmatpush1.msra.mxu0 %v989
  %5650 = vmatprep.subr.mxu0 0.0
  %5651 = vmatpush1.msra.mxu0 %v990
  %5652 = vmatprep.subr.mxu0 0.0
  %5653 = vmatpush1.msra.mxu0 %v991
  %5654 = vmatprep.subr.mxu0 0.0
  %5655 = vmatpush1.msra.mxu0 %v992
  %5656 = vmatprep.subr.mxu0 0.0
  %5657 = vmatpush1.msra.mxu0 %v993
  %5658 = vmatprep.subr.mxu0 0.0
  %5659 = vmatpush1.msra.mxu0 %v994
  %5660 = vmatprep.subr.mxu0 0.0
  %5661 = vmatpush1.msra.mxu0 %v995
  %5662 = vmatprep.subr.mxu0 0.0
  %5663 = vmatpush1.msra.mxu0 %v996
  %5664 = vmatprep.subr.mxu0 0.0
  %5665 = vmatpush1.msra.mxu0 %v997
  %5666 = vmatprep.subr.mxu0 0.0
  %5667 = vmatpush1.msra.mxu0 %v998
  %5668 = vmatprep.subr.mxu0 0.0
  %5669 = vmatpush1.msra.mxu0 %v999
  %5670 = vmatprep.subr.mxu0 0.0
  %5671 = vmatpush1.msra.mxu0 %v1000
  %5672 = vmatprep.mubr.f32.mxu0 %v5605
  %5673 = vmatmul.mubr.f32.gmra.mrb[0].mxu0 %v5604
  %v5674 = vpop.f32.mrb[0].mxu0
  %v5675 = vadd.f32 %v1038, %v5674
  %v5676 = vpop.f32.mrb[0].mxu0
  %5677 = vdwg.mxu0
  %5678 = vmatprep.subr.mxu0 0.0
  %5679 = vmatpush1.msra.mxu0 %v1001
  %5680 = vmatprep.subr.mxu0 0.0
  %5681 = vmatpush1.msra.mxu0 %v1002
  %5682 = vmatprep.subr.mxu0 0.0
  %5683 = vmatpush1.msra.mxu0 %v1003
  %5684 = vmatprep.subr.mxu0 0.0
  %5685 = vmatpush1.msra.mxu0 %v1004
  %5686 = vmatprep.subr.mxu0 0.0
  %5687 = vmatpush1.msra.mxu0 %v1005
  %5688 = vmatprep.subr.mxu0 0.0
  %5689 = vmatpush1.msra.mxu0 %v1006
  %5690 = vmatprep.subr.mxu0 0.0
  %5691 = vmatpush1.msra.mxu0 %v1007
  %5692 = vmatprep.subr.mxu0 0.0
  %5693 = vmatpush1.msra.mxu0 %v1008
  %5694 = vmatprep.subr.mxu0 0.0
  %5695 = vmatpush1.msra.mxu0 %v1009
  %5696 = vmatprep.subr.mxu0 0.0
  %5697 = vmatpush1.msra.mxu0 %v1010
  %5698 = vmatprep.subr.mxu0 0.0
  %5699 = vmatpush1.msra.mxu0 %v1011
  %5700 = vmatprep.subr.mxu0 0.0
  %5701 = vmatpush1.msra.mxu0 %v1012
  %5702 = vmatprep.subr.mxu0 0.0
  %5703 = vmatpush1.msra.mxu0 %v1013
  %5704 = vmatprep.subr.mxu0 0.0
  %5705 = vmatpush1.msra.mxu0 %v1014
  %5706 = vmatprep.subr.mxu0 0.0
  %5707 = vmatpush1.msra.mxu0 %v1015
  %5708 = vmatprep.subr.mxu0 0.0
  %5709 = vmatpush1.msra.mxu0 %v1016
  %5710 = vmatprep.subr.mxu0 0.0
  %5711 = vmatpush1.msra.mxu0 %v1017
  %5712 = vmatprep.subr.mxu0 0.0
  %5713 = vmatpush1.msra.mxu0 %v1018
  %5714 = vmatprep.subr.mxu0 0.0
  %5715 = vmatpush1.msra.mxu0 %v1019
  %5716 = vmatprep.subr.mxu0 0.0
  %5717 = vmatpush1.msra.mxu0 %v1020
  %5718 = vmatprep.subr.mxu0 0.0
  %5719 = vmatpush1.msra.mxu0 %v1021
  %5720 = vmatprep.subr.mxu0 0.0
  %5721 = vmatpush1.msra.mxu0 %v1022
  %5722 = vmatprep.subr.mxu0 0.0
  %5723 = vmatpush1.msra.mxu0 %v1023
  %5724 = vmatprep.subr.mxu0 0.0
  %5725 = vmatpush1.msra.mxu0 %v1024
  %5726 = vmatprep.subr.mxu0 0.0
  %5727 = vmatpush1.msra.mxu0 %v1025
  %5728 = vmatprep.subr.mxu0 0.0
  %5729 = vmatpush1.msra.mxu0 %v1026
  %5730 = vmatprep.subr.mxu0 0.0
  %5731 = vmatpush1.msra.mxu0 %v1027
  %5732 = vmatprep.subr.mxu0 0.0
  %5733 = vmatpush1.msra.mxu0 %v1028
  %5734 = vmatprep.subr.mxu0 0.0
  %5735 = vmatpush1.msra.mxu0 %v1029
  %5736 = vmatprep.subr.mxu0 0.0
  %5737 = vmatpush1.msra.mxu0 %v1030
  %5738 = vmatprep.subr.mxu0 0.0
  %5739 = vmatpush1.msra.mxu0 %v1031
  %5740 = vmatprep.subr.mxu0 0.0
  %5741 = vmatpush1.msra.mxu0 %v1032
  %5742 = vmatprep.mubr.f32.mxu0 %v5607
  %5743 = vmatmul.mubr.f32.gmra.mrb[0].mxu0 %v5606
  %v5744 = vpop.f32.mrb[0].mxu0
  %v5745 = vadd.f32 %v5675, %v5744
  %v5746 = vpop.f32.mrb[0].mxu0
  %5747 = vdwg.mxu0
  %v5748 = vmul.f32 %v5575, 0.2
  %v5749 = vadd.f32 %v5748, %v5745
  %v5750 = vsel %vm5576, %v5745, %v5749
  %vm5751 = vcmp.gt.f32.partialorder %v5750, 0.5
  %v5752 = vsel %vm5751, 1, 0
  %v5753 = vcvt.s32.f32 %v5752
  %v5754 = vadd.f32 %v5579, %v5753
  %v5755 = vld [vmem:[#allocation2 + $0x360] sm:$0xff]
  %v5756 = vld [vmem:[#allocation2 + $0x368] sm:$0xff]
  %v5757 = vld [vmem:[#allocation2 + $0x370] sm:$0xff]
  %v5758 = vld [vmem:[#allocation2 + $0x378] sm:$0xff]
  %v5759 = vmul.f32 %v5592, 0.2
  %v5760 = vmul.f32 %v5593, 0.2
  %v5761 = vmul.f32 %v5594, 0.2
  %v5762 = vmul.f32 %v5595, 0.2
  %v5763 = vadd.f32 %v5759, %v5755
  %v5764 = vadd.f32 %v5760, %v5756
  %v5765 = vadd.f32 %v5761, %v5757
  %v5766 = vadd.f32 %v5762, %v5758
  %v5767 = vsel %vm5596, %v5755, %v5763
  %v5768 = vsel %vm5597, %v5756, %v5764
  %v5769 = vsel %vm5598, %v5757, %v5765
  %v5770 = vsel %vm5599, %v5758, %v5766
  %vm5771 = vcmp.gt.f32.partialorder %v5767, 0.5
  %vm5772 = vcmp.gt.f32.partialorder %v5768, 0.5
  %vm5773 = vcmp.gt.f32.partialorder %v5769, 0.5
  %vm5774 = vcmp.gt.f32.partialorder %v5770, 0.5
  %v5775 = vsel %vm5771, 1, 0
  %v5776 = vsel %vm5772, 1, 0
  %v5777 = vsel %vm5773, 1, 0
  %v5778 = vsel %vm5774, 1, 0
  %v5779 = vcvt.s32.f32 %v5775
  %v5780 = vcvt.s32.f32 %v5776
  %v5781 = vcvt.s32.f32 %v5777
  %v5782 = vcvt.s32.f32 %v5778
  %5783 = vmatprep.subr.mxu0 0.0
  %5784 = vmatpush1.msra.mxu0 %v969
  %5785 = vmatprep.subr.mxu0 0.0
  %5786 = vmatpush1.msra.mxu0 %v970
  %5787 = vmatprep.subr.mxu0 0.0
  %5788 = vmatpush1.msra.mxu0 %v971
  %5789 = vmatprep.subr.mxu0 0.0
  %5790 = vmatpush1.msra.mxu0 %v972
  %5791 = vmatprep.subr.mxu0 0.0
  %5792 = vmatpush1.msra.mxu0 %v973
  %5793 = vmatprep.subr.mxu0 0.0
  %5794 = vmatpush1.msra.mxu0 %v974
  %5795 = vmatprep.subr.mxu0 0.0
  %5796 = vmatpush1.msra.mxu0 %v975
  %5797 = vmatprep.subr.mxu0 0.0
  %5798 = vmatpush1.msra.mxu0 %v976
  %5799 = vmatprep.subr.mxu0 0.0
  %5800 = vmatpush1.msra.mxu0 %v977
  %5801 = vmatprep.subr.mxu0 0.0
  %5802 = vmatpush1.msra.mxu0 %v978
  %5803 = vmatprep.subr.mxu0 0.0
  %5804 = vmatpush1.msra.mxu0 %v979
  %5805 = vmatprep.subr.mxu0 0.0
  %5806 = vmatpush1.msra.mxu0 %v980
  %5807 = vmatprep.subr.mxu0 0.0
  %5808 = vmatpush1.msra.mxu0 %v981
  %5809 = vmatprep.subr.mxu0 0.0
  %5810 = vmatpush1.msra.mxu0 %v982
  %5811 = vmatprep.subr.mxu0 0.0
  %5812 = vmatpush1.msra.mxu0 %v983
  %5813 = vmatprep.subr.mxu0 0.0
  %5814 = vmatpush1.msra.mxu0 %v984
  %5815 = vmatprep.subr.mxu0 0.0
  %5816 = vmatpush1.msra.mxu0 %v985
  %5817 = vmatprep.subr.mxu0 0.0
  %5818 = vmatpush1.msra.mxu0 %v986
  %5819 = vmatprep.subr.mxu0 0.0
  %5820 = vmatpush1.msra.mxu0 %v987
  %5821 = vmatprep.subr.mxu0 0.0
  %5822 = vmatpush1.msra.mxu0 %v988
  %5823 = vmatprep.subr.mxu0 0.0
  %5824 = vmatpush1.msra.mxu0 %v989
  %5825 = vmatprep.subr.mxu0 0.0
  %5826 = vmatpush1.msra.mxu0 %v990
  %5827 = vmatprep.subr.mxu0 0.0
  %5828 = vmatpush1.msra.mxu0 %v991
  %5829 = vmatprep.subr.mxu0 0.0
  %5830 = vmatpush1.msra.mxu0 %v992
  %5831 = vmatprep.subr.mxu0 0.0
  %5832 = vmatpush1.msra.mxu0 %v993
  %5833 = vmatprep.subr.mxu0 0.0
  %5834 = vmatpush1.msra.mxu0 %v994
  %5835 = vmatprep.subr.mxu0 0.0
  %5836 = vmatpush1.msra.mxu0 %v995
  %5837 = vmatprep.subr.mxu0 0.0
  %5838 = vmatpush1.msra.mxu0 %v996
  %5839 = vmatprep.subr.mxu0 0.0
  %5840 = vmatpush1.msra.mxu0 %v997
  %5841 = vmatprep.subr.mxu0 0.0
  %5842 = vmatpush1.msra.mxu0 %v998
  %5843 = vmatprep.subr.mxu0 0.0
  %5844 = vmatpush1.msra.mxu0 %v999
  %5845 = vmatprep.subr.mxu0 0.0
  %5846 = vmatpush1.msra.mxu0 %v1000
  %5847 = vmatprep.mubr.f32.mxu0 %v5780
  %5848 = vmatmul.mubr.f32.gmra.mrb[0].mxu0 %v5779
  %v5849 = vpop.f32.mrb[0].mxu0
  %v5850 = vadd.f32 %v1038, %v5849
  %v5851 = vpop.f32.mrb[0].mxu0
  %5852 = vdwg.mxu0
  %5853 = vmatprep.subr.mxu0 0.0
  %5854 = vmatpush1.msra.mxu0 %v1001
  %5855 = vmatprep.subr.mxu0 0.0
  %5856 = vmatpush1.msra.mxu0 %v1002
  %5857 = vmatprep.subr.mxu0 0.0
  %5858 = vmatpush1.msra.mxu0 %v1003
  %5859 = vmatprep.subr.mxu0 0.0
  %5860 = vmatpush1.msra.mxu0 %v1004
  %5861 = vmatprep.subr.mxu0 0.0
  %5862 = vmatpush1.msra.mxu0 %v1005
  %5863 = vmatprep.subr.mxu0 0.0
  %5864 = vmatpush1.msra.mxu0 %v1006
  %5865 = vmatprep.subr.mxu0 0.0
  %5866 = vmatpush1.msra.mxu0 %v1007
  %5867 = vmatprep.subr.mxu0 0.0
  %5868 = vmatpush1.msra.mxu0 %v1008
  %5869 = vmatprep.subr.mxu0 0.0
  %5870 = vmatpush1.msra.mxu0 %v1009
  %5871 = vmatprep.subr.mxu0 0.0
  %5872 = vmatpush1.msra.mxu0 %v1010
  %5873 = vmatprep.subr.mxu0 0.0
  %5874 = vmatpush1.msra.mxu0 %v1011
  %5875 = vmatprep.subr.mxu0 0.0
  %5876 = vmatpush1.msra.mxu0 %v1012
  %5877 = vmatprep.subr.mxu0 0.0
  %5878 = vmatpush1.msra.mxu0 %v1013
  %5879 = vmatprep.subr.mxu0 0.0
  %5880 = vmatpush1.msra.mxu0 %v1014
  %5881 = vmatprep.subr.mxu0 0.0
  %5882 = vmatpush1.msra.mxu0 %v1015
  %5883 = vmatprep.subr.mxu0 0.0
  %5884 = vmatpush1.msra.mxu0 %v1016
  %5885 = vmatprep.subr.mxu0 0.0
  %5886 = vmatpush1.msra.mxu0 %v1017
  %5887 = vmatprep.subr.mxu0 0.0
  %5888 = vmatpush1.msra.mxu0 %v1018
  %5889 = vmatprep.subr.mxu0 0.0
  %5890 = vmatpush1.msra.mxu0 %v1019
  %5891 = vmatprep.subr.mxu0 0.0
  %5892 = vmatpush1.msra.mxu0 %v1020
  %5893 = vmatprep.subr.mxu0 0.0
  %5894 = vmatpush1.msra.mxu0 %v1021
  %5895 = vmatprep.subr.mxu0 0.0
  %5896 = vmatpush1.msra.mxu0 %v1022
  %5897 = vmatprep.subr.mxu0 0.0
  %5898 = vmatpush1.msra.mxu0 %v1023
  %5899 = vmatprep.subr.mxu0 0.0
  %5900 = vmatpush1.msra.mxu0 %v1024
  %5901 = vmatprep.subr.mxu0 0.0
  %5902 = vmatpush1.msra.mxu0 %v1025
  %5903 = vmatprep.subr.mxu0 0.0
  %5904 = vmatpush1.msra.mxu0 %v1026
  %5905 = vmatprep.subr.mxu0 0.0
  %5906 = vmatpush1.msra.mxu0 %v1027
  %5907 = vmatprep.subr.mxu0 0.0
  %5908 = vmatpush1.msra.mxu0 %v1028
  %5909 = vmatprep.subr.mxu0 0.0
  %5910 = vmatpush1.msra.mxu0 %v1029
  %5911 = vmatprep.subr.mxu0 0.0
  %5912 = vmatpush1.msra.mxu0 %v1030
  %5913 = vmatprep.subr.mxu0 0.0
  %5914 = vmatpush1.msra.mxu0 %v1031
  %5915 = vmatprep.subr.mxu0 0.0
  %5916 = vmatpush1.msra.mxu0 %v1032
  %5917 = vmatprep.mubr.f32.mxu0 %v5782
  %5918 = vmatmul.mubr.f32.gmra.mrb[0].mxu0 %v5781
  %v5919 = vpop.f32.mrb[0].mxu0
  %v5920 = vadd.f32 %v5850, %v5919
  %v5921 = vpop.f32.mrb[0].mxu0
  %5922 = vdwg.mxu0
  %v5923 = vmul.f32 %v5750, 0.2
  %v5924 = vadd.f32 %v5923, %v5920
  %v5925 = vsel %vm5751, %v5920, %v5924
  %vm5926 = vcmp.gt.f32.partialorder %v5925, 0.5
  %v5927 = vsel %vm5926, 1, 0
  %v5928 = vcvt.s32.f32 %v5927
  %v5929 = vadd.f32 %v5754, %v5928
  %v5930 = vld [vmem:[#allocation2 + $0x380] sm:$0xff]
  %v5931 = vld [vmem:[#allocation2 + $0x388] sm:$0xff]
  %v5932 = vld [vmem:[#allocation2 + $0x390] sm:$0xff]
  %v5933 = vld [vmem:[#allocation2 + $0x398] sm:$0xff]
  %v5934 = vmul.f32 %v5767, 0.2
  %v5935 = vmul.f32 %v5768, 0.2
  %v5936 = vmul.f32 %v5769, 0.2
  %v5937 = vmul.f32 %v5770, 0.2
  %v5938 = vadd.f32 %v5934, %v5930
  %v5939 = vadd.f32 %v5935, %v5931
  %v5940 = vadd.f32 %v5936, %v5932
  %v5941 = vadd.f32 %v5937, %v5933
  %v5942 = vsel %vm5771, %v5930, %v5938
  %v5943 = vsel %vm5772, %v5931, %v5939
  %v5944 = vsel %vm5773, %v5932, %v5940
  %v5945 = vsel %vm5774, %v5933, %v5941
  %vm5946 = vcmp.gt.f32.partialorder %v5942, 0.5
  %vm5947 = vcmp.gt.f32.partialorder %v5943, 0.5
  %vm5948 = vcmp.gt.f32.partialorder %v5944, 0.5
  %vm5949 = vcmp.gt.f32.partialorder %v5945, 0.5
  %v5950 = vsel %vm5946, 1, 0
  %v5951 = vsel %vm5947, 1, 0
  %v5952 = vsel %vm5948, 1, 0
  %v5953 = vsel %vm5949, 1, 0
  %v5954 = vcvt.s32.f32 %v5950
  %v5955 = vcvt.s32.f32 %v5951
  %v5956 = vcvt.s32.f32 %v5952
  %v5957 = vcvt.s32.f32 %v5953
  %5958 = vmatprep.subr.mxu0 0.0
  %5959 = vmatpush1.msra.mxu0 %v969
  %5960 = vmatprep.subr.mxu0 0.0
  %5961 = vmatpush1.msra.mxu0 %v970
  %5962 = vmatprep.subr.mxu0 0.0
  %5963 = vmatpush1.msra.mxu0 %v971
  %5964 = vmatprep.subr.mxu0 0.0
  %5965 = vmatpush1.msra.mxu0 %v972
  %5966 = vmatprep.subr.mxu0 0.0
  %5967 = vmatpush1.msra.mxu0 %v973
  %5968 = vmatprep.subr.mxu0 0.0
  %5969 = vmatpush1.msra.mxu0 %v974
  %5970 = vmatprep.subr.mxu0 0.0
  %5971 = vmatpush1.msra.mxu0 %v975
  %5972 = vmatprep.subr.mxu0 0.0
  %5973 = vmatpush1.msra.mxu0 %v976
  %5974 = vmatprep.subr.mxu0 0.0
  %5975 = vmatpush1.msra.mxu0 %v977
  %5976 = vmatprep.subr.mxu0 0.0
  %5977 = vmatpush1.msra.mxu0 %v978
  %5978 = vmatprep.subr.mxu0 0.0
  %5979 = vmatpush1.msra.mxu0 %v979
  %5980 = vmatprep.subr.mxu0 0.0
  %5981 = vmatpush1.msra.mxu0 %v980
  %5982 = vmatprep.subr.mxu0 0.0
  %5983 = vmatpush1.msra.mxu0 %v981
  %5984 = vmatprep.subr.mxu0 0.0
  %5985 = vmatpush1.msra.mxu0 %v982
  %5986 = vmatprep.subr.mxu0 0.0
  %5987 = vmatpush1.msra.mxu0 %v983
  %5988 = vmatprep.subr.mxu0 0.0
  %5989 = vmatpush1.msra.mxu0 %v984
  %5990 = vmatprep.subr.mxu0 0.0
  %5991 = vmatpush1.msra.mxu0 %v985
  %5992 = vmatprep.subr.mxu0 0.0
  %5993 = vmatpush1.msra.mxu0 %v986
  %5994 = vmatprep.subr.mxu0 0.0
  %5995 = vmatpush1.msra.mxu0 %v987
  %5996 = vmatprep.subr.mxu0 0.0
  %5997 = vmatpush1.msra.mxu0 %v988
  %5998 = vmatprep.subr.mxu0 0.0
  %5999 = vmatpush1.msra.mxu0 %v989
  %6000 = vmatprep.subr.mxu0 0.0
  %6001 = vmatpush1.msra.mxu0 %v990
  %6002 = vmatprep.subr.mxu0 0.0
  %6003 = vmatpush1.msra.mxu0 %v991
  %6004 = vmatprep.subr.mxu0 0.0
  %6005 = vmatpush1.msra.mxu0 %v992
  %6006 = vmatprep.subr.mxu0 0.0
  %6007 = vmatpush1.msra.mxu0 %v993
  %6008 = vmatprep.subr.mxu0 0.0
  %6009 = vmatpush1.msra.mxu0 %v994
  %6010 = vmatprep.subr.mxu0 0.0
  %6011 = vmatpush1.msra.mxu0 %v995
  %6012 = vmatprep.subr.mxu0 0.0
  %6013 = vmatpush1.msra.mxu0 %v996
  %6014 = vmatprep.subr.mxu0 0.0
  %6015 = vmatpush1.msra.mxu0 %v997
  %6016 = vmatprep.subr.mxu0 0.0
  %6017 = vmatpush1.msra.mxu0 %v998
  %6018 = vmatprep.subr.mxu0 0.0
  %6019 = vmatpush1.msra.mxu0 %v999
  %6020 = vmatprep.subr.mxu0 0.0
  %6021 = vmatpush1.msra.mxu0 %v1000
  %6022 = vmatprep.mubr.f32.mxu0 %v5955
  %6023 = vmatmul.mubr.f32.gmra.mrb[0].mxu0 %v5954
  %v6024 = vpop.f32.mrb[0].mxu0
  %v6025 = vadd.f32 %v1038, %v6024
  %v6026 = vpop.f32.mrb[0].mxu0
  %6027 = vdwg.mxu0
  %6028 = vmatprep.subr.mxu0 0.0
  %6029 = vmatpush1.msra.mxu0 %v1001
  %6030 = vmatprep.subr.mxu0 0.0
  %6031 = vmatpush1.msra.mxu0 %v1002
  %6032 = vmatprep.subr.mxu0 0.0
  %6033 = vmatpush1.msra.mxu0 %v1003
  %6034 = vmatprep.subr.mxu0 0.0
  %6035 = vmatpush1.msra.mxu0 %v1004
  %6036 = vmatprep.subr.mxu0 0.0
  %6037 = vmatpush1.msra.mxu0 %v1005
  %6038 = vmatprep.subr.mxu0 0.0
  %6039 = vmatpush1.msra.mxu0 %v1006
  %6040 = vmatprep.subr.mxu0 0.0
  %6041 = vmatpush1.msra.mxu0 %v1007
  %6042 = vmatprep.subr.mxu0 0.0
  %6043 = vmatpush1.msra.mxu0 %v1008
  %6044 = vmatprep.subr.mxu0 0.0
  %6045 = vmatpush1.msra.mxu0 %v1009
  %6046 = vmatprep.subr.mxu0 0.0
  %6047 = vmatpush1.msra.mxu0 %v1010
  %6048 = vmatprep.subr.mxu0 0.0
  %6049 = vmatpush1.msra.mxu0 %v1011
  %6050 = vmatprep.subr.mxu0 0.0
  %6051 = vmatpush1.msra.mxu0 %v1012
  %6052 = vmatprep.subr.mxu0 0.0
  %6053 = vmatpush1.msra.mxu0 %v1013
  %6054 = vmatprep.subr.mxu0 0.0
  %6055 = vmatpush1.msra.mxu0 %v1014
  %6056 = vmatprep.subr.mxu0 0.0
  %6057 = vmatpush1.msra.mxu0 %v1015
  %6058 = vmatprep.subr.mxu0 0.0
  %6059 = vmatpush1.msra.mxu0 %v1016
  %6060 = vmatprep.subr.mxu0 0.0
  %6061 = vmatpush1.msra.mxu0 %v1017
  %6062 = vmatprep.subr.mxu0 0.0
  %6063 = vmatpush1.msra.mxu0 %v1018
  %6064 = vmatprep.subr.mxu0 0.0
  %6065 = vmatpush1.msra.mxu0 %v1019
  %6066 = vmatprep.subr.mxu0 0.0
  %6067 = vmatpush1.msra.mxu0 %v1020
  %6068 = vmatprep.subr.mxu0 0.0
  %6069 = vmatpush1.msra.mxu0 %v1021
  %6070 = vmatprep.subr.mxu0 0.0
  %6071 = vmatpush1.msra.mxu0 %v1022
  %6072 = vmatprep.subr.mxu0 0.0
  %6073 = vmatpush1.msra.mxu0 %v1023
  %6074 = vmatprep.subr.mxu0 0.0
  %6075 = vmatpush1.msra.mxu0 %v1024
  %6076 = vmatprep.subr.mxu0 0.0
  %6077 = vmatpush1.msra.mxu0 %v1025
  %6078 = vmatprep.subr.mxu0 0.0
  %6079 = vmatpush1.msra.mxu0 %v1026
  %6080 = vmatprep.subr.mxu0 0.0
  %6081 = vmatpush1.msra.mxu0 %v1027
  %6082 = vmatprep.subr.mxu0 0.0
  %6083 = vmatpush1.msra.mxu0 %v1028
  %6084 = vmatprep.subr.mxu0 0.0
  %6085 = vmatpush1.msra.mxu0 %v1029
  %6086 = vmatprep.subr.mxu0 0.0
  %6087 = vmatpush1.msra.mxu0 %v1030
  %6088 = vmatprep.subr.mxu0 0.0
  %6089 = vmatpush1.msra.mxu0 %v1031
  %6090 = vmatprep.subr.mxu0 0.0
  %6091 = vmatpush1.msra.mxu0 %v1032
  %6092 = vmatprep.mubr.f32.mxu0 %v5957
  %6093 = vmatmul.mubr.f32.gmra.mrb[0].mxu0 %v5956
  %v6094 = vpop.f32.mrb[0].mxu0
  %v6095 = vadd.f32 %v6025, %v6094
  %v6096 = vpop.f32.mrb[0].mxu0
  %6097 = vdwg.mxu0
  %v6098 = vmul.f32 %v5925, 0.2
  %v6099 = vadd.f32 %v6098, %v6095
  %v6100 = vsel %vm5926, %v6095, %v6099
  %vm6101 = vcmp.gt.f32.partialorder %v6100, 0.5
  %v6102 = vsel %vm6101, 1, 0
  %v6103 = vcvt.s32.f32 %v6102
  %v6104 = vadd.f32 %v5929, %v6103
  %v6105 = vld [vmem:[#allocation2 + $0x3a0] sm:$0xff]
  %v6106 = vld [vmem:[#allocation2 + $0x3a8] sm:$0xff]
  %v6107 = vld [vmem:[#allocation2 + $0x3b0] sm:$0xff]
  %v6108 = vld [vmem:[#allocation2 + $0x3b8] sm:$0xff]
  %v6109 = vmul.f32 %v5942, 0.2
  %v6110 = vmul.f32 %v5943, 0.2
  %v6111 = vmul.f32 %v5944, 0.2
  %v6112 = vmul.f32 %v5945, 0.2
  %v6113 = vadd.f32 %v6109, %v6105
  %v6114 = vadd.f32 %v6110, %v6106
  %v6115 = vadd.f32 %v6111, %v6107
  %v6116 = vadd.f32 %v6112, %v6108
  %v6117 = vsel %vm5946, %v6105, %v6113
  %v6118 = vsel %vm5947, %v6106, %v6114
  %v6119 = vsel %vm5948, %v6107, %v6115
  %v6120 = vsel %vm5949, %v6108, %v6116
  %vm6121 = vcmp.gt.f32.partialorder %v6117, 0.5
  %vm6122 = vcmp.gt.f32.partialorder %v6118, 0.5
  %vm6123 = vcmp.gt.f32.partialorder %v6119, 0.5
  %vm6124 = vcmp.gt.f32.partialorder %v6120, 0.5
  %v6125 = vsel %vm6121, 1, 0
  %v6126 = vsel %vm6122, 1, 0
  %v6127 = vsel %vm6123, 1, 0
  %v6128 = vsel %vm6124, 1, 0
  %v6129 = vcvt.s32.f32 %v6125
  %v6130 = vcvt.s32.f32 %v6126
  %v6131 = vcvt.s32.f32 %v6127
  %v6132 = vcvt.s32.f32 %v6128
  %6133 = vmatprep.subr.mxu0 0.0
  %6134 = vmatpush1.msra.mxu0 %v969
  %6135 = vmatprep.subr.mxu0 0.0
  %6136 = vmatpush1.msra.mxu0 %v970
  %6137 = vmatprep.subr.mxu0 0.0
  %6138 = vmatpush1.msra.mxu0 %v971
  %6139 = vmatprep.subr.mxu0 0.0
  %6140 = vmatpush1.msra.mxu0 %v972
  %6141 = vmatprep.subr.mxu0 0.0
  %6142 = vmatpush1.msra.mxu0 %v973
  %6143 = vmatprep.subr.mxu0 0.0
  %6144 = vmatpush1.msra.mxu0 %v974
  %6145 = vmatprep.subr.mxu0 0.0
  %6146 = vmatpush1.msra.mxu0 %v975
  %6147 = vmatprep.subr.mxu0 0.0
  %6148 = vmatpush1.msra.mxu0 %v976
  %6149 = vmatprep.subr.mxu0 0.0
  %6150 = vmatpush1.msra.mxu0 %v977
  %6151 = vmatprep.subr.mxu0 0.0
  %6152 = vmatpush1.msra.mxu0 %v978
  %6153 = vmatprep.subr.mxu0 0.0
  %6154 = vmatpush1.msra.mxu0 %v979
  %6155 = vmatprep.subr.mxu0 0.0
  %6156 = vmatpush1.msra.mxu0 %v980
  %6157 = vmatprep.subr.mxu0 0.0
  %6158 = vmatpush1.msra.mxu0 %v981
  %6159 = vmatprep.subr.mxu0 0.0
  %6160 = vmatpush1.msra.mxu0 %v982
  %6161 = vmatprep.subr.mxu0 0.0
  %6162 = vmatpush1.msra.mxu0 %v983
  %6163 = vmatprep.subr.mxu0 0.0
  %6164 = vmatpush1.msra.mxu0 %v984
  %6165 = vmatprep.subr.mxu0 0.0
  %6166 = vmatpush1.msra.mxu0 %v985
  %6167 = vmatprep.subr.mxu0 0.0
  %6168 = vmatpush1.msra.mxu0 %v986
  %6169 = vmatprep.subr.mxu0 0.0
  %6170 = vmatpush1.msra.mxu0 %v987
  %6171 = vmatprep.subr.mxu0 0.0
  %6172 = vmatpush1.msra.mxu0 %v988
  %6173 = vmatprep.subr.mxu0 0.0
  %6174 = vmatpush1.msra.mxu0 %v989
  %6175 = vmatprep.subr.mxu0 0.0
  %6176 = vmatpush1.msra.mxu0 %v990
  %6177 = vmatprep.subr.mxu0 0.0
  %6178 = vmatpush1.msra.mxu0 %v991
  %6179 = vmatprep.subr.mxu0 0.0
  %6180 = vmatpush1.msra.mxu0 %v992
  %6181 = vmatprep.subr.mxu0 0.0
  %6182 = vmatpush1.msra.mxu0 %v993
  %6183 = vmatprep.subr.mxu0 0.0
  %6184 = vmatpush1.msra.mxu0 %v994
  %6185 = vmatprep.subr.mxu0 0.0
  %6186 = vmatpush1.msra.mxu0 %v995
  %6187 = vmatprep.subr.mxu0 0.0
  %6188 = vmatpush1.msra.mxu0 %v996
  %6189 = vmatprep.subr.mxu0 0.0
  %6190 = vmatpush1.msra.mxu0 %v997
  %6191 = vmatprep.subr.mxu0 0.0
  %6192 = vmatpush1.msra.mxu0 %v998
  %6193 = vmatprep.subr.mxu0 0.0
  %6194 = vmatpush1.msra.mxu0 %v999
  %6195 = vmatprep.subr.mxu0 0.0
  %6196 = vmatpush1.msra.mxu0 %v1000
  %6197 = vmatprep.mubr.f32.mxu0 %v6130
  %6198 = vmatmul.mubr.f32.gmra.mrb[0].mxu0 %v6129
  %v6199 = vpop.f32.mrb[0].mxu0
  %v6200 = vadd.f32 %v1038, %v6199
  %v6201 = vpop.f32.mrb[0].mxu0
  %6202 = vdwg.mxu0
  %6203 = vmatprep.subr.mxu0 0.0
  %6204 = vmatpush1.msra.mxu0 %v1001
  %6205 = vmatprep.subr.mxu0 0.0
  %6206 = vmatpush1.msra.mxu0 %v1002
  %6207 = vmatprep.subr.mxu0 0.0
  %6208 = vmatpush1.msra.mxu0 %v1003
  %6209 = vmatprep.subr.mxu0 0.0
  %6210 = vmatpush1.msra.mxu0 %v1004
  %6211 = vmatprep.subr.mxu0 0.0
  %6212 = vmatpush1.msra.mxu0 %v1005
  %6213 = vmatprep.subr.mxu0 0.0
  %6214 = vmatpush1.msra.mxu0 %v1006
  %6215 = vmatprep.subr.mxu0 0.0
  %6216 = vmatpush1.msra.mxu0 %v1007
  %6217 = vmatprep.subr.mxu0 0.0
  %6218 = vmatpush1.msra.mxu0 %v1008
  %6219 = vmatprep.subr.mxu0 0.0
  %6220 = vmatpush1.msra.mxu0 %v1009
  %6221 = vmatprep.subr.mxu0 0.0
  %6222 = vmatpush1.msra.mxu0 %v1010
  %6223 = vmatprep.subr.mxu0 0.0
  %6224 = vmatpush1.msra.mxu0 %v1011
  %6225 = vmatprep.subr.mxu0 0.0
  %6226 = vmatpush1.msra.mxu0 %v1012
  %6227 = vmatprep.subr.mxu0 0.0
  %6228 = vmatpush1.msra.mxu0 %v1013
  %6229 = vmatprep.subr.mxu0 0.0
  %6230 = vmatpush1.msra.mxu0 %v1014
  %6231 = vmatprep.subr.mxu0 0.0
  %6232 = vmatpush1.msra.mxu0 %v1015
  %6233 = vmatprep.subr.mxu0 0.0
  %6234 = vmatpush1.msra.mxu0 %v1016
  %6235 = vmatprep.subr.mxu0 0.0
  %6236 = vmatpush1.msra.mxu0 %v1017
  %6237 = vmatprep.subr.mxu0 0.0
  %6238 = vmatpush1.msra.mxu0 %v1018
  %6239 = vmatprep.subr.mxu0 0.0
  %6240 = vmatpush1.msra.mxu0 %v1019
  %6241 = vmatprep.subr.mxu0 0.0
  %6242 = vmatpush1.msra.mxu0 %v1020
  %6243 = vmatprep.subr.mxu0 0.0
  %6244 = vmatpush1.msra.mxu0 %v1021
  %6245 = vmatprep.subr.mxu0 0.0
  %6246 = vmatpush1.msra.mxu0 %v1022
  %6247 = vmatprep.subr.mxu0 0.0
  %6248 = vmatpush1.msra.mxu0 %v1023
  %6249 = vmatprep.subr.mxu0 0.0
  %6250 = vmatpush1.msra.mxu0 %v1024
  %6251 = vmatprep.subr.mxu0 0.0
  %6252 = vmatpush1.msra.mxu0 %v1025
  %6253 = vmatprep.subr.mxu0 0.0
  %6254 = vmatpush1.msra.mxu0 %v1026
  %6255 = vmatprep.subr.mxu0 0.0
  %6256 = vmatpush1.msra.mxu0 %v1027
  %6257 = vmatprep.subr.mxu0 0.0
  %6258 = vmatpush1.msra.mxu0 %v1028
  %6259 = vmatprep.subr.mxu0 0.0
  %6260 = vmatpush1.msra.mxu0 %v1029
  %6261 = vmatprep.subr.mxu0 0.0
  %6262 = vmatpush1.msra.mxu0 %v1030
  %6263 = vmatprep.subr.mxu0 0.0
  %6264 = vmatpush1.msra.mxu0 %v1031
  %6265 = vmatprep.subr.mxu0 0.0
  %6266 = vmatpush1.msra.mxu0 %v1032
  %6267 = vmatprep.mubr.f32.mxu0 %v6132
  %6268 = vmatmul.mubr.f32.gmra.mrb[0].mxu0 %v6131
  %v6269 = vpop.f32.mrb[0].mxu0
  %v6270 = vadd.f32 %v6200, %v6269
  %v6271 = vpop.f32.mrb[0].mxu0
  %6272 = vdwg.mxu0
  %v6273 = vmul.f32 %v6100, 0.2
  %v6274 = vadd.f32 %v6273, %v6270
  %v6275 = vsel %vm6101, %v6270, %v6274
  %vm6276 = vcmp.gt.f32.partialorder %v6275, 0.5
  %v6277 = vsel %vm6276, 1, 0
  %v6278 = vcvt.s32.f32 %v6277
  %v6279 = vadd.f32 %v6104, %v6278
  %v6280 = vld [vmem:[#allocation2 + $0x3c0] sm:$0xff]
  %v6281 = vld [vmem:[#allocation2 + $0x3c8] sm:$0xff]
  %v6282 = vld [vmem:[#allocation2 + $0x3d0] sm:$0xff]
  %v6283 = vld [vmem:[#allocation2 + $0x3d8] sm:$0xff]
  %v6284 = vmul.f32 %v6117, 0.2
  %v6285 = vmul.f32 %v6118, 0.2
  %v6286 = vmul.f32 %v6119, 0.2
  %v6287 = vmul.f32 %v6120, 0.2
  %v6288 = vadd.f32 %v6284, %v6280
  %v6289 = vadd.f32 %v6285, %v6281
  %v6290 = vadd.f32 %v6286, %v6282
  %v6291 = vadd.f32 %v6287, %v6283
  %v6292 = vsel %vm6121, %v6280, %v6288
  %v6293 = vsel %vm6122, %v6281, %v6289
  %v6294 = vsel %vm6123, %v6282, %v6290
  %v6295 = vsel %vm6124, %v6283, %v6291
  %vm6296 = vcmp.gt.f32.partialorder %v6292, 0.5
  %vm6297 = vcmp.gt.f32.partialorder %v6293, 0.5
  %vm6298 = vcmp.gt.f32.partialorder %v6294, 0.5
  %vm6299 = vcmp.gt.f32.partialorder %v6295, 0.5
  %v6300 = vsel %vm6296, 1, 0
  %v6301 = vsel %vm6297, 1, 0
  %v6302 = vsel %vm6298, 1, 0
  %v6303 = vsel %vm6299, 1, 0
  %v6304 = vcvt.s32.f32 %v6300
  %v6305 = vcvt.s32.f32 %v6301
  %v6306 = vcvt.s32.f32 %v6302
  %v6307 = vcvt.s32.f32 %v6303
  %6308 = vmatprep.subr.mxu0 0.0
  %6309 = vmatpush1.msra.mxu0 %v969
  %6310 = vmatprep.subr.mxu0 0.0
  %6311 = vmatpush1.msra.mxu0 %v970
  %6312 = vmatprep.subr.mxu0 0.0
  %6313 = vmatpush1.msra.mxu0 %v971
  %6314 = vmatprep.subr.mxu0 0.0
  %6315 = vmatpush1.msra.mxu0 %v972
  %6316 = vmatprep.subr.mxu0 0.0
  %6317 = vmatpush1.msra.mxu0 %v973
  %6318 = vmatprep.subr.mxu0 0.0
  %6319 = vmatpush1.msra.mxu0 %v974
  %6320 = vmatprep.subr.mxu0 0.0
  %6321 = vmatpush1.msra.mxu0 %v975
  %6322 = vmatprep.subr.mxu0 0.0
  %6323 = vmatpush1.msra.mxu0 %v976
  %6324 = vmatprep.subr.mxu0 0.0
  %6325 = vmatpush1.msra.mxu0 %v977
  %6326 = vmatprep.subr.mxu0 0.0
  %6327 = vmatpush1.msra.mxu0 %v978
  %6328 = vmatprep.subr.mxu0 0.0
  %6329 = vmatpush1.msra.mxu0 %v979
  %6330 = vmatprep.subr.mxu0 0.0
  %6331 = vmatpush1.msra.mxu0 %v980
  %6332 = vmatprep.subr.mxu0 0.0
  %6333 = vmatpush1.msra.mxu0 %v981
  %6334 = vmatprep.subr.mxu0 0.0
  %6335 = vmatpush1.msra.mxu0 %v982
  %6336 = vmatprep.subr.mxu0 0.0
  %6337 = vmatpush1.msra.mxu0 %v983
  %6338 = vmatprep.subr.mxu0 0.0
  %6339 = vmatpush1.msra.mxu0 %v984
  %6340 = vmatprep.subr.mxu0 0.0
  %6341 = vmatpush1.msra.mxu0 %v985
  %6342 = vmatprep.subr.mxu0 0.0
  %6343 = vmatpush1.msra.mxu0 %v986
  %6344 = vmatprep.subr.mxu0 0.0
  %6345 = vmatpush1.msra.mxu0 %v987
  %6346 = vmatprep.subr.mxu0 0.0
  %6347 = vmatpush1.msra.mxu0 %v988
  %6348 = vmatprep.subr.mxu0 0.0
  %6349 = vmatpush1.msra.mxu0 %v989
  %6350 = vmatprep.subr.mxu0 0.0
  %6351 = vmatpush1.msra.mxu0 %v990
  %6352 = vmatprep.subr.mxu0 0.0
  %6353 = vmatpush1.msra.mxu0 %v991
  %6354 = vmatprep.subr.mxu0 0.0
  %6355 = vmatpush1.msra.mxu0 %v992
  %6356 = vmatprep.subr.mxu0 0.0
  %6357 = vmatpush1.msra.mxu0 %v993
  %6358 = vmatprep.subr.mxu0 0.0
  %6359 = vmatpush1.msra.mxu0 %v994
  %6360 = vmatprep.subr.mxu0 0.0
  %6361 = vmatpush1.msra.mxu0 %v995
  %6362 = vmatprep.subr.mxu0 0.0
  %6363 = vmatpush1.msra.mxu0 %v996
  %6364 = vmatprep.subr.mxu0 0.0
  %6365 = vmatpush1.msra.mxu0 %v997
  %6366 = vmatprep.subr.mxu0 0.0
  %6367 = vmatpush1.msra.mxu0 %v998
  %6368 = vmatprep.subr.mxu0 0.0
  %6369 = vmatpush1.msra.mxu0 %v999
  %6370 = vmatprep.subr.mxu0 0.0
  %6371 = vmatpush1.msra.mxu0 %v1000
  %6372 = vmatprep.mubr.f32.mxu0 %v6305
  %6373 = vmatmul.mubr.f32.gmra.mrb[0].mxu0 %v6304
  %v6374 = vpop.f32.mrb[0].mxu0
  %v6375 = vadd.f32 %v1038, %v6374
  %v6376 = vpop.f32.mrb[0].mxu0
  %6377 = vdwg.mxu0
  %6378 = vmatprep.subr.mxu0 0.0
  %6379 = vmatpush1.msra.mxu0 %v1001
  %6380 = vmatprep.subr.mxu0 0.0
  %6381 = vmatpush1.msra.mxu0 %v1002
  %6382 = vmatprep.subr.mxu0 0.0
  %6383 = vmatpush1.msra.mxu0 %v1003
  %6384 = vmatprep.subr.mxu0 0.0
  %6385 = vmatpush1.msra.mxu0 %v1004
  %6386 = vmatprep.subr.mxu0 0.0
  %6387 = vmatpush1.msra.mxu0 %v1005
  %6388 = vmatprep.subr.mxu0 0.0
  %6389 = vmatpush1.msra.mxu0 %v1006
  %6390 = vmatprep.subr.mxu0 0.0
  %6391 = vmatpush1.msra.mxu0 %v1007
  %6392 = vmatprep.subr.mxu0 0.0
  %6393 = vmatpush1.msra.mxu0 %v1008
  %6394 = vmatprep.subr.mxu0 0.0
  %6395 = vmatpush1.msra.mxu0 %v1009
  %6396 = vmatprep.subr.mxu0 0.0
  %6397 = vmatpush1.msra.mxu0 %v1010
  %6398 = vmatprep.subr.mxu0 0.0
  %6399 = vmatpush1.msra.mxu0 %v1011
  %6400 = vmatprep.subr.mxu0 0.0
  %6401 = vmatpush1.msra.mxu0 %v1012
  %6402 = vmatprep.subr.mxu0 0.0
  %6403 = vmatpush1.msra.mxu0 %v1013
  %6404 = vmatprep.subr.mxu0 0.0
  %6405 = vmatpush1.msra.mxu0 %v1014
  %6406 = vmatprep.subr.mxu0 0.0
  %6407 = vmatpush1.msra.mxu0 %v1015
  %6408 = vmatprep.subr.mxu0 0.0
  %6409 = vmatpush1.msra.mxu0 %v1016
  %6410 = vmatprep.subr.mxu0 0.0
  %6411 = vmatpush1.msra.mxu0 %v1017
  %6412 = vmatprep.subr.mxu0 0.0
  %6413 = vmatpush1.msra.mxu0 %v1018
  %6414 = vmatprep.subr.mxu0 0.0
  %6415 = vmatpush1.msra.mxu0 %v1019
  %6416 = vmatprep.subr.mxu0 0.0
  %6417 = vmatpush1.msra.mxu0 %v1020
  %6418 = vmatprep.subr.mxu0 0.0
  %6419 = vmatpush1.msra.mxu0 %v1021
  %6420 = vmatprep.subr.mxu0 0.0
  %6421 = vmatpush1.msra.mxu0 %v1022
  %6422 = vmatprep.subr.mxu0 0.0
  %6423 = vmatpush1.msra.mxu0 %v1023
  %6424 = vmatprep.subr.mxu0 0.0
  %6425 = vmatpush1.msra.mxu0 %v1024
  %6426 = vmatprep.subr.mxu0 0.0
  %6427 = vmatpush1.msra.mxu0 %v1025
  %6428 = vmatprep.subr.mxu0 0.0
  %6429 = vmatpush1.msra.mxu0 %v1026
  %6430 = vmatprep.subr.mxu0 0.0
  %6431 = vmatpush1.msra.mxu0 %v1027
  %6432 = vmatprep.subr.mxu0 0.0
  %6433 = vmatpush1.msra.mxu0 %v1028
  %6434 = vmatprep.subr.mxu0 0.0
  %6435 = vmatpush1.msra.mxu0 %v1029
  %6436 = vmatprep.subr.mxu0 0.0
  %6437 = vmatpush1.msra.mxu0 %v1030
  %6438 = vmatprep.subr.mxu0 0.0
  %6439 = vmatpush1.msra.mxu0 %v1031
  %6440 = vmatprep.subr.mxu0 0.0
  %6441 = vmatpush1.msra.mxu0 %v1032
  %6442 = vmatprep.mubr.f32.mxu0 %v6307
  %6443 = vmatmul.mubr.f32.gmra.mrb[0].mxu0 %v6306
  %v6444 = vpop.f32.mrb[0].mxu0
  %v6445 = vadd.f32 %v6375, %v6444
  %v6446 = vpop.f32.mrb[0].mxu0
  %6447 = vdwg.mxu0
  %v6448 = vmul.f32 %v6275, 0.2
  %v6449 = vadd.f32 %v6448, %v6445
  %v6450 = vsel %vm6276, %v6445, %v6449
  %vm6451 = vcmp.gt.f32.partialorder %v6450, 0.5
  %v6452 = vsel %vm6451, 1, 0
  %v6453 = vcvt.s32.f32 %v6452
  %v6454 = vadd.f32 %v6279, %v6453
  %v6455 = vld [vmem:[#allocation2 + $0x3e0] sm:$0xff]
  %v6456 = vld [vmem:[#allocation2 + $0x3e8] sm:$0xff]
  %v6457 = vld [vmem:[#allocation2 + $0x3f0] sm:$0xff]
  %v6458 = vld [vmem:[#allocation2 + $0x3f8] sm:$0xff]
  %v6459 = vmul.f32 %v6292, 0.2
  %v6460 = vmul.f32 %v6293, 0.2
  %v6461 = vmul.f32 %v6294, 0.2
  %v6462 = vmul.f32 %v6295, 0.2
  %v6463 = vadd.f32 %v6459, %v6455
  %v6464 = vadd.f32 %v6460, %v6456
  %v6465 = vadd.f32 %v6461, %v6457
  %v6466 = vadd.f32 %v6462, %v6458
  %v6467 = vsel %vm6296, %v6455, %v6463
  %v6468 = vsel %vm6297, %v6456, %v6464
  %v6469 = vsel %vm6298, %v6457, %v6465
  %v6470 = vsel %vm6299, %v6458, %v6466
  %vm6471 = vcmp.gt.f32.partialorder %v6467, 0.5
  %vm6472 = vcmp.gt.f32.partialorder %v6468, 0.5
  %vm6473 = vcmp.gt.f32.partialorder %v6469, 0.5
  %vm6474 = vcmp.gt.f32.partialorder %v6470, 0.5
  %v6475 = vsel %vm6471, 1, 0
  %v6476 = vsel %vm6472, 1, 0
  %v6477 = vsel %vm6473, 1, 0
  %v6478 = vsel %vm6474, 1, 0
  %v6479 = vcvt.s32.f32 %v6475
  %v6480 = vcvt.s32.f32 %v6476
  %v6481 = vcvt.s32.f32 %v6477
  %v6482 = vcvt.s32.f32 %v6478
  %6483 = vmatprep.subr.mxu0 0.0
  %6484 = vmatpush1.msra.mxu0 %v969
  %6485 = vmatprep.subr.mxu0 0.0
  %6486 = vmatpush1.msra.mxu0 %v970
  %6487 = vmatprep.subr.mxu0 0.0
  %6488 = vmatpush1.msra.mxu0 %v971
  %6489 = vmatprep.subr.mxu0 0.0
  %6490 = vmatpush1.msra.mxu0 %v972
  %6491 = vmatprep.subr.mxu0 0.0
  %6492 = vmatpush1.msra.mxu0 %v973
  %6493 = vmatprep.subr.mxu0 0.0
  %6494 = vmatpush1.msra.mxu0 %v974
  %6495 = vmatprep.subr.mxu0 0.0
  %6496 = vmatpush1.msra.mxu0 %v975
  %6497 = vmatprep.subr.mxu0 0.0
  %6498 = vmatpush1.msra.mxu0 %v976
  %6499 = vmatprep.subr.mxu0 0.0
  %6500 = vmatpush1.msra.mxu0 %v977
  %6501 = vmatprep.subr.mxu0 0.0
  %6502 = vmatpush1.msra.mxu0 %v978
  %6503 = vmatprep.subr.mxu0 0.0
  %6504 = vmatpush1.msra.mxu0 %v979
  %6505 = vmatprep.subr.mxu0 0.0
  %6506 = vmatpush1.msra.mxu0 %v980
  %6507 = vmatprep.subr.mxu0 0.0
  %6508 = vmatpush1.msra.mxu0 %v981
  %6509 = vmatprep.subr.mxu0 0.0
  %6510 = vmatpush1.msra.mxu0 %v982
  %6511 = vmatprep.subr.mxu0 0.0
  %6512 = vmatpush1.msra.mxu0 %v983
  %6513 = vmatprep.subr.mxu0 0.0
  %6514 = vmatpush1.msra.mxu0 %v984
  %6515 = vmatprep.subr.mxu0 0.0
  %6516 = vmatpush1.msra.mxu0 %v985
  %6517 = vmatprep.subr.mxu0 0.0
  %6518 = vmatpush1.msra.mxu0 %v986
  %6519 = vmatprep.subr.mxu0 0.0
  %6520 = vmatpush1.msra.mxu0 %v987
  %6521 = vmatprep.subr.mxu0 0.0
  %6522 = vmatpush1.msra.mxu0 %v988
  %6523 = vmatprep.subr.mxu0 0.0
  %6524 = vmatpush1.msra.mxu0 %v989
  %6525 = vmatprep.subr.mxu0 0.0
  %6526 = vmatpush1.msra.mxu0 %v990
  %6527 = vmatprep.subr.mxu0 0.0
  %6528 = vmatpush1.msra.mxu0 %v991
  %6529 = vmatprep.subr.mxu0 0.0
  %6530 = vmatpush1.msra.mxu0 %v992
  %6531 = vmatprep.subr.mxu0 0.0
  %6532 = vmatpush1.msra.mxu0 %v993
  %6533 = vmatprep.subr.mxu0 0.0
  %6534 = vmatpush1.msra.mxu0 %v994
  %6535 = vmatprep.subr.mxu0 0.0
  %6536 = vmatpush1.msra.mxu0 %v995
  %6537 = vmatprep.subr.mxu0 0.0
  %6538 = vmatpush1.msra.mxu0 %v996
  %6539 = vmatprep.subr.mxu0 0.0
  %6540 = vmatpush1.msra.mxu0 %v997
  %6541 = vmatprep.subr.mxu0 0.0
  %6542 = vmatpush1.msra.mxu0 %v998
  %6543 = vmatprep.subr.mxu0 0.0
  %6544 = vmatpush1.msra.mxu0 %v999
  %6545 = vmatprep.subr.mxu0 0.0
  %6546 = vmatpush1.msra.mxu0 %v1000
  %6547 = vmatprep.mubr.f32.mxu0 %v6480
  %6548 = vmatmul.mubr.f32.gmra.mrb[0].mxu0 %v6479
  %v6549 = vpop.f32.mrb[0].mxu0
  %v6550 = vadd.f32 %v1038, %v6549
  %v6551 = vpop.f32.mrb[0].mxu0
  %6552 = vdwg.mxu0
  %6553 = vmatprep.subr.mxu0 0.0
  %6554 = vmatpush1.msra.mxu0 %v1001
  %6555 = vmatprep.subr.mxu0 0.0
  %6556 = vmatpush1.msra.mxu0 %v1002
  %6557 = vmatprep.subr.mxu0 0.0
  %6558 = vmatpush1.msra.mxu0 %v1003
  %6559 = vmatprep.subr.mxu0 0.0
  %6560 = vmatpush1.msra.mxu0 %v1004
  %6561 = vmatprep.subr.mxu0 0.0
  %6562 = vmatpush1.msra.mxu0 %v1005
  %6563 = vmatprep.subr.mxu0 0.0
  %6564 = vmatpush1.msra.mxu0 %v1006
  %6565 = vmatprep.subr.mxu0 0.0
  %6566 = vmatpush1.msra.mxu0 %v1007
  %6567 = vmatprep.subr.mxu0 0.0
  %6568 = vmatpush1.msra.mxu0 %v1008
  %6569 = vmatprep.subr.mxu0 0.0
  %6570 = vmatpush1.msra.mxu0 %v1009
  %6571 = vmatprep.subr.mxu0 0.0
  %6572 = vmatpush1.msra.mxu0 %v1010
  %6573 = vmatprep.subr.mxu0 0.0
  %6574 = vmatpush1.msra.mxu0 %v1011
  %6575 = vmatprep.subr.mxu0 0.0
  %6576 = vmatpush1.msra.mxu0 %v1012
  %6577 = vmatprep.subr.mxu0 0.0
  %6578 = vmatpush1.msra.mxu0 %v1013
  %6579 = vmatprep.subr.mxu0 0.0
  %6580 = vmatpush1.msra.mxu0 %v1014
  %6581 = vmatprep.subr.mxu0 0.0
  %6582 = vmatpush1.msra.mxu0 %v1015
  %6583 = vmatprep.subr.mxu0 0.0
  %6584 = vmatpush1.msra.mxu0 %v1016
  %6585 = vmatprep.subr.mxu0 0.0
  %6586 = vmatpush1.msra.mxu0 %v1017
  %6587 = vmatprep.subr.mxu0 0.0
  %6588 = vmatpush1.msra.mxu0 %v1018
  %6589 = vmatprep.subr.mxu0 0.0
  %6590 = vmatpush1.msra.mxu0 %v1019
  %6591 = vmatprep.subr.mxu0 0.0
  %6592 = vmatpush1.msra.mxu0 %v1020
  %6593 = vmatprep.subr.mxu0 0.0
  %6594 = vmatpush1.msra.mxu0 %v1021
  %6595 = vmatprep.subr.mxu0 0.0
  %6596 = vmatpush1.msra.mxu0 %v1022
  %6597 = vmatprep.subr.mxu0 0.0
  %6598 = vmatpush1.msra.mxu0 %v1023
  %6599 = vmatprep.subr.mxu0 0.0
  %6600 = vmatpush1.msra.mxu0 %v1024
  %6601 = vmatprep.subr.mxu0 0.0
  %6602 = vmatpush1.msra.mxu0 %v1025
  %6603 = vmatprep.subr.mxu0 0.0
  %6604 = vmatpush1.msra.mxu0 %v1026
  %6605 = vmatprep.subr.mxu0 0.0
  %6606 = vmatpush1.msra.mxu0 %v1027
  %6607 = vmatprep.subr.mxu0 0.0
  %6608 = vmatpush1.msra.mxu0 %v1028
  %6609 = vmatprep.subr.mxu0 0.0
  %6610 = vmatpush1.msra.mxu0 %v1029
  %6611 = vmatprep.subr.mxu0 0.0
  %6612 = vmatpush1.msra.mxu0 %v1030
  %6613 = vmatprep.subr.mxu0 0.0
  %6614 = vmatpush1.msra.mxu0 %v1031
  %6615 = vmatprep.subr.mxu0 0.0
  %6616 = vmatpush1.msra.mxu0 %v1032
  %6617 = vmatprep.mubr.f32.mxu0 %v6482
  %6618 = vmatmul.mubr.f32.gmra.mrb[0].mxu0 %v6481
  %v6619 = vpop.f32.mrb[0].mxu0
  %v6620 = vadd.f32 %v6550, %v6619
  %v6621 = vpop.f32.mrb[0].mxu0
  %6622 = vdwg.mxu0
  %v6623 = vmul.f32 %v6450, 0.2
  %v6624 = vadd.f32 %v6623, %v6620
  %v6625 = vsel %vm6451, %v6620, %v6624
  %vm6626 = vcmp.gt.f32.partialorder %v6625, 0.5
  %v6627 = vsel %vm6626, 1, 0
  %v6628 = vcvt.s32.f32 %v6627
  %v6629 = vadd.f32 %v6454, %v6628
  %v6630 = vld [vmem:[#allocation2 + $0x400] sm:$0xff]
  %v6631 = vld [vmem:[#allocation2 + $0x408] sm:$0xff]
  %v6632 = vld [vmem:[#allocation2 + $0x410] sm:$0xff]
  %v6633 = vld [vmem:[#allocation2 + $0x418] sm:$0xff]
  %v6634 = vmul.f32 %v6467, 0.2
  %v6635 = vmul.f32 %v6468, 0.2
  %v6636 = vmul.f32 %v6469, 0.2
  %v6637 = vmul.f32 %v6470, 0.2
  %v6638 = vadd.f32 %v6634, %v6630
  %v6639 = vadd.f32 %v6635, %v6631
  %v6640 = vadd.f32 %v6636, %v6632
  %v6641 = vadd.f32 %v6637, %v6633
  %v6642 = vsel %vm6471, %v6630, %v6638
  %v6643 = vsel %vm6472, %v6631, %v6639
  %v6644 = vsel %vm6473, %v6632, %v6640
  %v6645 = vsel %vm6474, %v6633, %v6641
  %vm6646 = vcmp.gt.f32.partialorder %v6642, 0.5
  %vm6647 = vcmp.gt.f32.partialorder %v6643, 0.5
  %vm6648 = vcmp.gt.f32.partialorder %v6644, 0.5
  %vm6649 = vcmp.gt.f32.partialorder %v6645, 0.5
  %v6650 = vsel %vm6646, 1, 0
  %v6651 = vsel %vm6647, 1, 0
  %v6652 = vsel %vm6648, 1, 0
  %v6653 = vsel %vm6649, 1, 0
  %v6654 = vcvt.s32.f32 %v6650
  %v6655 = vcvt.s32.f32 %v6651
  %v6656 = vcvt.s32.f32 %v6652
  %v6657 = vcvt.s32.f32 %v6653
  %6658 = vmatprep.subr.mxu0 0.0
  %6659 = vmatpush1.msra.mxu0 %v969
  %6660 = vmatprep.subr.mxu0 0.0
  %6661 = vmatpush1.msra.mxu0 %v970
  %6662 = vmatprep.subr.mxu0 0.0
  %6663 = vmatpush1.msra.mxu0 %v971
  %6664 = vmatprep.subr.mxu0 0.0
  %6665 = vmatpush1.msra.mxu0 %v972
  %6666 = vmatprep.subr.mxu0 0.0
  %6667 = vmatpush1.msra.mxu0 %v973
  %6668 = vmatprep.subr.mxu0 0.0
  %6669 = vmatpush1.msra.mxu0 %v974
  %6670 = vmatprep.subr.mxu0 0.0
  %6671 = vmatpush1.msra.mxu0 %v975
  %6672 = vmatprep.subr.mxu0 0.0
  %6673 = vmatpush1.msra.mxu0 %v976
  %6674 = vmatprep.subr.mxu0 0.0
  %6675 = vmatpush1.msra.mxu0 %v977
  %6676 = vmatprep.subr.mxu0 0.0
  %6677 = vmatpush1.msra.mxu0 %v978
  %6678 = vmatprep.subr.mxu0 0.0
  %6679 = vmatpush1.msra.mxu0 %v979
  %6680 = vmatprep.subr.mxu0 0.0
  %6681 = vmatpush1.msra.mxu0 %v980
  %6682 = vmatprep.subr.mxu0 0.0
  %6683 = vmatpush1.msra.mxu0 %v981
  %6684 = vmatprep.subr.mxu0 0.0
  %6685 = vmatpush1.msra.mxu0 %v982
  %6686 = vmatprep.subr.mxu0 0.0
  %6687 = vmatpush1.msra.mxu0 %v983
  %6688 = vmatprep.subr.mxu0 0.0
  %6689 = vmatpush1.msra.mxu0 %v984
  %6690 = vmatprep.subr.mxu0 0.0
  %6691 = vmatpush1.msra.mxu0 %v985
  %6692 = vmatprep.subr.mxu0 0.0
  %6693 = vmatpush1.msra.mxu0 %v986
  %6694 = vmatprep.subr.mxu0 0.0
  %6695 = vmatpush1.msra.mxu0 %v987
  %6696 = vmatprep.subr.mxu0 0.0
  %6697 = vmatpush1.msra.mxu0 %v988
  %6698 = vmatprep.subr.mxu0 0.0
  %6699 = vmatpush1.msra.mxu0 %v989
  %6700 = vmatprep.subr.mxu0 0.0
  %6701 = vmatpush1.msra.mxu0 %v990
  %6702 = vmatprep.subr.mxu0 0.0
  %6703 = vmatpush1.msra.mxu0 %v991
  %6704 = vmatprep.subr.mxu0 0.0
  %6705 = vmatpush1.msra.mxu0 %v992
  %6706 = vmatprep.subr.mxu0 0.0
  %6707 = vmatpush1.msra.mxu0 %v993
  %6708 = vmatprep.subr.mxu0 0.0
  %6709 = vmatpush1.msra.mxu0 %v994
  %6710 = vmatprep.subr.mxu0 0.0
  %6711 = vmatpush1.msra.mxu0 %v995
  %6712 = vmatprep.subr.mxu0 0.0
  %6713 = vmatpush1.msra.mxu0 %v996
  %6714 = vmatprep.subr.mxu0 0.0
  %6715 = vmatpush1.msra.mxu0 %v997
  %6716 = vmatprep.subr.mxu0 0.0
  %6717 = vmatpush1.msra.mxu0 %v998
  %6718 = vmatprep.subr.mxu0 0.0
  %6719 = vmatpush1.msra.mxu0 %v999
  %6720 = vmatprep.subr.mxu0 0.0
  %6721 = vmatpush1.msra.mxu0 %v1000
  %6722 = vmatprep.mubr.f32.mxu0 %v6655
  %6723 = vmatmul.mubr.f32.gmra.mrb[0].mxu0 %v6654
  %v6724 = vpop.f32.mrb[0].mxu0
  %v6725 = vadd.f32 %v1038, %v6724
  %v6726 = vpop.f32.mrb[0].mxu0
  %6727 = vdwg.mxu0
  %6728 = vmatprep.subr.mxu0 0.0
  %6729 = vmatpush1.msra.mxu0 %v1001
  %6730 = vmatprep.subr.mxu0 0.0
  %6731 = vmatpush1.msra.mxu0 %v1002
  %6732 = vmatprep.subr.mxu0 0.0
  %6733 = vmatpush1.msra.mxu0 %v1003
  %6734 = vmatprep.subr.mxu0 0.0
  %6735 = vmatpush1.msra.mxu0 %v1004
  %6736 = vmatprep.subr.mxu0 0.0
  %6737 = vmatpush1.msra.mxu0 %v1005
  %6738 = vmatprep.subr.mxu0 0.0
  %6739 = vmatpush1.msra.mxu0 %v1006
  %6740 = vmatprep.subr.mxu0 0.0
  %6741 = vmatpush1.msra.mxu0 %v1007
  %6742 = vmatprep.subr.mxu0 0.0
  %6743 = vmatpush1.msra.mxu0 %v1008
  %6744 = vmatprep.subr.mxu0 0.0
  %6745 = vmatpush1.msra.mxu0 %v1009
  %6746 = vmatprep.subr.mxu0 0.0
  %6747 = vmatpush1.msra.mxu0 %v1010
  %6748 = vmatprep.subr.mxu0 0.0
  %6749 = vmatpush1.msra.mxu0 %v1011
  %6750 = vmatprep.subr.mxu0 0.0
  %6751 = vmatpush1.msra.mxu0 %v1012
  %6752 = vmatprep.subr.mxu0 0.0
  %6753 = vmatpush1.msra.mxu0 %v1013
  %6754 = vmatprep.subr.mxu0 0.0
  %6755 = vmatpush1.msra.mxu0 %v1014
  %6756 = vmatprep.subr.mxu0 0.0
  %6757 = vmatpush1.msra.mxu0 %v1015
  %6758 = vmatprep.subr.mxu0 0.0
  %6759 = vmatpush1.msra.mxu0 %v1016
  %6760 = vmatprep.subr.mxu0 0.0
  %6761 = vmatpush1.msra.mxu0 %v1017
  %6762 = vmatprep.subr.mxu0 0.0
  %6763 = vmatpush1.msra.mxu0 %v1018
  %6764 = vmatprep.subr.mxu0 0.0
  %6765 = vmatpush1.msra.mxu0 %v1019
  %6766 = vmatprep.subr.mxu0 0.0
  %6767 = vmatpush1.msra.mxu0 %v1020
  %6768 = vmatprep.subr.mxu0 0.0
  %6769 = vmatpush1.msra.mxu0 %v1021
  %6770 = vmatprep.subr.mxu0 0.0
  %6771 = vmatpush1.msra.mxu0 %v1022
  %6772 = vmatprep.subr.mxu0 0.0
  %6773 = vmatpush1.msra.mxu0 %v1023
  %6774 = vmatprep.subr.mxu0 0.0
  %6775 = vmatpush1.msra.mxu0 %v1024
  %6776 = vmatprep.subr.mxu0 0.0
  %6777 = vmatpush1.msra.mxu0 %v1025
  %6778 = vmatprep.subr.mxu0 0.0
  %6779 = vmatpush1.msra.mxu0 %v1026
  %6780 = vmatprep.subr.mxu0 0.0
  %6781 = vmatpush1.msra.mxu0 %v1027
  %6782 = vmatprep.subr.mxu0 0.0
  %6783 = vmatpush1.msra.mxu0 %v1028
  %6784 = vmatprep.subr.mxu0 0.0
  %6785 = vmatpush1.msra.mxu0 %v1029
  %6786 = vmatprep.subr.mxu0 0.0
  %6787 = vmatpush1.msra.mxu0 %v1030
  %6788 = vmatprep.subr.mxu0 0.0
  %6789 = vmatpush1.msra.mxu0 %v1031
  %6790 = vmatprep.subr.mxu0 0.0
  %6791 = vmatpush1.msra.mxu0 %v1032
  %6792 = vmatprep.mubr.f32.mxu0 %v6657
  %6793 = vmatmul.mubr.f32.gmra.mrb[0].mxu0 %v6656
  %v6794 = vpop.f32.mrb[0].mxu0
  %v6795 = vadd.f32 %v6725, %v6794
  %v6796 = vpop.f32.mrb[0].mxu0
  %6797 = vdwg.mxu0
  %v6798 = vmul.f32 %v6625, 0.2
  %v6799 = vadd.f32 %v6798, %v6795
  %v6800 = vsel %vm6626, %v6795, %v6799
  %vm6801 = vcmp.gt.f32.partialorder %v6800, 0.5
  %v6802 = vsel %vm6801, 1, 0
  %v6803 = vcvt.s32.f32 %v6802
  %v6804 = vadd.f32 %v6629, %v6803
  %v6805 = vld [vmem:[#allocation2 + $0x420] sm:$0xff]
  %v6806 = vld [vmem:[#allocation2 + $0x428] sm:$0xff]
  %v6807 = vld [vmem:[#allocation2 + $0x430] sm:$0xff]
  %v6808 = vld [vmem:[#allocation2 + $0x438] sm:$0xff]
  %v6809 = vmul.f32 %v6642, 0.2
  %v6810 = vmul.f32 %v6643, 0.2
  %v6811 = vmul.f32 %v6644, 0.2
  %v6812 = vmul.f32 %v6645, 0.2
  %v6813 = vadd.f32 %v6809, %v6805
  %v6814 = vadd.f32 %v6810, %v6806
  %v6815 = vadd.f32 %v6811, %v6807
  %v6816 = vadd.f32 %v6812, %v6808
  %v6817 = vsel %vm6646, %v6805, %v6813
  %v6818 = vsel %vm6647, %v6806, %v6814
  %v6819 = vsel %vm6648, %v6807, %v6815
  %v6820 = vsel %vm6649, %v6808, %v6816
  %vm6821 = vcmp.gt.f32.partialorder %v6817, 0.5
  %vm6822 = vcmp.gt.f32.partialorder %v6818, 0.5
  %vm6823 = vcmp.gt.f32.partialorder %v6819, 0.5
  %vm6824 = vcmp.gt.f32.partialorder %v6820, 0.5
  %v6825 = vsel %vm6821, 1, 0
  %v6826 = vsel %vm6822, 1, 0
  %v6827 = vsel %vm6823, 1, 0
  %v6828 = vsel %vm6824, 1, 0
  %v6829 = vcvt.s32.f32 %v6825
  %v6830 = vcvt.s32.f32 %v6826
  %v6831 = vcvt.s32.f32 %v6827
  %v6832 = vcvt.s32.f32 %v6828
  %6833 = vmatprep.subr.mxu0 0.0
  %6834 = vmatpush1.msra.mxu0 %v969
  %6835 = vmatprep.subr.mxu0 0.0
  %6836 = vmatpush1.msra.mxu0 %v970
  %6837 = vmatprep.subr.mxu0 0.0
  %6838 = vmatpush1.msra.mxu0 %v971
  %6839 = vmatprep.subr.mxu0 0.0
  %6840 = vmatpush1.msra.mxu0 %v972
  %6841 = vmatprep.subr.mxu0 0.0
  %6842 = vmatpush1.msra.mxu0 %v973
  %6843 = vmatprep.subr.mxu0 0.0
  %6844 = vmatpush1.msra.mxu0 %v974
  %6845 = vmatprep.subr.mxu0 0.0
  %6846 = vmatpush1.msra.mxu0 %v975
  %6847 = vmatprep.subr.mxu0 0.0
  %6848 = vmatpush1.msra.mxu0 %v976
  %6849 = vmatprep.subr.mxu0 0.0
  %6850 = vmatpush1.msra.mxu0 %v977
  %6851 = vmatprep.subr.mxu0 0.0
  %6852 = vmatpush1.msra.mxu0 %v978
  %6853 = vmatprep.subr.mxu0 0.0
  %6854 = vmatpush1.msra.mxu0 %v979
  %6855 = vmatprep.subr.mxu0 0.0
  %6856 = vmatpush1.msra.mxu0 %v980
  %6857 = vmatprep.subr.mxu0 0.0
  %6858 = vmatpush1.msra.mxu0 %v981
  %6859 = vmatprep.subr.mxu0 0.0
  %6860 = vmatpush1.msra.mxu0 %v982
  %6861 = vmatprep.subr.mxu0 0.0
  %6862 = vmatpush1.msra.mxu0 %v983
  %6863 = vmatprep.subr.mxu0 0.0
  %6864 = vmatpush1.msra.mxu0 %v984
  %6865 = vmatprep.subr.mxu0 0.0
  %6866 = vmatpush1.msra.mxu0 %v985
  %6867 = vmatprep.subr.mxu0 0.0
  %6868 = vmatpush1.msra.mxu0 %v986
  %6869 = vmatprep.subr.mxu0 0.0
  %6870 = vmatpush1.msra.mxu0 %v987
  %6871 = vmatprep.subr.mxu0 0.0
  %6872 = vmatpush1.msra.mxu0 %v988
  %6873 = vmatprep.subr.mxu0 0.0
  %6874 = vmatpush1.msra.mxu0 %v989
  %6875 = vmatprep.subr.mxu0 0.0
  %6876 = vmatpush1.msra.mxu0 %v990
  %6877 = vmatprep.subr.mxu0 0.0
  %6878 = vmatpush1.msra.mxu0 %v991
  %6879 = vmatprep.subr.mxu0 0.0
  %6880 = vmatpush1.msra.mxu0 %v992
  %6881 = vmatprep.subr.mxu0 0.0
  %6882 = vmatpush1.msra.mxu0 %v993
  %6883 = vmatprep.subr.mxu0 0.0
  %6884 = vmatpush1.msra.mxu0 %v994
  %6885 = vmatprep.subr.mxu0 0.0
  %6886 = vmatpush1.msra.mxu0 %v995
  %6887 = vmatprep.subr.mxu0 0.0
  %6888 = vmatpush1.msra.mxu0 %v996
  %6889 = vmatprep.subr.mxu0 0.0
  %6890 = vmatpush1.msra.mxu0 %v997
  %6891 = vmatprep.subr.mxu0 0.0
  %6892 = vmatpush1.msra.mxu0 %v998
  %6893 = vmatprep.subr.mxu0 0.0
  %6894 = vmatpush1.msra.mxu0 %v999
  %6895 = vmatprep.subr.mxu0 0.0
  %6896 = vmatpush1.msra.mxu0 %v1000
  %6897 = vmatprep.mubr.f32.mxu0 %v6830
  %6898 = vmatmul.mubr.f32.gmra.mrb[0].mxu0 %v6829
  %v6899 = vpop.f32.mrb[0].mxu0
  %v6900 = vadd.f32 %v1038, %v6899
  %v6901 = vpop.f32.mrb[0].mxu0
  %6902 = vdwg.mxu0
  %6903 = vmatprep.subr.mxu0 0.0
  %6904 = vmatpush1.msra.mxu0 %v1001
  %6905 = vmatprep.subr.mxu0 0.0
  %6906 = vmatpush1.msra.mxu0 %v1002
  %6907 = vmatprep.subr.mxu0 0.0
  %6908 = vmatpush1.msra.mxu0 %v1003
  %6909 = vmatprep.subr.mxu0 0.0
  %6910 = vmatpush1.msra.mxu0 %v1004
  %6911 = vmatprep.subr.mxu0 0.0
  %6912 = vmatpush1.msra.mxu0 %v1005
  %6913 = vmatprep.subr.mxu0 0.0
  %6914 = vmatpush1.msra.mxu0 %v1006
  %6915 = vmatprep.subr.mxu0 0.0
  %6916 = vmatpush1.msra.mxu0 %v1007
  %6917 = vmatprep.subr.mxu0 0.0
  %6918 = vmatpush1.msra.mxu0 %v1008
  %6919 = vmatprep.subr.mxu0 0.0
  %6920 = vmatpush1.msra.mxu0 %v1009
  %6921 = vmatprep.subr.mxu0 0.0
  %6922 = vmatpush1.msra.mxu0 %v1010
  %6923 = vmatprep.subr.mxu0 0.0
  %6924 = vmatpush1.msra.mxu0 %v1011
  %6925 = vmatprep.subr.mxu0 0.0
  %6926 = vmatpush1.msra.mxu0 %v1012
  %6927 = vmatprep.subr.mxu0 0.0
  %6928 = vmatpush1.msra.mxu0 %v1013
  %6929 = vmatprep.subr.mxu0 0.0
  %6930 = vmatpush1.msra.mxu0 %v1014
  %6931 = vmatprep.subr.mxu0 0.0
  %6932 = vmatpush1.msra.mxu0 %v1015
  %6933 = vmatprep.subr.mxu0 0.0
  %6934 = vmatpush1.msra.mxu0 %v1016
  %6935 = vmatprep.subr.mxu0 0.0
  %6936 = vmatpush1.msra.mxu0 %v1017
  %6937 = vmatprep.subr.mxu0 0.0
  %6938 = vmatpush1.msra.mxu0 %v1018
  %6939 = vmatprep.subr.mxu0 0.0
  %6940 = vmatpush1.msra.mxu0 %v1019
  %6941 = vmatprep.subr.mxu0 0.0
  %6942 = vmatpush1.msra.mxu0 %v1020
  %6943 = vmatprep.subr.mxu0 0.0
  %6944 = vmatpush1.msra.mxu0 %v1021
  %6945 = vmatprep.subr.mxu0 0.0
  %6946 = vmatpush1.msra.mxu0 %v1022
  %6947 = vmatprep.subr.mxu0 0.0
  %6948 = vmatpush1.msra.mxu0 %v1023
  %6949 = vmatprep.subr.mxu0 0.0
  %6950 = vmatpush1.msra.mxu0 %v1024
  %6951 = vmatprep.subr.mxu0 0.0
  %6952 = vmatpush1.msra.mxu0 %v1025
  %6953 = vmatprep.subr.mxu0 0.0
  %6954 = vmatpush1.msra.mxu0 %v1026
  %6955 = vmatprep.subr.mxu0 0.0
  %6956 = vmatpush1.msra.mxu0 %v1027
  %6957 = vmatprep.subr.mxu0 0.0
  %6958 = vmatpush1.msra.mxu0 %v1028
  %6959 = vmatprep.subr.mxu0 0.0
  %6960 = vmatpush1.msra.mxu0 %v1029
  %6961 = vmatprep.subr.mxu0 0.0
  %6962 = vmatpush1.msra.mxu0 %v1030
  %6963 = vmatprep.subr.mxu0 0.0
  %6964 = vmatpush1.msra.mxu0 %v1031
  %6965 = vmatprep.subr.mxu0 0.0
  %6966 = vmatpush1.msra.mxu0 %v1032
  %6967 = vmatprep.mubr.f32.mxu0 %v6832
  %6968 = vmatmul.mubr.f32.gmra.mrb[0].mxu0 %v6831
  %v6969 = vpop.f32.mrb[0].mxu0
  %v6970 = vadd.f32 %v6900, %v6969
  %v6971 = vpop.f32.mrb[0].mxu0
  %6972 = vdwg.mxu0
  %v6973 = vmul.f32 %v6800, 0.2
  %v6974 = vadd.f32 %v6973, %v6970
  %v6975 = vsel %vm6801, %v6970, %v6974
  %vm6976 = vcmp.gt.f32.partialorder %v6975, 0.5
  %v6977 = vsel %vm6976, 1, 0
  %v6978 = vcvt.s32.f32 %v6977
  %v6979 = vadd.f32 %v6804, %v6978
  %v6980 = vld [vmem:[#allocation2 + $0x440] sm:$0xff]
  %v6981 = vld [vmem:[#allocation2 + $0x448] sm:$0xff]
  %v6982 = vld [vmem:[#allocation2 + $0x450] sm:$0xff]
  %v6983 = vld [vmem:[#allocation2 + $0x458] sm:$0xff]
  %v6984 = vmul.f32 %v6817, 0.2
  %v6985 = vmul.f32 %v6818, 0.2
  %v6986 = vmul.f32 %v6819, 0.2
  %v6987 = vmul.f32 %v6820, 0.2
  %v6988 = vadd.f32 %v6984, %v6980
  %v6989 = vadd.f32 %v6985, %v6981
  %v6990 = vadd.f32 %v6986, %v6982
  %v6991 = vadd.f32 %v6987, %v6983
  %v6992 = vsel %vm6821, %v6980, %v6988
  %v6993 = vsel %vm6822, %v6981, %v6989
  %v6994 = vsel %vm6823, %v6982, %v6990
  %v6995 = vsel %vm6824, %v6983, %v6991
  %vm6996 = vcmp.gt.f32.partialorder %v6992, 0.5
  %vm6997 = vcmp.gt.f32.partialorder %v6993, 0.5
  %vm6998 = vcmp.gt.f32.partialorder %v6994, 0.5
  %vm6999 = vcmp.gt.f32.partialorder %v6995, 0.5
  %v7000 = vsel %vm6996, 1, 0
  %v7001 = vsel %vm6997, 1, 0
  %v7002 = vsel %vm6998, 1, 0
  %v7003 = vsel %vm6999, 1, 0
  %v7004 = vcvt.s32.f32 %v7000
  %v7005 = vcvt.s32.f32 %v7001
  %v7006 = vcvt.s32.f32 %v7002
  %v7007 = vcvt.s32.f32 %v7003
  %7008 = vmatprep.subr.mxu0 0.0
  %7009 = vmatpush1.msra.mxu0 %v969
  %7010 = vmatprep.subr.mxu0 0.0
  %7011 = vmatpush1.msra.mxu0 %v970
  %7012 = vmatprep.subr.mxu0 0.0
  %7013 = vmatpush1.msra.mxu0 %v971
  %7014 = vmatprep.subr.mxu0 0.0
  %7015 = vmatpush1.msra.mxu0 %v972
  %7016 = vmatprep.subr.mxu0 0.0
  %7017 = vmatpush1.msra.mxu0 %v973
  %7018 = vmatprep.subr.mxu0 0.0
  %7019 = vmatpush1.msra.mxu0 %v974
  %7020 = vmatprep.subr.mxu0 0.0
  %7021 = vmatpush1.msra.mxu0 %v975
  %7022 = vmatprep.subr.mxu0 0.0
  %7023 = vmatpush1.msra.mxu0 %v976
  %7024 = vmatprep.subr.mxu0 0.0
  %7025 = vmatpush1.msra.mxu0 %v977
  %7026 = vmatprep.subr.mxu0 0.0
  %7027 = vmatpush1.msra.mxu0 %v978
  %7028 = vmatprep.subr.mxu0 0.0
  %7029 = vmatpush1.msra.mxu0 %v979
  %7030 = vmatprep.subr.mxu0 0.0
  %7031 = vmatpush1.msra.mxu0 %v980
  %7032 = vmatprep.subr.mxu0 0.0
  %7033 = vmatpush1.msra.mxu0 %v981
  %7034 = vmatprep.subr.mxu0 0.0
  %7035 = vmatpush1.msra.mxu0 %v982
  %7036 = vmatprep.subr.mxu0 0.0
  %7037 = vmatpush1.msra.mxu0 %v983
  %7038 = vmatprep.subr.mxu0 0.0
  %7039 = vmatpush1.msra.mxu0 %v984
  %7040 = vmatprep.subr.mxu0 0.0
  %7041 = vmatpush1.msra.mxu0 %v985
  %7042 = vmatprep.subr.mxu0 0.0
  %7043 = vmatpush1.msra.mxu0 %v986
  %7044 = vmatprep.subr.mxu0 0.0
  %7045 = vmatpush1.msra.mxu0 %v987
  %7046 = vmatprep.subr.mxu0 0.0
  %7047 = vmatpush1.msra.mxu0 %v988
  %7048 = vmatprep.subr.mxu0 0.0
  %7049 = vmatpush1.msra.mxu0 %v989
  %7050 = vmatprep.subr.mxu0 0.0
  %7051 = vmatpush1.msra.mxu0 %v990
  %7052 = vmatprep.subr.mxu0 0.0
  %7053 = vmatpush1.msra.mxu0 %v991
  %7054 = vmatprep.subr.mxu0 0.0
  %7055 = vmatpush1.msra.mxu0 %v992
  %7056 = vmatprep.subr.mxu0 0.0
  %7057 = vmatpush1.msra.mxu0 %v993
  %7058 = vmatprep.subr.mxu0 0.0
  %7059 = vmatpush1.msra.mxu0 %v994
  %7060 = vmatprep.subr.mxu0 0.0
  %7061 = vmatpush1.msra.mxu0 %v995
  %7062 = vmatprep.subr.mxu0 0.0
  %7063 = vmatpush1.msra.mxu0 %v996
  %7064 = vmatprep.subr.mxu0 0.0
  %7065 = vmatpush1.msra.mxu0 %v997
  %7066 = vmatprep.subr.mxu0 0.0
  %7067 = vmatpush1.msra.mxu0 %v998
  %7068 = vmatprep.subr.mxu0 0.0
  %7069 = vmatpush1.msra.mxu0 %v999
  %7070 = vmatprep.subr.mxu0 0.0
  %7071 = vmatpush1.msra.mxu0 %v1000
  %7072 = vmatprep.mubr.f32.mxu0 %v7005
  %7073 = vmatmul.mubr.f32.gmra.mrb[0].mxu0 %v7004
  %v7074 = vpop.f32.mrb[0].mxu0
  %v7075 = vadd.f32 %v1038, %v7074
  %v7076 = vpop.f32.mrb[0].mxu0
  %7077 = vdwg.mxu0
  %7078 = vmatprep.subr.mxu0 0.0
  %7079 = vmatpush1.msra.mxu0 %v1001
  %7080 = vmatprep.subr.mxu0 0.0
  %7081 = vmatpush1.msra.mxu0 %v1002
  %7082 = vmatprep.subr.mxu0 0.0
  %7083 = vmatpush1.msra.mxu0 %v1003
  %7084 = vmatprep.subr.mxu0 0.0
  %7085 = vmatpush1.msra.mxu0 %v1004
  %7086 = vmatprep.subr.mxu0 0.0
  %7087 = vmatpush1.msra.mxu0 %v1005
  %7088 = vmatprep.subr.mxu0 0.0
  %7089 = vmatpush1.msra.mxu0 %v1006
  %7090 = vmatprep.subr.mxu0 0.0
  %7091 = vmatpush1.msra.mxu0 %v1007
  %7092 = vmatprep.subr.mxu0 0.0
  %7093 = vmatpush1.msra.mxu0 %v1008
  %7094 = vmatprep.subr.mxu0 0.0
  %7095 = vmatpush1.msra.mxu0 %v1009
  %7096 = vmatprep.subr.mxu0 0.0
  %7097 = vmatpush1.msra.mxu0 %v1010
  %7098 = vmatprep.subr.mxu0 0.0
  %7099 = vmatpush1.msra.mxu0 %v1011
  %7100 = vmatprep.subr.mxu0 0.0
  %7101 = vmatpush1.msra.mxu0 %v1012
  %7102 = vmatprep.subr.mxu0 0.0
  %7103 = vmatpush1.msra.mxu0 %v1013
  %7104 = vmatprep.subr.mxu0 0.0
  %7105 = vmatpush1.msra.mxu0 %v1014
  %7106 = vmatprep.subr.mxu0 0.0
  %7107 = vmatpush1.msra.mxu0 %v1015
  %7108 = vmatprep.subr.mxu0 0.0
  %7109 = vmatpush1.msra.mxu0 %v1016
  %7110 = vmatprep.subr.mxu0 0.0
  %7111 = vmatpush1.msra.mxu0 %v1017
  %7112 = vmatprep.subr.mxu0 0.0
  %7113 = vmatpush1.msra.mxu0 %v1018
  %7114 = vmatprep.subr.mxu0 0.0
  %7115 = vmatpush1.msra.mxu0 %v1019
  %7116 = vmatprep.subr.mxu0 0.0
  %7117 = vmatpush1.msra.mxu0 %v1020
  %7118 = vmatprep.subr.mxu0 0.0
  %7119 = vmatpush1.msra.mxu0 %v1021
  %7120 = vmatprep.subr.mxu0 0.0
  %7121 = vmatpush1.msra.mxu0 %v1022
  %7122 = vmatprep.subr.mxu0 0.0
  %7123 = vmatpush1.msra.mxu0 %v1023
  %7124 = vmatprep.subr.mxu0 0.0
  %7125 = vmatpush1.msra.mxu0 %v1024
  %7126 = vmatprep.subr.mxu0 0.0
  %7127 = vmatpush1.msra.mxu0 %v1025
  %7128 = vmatprep.subr.mxu0 0.0
  %7129 = vmatpush1.msra.mxu0 %v1026
  %7130 = vmatprep.subr.mxu0 0.0
  %7131 = vmatpush1.msra.mxu0 %v1027
  %7132 = vmatprep.subr.mxu0 0.0
  %7133 = vmatpush1.msra.mxu0 %v1028
  %7134 = vmatprep.subr.mxu0 0.0
  %7135 = vmatpush1.msra.mxu0 %v1029
  %7136 = vmatprep.subr.mxu0 0.0
  %7137 = vmatpush1.msra.mxu0 %v1030
  %7138 = vmatprep.subr.mxu0 0.0
  %7139 = vmatpush1.msra.mxu0 %v1031
  %7140 = vmatprep.subr.mxu0 0.0
  %7141 = vmatpush1.msra.mxu0 %v1032
  %7142 = vmatprep.mubr.f32.mxu0 %v7007
  %7143 = vmatmul.mubr.f32.gmra.mrb[0].mxu0 %v7006
  %v7144 = vpop.f32.mrb[0].mxu0
  %v7145 = vadd.f32 %v7075, %v7144
  %v7146 = vpop.f32.mrb[0].mxu0
  %7147 = vdwg.mxu0
  %v7148 = vmul.f32 %v6975, 0.2
  %v7149 = vadd.f32 %v7148, %v7145
  %v7150 = vsel %vm6976, %v7145, %v7149
  %vm7151 = vcmp.gt.f32.partialorder %v7150, 0.5
  %v7152 = vsel %vm7151, 1, 0
  %v7153 = vcvt.s32.f32 %v7152
  %v7154 = vadd.f32 %v6979, %v7153
  %v7155 = vld [vmem:[#allocation2 + $0x460] sm:$0xff]
  %v7156 = vld [vmem:[#allocation2 + $0x468] sm:$0xff]
  %v7157 = vld [vmem:[#allocation2 + $0x470] sm:$0xff]
  %v7158 = vld [vmem:[#allocation2 + $0x478] sm:$0xff]
  %v7159 = vmul.f32 %v6992, 0.2
  %v7160 = vmul.f32 %v6993, 0.2
  %v7161 = vmul.f32 %v6994, 0.2
  %v7162 = vmul.f32 %v6995, 0.2
  %v7163 = vadd.f32 %v7159, %v7155
  %v7164 = vadd.f32 %v7160, %v7156
  %v7165 = vadd.f32 %v7161, %v7157
  %v7166 = vadd.f32 %v7162, %v7158
  %v7167 = vsel %vm6996, %v7155, %v7163
  %v7168 = vsel %vm6997, %v7156, %v7164
  %v7169 = vsel %vm6998, %v7157, %v7165
  %v7170 = vsel %vm6999, %v7158, %v7166
  %vm7171 = vcmp.gt.f32.partialorder %v7167, 0.5
  %vm7172 = vcmp.gt.f32.partialorder %v7168, 0.5
  %vm7173 = vcmp.gt.f32.partialorder %v7169, 0.5
  %vm7174 = vcmp.gt.f32.partialorder %v7170, 0.5
  %v7175 = vsel %vm7171, 1, 0
  %v7176 = vsel %vm7172, 1, 0
  %v7177 = vsel %vm7173, 1, 0
  %v7178 = vsel %vm7174, 1, 0
  %v7179 = vcvt.s32.f32 %v7175
  %v7180 = vcvt.s32.f32 %v7176
  %v7181 = vcvt.s32.f32 %v7177
  %v7182 = vcvt.s32.f32 %v7178
  %7183 = vmatprep.subr.mxu0 0.0
  %7184 = vmatpush1.msra.mxu0 %v969
  %7185 = vmatprep.subr.mxu0 0.0
  %7186 = vmatpush1.msra.mxu0 %v970
  %7187 = vmatprep.subr.mxu0 0.0
  %7188 = vmatpush1.msra.mxu0 %v971
  %7189 = vmatprep.subr.mxu0 0.0
  %7190 = vmatpush1.msra.mxu0 %v972
  %7191 = vmatprep.subr.mxu0 0.0
  %7192 = vmatpush1.msra.mxu0 %v973
  %7193 = vmatprep.subr.mxu0 0.0
  %7194 = vmatpush1.msra.mxu0 %v974
  %7195 = vmatprep.subr.mxu0 0.0
  %7196 = vmatpush1.msra.mxu0 %v975
  %7197 = vmatprep.subr.mxu0 0.0
  %7198 = vmatpush1.msra.mxu0 %v976
  %7199 = vmatprep.subr.mxu0 0.0
  %7200 = vmatpush1.msra.mxu0 %v977
  %7201 = vmatprep.subr.mxu0 0.0
  %7202 = vmatpush1.msra.mxu0 %v978
  %7203 = vmatprep.subr.mxu0 0.0
  %7204 = vmatpush1.msra.mxu0 %v979
  %7205 = vmatprep.subr.mxu0 0.0
  %7206 = vmatpush1.msra.mxu0 %v980
  %7207 = vmatprep.subr.mxu0 0.0
  %7208 = vmatpush1.msra.mxu0 %v981
  %7209 = vmatprep.subr.mxu0 0.0
  %7210 = vmatpush1.msra.mxu0 %v982
  %7211 = vmatprep.subr.mxu0 0.0
  %7212 = vmatpush1.msra.mxu0 %v983
  %7213 = vmatprep.subr.mxu0 0.0
  %7214 = vmatpush1.msra.mxu0 %v984
  %7215 = vmatprep.subr.mxu0 0.0
  %7216 = vmatpush1.msra.mxu0 %v985
  %7217 = vmatprep.subr.mxu0 0.0
  %7218 = vmatpush1.msra.mxu0 %v986
  %7219 = vmatprep.subr.mxu0 0.0
  %7220 = vmatpush1.msra.mxu0 %v987
  %7221 = vmatprep.subr.mxu0 0.0
  %7222 = vmatpush1.msra.mxu0 %v988
  %7223 = vmatprep.subr.mxu0 0.0
  %7224 = vmatpush1.msra.mxu0 %v989
  %7225 = vmatprep.subr.mxu0 0.0
  %7226 = vmatpush1.msra.mxu0 %v990
  %7227 = vmatprep.subr.mxu0 0.0
  %7228 = vmatpush1.msra.mxu0 %v991
  %7229 = vmatprep.subr.mxu0 0.0
  %7230 = vmatpush1.msra.mxu0 %v992
  %7231 = vmatprep.subr.mxu0 0.0
  %7232 = vmatpush1.msra.mxu0 %v993
  %7233 = vmatprep.subr.mxu0 0.0
  %7234 = vmatpush1.msra.mxu0 %v994
  %7235 = vmatprep.subr.mxu0 0.0
  %7236 = vmatpush1.msra.mxu0 %v995
  %7237 = vmatprep.subr.mxu0 0.0
  %7238 = vmatpush1.msra.mxu0 %v996
  %7239 = vmatprep.subr.mxu0 0.0
  %7240 = vmatpush1.msra.mxu0 %v997
  %7241 = vmatprep.subr.mxu0 0.0
  %7242 = vmatpush1.msra.mxu0 %v998
  %7243 = vmatprep.subr.mxu0 0.0
  %7244 = vmatpush1.msra.mxu0 %v999
  %7245 = vmatprep.subr.mxu0 0.0
  %7246 = vmatpush1.msra.mxu0 %v1000
  %7247 = vmatprep.mubr.f32.mxu0 %v7180
  %7248 = vmatmul.mubr.f32.gmra.mrb[0].mxu0 %v7179
  %v7249 = vpop.f32.mrb[0].mxu0
  %v7250 = vadd.f32 %v1038, %v7249
  %v7251 = vpop.f32.mrb[0].mxu0
  %7252 = vdwg.mxu0
  %7253 = vmatprep.subr.mxu0 0.0
  %7254 = vmatpush1.msra.mxu0 %v1001
  %7255 = vmatprep.subr.mxu0 0.0
  %7256 = vmatpush1.msra.mxu0 %v1002
  %7257 = vmatprep.subr.mxu0 0.0
  %7258 = vmatpush1.msra.mxu0 %v1003
  %7259 = vmatprep.subr.mxu0 0.0
  %7260 = vmatpush1.msra.mxu0 %v1004
  %7261 = vmatprep.subr.mxu0 0.0
  %7262 = vmatpush1.msra.mxu0 %v1005
  %7263 = vmatprep.subr.mxu0 0.0
  %7264 = vmatpush1.msra.mxu0 %v1006
  %7265 = vmatprep.subr.mxu0 0.0
  %7266 = vmatpush1.msra.mxu0 %v1007
  %7267 = vmatprep.subr.mxu0 0.0
  %7268 = vmatpush1.msra.mxu0 %v1008
  %7269 = vmatprep.subr.mxu0 0.0
  %7270 = vmatpush1.msra.mxu0 %v1009
  %7271 = vmatprep.subr.mxu0 0.0
  %7272 = vmatpush1.msra.mxu0 %v1010
  %7273 = vmatprep.subr.mxu0 0.0
  %7274 = vmatpush1.msra.mxu0 %v1011
  %7275 = vmatprep.subr.mxu0 0.0
  %7276 = vmatpush1.msra.mxu0 %v1012
  %7277 = vmatprep.subr.mxu0 0.0
  %7278 = vmatpush1.msra.mxu0 %v1013
  %7279 = vmatprep.subr.mxu0 0.0
  %7280 = vmatpush1.msra.mxu0 %v1014
  %7281 = vmatprep.subr.mxu0 0.0
  %7282 = vmatpush1.msra.mxu0 %v1015
  %7283 = vmatprep.subr.mxu0 0.0
  %7284 = vmatpush1.msra.mxu0 %v1016
  %7285 = vmatprep.subr.mxu0 0.0
  %7286 = vmatpush1.msra.mxu0 %v1017
  %7287 = vmatprep.subr.mxu0 0.0
  %7288 = vmatpush1.msra.mxu0 %v1018
  %7289 = vmatprep.subr.mxu0 0.0
  %7290 = vmatpush1.msra.mxu0 %v1019
  %7291 = vmatprep.subr.mxu0 0.0
  %7292 = vmatpush1.msra.mxu0 %v1020
  %7293 = vmatprep.subr.mxu0 0.0
  %7294 = vmatpush1.msra.mxu0 %v1021
  %7295 = vmatprep.subr.mxu0 0.0
  %7296 = vmatpush1.msra.mxu0 %v1022
  %7297 = vmatprep.subr.mxu0 0.0
  %7298 = vmatpush1.msra.mxu0 %v1023
  %7299 = vmatprep.subr.mxu0 0.0
  %7300 = vmatpush1.msra.mxu0 %v1024
  %7301 = vmatprep.subr.mxu0 0.0
  %7302 = vmatpush1.msra.mxu0 %v1025
  %7303 = vmatprep.subr.mxu0 0.0
  %7304 = vmatpush1.msra.mxu0 %v1026
  %7305 = vmatprep.subr.mxu0 0.0
  %7306 = vmatpush1.msra.mxu0 %v1027
  %7307 = vmatprep.subr.mxu0 0.0
  %7308 = vmatpush1.msra.mxu0 %v1028
  %7309 = vmatprep.subr.mxu0 0.0
  %7310 = vmatpush1.msra.mxu0 %v1029
  %7311 = vmatprep.subr.mxu0 0.0
  %7312 = vmatpush1.msra.mxu0 %v1030
  %7313 = vmatprep.subr.mxu0 0.0
  %7314 = vmatpush1.msra.mxu0 %v1031
  %7315 = vmatprep.subr.mxu0 0.0
  %7316 = vmatpush1.msra.mxu0 %v1032
  %7317 = vmatprep.mubr.f32.mxu0 %v7182
  %7318 = vmatmul.mubr.f32.gmra.mrb[0].mxu0 %v7181
  %v7319 = vpop.f32.mrb[0].mxu0
  %v7320 = vadd.f32 %v7250, %v7319
  %v7321 = vpop.f32.mrb[0].mxu0
  %7322 = vdwg.mxu0
  %v7323 = vmul.f32 %v7150, 0.2
  %v7324 = vadd.f32 %v7323, %v7320
  %v7325 = vsel %vm7151, %v7320, %v7324
  %vm7326 = vcmp.gt.f32.partialorder %v7325, 0.5
  %v7327 = vsel %vm7326, 1, 0
  %v7328 = vcvt.s32.f32 %v7327
  %v7329 = vadd.f32 %v7154, %v7328
  %v7330 = vld [vmem:[#allocation2 + $0x480] sm:$0xff]
  %v7331 = vld [vmem:[#allocation2 + $0x488] sm:$0xff]
  %v7332 = vld [vmem:[#allocation2 + $0x490] sm:$0xff]
  %v7333 = vld [vmem:[#allocation2 + $0x498] sm:$0xff]
  %v7334 = vmul.f32 %v7167, 0.2
  %v7335 = vmul.f32 %v7168, 0.2
  %v7336 = vmul.f32 %v7169, 0.2
  %v7337 = vmul.f32 %v7170, 0.2
  %v7338 = vadd.f32 %v7334, %v7330
  %v7339 = vadd.f32 %v7335, %v7331
  %v7340 = vadd.f32 %v7336, %v7332
  %v7341 = vadd.f32 %v7337, %v7333
  %v7342 = vsel %vm7171, %v7330, %v7338
  %v7343 = vsel %vm7172, %v7331, %v7339
  %v7344 = vsel %vm7173, %v7332, %v7340
  %v7345 = vsel %vm7174, %v7333, %v7341
  %vm7346 = vcmp.gt.f32.partialorder %v7342, 0.5
  %vm7347 = vcmp.gt.f32.partialorder %v7343, 0.5
  %vm7348 = vcmp.gt.f32.partialorder %v7344, 0.5
  %vm7349 = vcmp.gt.f32.partialorder %v7345, 0.5
  %v7350 = vsel %vm7346, 1, 0
  %v7351 = vsel %vm7347, 1, 0
  %v7352 = vsel %vm7348, 1, 0
  %v7353 = vsel %vm7349, 1, 0
  %v7354 = vcvt.s32.f32 %v7350
  %v7355 = vcvt.s32.f32 %v7351
  %v7356 = vcvt.s32.f32 %v7352
  %v7357 = vcvt.s32.f32 %v7353
  %7358 = vmatprep.subr.mxu0 0.0
  %7359 = vmatpush1.msra.mxu0 %v969
  %7360 = vmatprep.subr.mxu0 0.0
  %7361 = vmatpush1.msra.mxu0 %v970
  %7362 = vmatprep.subr.mxu0 0.0
  %7363 = vmatpush1.msra.mxu0 %v971
  %7364 = vmatprep.subr.mxu0 0.0
  %7365 = vmatpush1.msra.mxu0 %v972
  %7366 = vmatprep.subr.mxu0 0.0
  %7367 = vmatpush1.msra.mxu0 %v973
  %7368 = vmatprep.subr.mxu0 0.0
  %7369 = vmatpush1.msra.mxu0 %v974
  %7370 = vmatprep.subr.mxu0 0.0
  %7371 = vmatpush1.msra.mxu0 %v975
  %7372 = vmatprep.subr.mxu0 0.0
  %7373 = vmatpush1.msra.mxu0 %v976
  %7374 = vmatprep.subr.mxu0 0.0
  %7375 = vmatpush1.msra.mxu0 %v977
  %7376 = vmatprep.subr.mxu0 0.0
  %7377 = vmatpush1.msra.mxu0 %v978
  %7378 = vmatprep.subr.mxu0 0.0
  %7379 = vmatpush1.msra.mxu0 %v979
  %7380 = vmatprep.subr.mxu0 0.0
  %7381 = vmatpush1.msra.mxu0 %v980
  %7382 = vmatprep.subr.mxu0 0.0
  %7383 = vmatpush1.msra.mxu0 %v981
  %7384 = vmatprep.subr.mxu0 0.0
  %7385 = vmatpush1.msra.mxu0 %v982
  %7386 = vmatprep.subr.mxu0 0.0
  %7387 = vmatpush1.msra.mxu0 %v983
  %7388 = vmatprep.subr.mxu0 0.0
  %7389 = vmatpush1.msra.mxu0 %v984
  %7390 = vmatprep.subr.mxu0 0.0
  %7391 = vmatpush1.msra.mxu0 %v985
  %7392 = vmatprep.subr.mxu0 0.0
  %7393 = vmatpush1.msra.mxu0 %v986
  %7394 = vmatprep.subr.mxu0 0.0
  %7395 = vmatpush1.msra.mxu0 %v987
  %7396 = vmatprep.subr.mxu0 0.0
  %7397 = vmatpush1.msra.mxu0 %v988
  %7398 = vmatprep.subr.mxu0 0.0
  %7399 = vmatpush1.msra.mxu0 %v989
  %7400 = vmatprep.subr.mxu0 0.0
  %7401 = vmatpush1.msra.mxu0 %v990
  %7402 = vmatprep.subr.mxu0 0.0
  %7403 = vmatpush1.msra.mxu0 %v991
  %7404 = vmatprep.subr.mxu0 0.0
  %7405 = vmatpush1.msra.mxu0 %v992
  %7406 = vmatprep.subr.mxu0 0.0
  %7407 = vmatpush1.msra.mxu0 %v993
  %7408 = vmatprep.subr.mxu0 0.0
  %7409 = vmatpush1.msra.mxu0 %v994
  %7410 = vmatprep.subr.mxu0 0.0
  %7411 = vmatpush1.msra.mxu0 %v995
  %7412 = vmatprep.subr.mxu0 0.0
  %7413 = vmatpush1.msra.mxu0 %v996
  %7414 = vmatprep.subr.mxu0 0.0
  %7415 = vmatpush1.msra.mxu0 %v997
  %7416 = vmatprep.subr.mxu0 0.0
  %7417 = vmatpush1.msra.mxu0 %v998
  %7418 = vmatprep.subr.mxu0 0.0
  %7419 = vmatpush1.msra.mxu0 %v999
  %7420 = vmatprep.subr.mxu0 0.0
  %7421 = vmatpush1.msra.mxu0 %v1000
  %7422 = vmatprep.mubr.f32.mxu0 %v7355
  %7423 = vmatmul.mubr.f32.gmra.mrb[0].mxu0 %v7354
  %v7424 = vpop.f32.mrb[0].mxu0
  %v7425 = vadd.f32 %v1038, %v7424
  %v7426 = vpop.f32.mrb[0].mxu0
  %7427 = vdwg.mxu0
  %7428 = vmatprep.subr.mxu0 0.0
  %7429 = vmatpush1.msra.mxu0 %v1001
  %7430 = vmatprep.subr.mxu0 0.0
  %7431 = vmatpush1.msra.mxu0 %v1002
  %7432 = vmatprep.subr.mxu0 0.0
  %7433 = vmatpush1.msra.mxu0 %v1003
  %7434 = vmatprep.subr.mxu0 0.0
  %7435 = vmatpush1.msra.mxu0 %v1004
  %7436 = vmatprep.subr.mxu0 0.0
  %7437 = vmatpush1.msra.mxu0 %v1005
  %7438 = vmatprep.subr.mxu0 0.0
  %7439 = vmatpush1.msra.mxu0 %v1006
  %7440 = vmatprep.subr.mxu0 0.0
  %7441 = vmatpush1.msra.mxu0 %v1007
  %7442 = vmatprep.subr.mxu0 0.0
  %7443 = vmatpush1.msra.mxu0 %v1008
  %7444 = vmatprep.subr.mxu0 0.0
  %7445 = vmatpush1.msra.mxu0 %v1009
  %7446 = vmatprep.subr.mxu0 0.0
  %7447 = vmatpush1.msra.mxu0 %v1010
  %7448 = vmatprep.subr.mxu0 0.0
  %7449 = vmatpush1.msra.mxu0 %v1011
  %7450 = vmatprep.subr.mxu0 0.0
  %7451 = vmatpush1.msra.mxu0 %v1012
  %7452 = vmatprep.subr.mxu0 0.0
  %7453 = vmatpush1.msra.mxu0 %v1013
  %7454 = vmatprep.subr.mxu0 0.0
  %7455 = vmatpush1.msra.mxu0 %v1014
  %7456 = vmatprep.subr.mxu0 0.0
  %7457 = vmatpush1.msra.mxu0 %v1015
  %7458 = vmatprep.subr.mxu0 0.0
  %7459 = vmatpush1.msra.mxu0 %v1016
  %7460 = vmatprep.subr.mxu0 0.0
  %7461 = vmatpush1.msra.mxu0 %v1017
  %7462 = vmatprep.subr.mxu0 0.0
  %7463 = vmatpush1.msra.mxu0 %v1018
  %7464 = vmatprep.subr.mxu0 0.0
  %7465 = vmatpush1.msra.mxu0 %v1019
  %7466 = vmatprep.subr.mxu0 0.0
  %7467 = vmatpush1.msra.mxu0 %v1020
  %7468 = vmatprep.subr.mxu0 0.0
  %7469 = vmatpush1.msra.mxu0 %v1021
  %7470 = vmatprep.subr.mxu0 0.0
  %7471 = vmatpush1.msra.mxu0 %v1022
  %7472 = vmatprep.subr.mxu0 0.0
  %7473 = vmatpush1.msra.mxu0 %v1023
  %7474 = vmatprep.subr.mxu0 0.0
  %7475 = vmatpush1.msra.mxu0 %v1024
  %7476 = vmatprep.subr.mxu0 0.0
  %7477 = vmatpush1.msra.mxu0 %v1025
  %7478 = vmatprep.subr.mxu0 0.0
  %7479 = vmatpush1.msra.mxu0 %v1026
  %7480 = vmatprep.subr.mxu0 0.0
  %7481 = vmatpush1.msra.mxu0 %v1027
  %7482 = vmatprep.subr.mxu0 0.0
  %7483 = vmatpush1.msra.mxu0 %v1028
  %7484 = vmatprep.subr.mxu0 0.0
  %7485 = vmatpush1.msra.mxu0 %v1029
  %7486 = vmatprep.subr.mxu0 0.0
  %7487 = vmatpush1.msra.mxu0 %v1030
  %7488 = vmatprep.subr.mxu0 0.0
  %7489 = vmatpush1.msra.mxu0 %v1031
  %7490 = vmatprep.subr.mxu0 0.0
  %7491 = vmatpush1.msra.mxu0 %v1032
  %7492 = vmatprep.mubr.f32.mxu0 %v7357
  %7493 = vmatmul.mubr.f32.gmra.mrb[0].mxu0 %v7356
  %v7494 = vpop.f32.mrb[0].mxu0
  %v7495 = vadd.f32 %v7425, %v7494
  %v7496 = vpop.f32.mrb[0].mxu0
  %7497 = vdwg.mxu0
  %v7498 = vmul.f32 %v7325, 0.2
  %v7499 = vadd.f32 %v7498, %v7495
  %v7500 = vsel %vm7326, %v7495, %v7499
  %vm7501 = vcmp.gt.f32.partialorder %v7500, 0.5
  %v7502 = vsel %vm7501, 1, 0
  %v7503 = vcvt.s32.f32 %v7502
  %v7504 = vadd.f32 %v7329, %v7503
  %v7505 = vld [vmem:[#allocation2 + $0x4a0] sm:$0xff]
  %v7506 = vld [vmem:[#allocation2 + $0x4a8] sm:$0xff]
  %v7507 = vld [vmem:[#allocation2 + $0x4b0] sm:$0xff]
  %v7508 = vld [vmem:[#allocation2 + $0x4b8] sm:$0xff]
  %v7509 = vmul.f32 %v7342, 0.2
  %v7510 = vmul.f32 %v7343, 0.2
  %v7511 = vmul.f32 %v7344, 0.2
  %v7512 = vmul.f32 %v7345, 0.2
  %v7513 = vadd.f32 %v7509, %v7505
  %v7514 = vadd.f32 %v7510, %v7506
  %v7515 = vadd.f32 %v7511, %v7507
  %v7516 = vadd.f32 %v7512, %v7508
  %v7517 = vsel %vm7346, %v7505, %v7513
  %v7518 = vsel %vm7347, %v7506, %v7514
  %v7519 = vsel %vm7348, %v7507, %v7515
  %v7520 = vsel %vm7349, %v7508, %v7516
  %vm7521 = vcmp.gt.f32.partialorder %v7517, 0.5
  %vm7522 = vcmp.gt.f32.partialorder %v7518, 0.5
  %vm7523 = vcmp.gt.f32.partialorder %v7519, 0.5
  %vm7524 = vcmp.gt.f32.partialorder %v7520, 0.5
  %v7525 = vsel %vm7521, 1, 0
  %v7526 = vsel %vm7522, 1, 0
  %v7527 = vsel %vm7523, 1, 0
  %v7528 = vsel %vm7524, 1, 0
  %v7529 = vcvt.s32.f32 %v7525
  %v7530 = vcvt.s32.f32 %v7526
  %v7531 = vcvt.s32.f32 %v7527
  %v7532 = vcvt.s32.f32 %v7528
  %7533 = vmatprep.subr.mxu0 0.0
  %7534 = vmatpush1.msra.mxu0 %v969
  %7535 = vmatprep.subr.mxu0 0.0
  %7536 = vmatpush1.msra.mxu0 %v970
  %7537 = vmatprep.subr.mxu0 0.0
  %7538 = vmatpush1.msra.mxu0 %v971
  %7539 = vmatprep.subr.mxu0 0.0
  %7540 = vmatpush1.msra.mxu0 %v972
  %7541 = vmatprep.subr.mxu0 0.0
  %7542 = vmatpush1.msra.mxu0 %v973
  %7543 = vmatprep.subr.mxu0 0.0
  %7544 = vmatpush1.msra.mxu0 %v974
  %7545 = vmatprep.subr.mxu0 0.0
  %7546 = vmatpush1.msra.mxu0 %v975
  %7547 = vmatprep.subr.mxu0 0.0
  %7548 = vmatpush1.msra.mxu0 %v976
  %7549 = vmatprep.subr.mxu0 0.0
  %7550 = vmatpush1.msra.mxu0 %v977
  %7551 = vmatprep.subr.mxu0 0.0
  %7552 = vmatpush1.msra.mxu0 %v978
  %7553 = vmatprep.subr.mxu0 0.0
  %7554 = vmatpush1.msra.mxu0 %v979
  %7555 = vmatprep.subr.mxu0 0.0
  %7556 = vmatpush1.msra.mxu0 %v980
  %7557 = vmatprep.subr.mxu0 0.0
  %7558 = vmatpush1.msra.mxu0 %v981
  %7559 = vmatprep.subr.mxu0 0.0
  %7560 = vmatpush1.msra.mxu0 %v982
  %7561 = vmatprep.subr.mxu0 0.0
  %7562 = vmatpush1.msra.mxu0 %v983
  %7563 = vmatprep.subr.mxu0 0.0
  %7564 = vmatpush1.msra.mxu0 %v984
  %7565 = vmatprep.subr.mxu0 0.0
  %7566 = vmatpush1.msra.mxu0 %v985
  %7567 = vmatprep.subr.mxu0 0.0
  %7568 = vmatpush1.msra.mxu0 %v986
  %7569 = vmatprep.subr.mxu0 0.0
  %7570 = vmatpush1.msra.mxu0 %v987
  %7571 = vmatprep.subr.mxu0 0.0
  %7572 = vmatpush1.msra.mxu0 %v988
  %7573 = vmatprep.subr.mxu0 0.0
  %7574 = vmatpush1.msra.mxu0 %v989
  %7575 = vmatprep.subr.mxu0 0.0
  %7576 = vmatpush1.msra.mxu0 %v990
  %7577 = vmatprep.subr.mxu0 0.0
  %7578 = vmatpush1.msra.mxu0 %v991
  %7579 = vmatprep.subr.mxu0 0.0
  %7580 = vmatpush1.msra.mxu0 %v992
  %7581 = vmatprep.subr.mxu0 0.0
  %7582 = vmatpush1.msra.mxu0 %v993
  %7583 = vmatprep.subr.mxu0 0.0
  %7584 = vmatpush1.msra.mxu0 %v994
  %7585 = vmatprep.subr.mxu0 0.0
  %7586 = vmatpush1.msra.mxu0 %v995
  %7587 = vmatprep.subr.mxu0 0.0
  %7588 = vmatpush1.msra.mxu0 %v996
  %7589 = vmatprep.subr.mxu0 0.0
  %7590 = vmatpush1.msra.mxu0 %v997
  %7591 = vmatprep.subr.mxu0 0.0
  %7592 = vmatpush1.msra.mxu0 %v998
  %7593 = vmatprep.subr.mxu0 0.0
  %7594 = vmatpush1.msra.mxu0 %v999
  %7595 = vmatprep.subr.mxu0 0.0
  %7596 = vmatpush1.msra.mxu0 %v1000
  %7597 = vmatprep.mubr.f32.mxu0 %v7530
  %7598 = vmatmul.mubr.f32.gmra.mrb[0].mxu0 %v7529
  %v7599 = vpop.f32.mrb[0].mxu0
  %v7600 = vadd.f32 %v1038, %v7599
  %v7601 = vpop.f32.mrb[0].mxu0
  %7602 = vdwg.mxu0
  %7603 = vmatprep.subr.mxu0 0.0
  %7604 = vmatpush1.msra.mxu0 %v1001
  %7605 = vmatprep.subr.mxu0 0.0
  %7606 = vmatpush1.msra.mxu0 %v1002
  %7607 = vmatprep.subr.mxu0 0.0
  %7608 = vmatpush1.msra.mxu0 %v1003
  %7609 = vmatprep.subr.mxu0 0.0
  %7610 = vmatpush1.msra.mxu0 %v1004
  %7611 = vmatprep.subr.mxu0 0.0
  %7612 = vmatpush1.msra.mxu0 %v1005
  %7613 = vmatprep.subr.mxu0 0.0
  %7614 = vmatpush1.msra.mxu0 %v1006
  %7615 = vmatprep.subr.mxu0 0.0
  %7616 = vmatpush1.msra.mxu0 %v1007
  %7617 = vmatprep.subr.mxu0 0.0
  %7618 = vmatpush1.msra.mxu0 %v1008
  %7619 = vmatprep.subr.mxu0 0.0
  %7620 = vmatpush1.msra.mxu0 %v1009
  %7621 = vmatprep.subr.mxu0 0.0
  %7622 = vmatpush1.msra.mxu0 %v1010
  %7623 = vmatprep.subr.mxu0 0.0
  %7624 = vmatpush1.msra.mxu0 %v1011
  %7625 = vmatprep.subr.mxu0 0.0
  %7626 = vmatpush1.msra.mxu0 %v1012
  %7627 = vmatprep.subr.mxu0 0.0
  %7628 = vmatpush1.msra.mxu0 %v1013
  %7629 = vmatprep.subr.mxu0 0.0
  %7630 = vmatpush1.msra.mxu0 %v1014
  %7631 = vmatprep.subr.mxu0 0.0
  %7632 = vmatpush1.msra.mxu0 %v1015
  %7633 = vmatprep.subr.mxu0 0.0
  %7634 = vmatpush1.msra.mxu0 %v1016
  %7635 = vmatprep.subr.mxu0 0.0
  %7636 = vmatpush1.msra.mxu0 %v1017
  %7637 = vmatprep.subr.mxu0 0.0
  %7638 = vmatpush1.msra.mxu0 %v1018
  %7639 = vmatprep.subr.mxu0 0.0
  %7640 = vmatpush1.msra.mxu0 %v1019
  %7641 = vmatprep.subr.mxu0 0.0
  %7642 = vmatpush1.msra.mxu0 %v1020
  %7643 = vmatprep.subr.mxu0 0.0
  %7644 = vmatpush1.msra.mxu0 %v1021
  %7645 = vmatprep.subr.mxu0 0.0
  %7646 = vmatpush1.msra.mxu0 %v1022
  %7647 = vmatprep.subr.mxu0 0.0
  %7648 = vmatpush1.msra.mxu0 %v1023
  %7649 = vmatprep.subr.mxu0 0.0
  %7650 = vmatpush1.msra.mxu0 %v1024
  %7651 = vmatprep.subr.mxu0 0.0
  %7652 = vmatpush1.msra.mxu0 %v1025
  %7653 = vmatprep.subr.mxu0 0.0
  %7654 = vmatpush1.msra.mxu0 %v1026
  %7655 = vmatprep.subr.mxu0 0.0
  %7656 = vmatpush1.msra.mxu0 %v1027
  %7657 = vmatprep.subr.mxu0 0.0
  %7658 = vmatpush1.msra.mxu0 %v1028
  %7659 = vmatprep.subr.mxu0 0.0
  %7660 = vmatpush1.msra.mxu0 %v1029
  %7661 = vmatprep.subr.mxu0 0.0
  %7662 = vmatpush1.msra.mxu0 %v1030
  %7663 = vmatprep.subr.mxu0 0.0
  %7664 = vmatpush1.msra.mxu0 %v1031
  %7665 = vmatprep.subr.mxu0 0.0
  %7666 = vmatpush1.msra.mxu0 %v1032
  %7667 = vmatprep.mubr.f32.mxu0 %v7532
  %7668 = vmatmul.mubr.f32.gmra.mrb[0].mxu0 %v7531
  %v7669 = vpop.f32.mrb[0].mxu0
  %v7670 = vadd.f32 %v7600, %v7669
  %v7671 = vpop.f32.mrb[0].mxu0
  %7672 = vdwg.mxu0
  %v7673 = vmul.f32 %v7500, 0.2
  %v7674 = vadd.f32 %v7673, %v7670
  %v7675 = vsel %vm7501, %v7670, %v7674
  %vm7676 = vcmp.gt.f32.partialorder %v7675, 0.5
  %v7677 = vsel %vm7676, 1, 0
  %v7678 = vcvt.s32.f32 %v7677
  %v7679 = vadd.f32 %v7504, %v7678
  %v7680 = vld [vmem:[#allocation2 + $0x4c0] sm:$0xff]
  %v7681 = vld [vmem:[#allocation2 + $0x4c8] sm:$0xff]
  %v7682 = vld [vmem:[#allocation2 + $0x4d0] sm:$0xff]
  %v7683 = vld [vmem:[#allocation2 + $0x4d8] sm:$0xff]
  %v7684 = vmul.f32 %v7517, 0.2
  %v7685 = vmul.f32 %v7518, 0.2
  %v7686 = vmul.f32 %v7519, 0.2
  %v7687 = vmul.f32 %v7520, 0.2
  %v7688 = vadd.f32 %v7684, %v7680
  %v7689 = vadd.f32 %v7685, %v7681
  %v7690 = vadd.f32 %v7686, %v7682
  %v7691 = vadd.f32 %v7687, %v7683
  %v7692 = vsel %vm7521, %v7680, %v7688
  %v7693 = vsel %vm7522, %v7681, %v7689
  %v7694 = vsel %vm7523, %v7682, %v7690
  %v7695 = vsel %vm7524, %v7683, %v7691
  %vm7696 = vcmp.gt.f32.partialorder %v7692, 0.5
  %vm7697 = vcmp.gt.f32.partialorder %v7693, 0.5
  %vm7698 = vcmp.gt.f32.partialorder %v7694, 0.5
  %vm7699 = vcmp.gt.f32.partialorder %v7695, 0.5
  %v7700 = vsel %vm7696, 1, 0
  %v7701 = vsel %vm7697, 1, 0
  %v7702 = vsel %vm7698, 1, 0
  %v7703 = vsel %vm7699, 1, 0
  %v7704 = vcvt.s32.f32 %v7700
  %v7705 = vcvt.s32.f32 %v7701
  %v7706 = vcvt.s32.f32 %v7702
  %v7707 = vcvt.s32.f32 %v7703
  %7708 = vmatprep.subr.mxu0 0.0
  %7709 = vmatpush1.msra.mxu0 %v969
  %7710 = vmatprep.subr.mxu0 0.0
  %7711 = vmatpush1.msra.mxu0 %v970
  %7712 = vmatprep.subr.mxu0 0.0
  %7713 = vmatpush1.msra.mxu0 %v971
  %7714 = vmatprep.subr.mxu0 0.0
  %7715 = vmatpush1.msra.mxu0 %v972
  %7716 = vmatprep.subr.mxu0 0.0
  %7717 = vmatpush1.msra.mxu0 %v973
  %7718 = vmatprep.subr.mxu0 0.0
  %7719 = vmatpush1.msra.mxu0 %v974
  %7720 = vmatprep.subr.mxu0 0.0
  %7721 = vmatpush1.msra.mxu0 %v975
  %7722 = vmatprep.subr.mxu0 0.0
  %7723 = vmatpush1.msra.mxu0 %v976
  %7724 = vmatprep.subr.mxu0 0.0
  %7725 = vmatpush1.msra.mxu0 %v977
  %7726 = vmatprep.subr.mxu0 0.0
  %7727 = vmatpush1.msra.mxu0 %v978
  %7728 = vmatprep.subr.mxu0 0.0
  %7729 = vmatpush1.msra.mxu0 %v979
  %7730 = vmatprep.subr.mxu0 0.0
  %7731 = vmatpush1.msra.mxu0 %v980
  %7732 = vmatprep.subr.mxu0 0.0
  %7733 = vmatpush1.msra.mxu0 %v981
  %7734 = vmatprep.subr.mxu0 0.0
  %7735 = vmatpush1.msra.mxu0 %v982
  %7736 = vmatprep.subr.mxu0 0.0
  %7737 = vmatpush1.msra.mxu0 %v983
  %7738 = vmatprep.subr.mxu0 0.0
  %7739 = vmatpush1.msra.mxu0 %v984
  %7740 = vmatprep.subr.mxu0 0.0
  %7741 = vmatpush1.msra.mxu0 %v985
  %7742 = vmatprep.subr.mxu0 0.0
  %7743 = vmatpush1.msra.mxu0 %v986
  %7744 = vmatprep.subr.mxu0 0.0
  %7745 = vmatpush1.msra.mxu0 %v987
  %7746 = vmatprep.subr.mxu0 0.0
  %7747 = vmatpush1.msra.mxu0 %v988
  %7748 = vmatprep.subr.mxu0 0.0
  %7749 = vmatpush1.msra.mxu0 %v989
  %7750 = vmatprep.subr.mxu0 0.0
  %7751 = vmatpush1.msra.mxu0 %v990
  %7752 = vmatprep.subr.mxu0 0.0
  %7753 = vmatpush1.msra.mxu0 %v991
  %7754 = vmatprep.subr.mxu0 0.0
  %7755 = vmatpush1.msra.mxu0 %v992
  %7756 = vmatprep.subr.mxu0 0.0
  %7757 = vmatpush1.msra.mxu0 %v993
  %7758 = vmatprep.subr.mxu0 0.0
  %7759 = vmatpush1.msra.mxu0 %v994
  %7760 = vmatprep.subr.mxu0 0.0
  %7761 = vmatpush1.msra.mxu0 %v995
  %7762 = vmatprep.subr.mxu0 0.0
  %7763 = vmatpush1.msra.mxu0 %v996
  %7764 = vmatprep.subr.mxu0 0.0
  %7765 = vmatpush1.msra.mxu0 %v997
  %7766 = vmatprep.subr.mxu0 0.0
  %7767 = vmatpush1.msra.mxu0 %v998
  %7768 = vmatprep.subr.mxu0 0.0
  %7769 = vmatpush1.msra.mxu0 %v999
  %7770 = vmatprep.subr.mxu0 0.0
  %7771 = vmatpush1.msra.mxu0 %v1000
  %7772 = vmatprep.mubr.f32.mxu0 %v7705
  %7773 = vmatmul.mubr.f32.gmra.mrb[0].mxu0 %v7704
  %v7774 = vpop.f32.mrb[0].mxu0
  %v7775 = vadd.f32 %v1038, %v7774
  %v7776 = vpop.f32.mrb[0].mxu0
  %7777 = vdwg.mxu0
  %7778 = vmatprep.subr.mxu0 0.0
  %7779 = vmatpush1.msra.mxu0 %v1001
  %7780 = vmatprep.subr.mxu0 0.0
  %7781 = vmatpush1.msra.mxu0 %v1002
  %7782 = vmatprep.subr.mxu0 0.0
  %7783 = vmatpush1.msra.mxu0 %v1003
  %7784 = vmatprep.subr.mxu0 0.0
  %7785 = vmatpush1.msra.mxu0 %v1004
  %7786 = vmatprep.subr.mxu0 0.0
  %7787 = vmatpush1.msra.mxu0 %v1005
  %7788 = vmatprep.subr.mxu0 0.0
  %7789 = vmatpush1.msra.mxu0 %v1006
  %7790 = vmatprep.subr.mxu0 0.0
  %7791 = vmatpush1.msra.mxu0 %v1007
  %7792 = vmatprep.subr.mxu0 0.0
  %7793 = vmatpush1.msra.mxu0 %v1008
  %7794 = vmatprep.subr.mxu0 0.0
  %7795 = vmatpush1.msra.mxu0 %v1009
  %7796 = vmatprep.subr.mxu0 0.0
  %7797 = vmatpush1.msra.mxu0 %v1010
  %7798 = vmatprep.subr.mxu0 0.0
  %7799 = vmatpush1.msra.mxu0 %v1011
  %7800 = vmatprep.subr.mxu0 0.0
  %7801 = vmatpush1.msra.mxu0 %v1012
  %7802 = vmatprep.subr.mxu0 0.0
  %7803 = vmatpush1.msra.mxu0 %v1013
  %7804 = vmatprep.subr.mxu0 0.0
  %7805 = vmatpush1.msra.mxu0 %v1014
  %7806 = vmatprep.subr.mxu0 0.0
  %7807 = vmatpush1.msra.mxu0 %v1015
  %7808 = vmatprep.subr.mxu0 0.0
  %7809 = vmatpush1.msra.mxu0 %v1016
  %7810 = vmatprep.subr.mxu0 0.0
  %7811 = vmatpush1.msra.mxu0 %v1017
  %7812 = vmatprep.subr.mxu0 0.0
  %7813 = vmatpush1.msra.mxu0 %v1018
  %7814 = vmatprep.subr.mxu0 0.0
  %7815 = vmatpush1.msra.mxu0 %v1019
  %7816 = vmatprep.subr.mxu0 0.0
  %7817 = vmatpush1.msra.mxu0 %v1020
  %7818 = vmatprep.subr.mxu0 0.0
  %7819 = vmatpush1.msra.mxu0 %v1021
  %7820 = vmatprep.subr.mxu0 0.0
  %7821 = vmatpush1.msra.mxu0 %v1022
  %7822 = vmatprep.subr.mxu0 0.0
  %7823 = vmatpush1.msra.mxu0 %v1023
  %7824 = vmatprep.subr.mxu0 0.0
  %7825 = vmatpush1.msra.mxu0 %v1024
  %7826 = vmatprep.subr.mxu0 0.0
  %7827 = vmatpush1.msra.mxu0 %v1025
  %7828 = vmatprep.subr.mxu0 0.0
  %7829 = vmatpush1.msra.mxu0 %v1026
  %7830 = vmatprep.subr.mxu0 0.0
  %7831 = vmatpush1.msra.mxu0 %v1027
  %7832 = vmatprep.subr.mxu0 0.0
  %7833 = vmatpush1.msra.mxu0 %v1028
  %7834 = vmatprep.subr.mxu0 0.0
  %7835 = vmatpush1.msra.mxu0 %v1029
  %7836 = vmatprep.subr.mxu0 0.0
  %7837 = vmatpush1.msra.mxu0 %v1030
  %7838 = vmatprep.subr.mxu0 0.0
  %7839 = vmatpush1.msra.mxu0 %v1031
  %7840 = vmatprep.subr.mxu0 0.0
  %7841 = vmatpush1.msra.mxu0 %v1032
  %7842 = vmatprep.mubr.f32.mxu0 %v7707
  %7843 = vmatmul.mubr.f32.gmra.mrb[0].mxu0 %v7706
  %v7844 = vpop.f32.mrb[0].mxu0
  %v7845 = vadd.f32 %v7775, %v7844
  %v7846 = vpop.f32.mrb[0].mxu0
  %7847 = vdwg.mxu0
  %v7848 = vmul.f32 %v7675, 0.2
  %v7849 = vadd.f32 %v7848, %v7845
  %v7850 = vsel %vm7676, %v7845, %v7849
  %vm7851 = vcmp.gt.f32.partialorder %v7850, 0.5
  %v7852 = vsel %vm7851, 1, 0
  %v7853 = vcvt.s32.f32 %v7852
  %v7854 = vadd.f32 %v7679, %v7853
  %v7855 = vmul.f32 %v7854, 0.025641026
  %7856 = vst [vmem:[%s5] sm:$0xff] %v7855
  // Predicated region
  $region22: #{hybrid_lif_gnn_only_location.1} parent=0 // pred_check
    _
  $region23: #{hybrid_lif_gnn_only_location.1} parent=0 // pred_check_branch
    %7858 = sbr.rel (0) target = $region25
  $region24: #{hybrid_lif_gnn_only_location.1} parent=0 // pred_region
    _
  $region25: #{hybrid_lif_gnn_only_location.1} parent=0 // pred_fallthru
    _
  // Predicated region
  $region26: #{hybrid_lif_gnn_only_location.1} parent=0 // pred_check
    _
  $region27: #{hybrid_lif_gnn_only_location.1} parent=0 // pred_check_branch
    %7860 = sbr.rel (0) target = $region29
  $region28: #{hybrid_lif_gnn_only_location.1} parent=0 // pred_region
    _
  $region29: #{hybrid_lif_gnn_only_location.1} parent=0 // pred_fallthru
    _

</llo_original>
